<compile_context>
chip_gen: v6e
topology: v6e:2x2x1
jax: 0.10.0
libtpu: 0.0.40
codegen_flags: <defaults>
</compile_context>

<pallas_src>
import numpy as np
import jax
import jax.numpy as jnp
from jax import lax
from jax.experimental import pallas as pl
from jax.experimental.pallas import tpu as pltpu

NUM_ATTACKABLE_BRANCH = 10   # stand-in for settings.num_attackable_branch
BN_EPS = 1e-5

# lane-aligned (padded) feature sizes
BR_IN, BR_IN_PAD = 9 * 185, 1792      # branch input  (1665 -> 14*128)
LD_IN, LD_IN_PAD = 2 * 91, 256        # load input    (182  -> 2*128)
EL_IN, EL_IN_PAD = 73, 128            # else input    (73   -> 128)
P1_DIM, P1_PAD = 16 * 46, 768         # branch stage-1 pooled map (736 -> 6*128)
BR_F, BR_F_PAD = 8 * 23, 256          # branch flattened features (184 -> 2*128)
LD_F, LD_F_PAD = 4 * 23, 128          # load flattened features   (92 -> 128)
OUT_PAD = 128                         # lane-dense logits / output slab (10 -> 128)
NEG_BIG = -1.0e30                     # bias for padded logits -> exp() underflows to 0

TB_MAX = 256                          # batch rows per grid step


# ----------------------------------------------------------------------------
# Pallas kernel: fully fused forward pass for one batch tile
# ----------------------------------------------------------------------------
def _elu(x):
    # PyTorch nn.ELU(alpha=1.0); clamp the exp argument since where() evaluates both sides
    return jnp.where(x > 0, x, jnp.exp(jnp.minimum(x, 0.0)) - 1.0)


def fused_forward_kernel(br_ref, ld_ref, el_ref,
                         m1e_ref, m1o_ref, b1v_ref,
                         m2a_ref, m2b_ref,
                         mde_ref, mdo_ref,
                         w1br_ref, w1ld_ref, w1el_ref, c1_ref,
                         w2_ref, c2_ref, w3_ref, c3_ref,
                         w4_ref, b4_ref, o_ref):
    f32, bf16 = jnp.float32, jnp.bfloat16

    # ---- branch path: Conv1d(9,16,3,s2,p1) + MaxPool(2,2) as two lane-space maps + max
    xb = br_ref[...]                                                   # (tb, 1792) bf16
    p1 = jnp.maximum(
        jnp.dot(xb, m1e_ref[...], preferred_element_type=f32),
        jnp.dot(xb, m1o_ref[...], preferred_element_type=f32)) + b1v_ref[...]
    p1 = p1.astype(bf16)                                               # (tb, 768)
    # Conv1d(16,8,2,s2,p1) + MaxPool(2,1): conv evaluated at positions m and m+1
    # (conv bias is position-independent so it is folded into fc1's shift instead)
    br = jnp.maximum(
        jnp.dot(p1, m2a_ref[...], preferred_element_type=f32),
        jnp.dot(p1, m2b_ref[...], preferred_element_type=f32))         # (tb, 256)

    # ---- load path: Conv1d(2,4,3,s2,p1) + MaxPool(2,2)  (bias folded into fc1 shift)
    xd = ld_ref[...]                                                   # (tb, 256) bf16
    ldf = jnp.maximum(
        jnp.dot(xd, mde_ref[...], preferred_element_type=f32),
        jnp.dot(xd, mdo_ref[...], preferred_element_type=f32))         # (tb, 128)

    # ---- fc_net (BatchNorm + bias + conv biases folded into weights/shifts);
    #      fc1 split into three K-aligned matmuls (256/128/128), no concat needed
    h = (jnp.dot(br.astype(bf16), w1br_ref[...], preferred_element_type=f32)
         + jnp.dot(ldf.astype(bf16), w1ld_ref[...], preferred_element_type=f32)
         + jnp.dot(el_ref[...], w1el_ref[...], preferred_element_type=f32)
         + c1_ref[...])
    h = _elu(h)
    h = _elu(jnp.dot(h.astype(bf16), w2_ref[...], preferred_element_type=f32) + c2_ref[...])
    h = _elu(jnp.dot(h.astype(bf16), w3_ref[...], preferred_element_type=f32) + c3_ref[...])
    logits = jnp.dot(h.astype(bf16), w4_ref[...], preferred_element_type=f32) + b4_ref[...]

    # ---- softmax over the 128-lane slab (padded lanes have -1e30 bias -> exp == 0)
    z = logits - jnp.max(logits, axis=1, keepdims=True)
    e = jnp.exp(z)
    o_ref[...] = e * pl.reciprocal(jnp.sum(e, axis=1, keepdims=True), approx=True)


# ----------------------------------------------------------------------------
# Host-side parameter preparation (init time, numpy)
# ----------------------------------------------------------------------------
def _conv_as_matrix(w, b, l_in, stride, pad, conv_pos, rows, cols):
    """Conv1d (w:(Cout,Cin,K), b:(Cout,)) evaluated at `conv_pos`, as a dense map on
    the channel-major flattened input:  (x_flat @ M)[co*P + p] (+ bias_vec) =
    conv_out[co, conv_pos[p]].  Zero-padded to (rows, cols)."""
    cout_n, cin_n, k_n = w.shape
    P = len(conv_pos)
    M = np.zeros((rows, cols), np.float32)
    bias = np.zeros((1, cols), np.float32)
    for co in range(cout_n):
        bias[0, co * P:(co + 1) * P] = b[co]
        for ci in range(cin_n):
            for k in range(k_n):
                wv = w[co, ci, k]
                for p, cp in enumerate(conv_pos):
                    idx = stride * cp + k - pad
                    if 0 <= idx < l_in:
                        M[ci * l_in + idx, co * P + p] += wv
    return M, bias


def init_params(key):
    ks = jax.random.split(key, 26)

    def nrm(k, shape, scale=0.1):
        return np.asarray(scale * jax.random.normal(k, shape, dtype=jnp.float32))

    raw = {'w1b': nrm(ks[0], (16, 9, 3)), 'b1b': nrm(ks[1], (16,)),
           'w2b': nrm(ks[2], (8, 16, 2)), 'b2b': nrm(ks[3], (8,)),
           'w1d': nrm(ks[4], (4, 2, 3)), 'b1d': nrm(ks[5], (4,)),
           'fw': [], 'fb': [], 's': [], 't': []}

    dims = [(349, 512), (512, 256), (256, 128), (128, NUM_ATTACKABLE_BRANCH)]
    ki = 6
    for li, (din, dout) in enumerate(dims):
        raw['fw'].append(nrm(ks[ki], (din, dout))); ki += 1
        raw['fb'].append(nrm(ks[ki], (1, dout))); ki += 1
        if li < 3:  # BatchNorm1d after the first three Linears
            gamma = 1.0 + nrm(ks[ki], (1, dout)); ki += 1
            beta = nrm(ks[ki], (1, dout)); ki += 1
            rmean = nrm(ks[ki], (1, dout)); ki += 1
            rvar = 1.0 + np.abs(nrm(ks[ki], (1, dout))); ki += 1
            scale = gamma / np.sqrt(rvar + BN_EPS)
            raw['s'].append(scale)
            raw['t'].append(beta - rmean * scale)

    # conv stages -> lane-space linear maps (even/odd pooling taps)
    m1e, b1v = _conv_as_matrix(raw['w1b'], raw['b1b'], 185, 2, 1, list(range(0, 92, 2)), BR_IN_PAD, P1_PAD)
    m1o, _ = _conv_as_matrix(raw['w1b'], raw['b1b'], 185, 2, 1, list(range(1, 92, 2)), BR_IN_PAD, P1_PAD)
    m2a, b2v = _conv_as_matrix(raw['w2b'], raw['b2b'], 46, 2, 1, list(range(0, 23)), P1_PAD, BR_F_PAD)
    m2b, _ = _conv_as_matrix(raw['w2b'], raw['b2b'], 46, 2, 1, list(range(1, 24)), P1_PAD, BR_F_PAD)
    mde, bdv = _conv_as_matrix(raw['w1d'], raw['b1d'], 91, 2, 1, list(range(0, 46, 2)), LD_IN_PAD, LD_F_PAD)
    mdo, _ = _conv_as_matrix(raw['w1d'], raw['b1d'], 91, 2, 1, list(range(1, 46, 2)), LD_IN_PAD, LD_F_PAD)

    # fc: fold BN (inference) + bias into (weight, shift)
    fwf, cf = [], []
    for li in range(4):
        w, b = raw['fw'][li], raw['fb'][li]
        if li < 3:
            w = w * raw['s'][li]
            b = b * raw['s'][li] + raw['t'][li]
        fwf.append(w.astype(np.float32)); cf.append(b.astype(np.float32))

    # split fc1 rows by source (branch/load/else) and pad each K to a multiple of 128
    w1 = fwf[0]
    w1br = np.zeros((BR_F_PAD, 512), np.float32); w1br[:BR_F] = w1[0:184]
    w1ld = np.zeros((LD_F_PAD, 512), np.float32); w1ld[:LD_F] = w1[184:276]
    w1el = np.zeros((EL_IN_PAD, 512), np.float32); w1el[:EL_IN] = w1[276:349]

    # fold the (position-independent) stage-2 conv biases into fc1's shift:
    #   (max(..)+b2v) @ w1br + (max(..)+bdv) @ w1ld = max(..)@w1br + max(..)@w1ld + (b2v@w1br + bdv@w1ld)
    c1 = cf[0] + b2v @ w1br + bdv @ w1ld

    # fc4 padded to a lane-dense 128-wide slab; padded logits get a huge negative bias
    w4p = np.zeros((128, OUT_PAD), np.float32); w4p[:, :NUM_ATTACKABLE_BRANCH] = fwf[3]
    b4p = np.full((1, OUT_PAD), NEG_BIG, np.float32); b4p[0, :NUM_ATTACKABLE_BRANCH] = cf[3][0]

    bf = jnp.bfloat16
    params = {
        'm1e': jnp.asarray(m1e, bf), 'm1o': jnp.asarray(m1o, bf), 'b1v': jnp.asarray(b1v),
        'm2a': jnp.asarray(m2a, bf), 'm2b': jnp.asarray(m2b, bf),
        'mde': jnp.asarray(mde, bf), 'mdo': jnp.asarray(mdo, bf),
        'w1br': jnp.asarray(w1br, bf), 'w1ld': jnp.asarray(w1ld, bf), 'w1el': jnp.asarray(w1el, bf),
        'c1': jnp.asarray(c1),
        'w2': jnp.asarray(fwf[1], bf), 'c2': jnp.asarray(cf[1]),
        'w3': jnp.asarray(fwf[2], bf), 'c3': jnp.asarray(cf[2]),
        'w4': jnp.asarray(w4p, bf), 'b4': jnp.asarray(b4p),
    }
    return params, raw


# ----------------------------------------------------------------------------
# Wrapper: layout plumbing + single pallas_call, batch-tiled
# ----------------------------------------------------------------------------
def adversarial_agent_forward(params, branch, load, els):
    B = branch.shape[0]
    br = jnp.pad(branch.reshape(B, BR_IN).astype(jnp.float32), ((0, 0), (0, BR_IN_PAD - BR_IN)))
    ld = jnp.pad(load.reshape(B, LD_IN).astype(jnp.float32), ((0, 0), (0, LD_IN_PAD - LD_IN)))
    el = jnp.pad(els.reshape(B, EL_IN).astype(jnp.float32), ((0, 0), (0, EL_IN_PAD - EL_IN)))

    # batch tiling: pad B up to a multiple of the tile, grid over batch tiles
    Bp = max(8, -(-B // 8) * 8)
    if Bp <= TB_MAX:
        tb = Bp
    else:
        tb = TB_MAX
        Bp = -(-B // tb) * tb
    if Bp != B:
        br = jnp.pad(br, ((0, Bp - B), (0, 0)))
        ld = jnp.pad(ld, ((0, Bp - B), (0, 0)))
        el = jnp.pad(el, ((0, Bp - B), (0, 0)))
    br = br.astype(jnp.bfloat16)
    ld = ld.astype(jnp.bfloat16)
    el = el.astype(jnp.bfloat16)

    w_order = ['m1e', 'm1o', 'b1v', 'm2a', 'm2b', 'mde', 'mdo',
               'w1br', 'w1ld', 'w1el', 'c1', 'w2', 'c2', 'w3', 'c3', 'w4', 'b4']
    weights = [params[n] for n in w_order]

    def data_spec(d):
        return pl.BlockSpec((tb, d), lambda i: (i, 0))

    def w_spec(w):
        return pl.BlockSpec(w.shape, lambda i: (0, 0))

    out = pl.pallas_call(
        fused_forward_kernel,
        out_shape=jax.ShapeDtypeStruct((Bp, OUT_PAD), jnp.float32),
        grid=(Bp // tb,),
        in_specs=[data_spec(BR_IN_PAD), data_spec(LD_IN_PAD), data_spec(EL_IN_PAD)]
                 + [w_spec(w) for w in weights],
        out_specs=pl.BlockSpec((tb, OUT_PAD), lambda i: (i, 0)),
        compiler_params=pltpu.CompilerParams(
            dimension_semantics=("parallel",),
            vmem_limit_bytes=40 * 1024 * 1024),
    )(br, ld, el, *weights)
    return out[:B, :NUM_ATTACKABLE_BRANCH]


# ----------------------------------------------------------------------------
# Plain-JAX f32 reference of the PyTorch module (for numerics validation)
# ----------------------------------------------------------------------------
def _conv1d(x, w, b, stride):
    y = lax.conv_general_dilated(x, w, window_strides=(stride,), padding=[(1, 1)],
                                 dimension_numbers=('NCH', 'OIH', 'NCH'))
    return y + b[None, :, None]


def _maxpool1d(x, k, stride):
    return lax.reduce_window(x, jnp.array(-jnp.inf, x.dtype), lax.max,
                             (1, 1, k), (1, 1, stride), 'VALID')


def reference_forward(raw, branch, load, els):
    x = branch.astype(jnp.float32)
    x = _maxpool1d(_conv1d(x, jnp.asarray(raw['w1b']), jnp.asarray(raw['b1b']), 2), 2, 2)
    x = _maxpool1d(_conv1d(x, jnp.asarray(raw['w2b']), jnp.asarray(raw['b2b']), 2), 2, 1)
    brf = x.reshape(x.shape[0], -1)
    y = load.astype(jnp.float32)
    y = _maxpool1d(_conv1d(y, jnp.asarray(raw['w1d']), jnp.asarray(raw['b1d']), 2), 2, 2)
    ldf = y.reshape(y.shape[0], -1)
    h = jnp.concatenate([brf, ldf, els.astype(jnp.float32)], axis=1)
    for li in range(3):
        h = h @ jnp.asarray(raw['fw'][li]) + jnp.asarray(raw['fb'][li])
        h = h * jnp.asarray(raw['s'][li]) + jnp.asarray(raw['t'][li])
        h = jnp.where(h > 0, h, jnp.exp(jnp.minimum(h, 0.0)) - 1.0)
    logits = h @ jnp.asarray(raw['fw'][3]) + jnp.asarray(raw['fb'][3])
    return jax.nn.softmax(logits, axis=1)


if __name__ == "__main__":
    key = jax.random.PRNGKey(0)
    k_par, k_br, k_ld, k_el = jax.random.split(key, 4)

    B = 2
    params, raw = init_params(k_par)
    branch = jax.random.normal(k_br, (B, 9, 185), dtype=jnp.float32)
    load = jax.random.normal(k_ld, (B, 2, 91), dtype=jnp.float32)
    els = jax.random.normal(k_el, (B, 73), dtype=jnp.float32)

    out = adversarial_agent_forward(params, branch, load, els)
    out = jax.block_until_ready(out)
    assert out.shape == (B, NUM_ATTACKABLE_BRANCH)
    # softmax rows sum to 1 (bf16 weights + approx reciprocal -> loose tolerance)
    assert jnp.allclose(jnp.sum(out, axis=1), 1.0, atol=5e-3)
    # validate against the plain-JAX f32 reference (bf16 matmuls -> loose tolerance)
    ref = jax.block_until_ready(reference_forward(raw, branch, load, els))
    max_err = float(jnp.max(jnp.abs(out - ref)))
    assert max_err < 5e-2, f"max |out - ref| = {max_err}"
    print("KERNEL_OK")
</pallas_src>

<mosaic_0001>
module attributes {stable_mosaic.version = 11 : i64} {
  func.func @fused_forward_kernel(%arg0: i32, %arg1: memref<8x1792xbf16, #tpu.memory_space<vmem>>, %arg2: memref<8x256xbf16, #tpu.memory_space<vmem>>, %arg3: memref<8x128xbf16, #tpu.memory_space<vmem>>, %arg4: memref<1792x768xbf16, #tpu.memory_space<vmem>>, %arg5: memref<1792x768xbf16, #tpu.memory_space<vmem>>, %arg6: memref<1x768xf32, #tpu.memory_space<vmem>>, %arg7: memref<768x256xbf16, #tpu.memory_space<vmem>>, %arg8: memref<768x256xbf16, #tpu.memory_space<vmem>>, %arg9: memref<256x128xbf16, #tpu.memory_space<vmem>>, %arg10: memref<256x128xbf16, #tpu.memory_space<vmem>>, %arg11: memref<256x512xbf16, #tpu.memory_space<vmem>>, %arg12: memref<128x512xbf16, #tpu.memory_space<vmem>>, %arg13: memref<128x512xbf16, #tpu.memory_space<vmem>>, %arg14: memref<1x512xf32, #tpu.memory_space<vmem>>, %arg15: memref<512x256xbf16, #tpu.memory_space<vmem>>, %arg16: memref<1x256xf32, #tpu.memory_space<vmem>>, %arg17: memref<256x128xbf16, #tpu.memory_space<vmem>>, %arg18: memref<1x128xf32, #tpu.memory_space<vmem>>, %arg19: memref<128x128xbf16, #tpu.memory_space<vmem>>, %arg20: memref<1x128xf32, #tpu.memory_space<vmem>>, %arg21: memref<8x128xf32, #tpu.memory_space<vmem>>) attributes {dimension_semantics = [#tpu.dimension_semantics<parallel>], iteration_bounds = array<i64: 1>, scalar_prefetch = 0 : i64, scratch_operands = 0 : i64, tpu.core_type = #tpu.core_type<tc>, window_params = [{transform_indices = @transform_0, window_bounds = array<i64: 8, 1792>}, {transform_indices = @transform_1, window_bounds = array<i64: 8, 256>}, {transform_indices = @transform_2, window_bounds = array<i64: 8, 128>}, {pipeline_mode = #tpu.pipeline_mode<synchronous>, transform_indices = @transform_3, window_bounds = array<i64: 1792, 768>}, {pipeline_mode = #tpu.pipeline_mode<synchronous>, transform_indices = @transform_4, window_bounds = array<i64: 1792, 768>}, {pipeline_mode = #tpu.pipeline_mode<synchronous>, transform_indices = @transform_5, window_bounds = array<i64: 1, 768>}, {pipeline_mode = #tpu.pipeline_mode<synchronous>, transform_indices = @transform_6, window_bounds = array<i64: 768, 256>}, {pipeline_mode = #tpu.pipeline_mode<synchronous>, transform_indices = @transform_7, window_bounds = array<i64: 768, 256>}, {pipeline_mode = #tpu.pipeline_mode<synchronous>, transform_indices = @transform_8, window_bounds = array<i64: 256, 128>}, {pipeline_mode = #tpu.pipeline_mode<synchronous>, transform_indices = @transform_9, window_bounds = array<i64: 256, 128>}, {pipeline_mode = #tpu.pipeline_mode<synchronous>, transform_indices = @transform_10, window_bounds = array<i64: 256, 512>}, {pipeline_mode = #tpu.pipeline_mode<synchronous>, transform_indices = @transform_11, window_bounds = array<i64: 128, 512>}, {pipeline_mode = #tpu.pipeline_mode<synchronous>, transform_indices = @transform_12, window_bounds = array<i64: 128, 512>}, {pipeline_mode = #tpu.pipeline_mode<synchronous>, transform_indices = @transform_13, window_bounds = array<i64: 1, 512>}, {pipeline_mode = #tpu.pipeline_mode<synchronous>, transform_indices = @transform_14, window_bounds = array<i64: 512, 256>}, {pipeline_mode = #tpu.pipeline_mode<synchronous>, transform_indices = @transform_15, window_bounds = array<i64: 1, 256>}, {pipeline_mode = #tpu.pipeline_mode<synchronous>, transform_indices = @transform_16, window_bounds = array<i64: 256, 128>}, {pipeline_mode = #tpu.pipeline_mode<synchronous>, transform_indices = @transform_17, window_bounds = array<i64: 1, 128>}, {pipeline_mode = #tpu.pipeline_mode<synchronous>, transform_indices = @transform_18, window_bounds = array<i64: 128, 128>}, {pipeline_mode = #tpu.pipeline_mode<synchronous>, transform_indices = @transform_19, window_bounds = array<i64: 1, 128>}, {transform_indices = @transform_20, window_bounds = array<i64: 8, 128>}]} {
    %c0 = arith.constant 0 : index
    %c0_0 = arith.constant 0 : index
    %0 = vector.load %arg1[%c0, %c0_0] : memref<8x1792xbf16, #tpu.memory_space<vmem>>, vector<8x1792xbf16>
    %c0_1 = arith.constant 0 : index
    %c0_2 = arith.constant 0 : index
    %1 = vector.load %arg4[%c0_1, %c0_2] : memref<1792x768xbf16, #tpu.memory_space<vmem>>, vector<1792x768xbf16>
    %cst = arith.constant dense<0.000000e+00> : vector<8x768xf32>
    %2 = tpu.matmul %0, %1, %cst {dimension_numbers = #tpu.dot_dimension_numbers<[1], [0], [0], [1], [0, 0, 1, 1], [], []>} : vector<8x1792xbf16>, vector<1792x768xbf16>, vector<8x768xf32> -> vector<8x768xf32>
    %c0_3 = arith.constant 0 : index
    %c0_4 = arith.constant 0 : index
    %3 = vector.load %arg5[%c0_3, %c0_4] : memref<1792x768xbf16, #tpu.memory_space<vmem>>, vector<1792x768xbf16>
    %cst_5 = arith.constant dense<0.000000e+00> : vector<8x768xf32>
    %4 = tpu.matmul %0, %3, %cst_5 {dimension_numbers = #tpu.dot_dimension_numbers<[1], [0], [0], [1], [0, 0, 1, 1], [], []>} : vector<8x1792xbf16>, vector<1792x768xbf16>, vector<8x768xf32> -> vector<8x768xf32>
    %5 = arith.maximumf %2, %4 : vector<8x768xf32>
    %c0_6 = arith.constant 0 : index
    %c0_7 = arith.constant 0 : index
    %6 = vector.load %arg6[%c0_6, %c0_7] : memref<1x768xf32, #tpu.memory_space<vmem>>, vector<1x768xf32>
    %7 = vector.broadcast %6 : vector<1x768xf32> to vector<8x768xf32>
    %8 = arith.addf %5, %7 : vector<8x768xf32>
    %9 = arith.truncf %8 : vector<8x768xf32> to vector<8x768xbf16>
    %c0_8 = arith.constant 0 : index
    %c0_9 = arith.constant 0 : index
    %10 = vector.load %arg7[%c0_8, %c0_9] : memref<768x256xbf16, #tpu.memory_space<vmem>>, vector<768x256xbf16>
    %cst_10 = arith.constant dense<0.000000e+00> : vector<8x256xf32>
    %11 = tpu.matmul %9, %10, %cst_10 {dimension_numbers = #tpu.dot_dimension_numbers<[1], [0], [0], [1], [0, 0, 1, 1], [], []>} : vector<8x768xbf16>, vector<768x256xbf16>, vector<8x256xf32> -> vector<8x256xf32>
    %c0_11 = arith.constant 0 : index
    %c0_12 = arith.constant 0 : index
    %12 = vector.load %arg8[%c0_11, %c0_12] : memref<768x256xbf16, #tpu.memory_space<vmem>>, vector<768x256xbf16>
    %cst_13 = arith.constant dense<0.000000e+00> : vector<8x256xf32>
    %13 = tpu.matmul %9, %12, %cst_13 {dimension_numbers = #tpu.dot_dimension_numbers<[1], [0], [0], [1], [0, 0, 1, 1], [], []>} : vector<8x768xbf16>, vector<768x256xbf16>, vector<8x256xf32> -> vector<8x256xf32>
    %14 = arith.maximumf %11, %13 : vector<8x256xf32>
    %c0_14 = arith.constant 0 : index
    %c0_15 = arith.constant 0 : index
    %15 = vector.load %arg2[%c0_14, %c0_15] : memref<8x256xbf16, #tpu.memory_space<vmem>>, vector<8x256xbf16>
    %c0_16 = arith.constant 0 : index
    %c0_17 = arith.constant 0 : index
    %16 = vector.load %arg9[%c0_16, %c0_17] : memref<256x128xbf16, #tpu.memory_space<vmem>>, vector<256x128xbf16>
    %cst_18 = arith.constant dense<0.000000e+00> : vector<8x128xf32>
    %17 = tpu.matmul %15, %16, %cst_18 {dimension_numbers = #tpu.dot_dimension_numbers<[1], [0], [0], [1], [0, 0, 1, 1], [], []>} : vector<8x256xbf16>, vector<256x128xbf16>, vector<8x128xf32> -> vector<8x128xf32>
    %c0_19 = arith.constant 0 : index
    %c0_20 = arith.constant 0 : index
    %18 = vector.load %arg10[%c0_19, %c0_20] : memref<256x128xbf16, #tpu.memory_space<vmem>>, vector<256x128xbf16>
    %cst_21 = arith.constant dense<0.000000e+00> : vector<8x128xf32>
    %19 = tpu.matmul %15, %18, %cst_21 {dimension_numbers = #tpu.dot_dimension_numbers<[1], [0], [0], [1], [0, 0, 1, 1], [], []>} : vector<8x256xbf16>, vector<256x128xbf16>, vector<8x128xf32> -> vector<8x128xf32>
    %20 = arith.maximumf %17, %19 : vector<8x128xf32>
    %21 = arith.truncf %14 : vector<8x256xf32> to vector<8x256xbf16>
    %c0_22 = arith.constant 0 : index
    %c0_23 = arith.constant 0 : index
    %22 = vector.load %arg11[%c0_22, %c0_23] : memref<256x512xbf16, #tpu.memory_space<vmem>>, vector<256x512xbf16>
    %cst_24 = arith.constant dense<0.000000e+00> : vector<8x512xf32>
    %23 = tpu.matmul %21, %22, %cst_24 {dimension_numbers = #tpu.dot_dimension_numbers<[1], [0], [0], [1], [0, 0, 1, 1], [], []>} : vector<8x256xbf16>, vector<256x512xbf16>, vector<8x512xf32> -> vector<8x512xf32>
    %24 = arith.truncf %20 : vector<8x128xf32> to vector<8x128xbf16>
    %c0_25 = arith.constant 0 : index
    %c0_26 = arith.constant 0 : index
    %25 = vector.load %arg12[%c0_25, %c0_26] : memref<128x512xbf16, #tpu.memory_space<vmem>>, vector<128x512xbf16>
    %cst_27 = arith.constant dense<0.000000e+00> : vector<8x512xf32>
    %26 = tpu.matmul %24, %25, %cst_27 {dimension_numbers = #tpu.dot_dimension_numbers<[1], [0], [0], [1], [0, 0, 1, 1], [], []>} : vector<8x128xbf16>, vector<128x512xbf16>, vector<8x512xf32> -> vector<8x512xf32>
    %27 = arith.addf %23, %26 : vector<8x512xf32>
    %c0_28 = arith.constant 0 : index
    %c0_29 = arith.constant 0 : index
    %28 = vector.load %arg3[%c0_28, %c0_29] : memref<8x128xbf16, #tpu.memory_space<vmem>>, vector<8x128xbf16>
    %c0_30 = arith.constant 0 : index
    %c0_31 = arith.constant 0 : index
    %29 = vector.load %arg13[%c0_30, %c0_31] : memref<128x512xbf16, #tpu.memory_space<vmem>>, vector<128x512xbf16>
    %cst_32 = arith.constant dense<0.000000e+00> : vector<8x512xf32>
    %30 = tpu.matmul %28, %29, %cst_32 {dimension_numbers = #tpu.dot_dimension_numbers<[1], [0], [0], [1], [0, 0, 1, 1], [], []>} : vector<8x128xbf16>, vector<128x512xbf16>, vector<8x512xf32> -> vector<8x512xf32>
    %31 = arith.addf %27, %30 : vector<8x512xf32>
    %c0_33 = arith.constant 0 : index
    %c0_34 = arith.constant 0 : index
    %32 = vector.load %arg14[%c0_33, %c0_34] : memref<1x512xf32, #tpu.memory_space<vmem>>, vector<1x512xf32>
    %33 = vector.broadcast %32 : vector<1x512xf32> to vector<8x512xf32>
    %34 = arith.addf %31, %33 : vector<8x512xf32>
    %cst_35 = arith.constant 0.000000e+00 : f32
    %35 = vector.broadcast %cst_35 : f32 to vector<8x512xf32>
    %36 = arith.cmpf ogt, %34, %35 : vector<8x512xf32>
    %cst_36 = arith.constant 0.000000e+00 : f32
    %37 = vector.broadcast %cst_36 : f32 to vector<8x512xf32>
    %38 = arith.minimumf %34, %37 : vector<8x512xf32>
    %39 = math.exp %38 : vector<8x512xf32>
    %cst_37 = arith.constant 1.000000e+00 : f32
    %40 = vector.broadcast %cst_37 : f32 to vector<8x512xf32>
    %41 = arith.subf %39, %40 : vector<8x512xf32>
    %42 = arith.select %36, %34, %41 : vector<8x512xi1>, vector<8x512xf32>
    %43 = arith.truncf %42 : vector<8x512xf32> to vector<8x512xbf16>
    %c0_38 = arith.constant 0 : index
    %c0_39 = arith.constant 0 : index
    %44 = vector.load %arg15[%c0_38, %c0_39] : memref<512x256xbf16, #tpu.memory_space<vmem>>, vector<512x256xbf16>
    %cst_40 = arith.constant dense<0.000000e+00> : vector<8x256xf32>
    %45 = tpu.matmul %43, %44, %cst_40 {dimension_numbers = #tpu.dot_dimension_numbers<[1], [0], [0], [1], [0, 0, 1, 1], [], []>} : vector<8x512xbf16>, vector<512x256xbf16>, vector<8x256xf32> -> vector<8x256xf32>
    %c0_41 = arith.constant 0 : index
    %c0_42 = arith.constant 0 : index
    %46 = vector.load %arg16[%c0_41, %c0_42] : memref<1x256xf32, #tpu.memory_space<vmem>>, vector<1x256xf32>
    %47 = vector.broadcast %46 : vector<1x256xf32> to vector<8x256xf32>
    %48 = arith.addf %45, %47 : vector<8x256xf32>
    %cst_43 = arith.constant 0.000000e+00 : f32
    %49 = vector.broadcast %cst_43 : f32 to vector<8x256xf32>
    %50 = arith.cmpf ogt, %48, %49 : vector<8x256xf32>
    %cst_44 = arith.constant 0.000000e+00 : f32
    %51 = vector.broadcast %cst_44 : f32 to vector<8x256xf32>
    %52 = arith.minimumf %48, %51 : vector<8x256xf32>
    %53 = math.exp %52 : vector<8x256xf32>
    %cst_45 = arith.constant 1.000000e+00 : f32
    %54 = vector.broadcast %cst_45 : f32 to vector<8x256xf32>
    %55 = arith.subf %53, %54 : vector<8x256xf32>
    %56 = arith.select %50, %48, %55 : vector<8x256xi1>, vector<8x256xf32>
    %57 = arith.truncf %56 : vector<8x256xf32> to vector<8x256xbf16>
    %c0_46 = arith.constant 0 : index
    %c0_47 = arith.constant 0 : index
    %58 = vector.load %arg17[%c0_46, %c0_47] : memref<256x128xbf16, #tpu.memory_space<vmem>>, vector<256x128xbf16>
    %cst_48 = arith.constant dense<0.000000e+00> : vector<8x128xf32>
    %59 = tpu.matmul %57, %58, %cst_48 {dimension_numbers = #tpu.dot_dimension_numbers<[1], [0], [0], [1], [0, 0, 1, 1], [], []>} : vector<8x256xbf16>, vector<256x128xbf16>, vector<8x128xf32> -> vector<8x128xf32>
    %c0_49 = arith.constant 0 : index
    %c0_50 = arith.constant 0 : index
    %60 = vector.load %arg18[%c0_49, %c0_50] : memref<1x128xf32, #tpu.memory_space<vmem>>, vector<1x128xf32>
    %61 = vector.broadcast %60 : vector<1x128xf32> to vector<8x128xf32>
    %62 = arith.addf %59, %61 : vector<8x128xf32>
    %cst_51 = arith.constant 0.000000e+00 : f32
    %63 = vector.broadcast %cst_51 : f32 to vector<8x128xf32>
    %64 = arith.cmpf ogt, %62, %63 : vector<8x128xf32>
    %cst_52 = arith.constant 0.000000e+00 : f32
    %65 = vector.broadcast %cst_52 : f32 to vector<8x128xf32>
    %66 = arith.minimumf %62, %65 : vector<8x128xf32>
    %67 = math.exp %66 : vector<8x128xf32>
    %cst_53 = arith.constant 1.000000e+00 : f32
    %68 = vector.broadcast %cst_53 : f32 to vector<8x128xf32>
    %69 = arith.subf %67, %68 : vector<8x128xf32>
    %70 = arith.select %64, %62, %69 : vector<8x128xi1>, vector<8x128xf32>
    %71 = arith.truncf %70 : vector<8x128xf32> to vector<8x128xbf16>
    %c0_54 = arith.constant 0 : index
    %c0_55 = arith.constant 0 : index
    %72 = vector.load %arg19[%c0_54, %c0_55] : memref<128x128xbf16, #tpu.memory_space<vmem>>, vector<128x128xbf16>
    %cst_56 = arith.constant dense<0.000000e+00> : vector<8x128xf32>
    %73 = tpu.matmul %71, %72, %cst_56 {dimension_numbers = #tpu.dot_dimension_numbers<[1], [0], [0], [1], [0, 0, 1, 1], [], []>} : vector<8x128xbf16>, vector<128x128xbf16>, vector<8x128xf32> -> vector<8x128xf32>
    %c0_57 = arith.constant 0 : index
    %c0_58 = arith.constant 0 : index
    %74 = vector.load %arg20[%c0_57, %c0_58] : memref<1x128xf32, #tpu.memory_space<vmem>>, vector<1x128xf32>
    %75 = vector.broadcast %74 : vector<1x128xf32> to vector<8x128xf32>
    %76 = arith.addf %73, %75 : vector<8x128xf32>
    %cst_59 = arith.constant dense<0xFF800000> : vector<8xf32>
    %77 = vector.multi_reduction <maximumf>, %76, %cst_59 [1] : vector<8x128xf32> to vector<8xf32>
    %78 = vector.shape_cast %77 : vector<8xf32> to vector<8x1xf32>
    %79 = vector.broadcast %78 : vector<8x1xf32> to vector<8x128xf32>
    %80 = arith.subf %76, %79 : vector<8x128xf32>
    %81 = math.exp %80 : vector<8x128xf32>
    %cst_60 = arith.constant dense<0.000000e+00> : vector<8xf32>
    %82 = vector.multi_reduction <add>, %81, %cst_60 [1] : vector<8x128xf32> to vector<8xf32>
    %83 = vector.shape_cast %82 : vector<8xf32> to vector<8x1xf32>
    %84 = tpu.reciprocal %83 {approx = true} : vector<8x1xf32> -> vector<8x1xf32>
    %85 = vector.broadcast %84 : vector<8x1xf32> to vector<8x128xf32>
    %86 = arith.mulf %81, %85 : vector<8x128xf32>
    %c0_61 = arith.constant 0 : index
    %c0_62 = arith.constant 0 : index
    %87 = vector.load %arg21[%c0_61, %c0_62] : memref<8x128xf32, #tpu.memory_space<vmem>>, vector<8x128xf32>
    tpu.vector_store %arg21[%c0_61, %c0_62], %86 {strides = array<i32>} : memref<8x128xf32, #tpu.memory_space<vmem>>, vector<8x128xf32>,
    return
  }
  func.func @transform_0(%arg0: i32) -> (i32, i32) {
    %c0_i32 = arith.constant 0 : i32
    %c0_i32_0 = arith.constant 0 : i32
    return %arg0, %c0_i32 : i32, i32
  }
  func.func @transform_1(%arg0: i32) -> (i32, i32) {
    %c0_i32 = arith.constant 0 : i32
    %c0_i32_0 = arith.constant 0 : i32
    return %arg0, %c0_i32 : i32, i32
  }
  func.func @transform_2(%arg0: i32) -> (i32, i32) {
    %c0_i32 = arith.constant 0 : i32
    %c0_i32_0 = arith.constant 0 : i32
    return %arg0, %c0_i32 : i32, i32
  }
  func.func @transform_3(%arg0: i32) -> (i32, i32) {
    %c0_i32 = arith.constant 0 : i32
    %c0_i32_0 = arith.constant 0 : i32
    %c0_i32_1 = arith.constant 0 : i32
    return %c0_i32, %c0_i32_0 : i32, i32
  }
  func.func @transform_4(%arg0: i32) -> (i32, i32) {
    %c0_i32 = arith.constant 0 : i32
    %c0_i32_0 = arith.constant 0 : i32
    %c0_i32_1 = arith.constant 0 : i32
    return %c0_i32, %c0_i32_0 : i32, i32
  }
  func.func @transform_5(%arg0: i32) -> (i32, i32) {
    %c0_i32 = arith.constant 0 : i32
    %c0_i32_0 = arith.constant 0 : i32
    %c0_i32_1 = arith.constant 0 : i32
    return %c0_i32, %c0_i32_0 : i32, i32
  }
  func.func @transform_6(%arg0: i32) -> (i32, i32) {
    %c0_i32 = arith.constant 0 : i32
    %c0_i32_0 = arith.constant 0 : i32
    %c0_i32_1 = arith.constant 0 : i32
    return %c0_i32, %c0_i32_0 : i32, i32
  }
  func.func @transform_7(%arg0: i32) -> (i32, i32) {
    %c0_i32 = arith.constant 0 : i32
    %c0_i32_0 = arith.constant 0 : i32
    %c0_i32_1 = arith.constant 0 : i32
    return %c0_i32, %c0_i32_0 : i32, i32
  }
  func.func @transform_8(%arg0: i32) -> (i32, i32) {
    %c0_i32 = arith.constant 0 : i32
    %c0_i32_0 = arith.constant 0 : i32
    %c0_i32_1 = arith.constant 0 : i32
    return %c0_i32, %c0_i32_0 : i32, i32
  }
  func.func @transform_9(%arg0: i32) -> (i32, i32) {
    %c0_i32 = arith.constant 0 : i32
    %c0_i32_0 = arith.constant 0 : i32
    %c0_i32_1 = arith.constant 0 : i32
    return %c0_i32, %c0_i32_0 : i32, i32
  }
  func.func @transform_10(%arg0: i32) -> (i32, i32) {
    %c0_i32 = arith.constant 0 : i32
    %c0_i32_0 = arith.constant 0 : i32
    %c0_i32_1 = arith.constant 0 : i32
    return %c0_i32, %c0_i32_0 : i32, i32
  }
  func.func @transform_11(%arg0: i32) -> (i32, i32) {
    %c0_i32 = arith.constant 0 : i32
    %c0_i32_0 = arith.constant 0 : i32
    %c0_i32_1 = arith.constant 0 : i32
    return %c0_i32, %c0_i32_0 : i32, i32
  }
  func.func @transform_12(%arg0: i32) -> (i32, i32) {
    %c0_i32 = arith.constant 0 : i32
    %c0_i32_0 = arith.constant 0 : i32
    %c0_i32_1 = arith.constant 0 : i32
    return %c0_i32, %c0_i32_0 : i32, i32
  }
  func.func @transform_13(%arg0: i32) -> (i32, i32) {
    %c0_i32 = arith.constant 0 : i32
    %c0_i32_0 = arith.constant 0 : i32
    %c0_i32_1 = arith.constant 0 : i32
    return %c0_i32, %c0_i32_0 : i32, i32
  }
  func.func @transform_14(%arg0: i32) -> (i32, i32) {
    %c0_i32 = arith.constant 0 : i32
    %c0_i32_0 = arith.constant 0 : i32
    %c0_i32_1 = arith.constant 0 : i32
    return %c0_i32, %c0_i32_0 : i32, i32
  }
  func.func @transform_15(%arg0: i32) -> (i32, i32) {
    %c0_i32 = arith.constant 0 : i32
    %c0_i32_0 = arith.constant 0 : i32
    %c0_i32_1 = arith.constant 0 : i32
    return %c0_i32, %c0_i32_0 : i32, i32
  }
  func.func @transform_16(%arg0: i32) -> (i32, i32) {
    %c0_i32 = arith.constant 0 : i32
    %c0_i32_0 = arith.constant 0 : i32
    %c0_i32_1 = arith.constant 0 : i32
    return %c0_i32, %c0_i32_0 : i32, i32
  }
  func.func @transform_17(%arg0: i32) -> (i32, i32) {
    %c0_i32 = arith.constant 0 : i32
    %c0_i32_0 = arith.constant 0 : i32
    %c0_i32_1 = arith.constant 0 : i32
    return %c0_i32, %c0_i32_0 : i32, i32
  }
  func.func @transform_18(%arg0: i32) -> (i32, i32) {
    %c0_i32 = arith.constant 0 : i32
    %c0_i32_0 = arith.constant 0 : i32
    %c0_i32_1 = arith.constant 0 : i32
    return %c0_i32, %c0_i32_0 : i32, i32
  }
  func.func @transform_19(%arg0: i32) -> (i32, i32) {
    %c0_i32 = arith.constant 0 : i32
    %c0_i32_0 = arith.constant 0 : i32
    %c0_i32_1 = arith.constant 0 : i32
    return %c0_i32, %c0_i32_0 : i32, i32
  }
  func.func @transform_20(%arg0: i32) -> (i32, i32) {
    %c0_i32 = arith.constant 0 : i32
    %c0_i32_0 = arith.constant 0 : i32
    return %arg0, %c0_i32 : i32, i32
  }
}

</mosaic_0001>

<llo_original>
// kernel: tpu_custom_call.1
$region0: #{tpu_custom_call.1}
  #allocation0 [shape = 'u32[]', space=smem, size = 0x4, offset = 0x4, fixed_abs, tag = 'smem constant byte address 0x4 - core index']
  #allocation1 [shape = 'u32[144,128]{1,0:T(1,128)}', space=vmem, size = 0x12000, scoped, tag = 'internal scratch']
  %s0 = inlined_call_operand.hbm [shape: bf16[8,1792], index: 0, kind: input, shape index: {}]
  %s1 = inlined_call_operand.hbm [shape: bf16[8,256], index: 1, kind: input, shape index: {}]
  %s2 = inlined_call_operand.hbm [shape: bf16[8,128], index: 2, kind: input, shape index: {}]
  %s3 = inlined_call_operand.hbm [shape: bf16[1792,768], index: 3, kind: input, shape index: {}]
  %s4 = inlined_call_operand.hbm [shape: bf16[1792,768], index: 4, kind: input, shape index: {}]
  %s5 = inlined_call_operand.hbm [shape: f32[1,768], index: 5, kind: input, shape index: {}]
  %s6 = inlined_call_operand.hbm [shape: bf16[768,256], index: 6, kind: input, shape index: {}]
  %s7 = inlined_call_operand.hbm [shape: bf16[768,256], index: 7, kind: input, shape index: {}]
  %s8 = inlined_call_operand.hbm [shape: bf16[256,128], index: 8, kind: input, shape index: {}]
  %s9 = inlined_call_operand.hbm [shape: bf16[256,128], index: 9, kind: input, shape index: {}]
  %s10 = inlined_call_operand.hbm [shape: bf16[256,512], index: 10, kind: input, shape index: {}]
  %s11 = inlined_call_operand.hbm [shape: bf16[128,512], index: 11, kind: input, shape index: {}]
  %s12 = inlined_call_operand.hbm [shape: bf16[128,512], index: 12, kind: input, shape index: {}]
  %s13 = inlined_call_operand.hbm [shape: f32[1,512], index: 13, kind: input, shape index: {}]
  %s14 = inlined_call_operand.hbm [shape: bf16[512,256], index: 14, kind: input, shape index: {}]
  %s15 = inlined_call_operand.hbm [shape: f32[1,256], index: 15, kind: input, shape index: {}]
  %s16 = inlined_call_operand.hbm [shape: bf16[256,128], index: 16, kind: input, shape index: {}]
  %s17 = inlined_call_operand.hbm [shape: f32[1,128], index: 17, kind: input, shape index: {}]
  %s18 = inlined_call_operand.hbm [shape: bf16[128,128], index: 18, kind: input, shape index: {}]
  %s19 = inlined_call_operand.hbm [shape: f32[1,128], index: 19, kind: input, shape index: {}]
  %s20 = inlined_call_operand.hbm [shape: f32[8,128], index: 20, kind: output, shape index: {}]
  %s21 = sld [smem:[#allocation0]]
  $region170: #{tpu_custom_call.1} parent=0
    _
  %s23 = ssub.s32 1, %s21
  %s24 = scalar_select 0, %s23, %s21
  $region1: #{tpu_custom_call.1} parent=0
    #allocation2 [shape = 'u8[28672]{0}', space=vmem, size = 0x7000, scoped, tag = 'input window, operand 0, single buffered']
    #allocation3 [shape = 's32[1]{0}', space=sflag, size = 0x4, scoped, tag = 'scoped memory for tpu_custom_call.1']
    #allocation4 [shape = 's32[1]{0}', space=sflag, size = 0x4, scoped, tag = 'scoped memory for tpu_custom_call.1']
    #allocation5 [shape = 'u8[4096]{0}', space=vmem, size = 0x1000, scoped, tag = 'input window, operand 1, single buffered']
    #allocation6 [shape = 's32[1]{0}', space=sflag, size = 0x4, scoped, tag = 'scoped memory for tpu_custom_call.1']
    #allocation7 [shape = 'u8[2048]{0}', space=vmem, size = 0x800, scoped, tag = 'input window, operand 2, single buffered']
    #allocation8 [shape = 'u8[2752512]{0}', space=vmem, size = 0x2a0000, scoped, tag = 'input window, operand 3, single buffered']
    #allocation9 [shape = 's32[1]{0}', space=sflag, size = 0x4, scoped, tag = 'scoped memory for tpu_custom_call.1']
    #allocation10 [shape = 'u8[2752512]{0}', space=vmem, size = 0x2a0000, scoped, tag = 'input window, operand 4, single buffered']
    #allocation11 [shape = 'u8[3072]{0}', space=vmem, size = 0xc00, scoped, tag = 'input window, operand 5, single buffered']
    #allocation12 [shape = 's32[1]{0}', space=sflag, size = 0x4, scoped, tag = 'scoped memory for tpu_custom_call.1']
    #allocation13 [shape = 'u8[393216]{0}', space=vmem, size = 0x60000, scoped, tag = 'input window, operand 6, single buffered']
    #allocation14 [shape = 'u8[393216]{0}', space=vmem, size = 0x60000, scoped, tag = 'input window, operand 7, single buffered']
    #allocation15 [shape = 's32[1]{0}', space=sflag, size = 0x4, scoped, tag = 'scoped memory for tpu_custom_call.1']
    #allocation16 [shape = 'u8[65536]{0}', space=vmem, size = 0x10000, scoped, tag = 'input window, operand 8, single buffered']
    #allocation17 [shape = 'u8[65536]{0}', space=vmem, size = 0x10000, scoped, tag = 'input window, operand 9, single buffered']
    #allocation18 [shape = 's32[1]{0}', space=sflag, size = 0x4, scoped, tag = 'scoped memory for tpu_custom_call.1']
    #allocation19 [shape = 'u8[262144]{0}', space=vmem, size = 0x40000, scoped, tag = 'input window, operand 10, single buffered']
    #allocation20 [shape = 'u8[131072]{0}', space=vmem, size = 0x20000, scoped, tag = 'input window, operand 11, single buffered']
    #allocation21 [shape = 's32[1]{0}', space=sflag, size = 0x4, scoped, tag = 'scoped memory for tpu_custom_call.1']
    #allocation22 [shape = 'u8[131072]{0}', space=vmem, size = 0x20000, scoped, tag = 'input window, operand 12, single buffered']
    #allocation23 [shape = 'u8[2048]{0}', space=vmem, size = 0x800, scoped, tag = 'input window, operand 13, single buffered']
    #allocation24 [shape = 's32[1]{0}', space=sflag, size = 0x4, scoped, tag = 'scoped memory for tpu_custom_call.1']
    #allocation25 [shape = 'u8[262144]{0}', space=vmem, size = 0x40000, scoped, tag = 'input window, operand 14, single buffered']
    #allocation26 [shape = 'u8[1024]{0}', space=vmem, size = 0x400, scoped, tag = 'input window, operand 15, single buffered']
    #allocation27 [shape = 's32[1]{0}', space=sflag, size = 0x4, scoped, tag = 'scoped memory for tpu_custom_call.1']
    #allocation28 [shape = 'u8[65536]{0}', space=vmem, size = 0x10000, scoped, tag = 'input window, operand 16, single buffered']
    #allocation29 [shape = 'u8[512]{0}', space=vmem, size = 0x400, scoped, tag = 'input window, operand 17, single buffered']
    #allocation30 [shape = 's32[1]{0}', space=sflag, size = 0x4, scoped, tag = 'scoped memory for tpu_custom_call.1']
    #allocation31 [shape = 'u8[32768]{0}', space=vmem, size = 0x8000, scoped, tag = 'input window, operand 18, single buffered']
    #allocation32 [shape = 'u8[512]{0}', space=vmem, size = 0x400, scoped, tag = 'input window, operand 19, single buffered']
    #allocation33 [shape = 's32[1]{0}', space=sflag, size = 0x4, scoped, tag = 'scoped memory for tpu_custom_call.1']
    #allocation34 [shape = 'u8[4096]{0}', space=vmem, size = 0x1000, scoped, tag = 'output window, operand 0, single buffered']
    %25 = vsyncpa [#allocation3], 0
    %26 = vsyncpa [#allocation6], 0
    %27 = vsyncpa [#allocation9], 0
    %28 = vsyncpa [#allocation12], 0
    %29 = vsyncpa [#allocation15], 0
    %30 = vsyncpa [#allocation18], 0
    %31 = vsyncpa [#allocation21], 0
    %32 = vsyncpa [#allocation24], 0
    %33 = vsyncpa [#allocation27], 0
    %34 = vsyncpa [#allocation30], 0
    %35 = vsyncpa [#allocation33], 0
    %36 = vsyncpa [#allocation4], 0
    // Predicated region
    $region2: #{tpu_custom_call.1} parent=1 // pred_check
      _
    $region3: #{tpu_custom_call.1} parent=1 // pred_check_branch
      %38 = sbr.rel (0) target = $region5
    $region4: #{tpu_custom_call.1} parent=1 // pred_region
      %s40 = ssub.s32 896, 896
      %41 = vsyncadd [#allocation3], %s40
      %s43 = sshll.u32 [#allocation2], 4
      %s44 = int_to_ptr.vmem [resolvable:$true] %s43
      %46 = dma.hbm_to_vmem [thread:$0]  %s0, 896, %s44, [#allocation3]
    $region5: #{tpu_custom_call.1} parent=1 // pred_fallthru
      _
    // Predicated region
    $region6: #{tpu_custom_call.1} parent=1 // pred_check
      _
    $region7: #{tpu_custom_call.1} parent=1 // pred_check_branch
      %48 = sbr.rel (0) target = $region9
    $region8: #{tpu_custom_call.1} parent=1 // pred_region
      %s50 = ssub.s32 128, 128
      %51 = vsyncadd [#allocation6], %s50
      %s53 = sshll.u32 [#allocation5], 4
      %s54 = int_to_ptr.vmem [resolvable:$true] %s53
      %56 = dma.hbm_to_vmem [thread:$0]  %s1, 128, %s54, [#allocation6]
    $region9: #{tpu_custom_call.1} parent=1 // pred_fallthru
      _
    // Predicated region
    $region10: #{tpu_custom_call.1} parent=1 // pred_check
      _
    $region11: #{tpu_custom_call.1} parent=1 // pred_check_branch
      %58 = sbr.rel (0) target = $region13
    $region12: #{tpu_custom_call.1} parent=1 // pred_region
      %s60 = ssub.s32 64, 64
      %61 = vsyncadd [#allocation6], %s60
      %s63 = sshll.u32 [#allocation7], 4
      %s64 = int_to_ptr.vmem [resolvable:$true] %s63
      %66 = dma.hbm_to_vmem [thread:$0]  %s2, 64, %s64, [#allocation6]
    $region13: #{tpu_custom_call.1} parent=1 // pred_fallthru
      _
    // Predicated region
    $region14: #{tpu_custom_call.1} parent=1 // pred_check
      _
    $region15: #{tpu_custom_call.1} parent=1 // pred_check_branch
      %68 = sbr.rel (0) target = $region17
    $region16: #{tpu_custom_call.1} parent=1 // pred_region
      %s70 = ssub.s32 86016, 86016
      %71 = vsyncadd [#allocation9], %s70
      %s72 = sshll.u32 [#allocation8], 4
      %s73 = int_to_ptr.vmem [resolvable:$true] %s72
      %78 = dma.hbm_to_vmem [thread:$0]  %s3, 86016, %s73, [#allocation9], 384, 384, 24
    $region17: #{tpu_custom_call.1} parent=1 // pred_fallthru
      _
    // Predicated region
    $region18: #{tpu_custom_call.1} parent=1 // pred_check
      _
    $region19: #{tpu_custom_call.1} parent=1 // pred_check_branch
      %80 = sbr.rel (0) target = $region21
    $region20: #{tpu_custom_call.1} parent=1 // pred_region
      %s82 = ssub.s32 86016, 86016
      %83 = vsyncadd [#allocation9], %s82
      %s84 = sshll.u32 [#allocation10], 4
      %s85 = int_to_ptr.vmem [resolvable:$true] %s84
      %90 = dma.hbm_to_vmem [thread:$0]  %s4, 86016, %s85, [#allocation9], 384, 384, 24
    $region21: #{tpu_custom_call.1} parent=1 // pred_fallthru
      _
    // Predicated region
    $region22: #{tpu_custom_call.1} parent=1 // pred_check
      _
    $region23: #{tpu_custom_call.1} parent=1 // pred_check_branch
      %92 = sbr.rel (0) target = $region25
    $region24: #{tpu_custom_call.1} parent=1 // pred_region
      %s94 = ssub.s32 96, 96
      %95 = vsyncadd [#allocation12], %s94
      %s97 = sshll.u32 [#allocation11], 4
      %s98 = int_to_ptr.vmem [resolvable:$true] %s97
      %100 = dma.hbm_to_vmem [thread:$0]  %s5, 96, %s98, [#allocation12]
    $region25: #{tpu_custom_call.1} parent=1 // pred_fallthru
      _
    // Predicated region
    $region26: #{tpu_custom_call.1} parent=1 // pred_check
      _
    $region27: #{tpu_custom_call.1} parent=1 // pred_check_branch
      %102 = sbr.rel (0) target = $region29
    $region28: #{tpu_custom_call.1} parent=1 // pred_region
      %s104 = ssub.s32 12288, 12288
      %105 = vsyncadd [#allocation12], %s104
      %s106 = sshll.u32 [#allocation13], 4
      %s107 = int_to_ptr.vmem [resolvable:$true] %s106
      %112 = dma.hbm_to_vmem [thread:$0]  %s6, 12288, %s107, [#allocation12], 128, 128, 8
    $region29: #{tpu_custom_call.1} parent=1 // pred_fallthru
      _
    // Predicated region
    $region30: #{tpu_custom_call.1} parent=1 // pred_check
      _
    $region31: #{tpu_custom_call.1} parent=1 // pred_check_branch
      %114 = sbr.rel (0) target = $region33
    $region32: #{tpu_custom_call.1} parent=1 // pred_region
      %s116 = ssub.s32 12288, 12288
      %117 = vsyncadd [#allocation15], %s116
      %s118 = sshll.u32 [#allocation14], 4
      %s119 = int_to_ptr.vmem [resolvable:$true] %s118
      %124 = dma.hbm_to_vmem [thread:$0]  %s7, 12288, %s119, [#allocation15], 128, 128, 8
    $region33: #{tpu_custom_call.1} parent=1 // pred_fallthru
      _
    // Predicated region
    $region34: #{tpu_custom_call.1} parent=1 // pred_check
      _
    $region35: #{tpu_custom_call.1} parent=1 // pred_check_branch
      %126 = sbr.rel (0) target = $region37
    $region36: #{tpu_custom_call.1} parent=1 // pred_region
      %s128 = ssub.s32 2048, 2048
      %129 = vsyncadd [#allocation15], %s128
      %s130 = sshll.u32 [#allocation16], 4
      %s131 = int_to_ptr.vmem [resolvable:$true] %s130
      %136 = dma.hbm_to_vmem [thread:$0]  %s8, 2048, %s131, [#allocation15], 64, 64, 4
    $region37: #{tpu_custom_call.1} parent=1 // pred_fallthru
      _
    // Predicated region
    $region38: #{tpu_custom_call.1} parent=1 // pred_check
      _
    $region39: #{tpu_custom_call.1} parent=1 // pred_check_branch
      %138 = sbr.rel (0) target = $region41
    $region40: #{tpu_custom_call.1} parent=1 // pred_region
      %s140 = ssub.s32 2048, 2048
      %141 = vsyncadd [#allocation18], %s140
      %s142 = sshll.u32 [#allocation17], 4
      %s143 = int_to_ptr.vmem [resolvable:$true] %s142
      %148 = dma.hbm_to_vmem [thread:$0]  %s9, 2048, %s143, [#allocation18], 64, 64, 4
    $region41: #{tpu_custom_call.1} parent=1 // pred_fallthru
      _
    // Predicated region
    $region42: #{tpu_custom_call.1} parent=1 // pred_check
      _
    $region43: #{tpu_custom_call.1} parent=1 // pred_check_branch
      %150 = sbr.rel (0) target = $region45
    $region44: #{tpu_custom_call.1} parent=1 // pred_region
      %s152 = ssub.s32 8192, 8192
      %153 = vsyncadd [#allocation18], %s152
      %s154 = sshll.u32 [#allocation19], 4
      %s155 = int_to_ptr.vmem [resolvable:$true] %s154
      %160 = dma.hbm_to_vmem [thread:$0]  %s10, 8192, %s155, [#allocation18], 256, 256, 16
    $region45: #{tpu_custom_call.1} parent=1 // pred_fallthru
      _
    // Predicated region
    $region46: #{tpu_custom_call.1} parent=1 // pred_check
      _
    $region47: #{tpu_custom_call.1} parent=1 // pred_check_branch
      %162 = sbr.rel (0) target = $region49
    $region48: #{tpu_custom_call.1} parent=1 // pred_region
      %s164 = ssub.s32 4096, 4096
      %165 = vsyncadd [#allocation21], %s164
      %s166 = sshll.u32 [#allocation20], 4
      %s167 = int_to_ptr.vmem [resolvable:$true] %s166
      %172 = dma.hbm_to_vmem [thread:$0]  %s11, 4096, %s167, [#allocation21], 256, 256, 16
    $region49: #{tpu_custom_call.1} parent=1 // pred_fallthru
      _
    // Predicated region
    $region50: #{tpu_custom_call.1} parent=1 // pred_check
      _
    $region51: #{tpu_custom_call.1} parent=1 // pred_check_branch
      %174 = sbr.rel (0) target = $region53
    $region52: #{tpu_custom_call.1} parent=1 // pred_region
      %s176 = ssub.s32 4096, 4096
      %177 = vsyncadd [#allocation21], %s176
      %s178 = sshll.u32 [#allocation22], 4
      %s179 = int_to_ptr.vmem [resolvable:$true] %s178
      %184 = dma.hbm_to_vmem [thread:$0]  %s12, 4096, %s179, [#allocation21], 256, 256, 16
    $region53: #{tpu_custom_call.1} parent=1 // pred_fallthru
      _
    // Predicated region
    $region54: #{tpu_custom_call.1} parent=1 // pred_check
      _
    $region55: #{tpu_custom_call.1} parent=1 // pred_check_branch
      %186 = sbr.rel (0) target = $region57
    $region56: #{tpu_custom_call.1} parent=1 // pred_region
      %s188 = ssub.s32 64, 64
      %189 = vsyncadd [#allocation24], %s188
      %s191 = sshll.u32 [#allocation23], 4
      %s192 = int_to_ptr.vmem [resolvable:$true] %s191
      %194 = dma.hbm_to_vmem [thread:$0]  %s13, 64, %s192, [#allocation24]
    $region57: #{tpu_custom_call.1} parent=1 // pred_fallthru
      _
    // Predicated region
    $region58: #{tpu_custom_call.1} parent=1 // pred_check
      _
    $region59: #{tpu_custom_call.1} parent=1 // pred_check_branch
      %196 = sbr.rel (0) target = $region61
    $region60: #{tpu_custom_call.1} parent=1 // pred_region
      %s198 = ssub.s32 8192, 8192
      %199 = vsyncadd [#allocation24], %s198
      %s200 = sshll.u32 [#allocation25], 4
      %s201 = int_to_ptr.vmem [resolvable:$true] %s200
      %206 = dma.hbm_to_vmem [thread:$0]  %s14, 8192, %s201, [#allocation24], 128, 128, 8
    $region61: #{tpu_custom_call.1} parent=1 // pred_fallthru
      _
    // Predicated region
    $region62: #{tpu_custom_call.1} parent=1 // pred_check
      _
    $region63: #{tpu_custom_call.1} parent=1 // pred_check_branch
      %208 = sbr.rel (0) target = $region65
    $region64: #{tpu_custom_call.1} parent=1 // pred_region
      %s210 = ssub.s32 32, 32
      %211 = vsyncadd [#allocation27], %s210
      %s213 = sshll.u32 [#allocation26], 4
      %s214 = int_to_ptr.vmem [resolvable:$true] %s213
      %216 = dma.hbm_to_vmem [thread:$0]  %s15, 32, %s214, [#allocation27]
    $region65: #{tpu_custom_call.1} parent=1 // pred_fallthru
      _
    // Predicated region
    $region66: #{tpu_custom_call.1} parent=1 // pred_check
      _
    $region67: #{tpu_custom_call.1} parent=1 // pred_check_branch
      %218 = sbr.rel (0) target = $region69
    $region68: #{tpu_custom_call.1} parent=1 // pred_region
      %s220 = ssub.s32 2048, 2048
      %221 = vsyncadd [#allocation27], %s220
      %s222 = sshll.u32 [#allocation28], 4
      %s223 = int_to_ptr.vmem [resolvable:$true] %s222
      %228 = dma.hbm_to_vmem [thread:$0]  %s16, 2048, %s223, [#allocation27], 64, 64, 4
    $region69: #{tpu_custom_call.1} parent=1 // pred_fallthru
      _
    // Predicated region
    $region70: #{tpu_custom_call.1} parent=1 // pred_check
      _
    $region71: #{tpu_custom_call.1} parent=1 // pred_check_branch
      %230 = sbr.rel (0) target = $region73
    $region72: #{tpu_custom_call.1} parent=1 // pred_region
      %s232 = ssub.s32 16, 16
      %233 = vsyncadd [#allocation30], %s232
      %s235 = sshll.u32 [#allocation29], 4
      %s236 = int_to_ptr.vmem [resolvable:$true] %s235
      %238 = dma.hbm_to_vmem [thread:$0]  %s17, 16, %s236, [#allocation30]
    $region73: #{tpu_custom_call.1} parent=1 // pred_fallthru
      _
    // Predicated region
    $region74: #{tpu_custom_call.1} parent=1 // pred_check
      _
    $region75: #{tpu_custom_call.1} parent=1 // pred_check_branch
      %240 = sbr.rel (0) target = $region77
    $region76: #{tpu_custom_call.1} parent=1 // pred_region
      %s242 = ssub.s32 1024, 1024
      %243 = vsyncadd [#allocation30], %s242
      %s244 = sshll.u32 [#allocation31], 4
      %s245 = int_to_ptr.vmem [resolvable:$true] %s244
      %250 = dma.hbm_to_vmem [thread:$0]  %s18, 1024, %s245, [#allocation30], 64, 64, 4
    $region77: #{tpu_custom_call.1} parent=1 // pred_fallthru
      _
    // Predicated region
    $region78: #{tpu_custom_call.1} parent=1 // pred_check
      _
    $region79: #{tpu_custom_call.1} parent=1 // pred_check_branch
      %252 = sbr.rel (0) target = $region81
    $region80: #{tpu_custom_call.1} parent=1 // pred_region
      %s254 = ssub.s32 16, 16
      %255 = vsyncadd [#allocation33], %s254
      %s257 = sshll.u32 [#allocation32], 4
      %s258 = int_to_ptr.vmem [resolvable:$true] %s257
      %260 = dma.hbm_to_vmem [thread:$0]  %s19, 16, %s258, [#allocation33]
    $region81: #{tpu_custom_call.1} parent=1 // pred_fallthru
      _
    // Predicated region
    $region82: #{tpu_custom_call.1} parent=1 // pred_check
      _
    $region83: #{tpu_custom_call.1} parent=1 // pred_check_branch
      %262 = sbr.rel (0) target = $region85
    $region84: #{tpu_custom_call.1} parent=1 // pred_region
      %263 = dma.done [#allocation3], 896
    $region85: #{tpu_custom_call.1} parent=1 // pred_fallthru
      _
    // Predicated region
    $region86: #{tpu_custom_call.1} parent=1 // pred_check
      _
    $region87: #{tpu_custom_call.1} parent=1 // pred_check_branch
      %265 = sbr.rel (0) target = $region89
    $region88: #{tpu_custom_call.1} parent=1 // pred_region
      %266 = dma.done [#allocation6], 128
    $region89: #{tpu_custom_call.1} parent=1 // pred_fallthru
      _
    // Predicated region
    $region90: #{tpu_custom_call.1} parent=1 // pred_check
      _
    $region91: #{tpu_custom_call.1} parent=1 // pred_check_branch
      %268 = sbr.rel (0) target = $region93
    $region92: #{tpu_custom_call.1} parent=1 // pred_region
      %269 = dma.done [#allocation6], 64
    $region93: #{tpu_custom_call.1} parent=1 // pred_fallthru
      _
    // Predicated region
    $region94: #{tpu_custom_call.1} parent=1 // pred_check
      _
    $region95: #{tpu_custom_call.1} parent=1 // pred_check_branch
      %271 = sbr.rel (0) target = $region97
    $region96: #{tpu_custom_call.1} parent=1 // pred_region
      %272 = dma.done [#allocation9], 86016
    $region97: #{tpu_custom_call.1} parent=1 // pred_fallthru
      _
    // Predicated region
    $region98: #{tpu_custom_call.1} parent=1 // pred_check
      _
    $region99: #{tpu_custom_call.1} parent=1 // pred_check_branch
      %274 = sbr.rel (0) target = $region101
    $region100: #{tpu_custom_call.1} parent=1 // pred_region
      %275 = dma.done [#allocation9], 86016
    $region101: #{tpu_custom_call.1} parent=1 // pred_fallthru
      _
    // Predicated region
    $region102: #{tpu_custom_call.1} parent=1 // pred_check
      _
    $region103: #{tpu_custom_call.1} parent=1 // pred_check_branch
      %277 = sbr.rel (0) target = $region105
    $region104: #{tpu_custom_call.1} parent=1 // pred_region
      %278 = dma.done [#allocation12], 96
    $region105: #{tpu_custom_call.1} parent=1 // pred_fallthru
      _
    // Predicated region
    $region106: #{tpu_custom_call.1} parent=1 // pred_check
      _
    $region107: #{tpu_custom_call.1} parent=1 // pred_check_branch
      %280 = sbr.rel (0) target = $region109
    $region108: #{tpu_custom_call.1} parent=1 // pred_region
      %281 = dma.done [#allocation12], 12288
    $region109: #{tpu_custom_call.1} parent=1 // pred_fallthru
      _
    // Predicated region
    $region110: #{tpu_custom_call.1} parent=1 // pred_check
      _
    $region111: #{tpu_custom_call.1} parent=1 // pred_check_branch
      %283 = sbr.rel (0) target = $region113
    $region112: #{tpu_custom_call.1} parent=1 // pred_region
      %284 = dma.done [#allocation15], 12288
    $region113: #{tpu_custom_call.1} parent=1 // pred_fallthru
      _
    // Predicated region
    $region114: #{tpu_custom_call.1} parent=1 // pred_check
      _
    $region115: #{tpu_custom_call.1} parent=1 // pred_check_branch
      %286 = sbr.rel (0) target = $region117
    $region116: #{tpu_custom_call.1} parent=1 // pred_region
      %287 = dma.done [#allocation15], 2048
    $region117: #{tpu_custom_call.1} parent=1 // pred_fallthru
      _
    // Predicated region
    $region118: #{tpu_custom_call.1} parent=1 // pred_check
      _
    $region119: #{tpu_custom_call.1} parent=1 // pred_check_branch
      %289 = sbr.rel (0) target = $region121
    $region120: #{tpu_custom_call.1} parent=1 // pred_region
      %290 = dma.done [#allocation18], 2048
    $region121: #{tpu_custom_call.1} parent=1 // pred_fallthru
      _
    // Predicated region
    $region122: #{tpu_custom_call.1} parent=1 // pred_check
      _
    $region123: #{tpu_custom_call.1} parent=1 // pred_check_branch
      %292 = sbr.rel (0) target = $region125
    $region124: #{tpu_custom_call.1} parent=1 // pred_region
      %293 = dma.done [#allocation18], 8192
    $region125: #{tpu_custom_call.1} parent=1 // pred_fallthru
      _
    // Predicated region
    $region126: #{tpu_custom_call.1} parent=1 // pred_check
      _
    $region127: #{tpu_custom_call.1} parent=1 // pred_check_branch
      %295 = sbr.rel (0) target = $region129
    $region128: #{tpu_custom_call.1} parent=1 // pred_region
      %296 = dma.done [#allocation21], 4096
    $region129: #{tpu_custom_call.1} parent=1 // pred_fallthru
      _
    // Predicated region
    $region130: #{tpu_custom_call.1} parent=1 // pred_check
      _
    $region131: #{tpu_custom_call.1} parent=1 // pred_check_branch
      %298 = sbr.rel (0) target = $region133
    $region132: #{tpu_custom_call.1} parent=1 // pred_region
      %299 = dma.done [#allocation21], 4096
    $region133: #{tpu_custom_call.1} parent=1 // pred_fallthru
      _
    // Predicated region
    $region134: #{tpu_custom_call.1} parent=1 // pred_check
      _
    $region135: #{tpu_custom_call.1} parent=1 // pred_check_branch
      %301 = sbr.rel (0) target = $region137
    $region136: #{tpu_custom_call.1} parent=1 // pred_region
      %302 = dma.done [#allocation24], 64
    $region137: #{tpu_custom_call.1} parent=1 // pred_fallthru
      _
    // Predicated region
    $region138: #{tpu_custom_call.1} parent=1 // pred_check
      _
    $region139: #{tpu_custom_call.1} parent=1 // pred_check_branch
      %304 = sbr.rel (0) target = $region141
    $region140: #{tpu_custom_call.1} parent=1 // pred_region
      %305 = dma.done [#allocation24], 8192
    $region141: #{tpu_custom_call.1} parent=1 // pred_fallthru
      _
    // Predicated region
    $region142: #{tpu_custom_call.1} parent=1 // pred_check
      _
    $region143: #{tpu_custom_call.1} parent=1 // pred_check_branch
      %307 = sbr.rel (0) target = $region145
    $region144: #{tpu_custom_call.1} parent=1 // pred_region
      %308 = dma.done [#allocation27], 32
    $region145: #{tpu_custom_call.1} parent=1 // pred_fallthru
      _
    // Predicated region
    $region146: #{tpu_custom_call.1} parent=1 // pred_check
      _
    $region147: #{tpu_custom_call.1} parent=1 // pred_check_branch
      %310 = sbr.rel (0) target = $region149
    $region148: #{tpu_custom_call.1} parent=1 // pred_region
      %311 = dma.done [#allocation27], 2048
    $region149: #{tpu_custom_call.1} parent=1 // pred_fallthru
      _
    // Predicated region
    $region150: #{tpu_custom_call.1} parent=1 // pred_check
      _
    $region151: #{tpu_custom_call.1} parent=1 // pred_check_branch
      %313 = sbr.rel (0) target = $region153
    $region152: #{tpu_custom_call.1} parent=1 // pred_region
      %314 = dma.done [#allocation30], 16
    $region153: #{tpu_custom_call.1} parent=1 // pred_fallthru
      _
    // Predicated region
    $region154: #{tpu_custom_call.1} parent=1 // pred_check
      _
    $region155: #{tpu_custom_call.1} parent=1 // pred_check_branch
      %316 = sbr.rel (0) target = $region157
    $region156: #{tpu_custom_call.1} parent=1 // pred_region
      %317 = dma.done [#allocation30], 1024
    $region157: #{tpu_custom_call.1} parent=1 // pred_fallthru
      _
    // Predicated region
    $region158: #{tpu_custom_call.1} parent=1 // pred_check
      _
    $region159: #{tpu_custom_call.1} parent=1 // pred_check_branch
      %319 = sbr.rel (0) target = $region161
    $region160: #{tpu_custom_call.1} parent=1 // pred_region
      %320 = dma.done [#allocation33], 16
    $region161: #{tpu_custom_call.1} parent=1 // pred_fallthru
      _
    %v322 = vld [vmem:[#allocation2] sm:$0xff]
    %v323 = vld [vmem:[#allocation2 + $0x8] sm:$0xff]
    %v324 = vld [vmem:[#allocation2 + $0x10] sm:$0xff]
    %v325 = vld [vmem:[#allocation2 + $0x18] sm:$0xff]
    %v326 = vld [vmem:[#allocation2 + $0x20] sm:$0xff]
    %v327 = vld [vmem:[#allocation2 + $0x28] sm:$0xff]
    %v328 = vld [vmem:[#allocation2 + $0x30] sm:$0xff]
    %v329 = vld [vmem:[#allocation8] sm:$0xff]
    %v330 = vld [vmem:[#allocation8 + $0x8] sm:$0xff]
    %v331 = vld [vmem:[#allocation8 + $0x10] sm:$0xff]
    %v332 = vld [vmem:[#allocation8 + $0x18] sm:$0xff]
    %v333 = vld [vmem:[#allocation8 + $0x20] sm:$0xff]
    %v334 = vld [vmem:[#allocation8 + $0x28] sm:$0xff]
    %v335 = vld [vmem:[#allocation8 + $0x30] sm:$0xff]
    %v336 = vld [vmem:[#allocation8 + $0x38] sm:$0xff]
    %v337 = vld [vmem:[#allocation8 + $0x40] sm:$0xff]
    %v338 = vld [vmem:[#allocation8 + $0x48] sm:$0xff]
    %v339 = vld [vmem:[#allocation8 + $0x50] sm:$0xff]
    %v340 = vld [vmem:[#allocation8 + $0x58] sm:$0xff]
    %v341 = vld [vmem:[#allocation8 + $0x60] sm:$0xff]
    %v342 = vld [vmem:[#allocation8 + $0x68] sm:$0xff]
    %v343 = vld [vmem:[#allocation8 + $0x70] sm:$0xff]
    %v344 = vld [vmem:[#allocation8 + $0x78] sm:$0xff]
    %v345 = vld [vmem:[#allocation8 + $0x80] sm:$0xff]
    %v346 = vld [vmem:[#allocation8 + $0x88] sm:$0xff]
    %v347 = vld [vmem:[#allocation8 + $0x90] sm:$0xff]
    %v348 = vld [vmem:[#allocation8 + $0x98] sm:$0xff]
    %v349 = vld [vmem:[#allocation8 + $0xa0] sm:$0xff]
    %v350 = vld [vmem:[#allocation8 + $0xa8] sm:$0xff]
    %v351 = vld [vmem:[#allocation8 + $0xb0] sm:$0xff]
    %v352 = vld [vmem:[#allocation8 + $0xb8] sm:$0xff]
    %v353 = vld [vmem:[#allocation8 + $0xc0] sm:$0xff]
    %v354 = vld [vmem:[#allocation8 + $0xc8] sm:$0xff]
    %v355 = vld [vmem:[#allocation8 + $0xd0] sm:$0xff]
    %v356 = vld [vmem:[#allocation8 + $0xd8] sm:$0xff]
    %v357 = vld [vmem:[#allocation8 + $0xe0] sm:$0xff]
    %v358 = vld [vmem:[#allocation8 + $0xe8] sm:$0xff]
    %v359 = vld [vmem:[#allocation8 + $0xf0] sm:$0xff]
    %v360 = vld [vmem:[#allocation8 + $0xf8] sm:$0xff]
    %v361 = vld [vmem:[#allocation8 + $0x100] sm:$0xff]
    %v362 = vld [vmem:[#allocation8 + $0x108] sm:$0xff]
    %v363 = vld [vmem:[#allocation8 + $0x110] sm:$0xff]
    %v364 = vld [vmem:[#allocation8 + $0x118] sm:$0xff]
    %v365 = vld [vmem:[#allocation8 + $0x120] sm:$0xff]
    %v366 = vld [vmem:[#allocation8 + $0x128] sm:$0xff]
    %v367 = vld [vmem:[#allocation8 + $0x130] sm:$0xff]
    %v368 = vld [vmem:[#allocation8 + $0x138] sm:$0xff]
    %v369 = vld [vmem:[#allocation8 + $0x140] sm:$0xff]
    %v370 = vld [vmem:[#allocation8 + $0x148] sm:$0xff]
    %v371 = vld [vmem:[#allocation8 + $0x150] sm:$0xff]
    %v372 = vld [vmem:[#allocation8 + $0x158] sm:$0xff]
    %v373 = vld [vmem:[#allocation8 + $0x160] sm:$0xff]
    %v374 = vld [vmem:[#allocation8 + $0x168] sm:$0xff]
    %v375 = vld [vmem:[#allocation8 + $0x170] sm:$0xff]
    %v376 = vld [vmem:[#allocation8 + $0x178] sm:$0xff]
    %v377 = vld [vmem:[#allocation8 + $0x180] sm:$0xff]
    %v378 = vld [vmem:[#allocation8 + $0x188] sm:$0xff]
    %v379 = vld [vmem:[#allocation8 + $0x190] sm:$0xff]
    %v380 = vld [vmem:[#allocation8 + $0x198] sm:$0xff]
    %v381 = vld [vmem:[#allocation8 + $0x1a0] sm:$0xff]
    %v382 = vld [vmem:[#allocation8 + $0x1a8] sm:$0xff]
    %v383 = vld [vmem:[#allocation8 + $0x1b0] sm:$0xff]
    %v384 = vld [vmem:[#allocation8 + $0x1b8] sm:$0xff]
    %v385 = vld [vmem:[#allocation8 + $0x1c0] sm:$0xff]
    %v386 = vld [vmem:[#allocation8 + $0x1c8] sm:$0xff]
    %v387 = vld [vmem:[#allocation8 + $0x1d0] sm:$0xff]
    %v388 = vld [vmem:[#allocation8 + $0x1d8] sm:$0xff]
    %v389 = vld [vmem:[#allocation8 + $0x1e0] sm:$0xff]
    %v390 = vld [vmem:[#allocation8 + $0x1e8] sm:$0xff]
    %v391 = vld [vmem:[#allocation8 + $0x1f0] sm:$0xff]
    %v392 = vld [vmem:[#allocation8 + $0x1f8] sm:$0xff]
    %v393 = vld [vmem:[#allocation8 + $0x200] sm:$0xff]
    %v394 = vld [vmem:[#allocation8 + $0x208] sm:$0xff]
    %v395 = vld [vmem:[#allocation8 + $0x210] sm:$0xff]
    %v396 = vld [vmem:[#allocation8 + $0x218] sm:$0xff]
    %v397 = vld [vmem:[#allocation8 + $0x220] sm:$0xff]
    %v398 = vld [vmem:[#allocation8 + $0x228] sm:$0xff]
    %v399 = vld [vmem:[#allocation8 + $0x230] sm:$0xff]
    %v400 = vld [vmem:[#allocation8 + $0x238] sm:$0xff]
    %v401 = vld [vmem:[#allocation8 + $0x240] sm:$0xff]
    %v402 = vld [vmem:[#allocation8 + $0x248] sm:$0xff]
    %v403 = vld [vmem:[#allocation8 + $0x250] sm:$0xff]
    %v404 = vld [vmem:[#allocation8 + $0x258] sm:$0xff]
    %v405 = vld [vmem:[#allocation8 + $0x260] sm:$0xff]
    %v406 = vld [vmem:[#allocation8 + $0x268] sm:$0xff]
    %v407 = vld [vmem:[#allocation8 + $0x270] sm:$0xff]
    %v408 = vld [vmem:[#allocation8 + $0x278] sm:$0xff]
    %v409 = vld [vmem:[#allocation8 + $0x280] sm:$0xff]
    %v410 = vld [vmem:[#allocation8 + $0x288] sm:$0xff]
    %v411 = vld [vmem:[#allocation8 + $0x290] sm:$0xff]
    %v412 = vld [vmem:[#allocation8 + $0x298] sm:$0xff]
    %v413 = vld [vmem:[#allocation8 + $0x2a0] sm:$0xff]
    %v414 = vld [vmem:[#allocation8 + $0x2a8] sm:$0xff]
    %v415 = vld [vmem:[#allocation8 + $0x2b0] sm:$0xff]
    %v416 = vld [vmem:[#allocation8 + $0x2b8] sm:$0xff]
    %v417 = vld [vmem:[#allocation8 + $0x2c0] sm:$0xff]
    %v418 = vld [vmem:[#allocation8 + $0x2c8] sm:$0xff]
    %v419 = vld [vmem:[#allocation8 + $0x2d0] sm:$0xff]
    %v420 = vld [vmem:[#allocation8 + $0x2d8] sm:$0xff]
    %v421 = vld [vmem:[#allocation8 + $0x2e0] sm:$0xff]
    %v422 = vld [vmem:[#allocation8 + $0x2e8] sm:$0xff]
    %v423 = vld [vmem:[#allocation8 + $0x2f0] sm:$0xff]
    %v424 = vld [vmem:[#allocation8 + $0x2f8] sm:$0xff]
    %v425 = vld [vmem:[#allocation8 + $0x300] sm:$0xff]
    %v426 = vld [vmem:[#allocation8 + $0x308] sm:$0xff]
    %v427 = vld [vmem:[#allocation8 + $0x310] sm:$0xff]
    %v428 = vld [vmem:[#allocation8 + $0x318] sm:$0xff]
    %v429 = vld [vmem:[#allocation8 + $0x320] sm:$0xff]
    %v430 = vld [vmem:[#allocation8 + $0x328] sm:$0xff]
    %v431 = vld [vmem:[#allocation8 + $0x330] sm:$0xff]
    %v432 = vld [vmem:[#allocation8 + $0x338] sm:$0xff]
    %v433 = vld [vmem:[#allocation8 + $0x340] sm:$0xff]
    %v434 = vld [vmem:[#allocation8 + $0x348] sm:$0xff]
    %v435 = vld [vmem:[#allocation8 + $0x350] sm:$0xff]
    %v436 = vld [vmem:[#allocation8 + $0x358] sm:$0xff]
    %v437 = vld [vmem:[#allocation8 + $0x360] sm:$0xff]
    %v438 = vld [vmem:[#allocation8 + $0x368] sm:$0xff]
    %v439 = vld [vmem:[#allocation8 + $0x370] sm:$0xff]
    %v440 = vld [vmem:[#allocation8 + $0x378] sm:$0xff]
    %v441 = vld [vmem:[#allocation8 + $0x380] sm:$0xff]
    %v442 = vld [vmem:[#allocation8 + $0x388] sm:$0xff]
    %v443 = vld [vmem:[#allocation8 + $0x390] sm:$0xff]
    %v444 = vld [vmem:[#allocation8 + $0x398] sm:$0xff]
    %v445 = vld [vmem:[#allocation8 + $0x3a0] sm:$0xff]
    %v446 = vld [vmem:[#allocation8 + $0x3a8] sm:$0xff]
    %v447 = vld [vmem:[#allocation8 + $0x3b0] sm:$0xff]
    %v448 = vld [vmem:[#allocation8 + $0x3b8] sm:$0xff]
    %v449 = vld [vmem:[#allocation8 + $0x3c0] sm:$0xff]
    %v450 = vld [vmem:[#allocation8 + $0x3c8] sm:$0xff]
    %v451 = vld [vmem:[#allocation8 + $0x3d0] sm:$0xff]
    %v452 = vld [vmem:[#allocation8 + $0x3d8] sm:$0xff]
    %v453 = vld [vmem:[#allocation8 + $0x3e0] sm:$0xff]
    %v454 = vld [vmem:[#allocation8 + $0x3e8] sm:$0xff]
    %v455 = vld [vmem:[#allocation8 + $0x3f0] sm:$0xff]
    %v456 = vld [vmem:[#allocation8 + $0x3f8] sm:$0xff]
    %v457 = vld [vmem:[#allocation8 + $0x400] sm:$0xff]
    %v458 = vld [vmem:[#allocation8 + $0x408] sm:$0xff]
    %v459 = vld [vmem:[#allocation8 + $0x410] sm:$0xff]
    %v460 = vld [vmem:[#allocation8 + $0x418] sm:$0xff]
    %v461 = vld [vmem:[#allocation8 + $0x420] sm:$0xff]
    %v462 = vld [vmem:[#allocation8 + $0x428] sm:$0xff]
    %v463 = vld [vmem:[#allocation8 + $0x430] sm:$0xff]
    %v464 = vld [vmem:[#allocation8 + $0x438] sm:$0xff]
    %v465 = vld [vmem:[#allocation8 + $0x440] sm:$0xff]
    %v466 = vld [vmem:[#allocation8 + $0x448] sm:$0xff]
    %v467 = vld [vmem:[#allocation8 + $0x450] sm:$0xff]
    %v468 = vld [vmem:[#allocation8 + $0x458] sm:$0xff]
    %v469 = vld [vmem:[#allocation8 + $0x460] sm:$0xff]
    %v470 = vld [vmem:[#allocation8 + $0x468] sm:$0xff]
    %v471 = vld [vmem:[#allocation8 + $0x470] sm:$0xff]
    %v472 = vld [vmem:[#allocation8 + $0x478] sm:$0xff]
    %v473 = vld [vmem:[#allocation8 + $0x480] sm:$0xff]
    %v474 = vld [vmem:[#allocation8 + $0x488] sm:$0xff]
    %v475 = vld [vmem:[#allocation8 + $0x490] sm:$0xff]
    %v476 = vld [vmem:[#allocation8 + $0x498] sm:$0xff]
    %v477 = vld [vmem:[#allocation8 + $0x4a0] sm:$0xff]
    %v478 = vld [vmem:[#allocation8 + $0x4a8] sm:$0xff]
    %v479 = vld [vmem:[#allocation8 + $0x4b0] sm:$0xff]
    %v480 = vld [vmem:[#allocation8 + $0x4b8] sm:$0xff]
    %v481 = vld [vmem:[#allocation8 + $0x4c0] sm:$0xff]
    %v482 = vld [vmem:[#allocation8 + $0x4c8] sm:$0xff]
    %v483 = vld [vmem:[#allocation8 + $0x4d0] sm:$0xff]
    %v484 = vld [vmem:[#allocation8 + $0x4d8] sm:$0xff]
    %v485 = vld [vmem:[#allocation8 + $0x4e0] sm:$0xff]
    %v486 = vld [vmem:[#allocation8 + $0x4e8] sm:$0xff]
    %v487 = vld [vmem:[#allocation8 + $0x4f0] sm:$0xff]
    %v488 = vld [vmem:[#allocation8 + $0x4f8] sm:$0xff]
    %v489 = vld [vmem:[#allocation8 + $0x500] sm:$0xff]
    %v490 = vld [vmem:[#allocation8 + $0x508] sm:$0xff]
    %v491 = vld [vmem:[#allocation8 + $0x510] sm:$0xff]
    %v492 = vld [vmem:[#allocation8 + $0x518] sm:$0xff]
    %v493 = vld [vmem:[#allocation8 + $0x520] sm:$0xff]
    %v494 = vld [vmem:[#allocation8 + $0x528] sm:$0xff]
    %v495 = vld [vmem:[#allocation8 + $0x530] sm:$0xff]
    %v496 = vld [vmem:[#allocation8 + $0x538] sm:$0xff]
    %v497 = vld [vmem:[#allocation8 + $0x540] sm:$0xff]
    %v498 = vld [vmem:[#allocation8 + $0x548] sm:$0xff]
    %v499 = vld [vmem:[#allocation8 + $0x550] sm:$0xff]
    %v500 = vld [vmem:[#allocation8 + $0x558] sm:$0xff]
    %v501 = vld [vmem:[#allocation8 + $0x560] sm:$0xff]
    %v502 = vld [vmem:[#allocation8 + $0x568] sm:$0xff]
    %v503 = vld [vmem:[#allocation8 + $0x570] sm:$0xff]
    %v504 = vld [vmem:[#allocation8 + $0x578] sm:$0xff]
    %v505 = vld [vmem:[#allocation8 + $0x580] sm:$0xff]
    %v506 = vld [vmem:[#allocation8 + $0x588] sm:$0xff]
    %v507 = vld [vmem:[#allocation8 + $0x590] sm:$0xff]
    %v508 = vld [vmem:[#allocation8 + $0x598] sm:$0xff]
    %v509 = vld [vmem:[#allocation8 + $0x5a0] sm:$0xff]
    %v510 = vld [vmem:[#allocation8 + $0x5a8] sm:$0xff]
    %v511 = vld [vmem:[#allocation8 + $0x5b0] sm:$0xff]
    %v512 = vld [vmem:[#allocation8 + $0x5b8] sm:$0xff]
    %v513 = vld [vmem:[#allocation8 + $0x5c0] sm:$0xff]
    %v514 = vld [vmem:[#allocation8 + $0x5c8] sm:$0xff]
    %v515 = vld [vmem:[#allocation8 + $0x5d0] sm:$0xff]
    %v516 = vld [vmem:[#allocation8 + $0x5d8] sm:$0xff]
    %v517 = vld [vmem:[#allocation8 + $0x5e0] sm:$0xff]
    %v518 = vld [vmem:[#allocation8 + $0x5e8] sm:$0xff]
    %v519 = vld [vmem:[#allocation8 + $0x5f0] sm:$0xff]
    %v520 = vld [vmem:[#allocation8 + $0x5f8] sm:$0xff]
    %v521 = vld [vmem:[#allocation8 + $0x600] sm:$0xff]
    %v522 = vld [vmem:[#allocation8 + $0x608] sm:$0xff]
    %v523 = vld [vmem:[#allocation8 + $0x610] sm:$0xff]
    %v524 = vld [vmem:[#allocation8 + $0x618] sm:$0xff]
    %v525 = vld [vmem:[#allocation8 + $0x620] sm:$0xff]
    %v526 = vld [vmem:[#allocation8 + $0x628] sm:$0xff]
    %v527 = vld [vmem:[#allocation8 + $0x630] sm:$0xff]
    %v528 = vld [vmem:[#allocation8 + $0x638] sm:$0xff]
    %v529 = vld [vmem:[#allocation8 + $0x640] sm:$0xff]
    %v530 = vld [vmem:[#allocation8 + $0x648] sm:$0xff]
    %v531 = vld [vmem:[#allocation8 + $0x650] sm:$0xff]
    %v532 = vld [vmem:[#allocation8 + $0x658] sm:$0xff]
    %v533 = vld [vmem:[#allocation8 + $0x660] sm:$0xff]
    %v534 = vld [vmem:[#allocation8 + $0x668] sm:$0xff]
    %v535 = vld [vmem:[#allocation8 + $0x670] sm:$0xff]
    %v536 = vld [vmem:[#allocation8 + $0x678] sm:$0xff]
    %v537 = vld [vmem:[#allocation8 + $0x680] sm:$0xff]
    %v538 = vld [vmem:[#allocation8 + $0x688] sm:$0xff]
    %v539 = vld [vmem:[#allocation8 + $0x690] sm:$0xff]
    %v540 = vld [vmem:[#allocation8 + $0x698] sm:$0xff]
    %v541 = vld [vmem:[#allocation8 + $0x6a0] sm:$0xff]
    %v542 = vld [vmem:[#allocation8 + $0x6a8] sm:$0xff]
    %v543 = vld [vmem:[#allocation8 + $0x6b0] sm:$0xff]
    %v544 = vld [vmem:[#allocation8 + $0x6b8] sm:$0xff]
    %v545 = vld [vmem:[#allocation8 + $0x6c0] sm:$0xff]
    %v546 = vld [vmem:[#allocation8 + $0x6c8] sm:$0xff]
    %v547 = vld [vmem:[#allocation8 + $0x6d0] sm:$0xff]
    %v548 = vld [vmem:[#allocation8 + $0x6d8] sm:$0xff]
    %v549 = vld [vmem:[#allocation8 + $0x6e0] sm:$0xff]
    %v550 = vld [vmem:[#allocation8 + $0x6e8] sm:$0xff]
    %v551 = vld [vmem:[#allocation8 + $0x6f0] sm:$0xff]
    %v552 = vld [vmem:[#allocation8 + $0x6f8] sm:$0xff]
    %v553 = vld [vmem:[#allocation8 + $0x700] sm:$0xff]
    %v554 = vld [vmem:[#allocation8 + $0x708] sm:$0xff]
    %v555 = vld [vmem:[#allocation8 + $0x710] sm:$0xff]
    %v556 = vld [vmem:[#allocation8 + $0x718] sm:$0xff]
    %v557 = vld [vmem:[#allocation8 + $0x720] sm:$0xff]
    %v558 = vld [vmem:[#allocation8 + $0x728] sm:$0xff]
    %v559 = vld [vmem:[#allocation8 + $0x730] sm:$0xff]
    %v560 = vld [vmem:[#allocation8 + $0x738] sm:$0xff]
    %v561 = vld [vmem:[#allocation8 + $0x740] sm:$0xff]
    %v562 = vld [vmem:[#allocation8 + $0x748] sm:$0xff]
    %v563 = vld [vmem:[#allocation8 + $0x750] sm:$0xff]
    %v564 = vld [vmem:[#allocation8 + $0x758] sm:$0xff]
    %v565 = vld [vmem:[#allocation8 + $0x760] sm:$0xff]
    %v566 = vld [vmem:[#allocation8 + $0x768] sm:$0xff]
    %v567 = vld [vmem:[#allocation8 + $0x770] sm:$0xff]
    %v568 = vld [vmem:[#allocation8 + $0x778] sm:$0xff]
    %v569 = vld [vmem:[#allocation8 + $0x780] sm:$0xff]
    %v570 = vld [vmem:[#allocation8 + $0x788] sm:$0xff]
    %v571 = vld [vmem:[#allocation8 + $0x790] sm:$0xff]
    %v572 = vld [vmem:[#allocation8 + $0x798] sm:$0xff]
    %v573 = vld [vmem:[#allocation8 + $0x7a0] sm:$0xff]
    %v574 = vld [vmem:[#allocation8 + $0x7a8] sm:$0xff]
    %v575 = vld [vmem:[#allocation8 + $0x7b0] sm:$0xff]
    %v576 = vld [vmem:[#allocation8 + $0x7b8] sm:$0xff]
    %v577 = vld [vmem:[#allocation8 + $0x7c0] sm:$0xff]
    %v578 = vld [vmem:[#allocation8 + $0x7c8] sm:$0xff]
    %v579 = vld [vmem:[#allocation8 + $0x7d0] sm:$0xff]
    %v580 = vld [vmem:[#allocation8 + $0x7d8] sm:$0xff]
    %v581 = vld [vmem:[#allocation8 + $0x7e0] sm:$0xff]
    %v582 = vld [vmem:[#allocation8 + $0x7e8] sm:$0xff]
    %v583 = vld [vmem:[#allocation8 + $0x7f0] sm:$0xff]
    %v584 = vld [vmem:[#allocation8 + $0x7f8] sm:$0xff]
    %v585 = vld [vmem:[#allocation8 + $0x800] sm:$0xff]
    %v586 = vld [vmem:[#allocation8 + $0x808] sm:$0xff]
    %v587 = vld [vmem:[#allocation8 + $0x810] sm:$0xff]
    %v588 = vld [vmem:[#allocation8 + $0x818] sm:$0xff]
    %v589 = vld [vmem:[#allocation8 + $0x820] sm:$0xff]
    %v590 = vld [vmem:[#allocation8 + $0x828] sm:$0xff]
    %v591 = vld [vmem:[#allocation8 + $0x830] sm:$0xff]
    %v592 = vld [vmem:[#allocation8 + $0x838] sm:$0xff]
    %v593 = vld [vmem:[#allocation8 + $0x840] sm:$0xff]
    %v594 = vld [vmem:[#allocation8 + $0x848] sm:$0xff]
    %v595 = vld [vmem:[#allocation8 + $0x850] sm:$0xff]
    %v596 = vld [vmem:[#allocation8 + $0x858] sm:$0xff]
    %v597 = vld [vmem:[#allocation8 + $0x860] sm:$0xff]
    %v598 = vld [vmem:[#allocation8 + $0x868] sm:$0xff]
    %v599 = vld [vmem:[#allocation8 + $0x870] sm:$0xff]
    %v600 = vld [vmem:[#allocation8 + $0x878] sm:$0xff]
    %v601 = vld [vmem:[#allocation8 + $0x880] sm:$0xff]
    %v602 = vld [vmem:[#allocation8 + $0x888] sm:$0xff]
    %v603 = vld [vmem:[#allocation8 + $0x890] sm:$0xff]
    %v604 = vld [vmem:[#allocation8 + $0x898] sm:$0xff]
    %v605 = vld [vmem:[#allocation8 + $0x8a0] sm:$0xff]
    %v606 = vld [vmem:[#allocation8 + $0x8a8] sm:$0xff]
    %v607 = vld [vmem:[#allocation8 + $0x8b0] sm:$0xff]
    %v608 = vld [vmem:[#allocation8 + $0x8b8] sm:$0xff]
    %v609 = vld [vmem:[#allocation8 + $0x8c0] sm:$0xff]
    %v610 = vld [vmem:[#allocation8 + $0x8c8] sm:$0xff]
    %v611 = vld [vmem:[#allocation8 + $0x8d0] sm:$0xff]
    %v612 = vld [vmem:[#allocation8 + $0x8d8] sm:$0xff]
    %v613 = vld [vmem:[#allocation8 + $0x8e0] sm:$0xff]
    %v614 = vld [vmem:[#allocation8 + $0x8e8] sm:$0xff]
    %v615 = vld [vmem:[#allocation8 + $0x8f0] sm:$0xff]
    %v616 = vld [vmem:[#allocation8 + $0x8f8] sm:$0xff]
    %v617 = vld [vmem:[#allocation8 + $0x900] sm:$0xff]
    %v618 = vld [vmem:[#allocation8 + $0x908] sm:$0xff]
    %v619 = vld [vmem:[#allocation8 + $0x910] sm:$0xff]
    %v620 = vld [vmem:[#allocation8 + $0x918] sm:$0xff]
    %v621 = vld [vmem:[#allocation8 + $0x920] sm:$0xff]
    %v622 = vld [vmem:[#allocation8 + $0x928] sm:$0xff]
    %v623 = vld [vmem:[#allocation8 + $0x930] sm:$0xff]
    %v624 = vld [vmem:[#allocation8 + $0x938] sm:$0xff]
    %v625 = vld [vmem:[#allocation8 + $0x940] sm:$0xff]
    %v626 = vld [vmem:[#allocation8 + $0x948] sm:$0xff]
    %v627 = vld [vmem:[#allocation8 + $0x950] sm:$0xff]
    %v628 = vld [vmem:[#allocation8 + $0x958] sm:$0xff]
    %v629 = vld [vmem:[#allocation8 + $0x960] sm:$0xff]
    %v630 = vld [vmem:[#allocation8 + $0x968] sm:$0xff]
    %v631 = vld [vmem:[#allocation8 + $0x970] sm:$0xff]
    %v632 = vld [vmem:[#allocation8 + $0x978] sm:$0xff]
    %v633 = vld [vmem:[#allocation8 + $0x980] sm:$0xff]
    %v634 = vld [vmem:[#allocation8 + $0x988] sm:$0xff]
    %v635 = vld [vmem:[#allocation8 + $0x990] sm:$0xff]
    %v636 = vld [vmem:[#allocation8 + $0x998] sm:$0xff]
    %v637 = vld [vmem:[#allocation8 + $0x9a0] sm:$0xff]
    %v638 = vld [vmem:[#allocation8 + $0x9a8] sm:$0xff]
    %v639 = vld [vmem:[#allocation8 + $0x9b0] sm:$0xff]
    %v640 = vld [vmem:[#allocation8 + $0x9b8] sm:$0xff]
    %v641 = vld [vmem:[#allocation8 + $0x9c0] sm:$0xff]
    %v642 = vld [vmem:[#allocation8 + $0x9c8] sm:$0xff]
    %v643 = vld [vmem:[#allocation8 + $0x9d0] sm:$0xff]
    %v644 = vld [vmem:[#allocation8 + $0x9d8] sm:$0xff]
    %v645 = vld [vmem:[#allocation8 + $0x9e0] sm:$0xff]
    %v646 = vld [vmem:[#allocation8 + $0x9e8] sm:$0xff]
    %v647 = vld [vmem:[#allocation8 + $0x9f0] sm:$0xff]
    %v648 = vld [vmem:[#allocation8 + $0x9f8] sm:$0xff]
    %v649 = vld [vmem:[#allocation8 + $0xa00] sm:$0xff]
    %v650 = vld [vmem:[#allocation8 + $0xa08] sm:$0xff]
    %v651 = vld [vmem:[#allocation8 + $0xa10] sm:$0xff]
    %v652 = vld [vmem:[#allocation8 + $0xa18] sm:$0xff]
    %v653 = vld [vmem:[#allocation8 + $0xa20] sm:$0xff]
    %v654 = vld [vmem:[#allocation8 + $0xa28] sm:$0xff]
    %v655 = vld [vmem:[#allocation8 + $0xa30] sm:$0xff]
    %v656 = vld [vmem:[#allocation8 + $0xa38] sm:$0xff]
    %v657 = vld [vmem:[#allocation8 + $0xa40] sm:$0xff]
    %v658 = vld [vmem:[#allocation8 + $0xa48] sm:$0xff]
    %v659 = vld [vmem:[#allocation8 + $0xa50] sm:$0xff]
    %v660 = vld [vmem:[#allocation8 + $0xa58] sm:$0xff]
    %v661 = vld [vmem:[#allocation8 + $0xa60] sm:$0xff]
    %v662 = vld [vmem:[#allocation8 + $0xa68] sm:$0xff]
    %v663 = vld [vmem:[#allocation8 + $0xa70] sm:$0xff]
    %v664 = vld [vmem:[#allocation8 + $0xa78] sm:$0xff]
    %v665 = vld [vmem:[#allocation8 + $0xa80] sm:$0xff]
    %v666 = vld [vmem:[#allocation8 + $0xa88] sm:$0xff]
    %v667 = vld [vmem:[#allocation8 + $0xa90] sm:$0xff]
    %v668 = vld [vmem:[#allocation8 + $0xa98] sm:$0xff]
    %v669 = vld [vmem:[#allocation8 + $0xaa0] sm:$0xff]
    %v670 = vld [vmem:[#allocation8 + $0xaa8] sm:$0xff]
    %v671 = vld [vmem:[#allocation8 + $0xab0] sm:$0xff]
    %v672 = vld [vmem:[#allocation8 + $0xab8] sm:$0xff]
    %v673 = vld [vmem:[#allocation8 + $0xac0] sm:$0xff]
    %v674 = vld [vmem:[#allocation8 + $0xac8] sm:$0xff]
    %v675 = vld [vmem:[#allocation8 + $0xad0] sm:$0xff]
    %v676 = vld [vmem:[#allocation8 + $0xad8] sm:$0xff]
    %v677 = vld [vmem:[#allocation8 + $0xae0] sm:$0xff]
    %v678 = vld [vmem:[#allocation8 + $0xae8] sm:$0xff]
    %v679 = vld [vmem:[#allocation8 + $0xaf0] sm:$0xff]
    %v680 = vld [vmem:[#allocation8 + $0xaf8] sm:$0xff]
    %v681 = vld [vmem:[#allocation8 + $0xb00] sm:$0xff]
    %v682 = vld [vmem:[#allocation8 + $0xb08] sm:$0xff]
    %v683 = vld [vmem:[#allocation8 + $0xb10] sm:$0xff]
    %v684 = vld [vmem:[#allocation8 + $0xb18] sm:$0xff]
    %v685 = vld [vmem:[#allocation8 + $0xb20] sm:$0xff]
    %v686 = vld [vmem:[#allocation8 + $0xb28] sm:$0xff]
    %v687 = vld [vmem:[#allocation8 + $0xb30] sm:$0xff]
    %v688 = vld [vmem:[#allocation8 + $0xb38] sm:$0xff]
    %v689 = vld [vmem:[#allocation8 + $0xb40] sm:$0xff]
    %v690 = vld [vmem:[#allocation8 + $0xb48] sm:$0xff]
    %v691 = vld [vmem:[#allocation8 + $0xb50] sm:$0xff]
    %v692 = vld [vmem:[#allocation8 + $0xb58] sm:$0xff]
    %v693 = vld [vmem:[#allocation8 + $0xb60] sm:$0xff]
    %v694 = vld [vmem:[#allocation8 + $0xb68] sm:$0xff]
    %v695 = vld [vmem:[#allocation8 + $0xb70] sm:$0xff]
    %v696 = vld [vmem:[#allocation8 + $0xb78] sm:$0xff]
    %v697 = vld [vmem:[#allocation8 + $0xb80] sm:$0xff]
    %v698 = vld [vmem:[#allocation8 + $0xb88] sm:$0xff]
    %v699 = vld [vmem:[#allocation8 + $0xb90] sm:$0xff]
    %v700 = vld [vmem:[#allocation8 + $0xb98] sm:$0xff]
    %v701 = vld [vmem:[#allocation8 + $0xba0] sm:$0xff]
    %v702 = vld [vmem:[#allocation8 + $0xba8] sm:$0xff]
    %v703 = vld [vmem:[#allocation8 + $0xbb0] sm:$0xff]
    %v704 = vld [vmem:[#allocation8 + $0xbb8] sm:$0xff]
    %v705 = vld [vmem:[#allocation8 + $0xbc0] sm:$0xff]
    %v706 = vld [vmem:[#allocation8 + $0xbc8] sm:$0xff]
    %v707 = vld [vmem:[#allocation8 + $0xbd0] sm:$0xff]
    %v708 = vld [vmem:[#allocation8 + $0xbd8] sm:$0xff]
    %v709 = vld [vmem:[#allocation8 + $0xbe0] sm:$0xff]
    %v710 = vld [vmem:[#allocation8 + $0xbe8] sm:$0xff]
    %v711 = vld [vmem:[#allocation8 + $0xbf0] sm:$0xff]
    %v712 = vld [vmem:[#allocation8 + $0xbf8] sm:$0xff]
    %v713 = vld [vmem:[#allocation8 + $0xc00] sm:$0xff]
    %v714 = vld [vmem:[#allocation8 + $0xc08] sm:$0xff]
    %v715 = vld [vmem:[#allocation8 + $0xc10] sm:$0xff]
    %v716 = vld [vmem:[#allocation8 + $0xc18] sm:$0xff]
    %v717 = vld [vmem:[#allocation8 + $0xc20] sm:$0xff]
    %v718 = vld [vmem:[#allocation8 + $0xc28] sm:$0xff]
    %v719 = vld [vmem:[#allocation8 + $0xc30] sm:$0xff]
    %v720 = vld [vmem:[#allocation8 + $0xc38] sm:$0xff]
    %v721 = vld [vmem:[#allocation8 + $0xc40] sm:$0xff]
    %v722 = vld [vmem:[#allocation8 + $0xc48] sm:$0xff]
    %v723 = vld [vmem:[#allocation8 + $0xc50] sm:$0xff]
    %v724 = vld [vmem:[#allocation8 + $0xc58] sm:$0xff]
    %v725 = vld [vmem:[#allocation8 + $0xc60] sm:$0xff]
    %v726 = vld [vmem:[#allocation8 + $0xc68] sm:$0xff]
    %v727 = vld [vmem:[#allocation8 + $0xc70] sm:$0xff]
    %v728 = vld [vmem:[#allocation8 + $0xc78] sm:$0xff]
    %v729 = vld [vmem:[#allocation8 + $0xc80] sm:$0xff]
    %v730 = vld [vmem:[#allocation8 + $0xc88] sm:$0xff]
    %v731 = vld [vmem:[#allocation8 + $0xc90] sm:$0xff]
    %v732 = vld [vmem:[#allocation8 + $0xc98] sm:$0xff]
    %v733 = vld [vmem:[#allocation8 + $0xca0] sm:$0xff]
    %v734 = vld [vmem:[#allocation8 + $0xca8] sm:$0xff]
    %v735 = vld [vmem:[#allocation8 + $0xcb0] sm:$0xff]
    %v736 = vld [vmem:[#allocation8 + $0xcb8] sm:$0xff]
    %v737 = vld [vmem:[#allocation8 + $0xcc0] sm:$0xff]
    %v738 = vld [vmem:[#allocation8 + $0xcc8] sm:$0xff]
    %v739 = vld [vmem:[#allocation8 + $0xcd0] sm:$0xff]
    %v740 = vld [vmem:[#allocation8 + $0xcd8] sm:$0xff]
    %v741 = vld [vmem:[#allocation8 + $0xce0] sm:$0xff]
    %v742 = vld [vmem:[#allocation8 + $0xce8] sm:$0xff]
    %v743 = vld [vmem:[#allocation8 + $0xcf0] sm:$0xff]
    %v744 = vld [vmem:[#allocation8 + $0xcf8] sm:$0xff]
    %v745 = vld [vmem:[#allocation8 + $0xd00] sm:$0xff]
    %v746 = vld [vmem:[#allocation8 + $0xd08] sm:$0xff]
    %v747 = vld [vmem:[#allocation8 + $0xd10] sm:$0xff]
    %v748 = vld [vmem:[#allocation8 + $0xd18] sm:$0xff]
    %v749 = vld [vmem:[#allocation8 + $0xd20] sm:$0xff]
    %v750 = vld [vmem:[#allocation8 + $0xd28] sm:$0xff]
    %v751 = vld [vmem:[#allocation8 + $0xd30] sm:$0xff]
    %v752 = vld [vmem:[#allocation8 + $0xd38] sm:$0xff]
    %v753 = vld [vmem:[#allocation8 + $0xd40] sm:$0xff]
    %v754 = vld [vmem:[#allocation8 + $0xd48] sm:$0xff]
    %v755 = vld [vmem:[#allocation8 + $0xd50] sm:$0xff]
    %v756 = vld [vmem:[#allocation8 + $0xd58] sm:$0xff]
    %v757 = vld [vmem:[#allocation8 + $0xd60] sm:$0xff]
    %v758 = vld [vmem:[#allocation8 + $0xd68] sm:$0xff]
    %v759 = vld [vmem:[#allocation8 + $0xd70] sm:$0xff]
    %v760 = vld [vmem:[#allocation8 + $0xd78] sm:$0xff]
    %v761 = vld [vmem:[#allocation8 + $0xd80] sm:$0xff]
    %v762 = vld [vmem:[#allocation8 + $0xd88] sm:$0xff]
    %v763 = vld [vmem:[#allocation8 + $0xd90] sm:$0xff]
    %v764 = vld [vmem:[#allocation8 + $0xd98] sm:$0xff]
    %v765 = vld [vmem:[#allocation8 + $0xda0] sm:$0xff]
    %v766 = vld [vmem:[#allocation8 + $0xda8] sm:$0xff]
    %v767 = vld [vmem:[#allocation8 + $0xdb0] sm:$0xff]
    %v768 = vld [vmem:[#allocation8 + $0xdb8] sm:$0xff]
    %v769 = vld [vmem:[#allocation8 + $0xdc0] sm:$0xff]
    %v770 = vld [vmem:[#allocation8 + $0xdc8] sm:$0xff]
    %v771 = vld [vmem:[#allocation8 + $0xdd0] sm:$0xff]
    %v772 = vld [vmem:[#allocation8 + $0xdd8] sm:$0xff]
    %v773 = vld [vmem:[#allocation8 + $0xde0] sm:$0xff]
    %v774 = vld [vmem:[#allocation8 + $0xde8] sm:$0xff]
    %v775 = vld [vmem:[#allocation8 + $0xdf0] sm:$0xff]
    %v776 = vld [vmem:[#allocation8 + $0xdf8] sm:$0xff]
    %v777 = vld [vmem:[#allocation8 + $0xe00] sm:$0xff]
    %v778 = vld [vmem:[#allocation8 + $0xe08] sm:$0xff]
    %v779 = vld [vmem:[#allocation8 + $0xe10] sm:$0xff]
    %v780 = vld [vmem:[#allocation8 + $0xe18] sm:$0xff]
    %v781 = vld [vmem:[#allocation8 + $0xe20] sm:$0xff]
    %v782 = vld [vmem:[#allocation8 + $0xe28] sm:$0xff]
    %v783 = vld [vmem:[#allocation8 + $0xe30] sm:$0xff]
    %v784 = vld [vmem:[#allocation8 + $0xe38] sm:$0xff]
    %v785 = vld [vmem:[#allocation8 + $0xe40] sm:$0xff]
    %v786 = vld [vmem:[#allocation8 + $0xe48] sm:$0xff]
    %v787 = vld [vmem:[#allocation8 + $0xe50] sm:$0xff]
    %v788 = vld [vmem:[#allocation8 + $0xe58] sm:$0xff]
    %v789 = vld [vmem:[#allocation8 + $0xe60] sm:$0xff]
    %v790 = vld [vmem:[#allocation8 + $0xe68] sm:$0xff]
    %v791 = vld [vmem:[#allocation8 + $0xe70] sm:$0xff]
    %v792 = vld [vmem:[#allocation8 + $0xe78] sm:$0xff]
    %v793 = vld [vmem:[#allocation8 + $0xe80] sm:$0xff]
    %v794 = vld [vmem:[#allocation8 + $0xe88] sm:$0xff]
    %v795 = vld [vmem:[#allocation8 + $0xe90] sm:$0xff]
    %v796 = vld [vmem:[#allocation8 + $0xe98] sm:$0xff]
    %v797 = vld [vmem:[#allocation8 + $0xea0] sm:$0xff]
    %v798 = vld [vmem:[#allocation8 + $0xea8] sm:$0xff]
    %v799 = vld [vmem:[#allocation8 + $0xeb0] sm:$0xff]
    %v800 = vld [vmem:[#allocation8 + $0xeb8] sm:$0xff]
    %v801 = vld [vmem:[#allocation8 + $0xec0] sm:$0xff]
    %v802 = vld [vmem:[#allocation8 + $0xec8] sm:$0xff]
    %v803 = vld [vmem:[#allocation8 + $0xed0] sm:$0xff]
    %v804 = vld [vmem:[#allocation8 + $0xed8] sm:$0xff]
    %v805 = vld [vmem:[#allocation8 + $0xee0] sm:$0xff]
    %v806 = vld [vmem:[#allocation8 + $0xee8] sm:$0xff]
    %v807 = vld [vmem:[#allocation8 + $0xef0] sm:$0xff]
    %v808 = vld [vmem:[#allocation8 + $0xef8] sm:$0xff]
    %v809 = vld [vmem:[#allocation8 + $0xf00] sm:$0xff]
    %v810 = vld [vmem:[#allocation8 + $0xf08] sm:$0xff]
    %v811 = vld [vmem:[#allocation8 + $0xf10] sm:$0xff]
    %v812 = vld [vmem:[#allocation8 + $0xf18] sm:$0xff]
    %v813 = vld [vmem:[#allocation8 + $0xf20] sm:$0xff]
    %v814 = vld [vmem:[#allocation8 + $0xf28] sm:$0xff]
    %v815 = vld [vmem:[#allocation8 + $0xf30] sm:$0xff]
    %v816 = vld [vmem:[#allocation8 + $0xf38] sm:$0xff]
    %v817 = vld [vmem:[#allocation8 + $0xf40] sm:$0xff]
    %v818 = vld [vmem:[#allocation8 + $0xf48] sm:$0xff]
    %v819 = vld [vmem:[#allocation8 + $0xf50] sm:$0xff]
    %v820 = vld [vmem:[#allocation8 + $0xf58] sm:$0xff]
    %v821 = vld [vmem:[#allocation8 + $0xf60] sm:$0xff]
    %v822 = vld [vmem:[#allocation8 + $0xf68] sm:$0xff]
    %v823 = vld [vmem:[#allocation8 + $0xf70] sm:$0xff]
    %v824 = vld [vmem:[#allocation8 + $0xf78] sm:$0xff]
    %v825 = vld [vmem:[#allocation8 + $0xf80] sm:$0xff]
    %v826 = vld [vmem:[#allocation8 + $0xf88] sm:$0xff]
    %v827 = vld [vmem:[#allocation8 + $0xf90] sm:$0xff]
    %v828 = vld [vmem:[#allocation8 + $0xf98] sm:$0xff]
    %v829 = vld [vmem:[#allocation8 + $0xfa0] sm:$0xff]
    %v830 = vld [vmem:[#allocation8 + $0xfa8] sm:$0xff]
    %v831 = vld [vmem:[#allocation8 + $0xfb0] sm:$0xff]
    %v832 = vld [vmem:[#allocation8 + $0xfb8] sm:$0xff]
    %v833 = vld [vmem:[#allocation8 + $0xfc0] sm:$0xff]
    %v834 = vld [vmem:[#allocation8 + $0xfc8] sm:$0xff]
    %v835 = vld [vmem:[#allocation8 + $0xfd0] sm:$0xff]
    %v836 = vld [vmem:[#allocation8 + $0xfd8] sm:$0xff]
    %v837 = vld [vmem:[#allocation8 + $0xfe0] sm:$0xff]
    %v838 = vld [vmem:[#allocation8 + $0xfe8] sm:$0xff]
    %v839 = vld [vmem:[#allocation8 + $0xff0] sm:$0xff]
    %v840 = vld [vmem:[#allocation8 + $0xff8] sm:$0xff]
    %v841 = vld [vmem:[#allocation8 + $0x1000] sm:$0xff]
    %v842 = vld [vmem:[#allocation8 + $0x1008] sm:$0xff]
    %v843 = vld [vmem:[#allocation8 + $0x1010] sm:$0xff]
    %v844 = vld [vmem:[#allocation8 + $0x1018] sm:$0xff]
    %v845 = vld [vmem:[#allocation8 + $0x1020] sm:$0xff]
    %v846 = vld [vmem:[#allocation8 + $0x1028] sm:$0xff]
    %v847 = vld [vmem:[#allocation8 + $0x1030] sm:$0xff]
    %v848 = vld [vmem:[#allocation8 + $0x1038] sm:$0xff]
    %v849 = vld [vmem:[#allocation8 + $0x1040] sm:$0xff]
    %v850 = vld [vmem:[#allocation8 + $0x1048] sm:$0xff]
    %v851 = vld [vmem:[#allocation8 + $0x1050] sm:$0xff]
    %v852 = vld [vmem:[#allocation8 + $0x1058] sm:$0xff]
    %v853 = vld [vmem:[#allocation8 + $0x1060] sm:$0xff]
    %v854 = vld [vmem:[#allocation8 + $0x1068] sm:$0xff]
    %v855 = vld [vmem:[#allocation8 + $0x1070] sm:$0xff]
    %v856 = vld [vmem:[#allocation8 + $0x1078] sm:$0xff]
    %v857 = vld [vmem:[#allocation8 + $0x1080] sm:$0xff]
    %v858 = vld [vmem:[#allocation8 + $0x1088] sm:$0xff]
    %v859 = vld [vmem:[#allocation8 + $0x1090] sm:$0xff]
    %v860 = vld [vmem:[#allocation8 + $0x1098] sm:$0xff]
    %v861 = vld [vmem:[#allocation8 + $0x10a0] sm:$0xff]
    %v862 = vld [vmem:[#allocation8 + $0x10a8] sm:$0xff]
    %v863 = vld [vmem:[#allocation8 + $0x10b0] sm:$0xff]
    %v864 = vld [vmem:[#allocation8 + $0x10b8] sm:$0xff]
    %v865 = vld [vmem:[#allocation8 + $0x10c0] sm:$0xff]
    %v866 = vld [vmem:[#allocation8 + $0x10c8] sm:$0xff]
    %v867 = vld [vmem:[#allocation8 + $0x10d0] sm:$0xff]
    %v868 = vld [vmem:[#allocation8 + $0x10d8] sm:$0xff]
    %v869 = vld [vmem:[#allocation8 + $0x10e0] sm:$0xff]
    %v870 = vld [vmem:[#allocation8 + $0x10e8] sm:$0xff]
    %v871 = vld [vmem:[#allocation8 + $0x10f0] sm:$0xff]
    %v872 = vld [vmem:[#allocation8 + $0x10f8] sm:$0xff]
    %v873 = vld [vmem:[#allocation8 + $0x1100] sm:$0xff]
    %v874 = vld [vmem:[#allocation8 + $0x1108] sm:$0xff]
    %v875 = vld [vmem:[#allocation8 + $0x1110] sm:$0xff]
    %v876 = vld [vmem:[#allocation8 + $0x1118] sm:$0xff]
    %v877 = vld [vmem:[#allocation8 + $0x1120] sm:$0xff]
    %v878 = vld [vmem:[#allocation8 + $0x1128] sm:$0xff]
    %v879 = vld [vmem:[#allocation8 + $0x1130] sm:$0xff]
    %v880 = vld [vmem:[#allocation8 + $0x1138] sm:$0xff]
    %v881 = vld [vmem:[#allocation8 + $0x1140] sm:$0xff]
    %v882 = vld [vmem:[#allocation8 + $0x1148] sm:$0xff]
    %v883 = vld [vmem:[#allocation8 + $0x1150] sm:$0xff]
    %v884 = vld [vmem:[#allocation8 + $0x1158] sm:$0xff]
    %v885 = vld [vmem:[#allocation8 + $0x1160] sm:$0xff]
    %v886 = vld [vmem:[#allocation8 + $0x1168] sm:$0xff]
    %v887 = vld [vmem:[#allocation8 + $0x1170] sm:$0xff]
    %v888 = vld [vmem:[#allocation8 + $0x1178] sm:$0xff]
    %v889 = vld [vmem:[#allocation8 + $0x1180] sm:$0xff]
    %v890 = vld [vmem:[#allocation8 + $0x1188] sm:$0xff]
    %v891 = vld [vmem:[#allocation8 + $0x1190] sm:$0xff]
    %v892 = vld [vmem:[#allocation8 + $0x1198] sm:$0xff]
    %v893 = vld [vmem:[#allocation8 + $0x11a0] sm:$0xff]
    %v894 = vld [vmem:[#allocation8 + $0x11a8] sm:$0xff]
    %v895 = vld [vmem:[#allocation8 + $0x11b0] sm:$0xff]
    %v896 = vld [vmem:[#allocation8 + $0x11b8] sm:$0xff]
    %v897 = vld [vmem:[#allocation8 + $0x11c0] sm:$0xff]
    %v898 = vld [vmem:[#allocation8 + $0x11c8] sm:$0xff]
    %v899 = vld [vmem:[#allocation8 + $0x11d0] sm:$0xff]
    %v900 = vld [vmem:[#allocation8 + $0x11d8] sm:$0xff]
    %v901 = vld [vmem:[#allocation8 + $0x11e0] sm:$0xff]
    %v902 = vld [vmem:[#allocation8 + $0x11e8] sm:$0xff]
    %v903 = vld [vmem:[#allocation8 + $0x11f0] sm:$0xff]
    %v904 = vld [vmem:[#allocation8 + $0x11f8] sm:$0xff]
    %v905 = vld [vmem:[#allocation8 + $0x1200] sm:$0xff]
    %v906 = vld [vmem:[#allocation8 + $0x1208] sm:$0xff]
    %v907 = vld [vmem:[#allocation8 + $0x1210] sm:$0xff]
    %v908 = vld [vmem:[#allocation8 + $0x1218] sm:$0xff]
    %v909 = vld [vmem:[#allocation8 + $0x1220] sm:$0xff]
    %v910 = vld [vmem:[#allocation8 + $0x1228] sm:$0xff]
    %v911 = vld [vmem:[#allocation8 + $0x1230] sm:$0xff]
    %v912 = vld [vmem:[#allocation8 + $0x1238] sm:$0xff]
    %v913 = vld [vmem:[#allocation8 + $0x1240] sm:$0xff]
    %v914 = vld [vmem:[#allocation8 + $0x1248] sm:$0xff]
    %v915 = vld [vmem:[#allocation8 + $0x1250] sm:$0xff]
    %v916 = vld [vmem:[#allocation8 + $0x1258] sm:$0xff]
    %v917 = vld [vmem:[#allocation8 + $0x1260] sm:$0xff]
    %v918 = vld [vmem:[#allocation8 + $0x1268] sm:$0xff]
    %v919 = vld [vmem:[#allocation8 + $0x1270] sm:$0xff]
    %v920 = vld [vmem:[#allocation8 + $0x1278] sm:$0xff]
    %v921 = vld [vmem:[#allocation8 + $0x1280] sm:$0xff]
    %v922 = vld [vmem:[#allocation8 + $0x1288] sm:$0xff]
    %v923 = vld [vmem:[#allocation8 + $0x1290] sm:$0xff]
    %v924 = vld [vmem:[#allocation8 + $0x1298] sm:$0xff]
    %v925 = vld [vmem:[#allocation8 + $0x12a0] sm:$0xff]
    %v926 = vld [vmem:[#allocation8 + $0x12a8] sm:$0xff]
    %v927 = vld [vmem:[#allocation8 + $0x12b0] sm:$0xff]
    %v928 = vld [vmem:[#allocation8 + $0x12b8] sm:$0xff]
    %v929 = vld [vmem:[#allocation8 + $0x12c0] sm:$0xff]
    %v930 = vld [vmem:[#allocation8 + $0x12c8] sm:$0xff]
    %v931 = vld [vmem:[#allocation8 + $0x12d0] sm:$0xff]
    %v932 = vld [vmem:[#allocation8 + $0x12d8] sm:$0xff]
    %v933 = vld [vmem:[#allocation8 + $0x12e0] sm:$0xff]
    %v934 = vld [vmem:[#allocation8 + $0x12e8] sm:$0xff]
    %v935 = vld [vmem:[#allocation8 + $0x12f0] sm:$0xff]
    %v936 = vld [vmem:[#allocation8 + $0x12f8] sm:$0xff]
    %v937 = vld [vmem:[#allocation8 + $0x1300] sm:$0xff]
    %v938 = vld [vmem:[#allocation8 + $0x1308] sm:$0xff]
    %v939 = vld [vmem:[#allocation8 + $0x1310] sm:$0xff]
    %v940 = vld [vmem:[#allocation8 + $0x1318] sm:$0xff]
    %v941 = vld [vmem:[#allocation8 + $0x1320] sm:$0xff]
    %v942 = vld [vmem:[#allocation8 + $0x1328] sm:$0xff]
    %v943 = vld [vmem:[#allocation8 + $0x1330] sm:$0xff]
    %v944 = vld [vmem:[#allocation8 + $0x1338] sm:$0xff]
    %v945 = vld [vmem:[#allocation8 + $0x1340] sm:$0xff]
    %v946 = vld [vmem:[#allocation8 + $0x1348] sm:$0xff]
    %v947 = vld [vmem:[#allocation8 + $0x1350] sm:$0xff]
    %v948 = vld [vmem:[#allocation8 + $0x1358] sm:$0xff]
    %v949 = vld [vmem:[#allocation8 + $0x1360] sm:$0xff]
    %v950 = vld [vmem:[#allocation8 + $0x1368] sm:$0xff]
    %v951 = vld [vmem:[#allocation8 + $0x1370] sm:$0xff]
    %v952 = vld [vmem:[#allocation8 + $0x1378] sm:$0xff]
    %v953 = vld [vmem:[#allocation8 + $0x1380] sm:$0xff]
    %v954 = vld [vmem:[#allocation8 + $0x1388] sm:$0xff]
    %v955 = vld [vmem:[#allocation8 + $0x1390] sm:$0xff]
    %v956 = vld [vmem:[#allocation8 + $0x1398] sm:$0xff]
    %v957 = vld [vmem:[#allocation8 + $0x13a0] sm:$0xff]
    %v958 = vld [vmem:[#allocation8 + $0x13a8] sm:$0xff]
    %v959 = vld [vmem:[#allocation8 + $0x13b0] sm:$0xff]
    %v960 = vld [vmem:[#allocation8 + $0x13b8] sm:$0xff]
    %v961 = vld [vmem:[#allocation8 + $0x13c0] sm:$0xff]
    %v962 = vld [vmem:[#allocation8 + $0x13c8] sm:$0xff]
    %v963 = vld [vmem:[#allocation8 + $0x13d0] sm:$0xff]
    %v964 = vld [vmem:[#allocation8 + $0x13d8] sm:$0xff]
    %v965 = vld [vmem:[#allocation8 + $0x13e0] sm:$0xff]
    %v966 = vld [vmem:[#allocation8 + $0x13e8] sm:$0xff]
    %v967 = vld [vmem:[#allocation8 + $0x13f0] sm:$0xff]
    %v968 = vld [vmem:[#allocation8 + $0x13f8] sm:$0xff]
    %v969 = vld [vmem:[#allocation8 + $0x1400] sm:$0xff]
    %v970 = vld [vmem:[#allocation8 + $0x1408] sm:$0xff]
    %v971 = vld [vmem:[#allocation8 + $0x1410] sm:$0xff]
    %v972 = vld [vmem:[#allocation8 + $0x1418] sm:$0xff]
    %v973 = vld [vmem:[#allocation8 + $0x1420] sm:$0xff]
    %v974 = vld [vmem:[#allocation8 + $0x1428] sm:$0xff]
    %v975 = vld [vmem:[#allocation8 + $0x1430] sm:$0xff]
    %v976 = vld [vmem:[#allocation8 + $0x1438] sm:$0xff]
    %v977 = vld [vmem:[#allocation8 + $0x1440] sm:$0xff]
    %v978 = vld [vmem:[#allocation8 + $0x1448] sm:$0xff]
    %v979 = vld [vmem:[#allocation8 + $0x1450] sm:$0xff]
    %v980 = vld [vmem:[#allocation8 + $0x1458] sm:$0xff]
    %v981 = vld [vmem:[#allocation8 + $0x1460] sm:$0xff]
    %v982 = vld [vmem:[#allocation8 + $0x1468] sm:$0xff]
    %v983 = vld [vmem:[#allocation8 + $0x1470] sm:$0xff]
    %v984 = vld [vmem:[#allocation8 + $0x1478] sm:$0xff]
    %v985 = vld [vmem:[#allocation8 + $0x1480] sm:$0xff]
    %v986 = vld [vmem:[#allocation8 + $0x1488] sm:$0xff]
    %v987 = vld [vmem:[#allocation8 + $0x1490] sm:$0xff]
    %v988 = vld [vmem:[#allocation8 + $0x1498] sm:$0xff]
    %v989 = vld [vmem:[#allocation8 + $0x14a0] sm:$0xff]
    %v990 = vld [vmem:[#allocation8 + $0x14a8] sm:$0xff]
    %v991 = vld [vmem:[#allocation8 + $0x14b0] sm:$0xff]
    %v992 = vld [vmem:[#allocation8 + $0x14b8] sm:$0xff]
    %v993 = vld [vmem:[#allocation8 + $0x14c0] sm:$0xff]
    %v994 = vld [vmem:[#allocation8 + $0x14c8] sm:$0xff]
    %v995 = vld [vmem:[#allocation8 + $0x14d0] sm:$0xff]
    %v996 = vld [vmem:[#allocation8 + $0x14d8] sm:$0xff]
    %v997 = vld [vmem:[#allocation8 + $0x14e0] sm:$0xff]
    %v998 = vld [vmem:[#allocation8 + $0x14e8] sm:$0xff]
    %v999 = vld [vmem:[#allocation8 + $0x14f0] sm:$0xff]
    %v1000 = vld [vmem:[#allocation8 + $0x14f8] sm:$0xff]
    %v1008 = vunpack.c.l.b16 %v322
    %v1009 = vunpack.c.h.b16 %v322
    %v1010 = vunpack.c.l.b16 %v323
    %v1011 = vunpack.c.h.b16 %v323
    %v1012 = vunpack.c.l.b16 %v324
    %v1013 = vunpack.c.h.b16 %v324
    %v1014 = vunpack.c.l.b16 %v325
    %v1015 = vunpack.c.h.b16 %v325
    %v1016 = vunpack.c.l.b16 %v326
    %v1017 = vunpack.c.h.b16 %v326
    %v1018 = vunpack.c.l.b16 %v327
    %v1019 = vunpack.c.h.b16 %v327
    %v1020 = vunpack.c.l.b16 %v328
    %v1021 = vunpack.c.h.b16 %v328
    %v1022 = vpack.c.b16 %v1008, %v1008
    %v1023 = vpack.c.b16 %v1009, %v1009
    %v1024 = vpack.c.b16 %v1010, %v1010
    %v1025 = vpack.c.b16 %v1011, %v1011
    %v1026 = vpack.c.b16 %v1012, %v1012
    %v1027 = vpack.c.b16 %v1013, %v1013
    %v1028 = vpack.c.b16 %v1014, %v1014
    %v1029 = vpack.c.b16 %v1015, %v1015
    %v1030 = vpack.c.b16 %v1016, %v1016
    %v1031 = vpack.c.b16 %v1017, %v1017
    %v1032 = vpack.c.b16 %v1018, %v1018
    %v1033 = vpack.c.b16 %v1019, %v1019
    %v1034 = vpack.c.b16 %v1020, %v1020
    %v1035 = vpack.c.b16 %v1021, %v1021
    %v1722 = vunpack.c.l.b16 %v329
    %v1723 = vunpack.c.h.b16 %v329
    %v1724 = vunpack.c.l.b16 %v330
    %v1725 = vunpack.c.h.b16 %v330
    %v1726 = vunpack.c.l.b16 %v331
    %v1727 = vunpack.c.h.b16 %v331
    %v1728 = vunpack.c.l.b16 %v332
    %v1729 = vunpack.c.h.b16 %v332
    %v1730 = vunpack.c.l.b16 %v333
    %v1731 = vunpack.c.h.b16 %v333
    %v1732 = vunpack.c.l.b16 %v334
    %v1733 = vunpack.c.h.b16 %v334
    %v1734 = vunpack.c.l.b16 %v335
    %v1735 = vunpack.c.h.b16 %v335
    %v1736 = vunpack.c.l.b16 %v336
    %v1737 = vunpack.c.h.b16 %v336
    %v1738 = vunpack.c.l.b16 %v337
    %v1739 = vunpack.c.h.b16 %v337
    %v1740 = vunpack.c.l.b16 %v338
    %v1741 = vunpack.c.h.b16 %v338
    %v1742 = vunpack.c.l.b16 %v339
    %v1743 = vunpack.c.h.b16 %v339
    %v1744 = vunpack.c.l.b16 %v340
    %v1745 = vunpack.c.h.b16 %v340
    %v1746 = vunpack.c.l.b16 %v341
    %v1747 = vunpack.c.h.b16 %v341
    %v1748 = vunpack.c.l.b16 %v342
    %v1749 = vunpack.c.h.b16 %v342
    %v1750 = vunpack.c.l.b16 %v343
    %v1751 = vunpack.c.h.b16 %v343
    %v1752 = vunpack.c.l.b16 %v344
    %v1753 = vunpack.c.h.b16 %v344
    %v1754 = vunpack.c.l.b16 %v345
    %v1755 = vunpack.c.h.b16 %v345
    %v1756 = vunpack.c.l.b16 %v346
    %v1757 = vunpack.c.h.b16 %v346
    %v1758 = vunpack.c.l.b16 %v347
    %v1759 = vunpack.c.h.b16 %v347
    %v1760 = vunpack.c.l.b16 %v348
    %v1761 = vunpack.c.h.b16 %v348
    %v1762 = vunpack.c.l.b16 %v349
    %v1763 = vunpack.c.h.b16 %v349
    %v1764 = vunpack.c.l.b16 %v350
    %v1765 = vunpack.c.h.b16 %v350
    %v1766 = vunpack.c.l.b16 %v351
    %v1767 = vunpack.c.h.b16 %v351
    %v1768 = vunpack.c.l.b16 %v352
    %v1769 = vunpack.c.h.b16 %v352
    %v1770 = vunpack.c.l.b16 %v353
    %v1771 = vunpack.c.h.b16 %v353
    %v1772 = vunpack.c.l.b16 %v354
    %v1773 = vunpack.c.h.b16 %v354
    %v1774 = vunpack.c.l.b16 %v355
    %v1775 = vunpack.c.h.b16 %v355
    %v1776 = vunpack.c.l.b16 %v356
    %v1777 = vunpack.c.h.b16 %v356
    %v1778 = vunpack.c.l.b16 %v357
    %v1779 = vunpack.c.h.b16 %v357
    %v1780 = vunpack.c.l.b16 %v358
    %v1781 = vunpack.c.h.b16 %v358
    %v1782 = vunpack.c.l.b16 %v359
    %v1783 = vunpack.c.h.b16 %v359
    %v1784 = vunpack.c.l.b16 %v360
    %v1785 = vunpack.c.h.b16 %v360
    %v1786 = vunpack.c.l.b16 %v361
    %v1787 = vunpack.c.h.b16 %v361
    %v1788 = vunpack.c.l.b16 %v362
    %v1789 = vunpack.c.h.b16 %v362
    %v1790 = vunpack.c.l.b16 %v363
    %v1791 = vunpack.c.h.b16 %v363
    %v1792 = vunpack.c.l.b16 %v364
    %v1793 = vunpack.c.h.b16 %v364
    %v1794 = vunpack.c.l.b16 %v365
    %v1795 = vunpack.c.h.b16 %v365
    %v1796 = vunpack.c.l.b16 %v366
    %v1797 = vunpack.c.h.b16 %v366
    %v1798 = vunpack.c.l.b16 %v367
    %v1799 = vunpack.c.h.b16 %v367
    %v1800 = vunpack.c.l.b16 %v368
    %v1801 = vunpack.c.h.b16 %v368
    %v1802 = vunpack.c.l.b16 %v369
    %v1803 = vunpack.c.h.b16 %v369
    %v1804 = vunpack.c.l.b16 %v370
    %v1805 = vunpack.c.h.b16 %v370
    %v1806 = vunpack.c.l.b16 %v371
    %v1807 = vunpack.c.h.b16 %v371
    %v1808 = vunpack.c.l.b16 %v372
    %v1809 = vunpack.c.h.b16 %v372
    %v1810 = vunpack.c.l.b16 %v373
    %v1811 = vunpack.c.h.b16 %v373
    %v1812 = vunpack.c.l.b16 %v374
    %v1813 = vunpack.c.h.b16 %v374
    %v1814 = vunpack.c.l.b16 %v375
    %v1815 = vunpack.c.h.b16 %v375
    %v1816 = vunpack.c.l.b16 %v376
    %v1817 = vunpack.c.h.b16 %v376
    %v1818 = vunpack.c.l.b16 %v377
    %v1819 = vunpack.c.h.b16 %v377
    %v1820 = vunpack.c.l.b16 %v378
    %v1821 = vunpack.c.h.b16 %v378
    %v1822 = vunpack.c.l.b16 %v379
    %v1823 = vunpack.c.h.b16 %v379
    %v1824 = vunpack.c.l.b16 %v380
    %v1825 = vunpack.c.h.b16 %v380
    %v1826 = vunpack.c.l.b16 %v381
    %v1827 = vunpack.c.h.b16 %v381
    %v1828 = vunpack.c.l.b16 %v382
    %v1829 = vunpack.c.h.b16 %v382
    %v1830 = vunpack.c.l.b16 %v383
    %v1831 = vunpack.c.h.b16 %v383
    %v1832 = vunpack.c.l.b16 %v384
    %v1833 = vunpack.c.h.b16 %v384
    %v1834 = vunpack.c.l.b16 %v385
    %v1835 = vunpack.c.h.b16 %v385
    %v1836 = vunpack.c.l.b16 %v386
    %v1837 = vunpack.c.h.b16 %v386
    %v1838 = vunpack.c.l.b16 %v387
    %v1839 = vunpack.c.h.b16 %v387
    %v1840 = vunpack.c.l.b16 %v388
    %v1841 = vunpack.c.h.b16 %v388
    %v1842 = vunpack.c.l.b16 %v389
    %v1843 = vunpack.c.h.b16 %v389
    %v1844 = vunpack.c.l.b16 %v390
    %v1845 = vunpack.c.h.b16 %v390
    %v1846 = vunpack.c.l.b16 %v391
    %v1847 = vunpack.c.h.b16 %v391
    %v1848 = vunpack.c.l.b16 %v392
    %v1849 = vunpack.c.h.b16 %v392
    %v1850 = vunpack.c.l.b16 %v393
    %v1851 = vunpack.c.h.b16 %v393
    %v1852 = vunpack.c.l.b16 %v394
    %v1853 = vunpack.c.h.b16 %v394
    %v1854 = vunpack.c.l.b16 %v395
    %v1855 = vunpack.c.h.b16 %v395
    %v1856 = vunpack.c.l.b16 %v396
    %v1857 = vunpack.c.h.b16 %v396
    %v1858 = vunpack.c.l.b16 %v397
    %v1859 = vunpack.c.h.b16 %v397
    %v1860 = vunpack.c.l.b16 %v398
    %v1861 = vunpack.c.h.b16 %v398
    %v1862 = vunpack.c.l.b16 %v399
    %v1863 = vunpack.c.h.b16 %v399
    %v1864 = vunpack.c.l.b16 %v400
    %v1865 = vunpack.c.h.b16 %v400
    %v1866 = vunpack.c.l.b16 %v401
    %v1867 = vunpack.c.h.b16 %v401
    %v1868 = vunpack.c.l.b16 %v402
    %v1869 = vunpack.c.h.b16 %v402
    %v1870 = vunpack.c.l.b16 %v403
    %v1871 = vunpack.c.h.b16 %v403
    %v1872 = vunpack.c.l.b16 %v404
    %v1873 = vunpack.c.h.b16 %v404
    %v1874 = vunpack.c.l.b16 %v405
    %v1875 = vunpack.c.h.b16 %v405
    %v1876 = vunpack.c.l.b16 %v406
    %v1877 = vunpack.c.h.b16 %v406
    %v1878 = vunpack.c.l.b16 %v407
    %v1879 = vunpack.c.h.b16 %v407
    %v1880 = vunpack.c.l.b16 %v408
    %v1881 = vunpack.c.h.b16 %v408
    %v1882 = vunpack.c.l.b16 %v409
    %v1883 = vunpack.c.h.b16 %v409
    %v1884 = vunpack.c.l.b16 %v410
    %v1885 = vunpack.c.h.b16 %v410
    %v1886 = vunpack.c.l.b16 %v411
    %v1887 = vunpack.c.h.b16 %v411
    %v1888 = vunpack.c.l.b16 %v412
    %v1889 = vunpack.c.h.b16 %v412
    %v1890 = vunpack.c.l.b16 %v413
    %v1891 = vunpack.c.h.b16 %v413
    %v1892 = vunpack.c.l.b16 %v414
    %v1893 = vunpack.c.h.b16 %v414
    %v1894 = vunpack.c.l.b16 %v415
    %v1895 = vunpack.c.h.b16 %v415
    %v1896 = vunpack.c.l.b16 %v416
    %v1897 = vunpack.c.h.b16 %v416
    %v1898 = vunpack.c.l.b16 %v417
    %v1899 = vunpack.c.h.b16 %v417
    %v1900 = vunpack.c.l.b16 %v418
    %v1901 = vunpack.c.h.b16 %v418
    %v1902 = vunpack.c.l.b16 %v419
    %v1903 = vunpack.c.h.b16 %v419
    %v1904 = vunpack.c.l.b16 %v420
    %v1905 = vunpack.c.h.b16 %v420
    %v1906 = vunpack.c.l.b16 %v421
    %v1907 = vunpack.c.h.b16 %v421
    %v1908 = vunpack.c.l.b16 %v422
    %v1909 = vunpack.c.h.b16 %v422
    %v1910 = vunpack.c.l.b16 %v423
    %v1911 = vunpack.c.h.b16 %v423
    %v1912 = vunpack.c.l.b16 %v424
    %v1913 = vunpack.c.h.b16 %v424
    %v1914 = vunpack.c.l.b16 %v425
    %v1915 = vunpack.c.h.b16 %v425
    %v1916 = vunpack.c.l.b16 %v426
    %v1917 = vunpack.c.h.b16 %v426
    %v1918 = vunpack.c.l.b16 %v427
    %v1919 = vunpack.c.h.b16 %v427
    %v1920 = vunpack.c.l.b16 %v428
    %v1921 = vunpack.c.h.b16 %v428
    %v1922 = vunpack.c.l.b16 %v429
    %v1923 = vunpack.c.h.b16 %v429
    %v1924 = vunpack.c.l.b16 %v430
    %v1925 = vunpack.c.h.b16 %v430
    %v1926 = vunpack.c.l.b16 %v431
    %v1927 = vunpack.c.h.b16 %v431
    %v1928 = vunpack.c.l.b16 %v432
    %v1929 = vunpack.c.h.b16 %v432
    %v1930 = vunpack.c.l.b16 %v433
    %v1931 = vunpack.c.h.b16 %v433
    %v1932 = vunpack.c.l.b16 %v434
    %v1933 = vunpack.c.h.b16 %v434
    %v1934 = vunpack.c.l.b16 %v435
    %v1935 = vunpack.c.h.b16 %v435
    %v1936 = vunpack.c.l.b16 %v436
    %v1937 = vunpack.c.h.b16 %v436
    %v1938 = vunpack.c.l.b16 %v437
    %v1939 = vunpack.c.h.b16 %v437
    %v1940 = vunpack.c.l.b16 %v438
    %v1941 = vunpack.c.h.b16 %v438
    %v1942 = vunpack.c.l.b16 %v439
    %v1943 = vunpack.c.h.b16 %v439
    %v1944 = vunpack.c.l.b16 %v440
    %v1945 = vunpack.c.h.b16 %v440
    %v1946 = vunpack.c.l.b16 %v441
    %v1947 = vunpack.c.h.b16 %v441
    %v1948 = vunpack.c.l.b16 %v442
    %v1949 = vunpack.c.h.b16 %v442
    %v1950 = vunpack.c.l.b16 %v443
    %v1951 = vunpack.c.h.b16 %v443
    %v1952 = vunpack.c.l.b16 %v444
    %v1953 = vunpack.c.h.b16 %v444
    %v1954 = vunpack.c.l.b16 %v445
    %v1955 = vunpack.c.h.b16 %v445
    %v1956 = vunpack.c.l.b16 %v446
    %v1957 = vunpack.c.h.b16 %v446
    %v1958 = vunpack.c.l.b16 %v447
    %v1959 = vunpack.c.h.b16 %v447
    %v1960 = vunpack.c.l.b16 %v448
    %v1961 = vunpack.c.h.b16 %v448
    %v1962 = vunpack.c.l.b16 %v449
    %v1963 = vunpack.c.h.b16 %v449
    %v1964 = vunpack.c.l.b16 %v450
    %v1965 = vunpack.c.h.b16 %v450
    %v1966 = vunpack.c.l.b16 %v451
    %v1967 = vunpack.c.h.b16 %v451
    %v1968 = vunpack.c.l.b16 %v452
    %v1969 = vunpack.c.h.b16 %v452
    %v1970 = vunpack.c.l.b16 %v453
    %v1971 = vunpack.c.h.b16 %v453
    %v1972 = vunpack.c.l.b16 %v454
    %v1973 = vunpack.c.h.b16 %v454
    %v1974 = vunpack.c.l.b16 %v455
    %v1975 = vunpack.c.h.b16 %v455
    %v1976 = vunpack.c.l.b16 %v456
    %v1977 = vunpack.c.h.b16 %v456
    %v1978 = vunpack.c.l.b16 %v457
    %v1979 = vunpack.c.h.b16 %v457
    %v1980 = vunpack.c.l.b16 %v458
    %v1981 = vunpack.c.h.b16 %v458
    %v1982 = vunpack.c.l.b16 %v459
    %v1983 = vunpack.c.h.b16 %v459
    %v1984 = vunpack.c.l.b16 %v460
    %v1985 = vunpack.c.h.b16 %v460
    %v1986 = vunpack.c.l.b16 %v461
    %v1987 = vunpack.c.h.b16 %v461
    %v1988 = vunpack.c.l.b16 %v462
    %v1989 = vunpack.c.h.b16 %v462
    %v1990 = vunpack.c.l.b16 %v463
    %v1991 = vunpack.c.h.b16 %v463
    %v1992 = vunpack.c.l.b16 %v464
    %v1993 = vunpack.c.h.b16 %v464
    %v1994 = vunpack.c.l.b16 %v465
    %v1995 = vunpack.c.h.b16 %v465
    %v1996 = vunpack.c.l.b16 %v466
    %v1997 = vunpack.c.h.b16 %v466
    %v1998 = vunpack.c.l.b16 %v467
    %v1999 = vunpack.c.h.b16 %v467
    %v2000 = vunpack.c.l.b16 %v468
    %v2001 = vunpack.c.h.b16 %v468
    %v2002 = vunpack.c.l.b16 %v469
    %v2003 = vunpack.c.h.b16 %v469
    %v2004 = vunpack.c.l.b16 %v470
    %v2005 = vunpack.c.h.b16 %v470
    %v2006 = vunpack.c.l.b16 %v471
    %v2007 = vunpack.c.h.b16 %v471
    %v2008 = vunpack.c.l.b16 %v472
    %v2009 = vunpack.c.h.b16 %v472
    %v2010 = vunpack.c.l.b16 %v473
    %v2011 = vunpack.c.h.b16 %v473
    %v2012 = vunpack.c.l.b16 %v474
    %v2013 = vunpack.c.h.b16 %v474
    %v2014 = vunpack.c.l.b16 %v475
    %v2015 = vunpack.c.h.b16 %v475
    %v2016 = vunpack.c.l.b16 %v476
    %v2017 = vunpack.c.h.b16 %v476
    %v2018 = vunpack.c.l.b16 %v477
    %v2019 = vunpack.c.h.b16 %v477
    %v2020 = vunpack.c.l.b16 %v478
    %v2021 = vunpack.c.h.b16 %v478
    %v2022 = vunpack.c.l.b16 %v479
    %v2023 = vunpack.c.h.b16 %v479
    %v2024 = vunpack.c.l.b16 %v480
    %v2025 = vunpack.c.h.b16 %v480
    %v2026 = vunpack.c.l.b16 %v481
    %v2027 = vunpack.c.h.b16 %v481
    %v2028 = vunpack.c.l.b16 %v482
    %v2029 = vunpack.c.h.b16 %v482
    %v2030 = vunpack.c.l.b16 %v483
    %v2031 = vunpack.c.h.b16 %v483
    %v2032 = vunpack.c.l.b16 %v484
    %v2033 = vunpack.c.h.b16 %v484
    %v2034 = vunpack.c.l.b16 %v485
    %v2035 = vunpack.c.h.b16 %v485
    %v2036 = vunpack.c.l.b16 %v486
    %v2037 = vunpack.c.h.b16 %v486
    %v2038 = vunpack.c.l.b16 %v487
    %v2039 = vunpack.c.h.b16 %v487
    %v2040 = vunpack.c.l.b16 %v488
    %v2041 = vunpack.c.h.b16 %v488
    %v2042 = vunpack.c.l.b16 %v489
    %v2043 = vunpack.c.h.b16 %v489
    %v2044 = vunpack.c.l.b16 %v490
    %v2045 = vunpack.c.h.b16 %v490
    %v2046 = vunpack.c.l.b16 %v491
    %v2047 = vunpack.c.h.b16 %v491
    %v2048 = vunpack.c.l.b16 %v492
    %v2049 = vunpack.c.h.b16 %v492
    %v2050 = vunpack.c.l.b16 %v493
    %v2051 = vunpack.c.h.b16 %v493
    %v2052 = vunpack.c.l.b16 %v494
    %v2053 = vunpack.c.h.b16 %v494
    %v2054 = vunpack.c.l.b16 %v495
    %v2055 = vunpack.c.h.b16 %v495
    %v2056 = vunpack.c.l.b16 %v496
    %v2057 = vunpack.c.h.b16 %v496
    %v2058 = vunpack.c.l.b16 %v497
    %v2059 = vunpack.c.h.b16 %v497
    %v2060 = vunpack.c.l.b16 %v498
    %v2061 = vunpack.c.h.b16 %v498
    %v2062 = vunpack.c.l.b16 %v499
    %v2063 = vunpack.c.h.b16 %v499
    %v2064 = vunpack.c.l.b16 %v500
    %v2065 = vunpack.c.h.b16 %v500
    %v2066 = vunpack.c.l.b16 %v501
    %v2067 = vunpack.c.h.b16 %v501
    %v2068 = vunpack.c.l.b16 %v502
    %v2069 = vunpack.c.h.b16 %v502
    %v2070 = vunpack.c.l.b16 %v503
    %v2071 = vunpack.c.h.b16 %v503
    %v2072 = vunpack.c.l.b16 %v504
    %v2073 = vunpack.c.h.b16 %v504
    %v2074 = vunpack.c.l.b16 %v505
    %v2075 = vunpack.c.h.b16 %v505
    %v2076 = vunpack.c.l.b16 %v506
    %v2077 = vunpack.c.h.b16 %v506
    %v2078 = vunpack.c.l.b16 %v507
    %v2079 = vunpack.c.h.b16 %v507
    %v2080 = vunpack.c.l.b16 %v508
    %v2081 = vunpack.c.h.b16 %v508
    %v2082 = vunpack.c.l.b16 %v509
    %v2083 = vunpack.c.h.b16 %v509
    %v2084 = vunpack.c.l.b16 %v510
    %v2085 = vunpack.c.h.b16 %v510
    %v2086 = vunpack.c.l.b16 %v511
    %v2087 = vunpack.c.h.b16 %v511
    %v2088 = vunpack.c.l.b16 %v512
    %v2089 = vunpack.c.h.b16 %v512
    %v2090 = vunpack.c.l.b16 %v513
    %v2091 = vunpack.c.h.b16 %v513
    %v2092 = vunpack.c.l.b16 %v514
    %v2093 = vunpack.c.h.b16 %v514
    %v2094 = vunpack.c.l.b16 %v515
    %v2095 = vunpack.c.h.b16 %v515
    %v2096 = vunpack.c.l.b16 %v516
    %v2097 = vunpack.c.h.b16 %v516
    %v2098 = vunpack.c.l.b16 %v517
    %v2099 = vunpack.c.h.b16 %v517
    %v2100 = vunpack.c.l.b16 %v518
    %v2101 = vunpack.c.h.b16 %v518
    %v2102 = vunpack.c.l.b16 %v519
    %v2103 = vunpack.c.h.b16 %v519
    %v2104 = vunpack.c.l.b16 %v520
    %v2105 = vunpack.c.h.b16 %v520
    %v2106 = vunpack.c.l.b16 %v521
    %v2107 = vunpack.c.h.b16 %v521
    %v2108 = vunpack.c.l.b16 %v522
    %v2109 = vunpack.c.h.b16 %v522
    %v2110 = vunpack.c.l.b16 %v523
    %v2111 = vunpack.c.h.b16 %v523
    %v2112 = vunpack.c.l.b16 %v524
    %v2113 = vunpack.c.h.b16 %v524
    %v2114 = vunpack.c.l.b16 %v525
    %v2115 = vunpack.c.h.b16 %v525
    %v2116 = vunpack.c.l.b16 %v526
    %v2117 = vunpack.c.h.b16 %v526
    %v2118 = vunpack.c.l.b16 %v527
    %v2119 = vunpack.c.h.b16 %v527
    %v2120 = vunpack.c.l.b16 %v528
    %v2121 = vunpack.c.h.b16 %v528
    %v2122 = vunpack.c.l.b16 %v529
    %v2123 = vunpack.c.h.b16 %v529
    %v2124 = vunpack.c.l.b16 %v530
    %v2125 = vunpack.c.h.b16 %v530
    %v2126 = vunpack.c.l.b16 %v531
    %v2127 = vunpack.c.h.b16 %v531
    %v2128 = vunpack.c.l.b16 %v532
    %v2129 = vunpack.c.h.b16 %v532
    %v2130 = vunpack.c.l.b16 %v533
    %v2131 = vunpack.c.h.b16 %v533
    %v2132 = vunpack.c.l.b16 %v534
    %v2133 = vunpack.c.h.b16 %v534
    %v2134 = vunpack.c.l.b16 %v535
    %v2135 = vunpack.c.h.b16 %v535
    %v2136 = vunpack.c.l.b16 %v536
    %v2137 = vunpack.c.h.b16 %v536
    %v2138 = vunpack.c.l.b16 %v537
    %v2139 = vunpack.c.h.b16 %v537
    %v2140 = vunpack.c.l.b16 %v538
    %v2141 = vunpack.c.h.b16 %v538
    %v2142 = vunpack.c.l.b16 %v539
    %v2143 = vunpack.c.h.b16 %v539
    %v2144 = vunpack.c.l.b16 %v540
    %v2145 = vunpack.c.h.b16 %v540
    %v2146 = vunpack.c.l.b16 %v541
    %v2147 = vunpack.c.h.b16 %v541
    %v2148 = vunpack.c.l.b16 %v542
    %v2149 = vunpack.c.h.b16 %v542
    %v2150 = vunpack.c.l.b16 %v543
    %v2151 = vunpack.c.h.b16 %v543
    %v2152 = vunpack.c.l.b16 %v544
    %v2153 = vunpack.c.h.b16 %v544
    %v2154 = vunpack.c.l.b16 %v545
    %v2155 = vunpack.c.h.b16 %v545
    %v2156 = vunpack.c.l.b16 %v546
    %v2157 = vunpack.c.h.b16 %v546
    %v2158 = vunpack.c.l.b16 %v547
    %v2159 = vunpack.c.h.b16 %v547
    %v2160 = vunpack.c.l.b16 %v548
    %v2161 = vunpack.c.h.b16 %v548
    %v2162 = vunpack.c.l.b16 %v549
    %v2163 = vunpack.c.h.b16 %v549
    %v2164 = vunpack.c.l.b16 %v550
    %v2165 = vunpack.c.h.b16 %v550
    %v2166 = vunpack.c.l.b16 %v551
    %v2167 = vunpack.c.h.b16 %v551
    %v2168 = vunpack.c.l.b16 %v552
    %v2169 = vunpack.c.h.b16 %v552
    %v2170 = vunpack.c.l.b16 %v553
    %v2171 = vunpack.c.h.b16 %v553
    %v2172 = vunpack.c.l.b16 %v554
    %v2173 = vunpack.c.h.b16 %v554
    %v2174 = vunpack.c.l.b16 %v555
    %v2175 = vunpack.c.h.b16 %v555
    %v2176 = vunpack.c.l.b16 %v556
    %v2177 = vunpack.c.h.b16 %v556
    %v2178 = vunpack.c.l.b16 %v557
    %v2179 = vunpack.c.h.b16 %v557
    %v2180 = vunpack.c.l.b16 %v558
    %v2181 = vunpack.c.h.b16 %v558
    %v2182 = vunpack.c.l.b16 %v559
    %v2183 = vunpack.c.h.b16 %v559
    %v2184 = vunpack.c.l.b16 %v560
    %v2185 = vunpack.c.h.b16 %v560
    %v2186 = vunpack.c.l.b16 %v561
    %v2187 = vunpack.c.h.b16 %v561
    %v2188 = vunpack.c.l.b16 %v562
    %v2189 = vunpack.c.h.b16 %v562
    %v2190 = vunpack.c.l.b16 %v563
    %v2191 = vunpack.c.h.b16 %v563
    %v2192 = vunpack.c.l.b16 %v564
    %v2193 = vunpack.c.h.b16 %v564
    %v2194 = vunpack.c.l.b16 %v565
    %v2195 = vunpack.c.h.b16 %v565
    %v2196 = vunpack.c.l.b16 %v566
    %v2197 = vunpack.c.h.b16 %v566
    %v2198 = vunpack.c.l.b16 %v567
    %v2199 = vunpack.c.h.b16 %v567
    %v2200 = vunpack.c.l.b16 %v568
    %v2201 = vunpack.c.h.b16 %v568
    %v2202 = vunpack.c.l.b16 %v569
    %v2203 = vunpack.c.h.b16 %v569
    %v2204 = vunpack.c.l.b16 %v570
    %v2205 = vunpack.c.h.b16 %v570
    %v2206 = vunpack.c.l.b16 %v571
    %v2207 = vunpack.c.h.b16 %v571
    %v2208 = vunpack.c.l.b16 %v572
    %v2209 = vunpack.c.h.b16 %v572
    %v2210 = vunpack.c.l.b16 %v573
    %v2211 = vunpack.c.h.b16 %v573
    %v2212 = vunpack.c.l.b16 %v574
    %v2213 = vunpack.c.h.b16 %v574
    %v2214 = vunpack.c.l.b16 %v575
    %v2215 = vunpack.c.h.b16 %v575
    %v2216 = vunpack.c.l.b16 %v576
    %v2217 = vunpack.c.h.b16 %v576
    %v2218 = vunpack.c.l.b16 %v577
    %v2219 = vunpack.c.h.b16 %v577
    %v2220 = vunpack.c.l.b16 %v578
    %v2221 = vunpack.c.h.b16 %v578
    %v2222 = vunpack.c.l.b16 %v579
    %v2223 = vunpack.c.h.b16 %v579
    %v2224 = vunpack.c.l.b16 %v580
    %v2225 = vunpack.c.h.b16 %v580
    %v2226 = vunpack.c.l.b16 %v581
    %v2227 = vunpack.c.h.b16 %v581
    %v2228 = vunpack.c.l.b16 %v582
    %v2229 = vunpack.c.h.b16 %v582
    %v2230 = vunpack.c.l.b16 %v583
    %v2231 = vunpack.c.h.b16 %v583
    %v2232 = vunpack.c.l.b16 %v584
    %v2233 = vunpack.c.h.b16 %v584
    %v2234 = vunpack.c.l.b16 %v585
    %v2235 = vunpack.c.h.b16 %v585
    %v2236 = vunpack.c.l.b16 %v586
    %v2237 = vunpack.c.h.b16 %v586
    %v2238 = vunpack.c.l.b16 %v587
    %v2239 = vunpack.c.h.b16 %v587
    %v2240 = vunpack.c.l.b16 %v588
    %v2241 = vunpack.c.h.b16 %v588
    %v2242 = vunpack.c.l.b16 %v589
    %v2243 = vunpack.c.h.b16 %v589
    %v2244 = vunpack.c.l.b16 %v590
    %v2245 = vunpack.c.h.b16 %v590
    %v2246 = vunpack.c.l.b16 %v591
    %v2247 = vunpack.c.h.b16 %v591
    %v2248 = vunpack.c.l.b16 %v592
    %v2249 = vunpack.c.h.b16 %v592
    %v2250 = vunpack.c.l.b16 %v593
    %v2251 = vunpack.c.h.b16 %v593
    %v2252 = vunpack.c.l.b16 %v594
    %v2253 = vunpack.c.h.b16 %v594
    %v2254 = vunpack.c.l.b16 %v595
    %v2255 = vunpack.c.h.b16 %v595
    %v2256 = vunpack.c.l.b16 %v596
    %v2257 = vunpack.c.h.b16 %v596
    %v2258 = vunpack.c.l.b16 %v597
    %v2259 = vunpack.c.h.b16 %v597
    %v2260 = vunpack.c.l.b16 %v598
    %v2261 = vunpack.c.h.b16 %v598
    %v2262 = vunpack.c.l.b16 %v599
    %v2263 = vunpack.c.h.b16 %v599
    %v2264 = vunpack.c.l.b16 %v600
    %v2265 = vunpack.c.h.b16 %v600
    %v2266 = vunpack.c.l.b16 %v601
    %v2267 = vunpack.c.h.b16 %v601
    %v2268 = vunpack.c.l.b16 %v602
    %v2269 = vunpack.c.h.b16 %v602
    %v2270 = vunpack.c.l.b16 %v603
    %v2271 = vunpack.c.h.b16 %v603
    %v2272 = vunpack.c.l.b16 %v604
    %v2273 = vunpack.c.h.b16 %v604
    %v2274 = vunpack.c.l.b16 %v605
    %v2275 = vunpack.c.h.b16 %v605
    %v2276 = vunpack.c.l.b16 %v606
    %v2277 = vunpack.c.h.b16 %v606
    %v2278 = vunpack.c.l.b16 %v607
    %v2279 = vunpack.c.h.b16 %v607
    %v2280 = vunpack.c.l.b16 %v608
    %v2281 = vunpack.c.h.b16 %v608
    %v2282 = vunpack.c.l.b16 %v609
    %v2283 = vunpack.c.h.b16 %v609
    %v2284 = vunpack.c.l.b16 %v610
    %v2285 = vunpack.c.h.b16 %v610
    %v2286 = vunpack.c.l.b16 %v611
    %v2287 = vunpack.c.h.b16 %v611
    %v2288 = vunpack.c.l.b16 %v612
    %v2289 = vunpack.c.h.b16 %v612
    %v2290 = vunpack.c.l.b16 %v613
    %v2291 = vunpack.c.h.b16 %v613
    %v2292 = vunpack.c.l.b16 %v614
    %v2293 = vunpack.c.h.b16 %v614
    %v2294 = vunpack.c.l.b16 %v615
    %v2295 = vunpack.c.h.b16 %v615
    %v2296 = vunpack.c.l.b16 %v616
    %v2297 = vunpack.c.h.b16 %v616
    %v2298 = vunpack.c.l.b16 %v617
    %v2299 = vunpack.c.h.b16 %v617
    %v2300 = vunpack.c.l.b16 %v618
    %v2301 = vunpack.c.h.b16 %v618
    %v2302 = vunpack.c.l.b16 %v619
    %v2303 = vunpack.c.h.b16 %v619
    %v2304 = vunpack.c.l.b16 %v620
    %v2305 = vunpack.c.h.b16 %v620
    %v2306 = vunpack.c.l.b16 %v621
    %v2307 = vunpack.c.h.b16 %v621
    %v2308 = vunpack.c.l.b16 %v622
    %v2309 = vunpack.c.h.b16 %v622
    %v2310 = vunpack.c.l.b16 %v623
    %v2311 = vunpack.c.h.b16 %v623
    %v2312 = vunpack.c.l.b16 %v624
    %v2313 = vunpack.c.h.b16 %v624
    %v2314 = vunpack.c.l.b16 %v625
    %v2315 = vunpack.c.h.b16 %v625
    %v2316 = vunpack.c.l.b16 %v626
    %v2317 = vunpack.c.h.b16 %v626
    %v2318 = vunpack.c.l.b16 %v627
    %v2319 = vunpack.c.h.b16 %v627
    %v2320 = vunpack.c.l.b16 %v628
    %v2321 = vunpack.c.h.b16 %v628
    %v2322 = vunpack.c.l.b16 %v629
    %v2323 = vunpack.c.h.b16 %v629
    %v2324 = vunpack.c.l.b16 %v630
    %v2325 = vunpack.c.h.b16 %v630
    %v2326 = vunpack.c.l.b16 %v631
    %v2327 = vunpack.c.h.b16 %v631
    %v2328 = vunpack.c.l.b16 %v632
    %v2329 = vunpack.c.h.b16 %v632
    %v2330 = vunpack.c.l.b16 %v633
    %v2331 = vunpack.c.h.b16 %v633
    %v2332 = vunpack.c.l.b16 %v634
    %v2333 = vunpack.c.h.b16 %v634
    %v2334 = vunpack.c.l.b16 %v635
    %v2335 = vunpack.c.h.b16 %v635
    %v2336 = vunpack.c.l.b16 %v636
    %v2337 = vunpack.c.h.b16 %v636
    %v2338 = vunpack.c.l.b16 %v637
    %v2339 = vunpack.c.h.b16 %v637
    %v2340 = vunpack.c.l.b16 %v638
    %v2341 = vunpack.c.h.b16 %v638
    %v2342 = vunpack.c.l.b16 %v639
    %v2343 = vunpack.c.h.b16 %v639
    %v2344 = vunpack.c.l.b16 %v640
    %v2345 = vunpack.c.h.b16 %v640
    %v2346 = vunpack.c.l.b16 %v641
    %v2347 = vunpack.c.h.b16 %v641
    %v2348 = vunpack.c.l.b16 %v642
    %v2349 = vunpack.c.h.b16 %v642
    %v2350 = vunpack.c.l.b16 %v643
    %v2351 = vunpack.c.h.b16 %v643
    %v2352 = vunpack.c.l.b16 %v644
    %v2353 = vunpack.c.h.b16 %v644
    %v2354 = vunpack.c.l.b16 %v645
    %v2355 = vunpack.c.h.b16 %v645
    %v2356 = vunpack.c.l.b16 %v646
    %v2357 = vunpack.c.h.b16 %v646
    %v2358 = vunpack.c.l.b16 %v647
    %v2359 = vunpack.c.h.b16 %v647
    %v2360 = vunpack.c.l.b16 %v648
    %v2361 = vunpack.c.h.b16 %v648
    %v2362 = vunpack.c.l.b16 %v649
    %v2363 = vunpack.c.h.b16 %v649
    %v2364 = vunpack.c.l.b16 %v650
    %v2365 = vunpack.c.h.b16 %v650
    %v2366 = vunpack.c.l.b16 %v651
    %v2367 = vunpack.c.h.b16 %v651
    %v2368 = vunpack.c.l.b16 %v652
    %v2369 = vunpack.c.h.b16 %v652
    %v2370 = vunpack.c.l.b16 %v653
    %v2371 = vunpack.c.h.b16 %v653
    %v2372 = vunpack.c.l.b16 %v654
    %v2373 = vunpack.c.h.b16 %v654
    %v2374 = vunpack.c.l.b16 %v655
    %v2375 = vunpack.c.h.b16 %v655
    %v2376 = vunpack.c.l.b16 %v656
    %v2377 = vunpack.c.h.b16 %v656
    %v2378 = vunpack.c.l.b16 %v657
    %v2379 = vunpack.c.h.b16 %v657
    %v2380 = vunpack.c.l.b16 %v658
    %v2381 = vunpack.c.h.b16 %v658
    %v2382 = vunpack.c.l.b16 %v659
    %v2383 = vunpack.c.h.b16 %v659
    %v2384 = vunpack.c.l.b16 %v660
    %v2385 = vunpack.c.h.b16 %v660
    %v2386 = vunpack.c.l.b16 %v661
    %v2387 = vunpack.c.h.b16 %v661
    %v2388 = vunpack.c.l.b16 %v662
    %v2389 = vunpack.c.h.b16 %v662
    %v2390 = vunpack.c.l.b16 %v663
    %v2391 = vunpack.c.h.b16 %v663
    %v2392 = vunpack.c.l.b16 %v664
    %v2393 = vunpack.c.h.b16 %v664
    %v2394 = vunpack.c.l.b16 %v665
    %v2395 = vunpack.c.h.b16 %v665
    %v2396 = vunpack.c.l.b16 %v666
    %v2397 = vunpack.c.h.b16 %v666
    %v2398 = vunpack.c.l.b16 %v667
    %v2399 = vunpack.c.h.b16 %v667
    %v2400 = vunpack.c.l.b16 %v668
    %v2401 = vunpack.c.h.b16 %v668
    %v2402 = vunpack.c.l.b16 %v669
    %v2403 = vunpack.c.h.b16 %v669
    %v2404 = vunpack.c.l.b16 %v670
    %v2405 = vunpack.c.h.b16 %v670
    %v2406 = vunpack.c.l.b16 %v671
    %v2407 = vunpack.c.h.b16 %v671
    %v2408 = vunpack.c.l.b16 %v672
    %v2409 = vunpack.c.h.b16 %v672
    %v2410 = vunpack.c.l.b16 %v673
    %v2411 = vunpack.c.h.b16 %v673
    %v2412 = vunpack.c.l.b16 %v674
    %v2413 = vunpack.c.h.b16 %v674
    %v2414 = vunpack.c.l.b16 %v675
    %v2415 = vunpack.c.h.b16 %v675
    %v2416 = vunpack.c.l.b16 %v676
    %v2417 = vunpack.c.h.b16 %v676
    %v2418 = vunpack.c.l.b16 %v677
    %v2419 = vunpack.c.h.b16 %v677
    %v2420 = vunpack.c.l.b16 %v678
    %v2421 = vunpack.c.h.b16 %v678
    %v2422 = vunpack.c.l.b16 %v679
    %v2423 = vunpack.c.h.b16 %v679
    %v2424 = vunpack.c.l.b16 %v680
    %v2425 = vunpack.c.h.b16 %v680
    %v2426 = vunpack.c.l.b16 %v681
    %v2427 = vunpack.c.h.b16 %v681
    %v2428 = vunpack.c.l.b16 %v682
    %v2429 = vunpack.c.h.b16 %v682
    %v2430 = vunpack.c.l.b16 %v683
    %v2431 = vunpack.c.h.b16 %v683
    %v2432 = vunpack.c.l.b16 %v684
    %v2433 = vunpack.c.h.b16 %v684
    %v2434 = vunpack.c.l.b16 %v685
    %v2435 = vunpack.c.h.b16 %v685
    %v2436 = vunpack.c.l.b16 %v686
    %v2437 = vunpack.c.h.b16 %v686
    %v2438 = vunpack.c.l.b16 %v687
    %v2439 = vunpack.c.h.b16 %v687
    %v2440 = vunpack.c.l.b16 %v688
    %v2441 = vunpack.c.h.b16 %v688
    %v2442 = vunpack.c.l.b16 %v689
    %v2443 = vunpack.c.h.b16 %v689
    %v2444 = vunpack.c.l.b16 %v690
    %v2445 = vunpack.c.h.b16 %v690
    %v2446 = vunpack.c.l.b16 %v691
    %v2447 = vunpack.c.h.b16 %v691
    %v2448 = vunpack.c.l.b16 %v692
    %v2449 = vunpack.c.h.b16 %v692
    %v2450 = vunpack.c.l.b16 %v693
    %v2451 = vunpack.c.h.b16 %v693
    %v2452 = vunpack.c.l.b16 %v694
    %v2453 = vunpack.c.h.b16 %v694
    %v2454 = vunpack.c.l.b16 %v695
    %v2455 = vunpack.c.h.b16 %v695
    %v2456 = vunpack.c.l.b16 %v696
    %v2457 = vunpack.c.h.b16 %v696
    %v2458 = vunpack.c.l.b16 %v697
    %v2459 = vunpack.c.h.b16 %v697
    %v2460 = vunpack.c.l.b16 %v698
    %v2461 = vunpack.c.h.b16 %v698
    %v2462 = vunpack.c.l.b16 %v699
    %v2463 = vunpack.c.h.b16 %v699
    %v2464 = vunpack.c.l.b16 %v700
    %v2465 = vunpack.c.h.b16 %v700
    %v2466 = vunpack.c.l.b16 %v701
    %v2467 = vunpack.c.h.b16 %v701
    %v2468 = vunpack.c.l.b16 %v702
    %v2469 = vunpack.c.h.b16 %v702
    %v2470 = vunpack.c.l.b16 %v703
    %v2471 = vunpack.c.h.b16 %v703
    %v2472 = vunpack.c.l.b16 %v704
    %v2473 = vunpack.c.h.b16 %v704
    %v2474 = vunpack.c.l.b16 %v705
    %v2475 = vunpack.c.h.b16 %v705
    %v2476 = vunpack.c.l.b16 %v706
    %v2477 = vunpack.c.h.b16 %v706
    %v2478 = vunpack.c.l.b16 %v707
    %v2479 = vunpack.c.h.b16 %v707
    %v2480 = vunpack.c.l.b16 %v708
    %v2481 = vunpack.c.h.b16 %v708
    %v2482 = vunpack.c.l.b16 %v709
    %v2483 = vunpack.c.h.b16 %v709
    %v2484 = vunpack.c.l.b16 %v710
    %v2485 = vunpack.c.h.b16 %v710
    %v2486 = vunpack.c.l.b16 %v711
    %v2487 = vunpack.c.h.b16 %v711
    %v2488 = vunpack.c.l.b16 %v712
    %v2489 = vunpack.c.h.b16 %v712
    %v2490 = vunpack.c.l.b16 %v713
    %v2491 = vunpack.c.h.b16 %v713
    %v2492 = vunpack.c.l.b16 %v714
    %v2493 = vunpack.c.h.b16 %v714
    %v2494 = vunpack.c.l.b16 %v715
    %v2495 = vunpack.c.h.b16 %v715
    %v2496 = vunpack.c.l.b16 %v716
    %v2497 = vunpack.c.h.b16 %v716
    %v2498 = vunpack.c.l.b16 %v717
    %v2499 = vunpack.c.h.b16 %v717
    %v2500 = vunpack.c.l.b16 %v718
    %v2501 = vunpack.c.h.b16 %v718
    %v2502 = vunpack.c.l.b16 %v719
    %v2503 = vunpack.c.h.b16 %v719
    %v2504 = vunpack.c.l.b16 %v720
    %v2505 = vunpack.c.h.b16 %v720
    %v2506 = vunpack.c.l.b16 %v721
    %v2507 = vunpack.c.h.b16 %v721
    %v2508 = vunpack.c.l.b16 %v722
    %v2509 = vunpack.c.h.b16 %v722
    %v2510 = vunpack.c.l.b16 %v723
    %v2511 = vunpack.c.h.b16 %v723
    %v2512 = vunpack.c.l.b16 %v724
    %v2513 = vunpack.c.h.b16 %v724
    %v2514 = vunpack.c.l.b16 %v725
    %v2515 = vunpack.c.h.b16 %v725
    %v2516 = vunpack.c.l.b16 %v726
    %v2517 = vunpack.c.h.b16 %v726
    %v2518 = vunpack.c.l.b16 %v727
    %v2519 = vunpack.c.h.b16 %v727
    %v2520 = vunpack.c.l.b16 %v728
    %v2521 = vunpack.c.h.b16 %v728
    %v2522 = vunpack.c.l.b16 %v729
    %v2523 = vunpack.c.h.b16 %v729
    %v2524 = vunpack.c.l.b16 %v730
    %v2525 = vunpack.c.h.b16 %v730
    %v2526 = vunpack.c.l.b16 %v731
    %v2527 = vunpack.c.h.b16 %v731
    %v2528 = vunpack.c.l.b16 %v732
    %v2529 = vunpack.c.h.b16 %v732
    %v2530 = vunpack.c.l.b16 %v733
    %v2531 = vunpack.c.h.b16 %v733
    %v2532 = vunpack.c.l.b16 %v734
    %v2533 = vunpack.c.h.b16 %v734
    %v2534 = vunpack.c.l.b16 %v735
    %v2535 = vunpack.c.h.b16 %v735
    %v2536 = vunpack.c.l.b16 %v736
    %v2537 = vunpack.c.h.b16 %v736
    %v2538 = vunpack.c.l.b16 %v737
    %v2539 = vunpack.c.h.b16 %v737
    %v2540 = vunpack.c.l.b16 %v738
    %v2541 = vunpack.c.h.b16 %v738
    %v2542 = vunpack.c.l.b16 %v739
    %v2543 = vunpack.c.h.b16 %v739
    %v2544 = vunpack.c.l.b16 %v740
    %v2545 = vunpack.c.h.b16 %v740
    %v2546 = vunpack.c.l.b16 %v741
    %v2547 = vunpack.c.h.b16 %v741
    %v2548 = vunpack.c.l.b16 %v742
    %v2549 = vunpack.c.h.b16 %v742
    %v2550 = vunpack.c.l.b16 %v743
    %v2551 = vunpack.c.h.b16 %v743
    %v2552 = vunpack.c.l.b16 %v744
    %v2553 = vunpack.c.h.b16 %v744
    %v2554 = vunpack.c.l.b16 %v745
    %v2555 = vunpack.c.h.b16 %v745
    %v2556 = vunpack.c.l.b16 %v746
    %v2557 = vunpack.c.h.b16 %v746
    %v2558 = vunpack.c.l.b16 %v747
    %v2559 = vunpack.c.h.b16 %v747
    %v2560 = vunpack.c.l.b16 %v748
    %v2561 = vunpack.c.h.b16 %v748
    %v2562 = vunpack.c.l.b16 %v749
    %v2563 = vunpack.c.h.b16 %v749
    %v2564 = vunpack.c.l.b16 %v750
    %v2565 = vunpack.c.h.b16 %v750
    %v2566 = vunpack.c.l.b16 %v751
    %v2567 = vunpack.c.h.b16 %v751
    %v2568 = vunpack.c.l.b16 %v752
    %v2569 = vunpack.c.h.b16 %v752
    %v2570 = vunpack.c.l.b16 %v753
    %v2571 = vunpack.c.h.b16 %v753
    %v2572 = vunpack.c.l.b16 %v754
    %v2573 = vunpack.c.h.b16 %v754
    %v2574 = vunpack.c.l.b16 %v755
    %v2575 = vunpack.c.h.b16 %v755
    %v2576 = vunpack.c.l.b16 %v756
    %v2577 = vunpack.c.h.b16 %v756
    %v2578 = vunpack.c.l.b16 %v757
    %v2579 = vunpack.c.h.b16 %v757
    %v2580 = vunpack.c.l.b16 %v758
    %v2581 = vunpack.c.h.b16 %v758
    %v2582 = vunpack.c.l.b16 %v759
    %v2583 = vunpack.c.h.b16 %v759
    %v2584 = vunpack.c.l.b16 %v760
    %v2585 = vunpack.c.h.b16 %v760
    %v2586 = vunpack.c.l.b16 %v761
    %v2587 = vunpack.c.h.b16 %v761
    %v2588 = vunpack.c.l.b16 %v762
    %v2589 = vunpack.c.h.b16 %v762
    %v2590 = vunpack.c.l.b16 %v763
    %v2591 = vunpack.c.h.b16 %v763
    %v2592 = vunpack.c.l.b16 %v764
    %v2593 = vunpack.c.h.b16 %v764
    %v2594 = vunpack.c.l.b16 %v765
    %v2595 = vunpack.c.h.b16 %v765
    %v2596 = vunpack.c.l.b16 %v766
    %v2597 = vunpack.c.h.b16 %v766
    %v2598 = vunpack.c.l.b16 %v767
    %v2599 = vunpack.c.h.b16 %v767
    %v2600 = vunpack.c.l.b16 %v768
    %v2601 = vunpack.c.h.b16 %v768
    %v2602 = vunpack.c.l.b16 %v769
    %v2603 = vunpack.c.h.b16 %v769
    %v2604 = vunpack.c.l.b16 %v770
    %v2605 = vunpack.c.h.b16 %v770
    %v2606 = vunpack.c.l.b16 %v771
    %v2607 = vunpack.c.h.b16 %v771
    %v2608 = vunpack.c.l.b16 %v772
    %v2609 = vunpack.c.h.b16 %v772
    %v2610 = vunpack.c.l.b16 %v773
    %v2611 = vunpack.c.h.b16 %v773
    %v2612 = vunpack.c.l.b16 %v774
    %v2613 = vunpack.c.h.b16 %v774
    %v2614 = vunpack.c.l.b16 %v775
    %v2615 = vunpack.c.h.b16 %v775
    %v2616 = vunpack.c.l.b16 %v776
    %v2617 = vunpack.c.h.b16 %v776
    %v2618 = vunpack.c.l.b16 %v777
    %v2619 = vunpack.c.h.b16 %v777
    %v2620 = vunpack.c.l.b16 %v778
    %v2621 = vunpack.c.h.b16 %v778
    %v2622 = vunpack.c.l.b16 %v779
    %v2623 = vunpack.c.h.b16 %v779
    %v2624 = vunpack.c.l.b16 %v780
    %v2625 = vunpack.c.h.b16 %v780
    %v2626 = vunpack.c.l.b16 %v781
    %v2627 = vunpack.c.h.b16 %v781
    %v2628 = vunpack.c.l.b16 %v782
    %v2629 = vunpack.c.h.b16 %v782
    %v2630 = vunpack.c.l.b16 %v783
    %v2631 = vunpack.c.h.b16 %v783
    %v2632 = vunpack.c.l.b16 %v784
    %v2633 = vunpack.c.h.b16 %v784
    %v2634 = vunpack.c.l.b16 %v785
    %v2635 = vunpack.c.h.b16 %v785
    %v2636 = vunpack.c.l.b16 %v786
    %v2637 = vunpack.c.h.b16 %v786
    %v2638 = vunpack.c.l.b16 %v787
    %v2639 = vunpack.c.h.b16 %v787
    %v2640 = vunpack.c.l.b16 %v788
    %v2641 = vunpack.c.h.b16 %v788
    %v2642 = vunpack.c.l.b16 %v789
    %v2643 = vunpack.c.h.b16 %v789
    %v2644 = vunpack.c.l.b16 %v790
    %v2645 = vunpack.c.h.b16 %v790
    %v2646 = vunpack.c.l.b16 %v791
    %v2647 = vunpack.c.h.b16 %v791
    %v2648 = vunpack.c.l.b16 %v792
    %v2649 = vunpack.c.h.b16 %v792
    %v2650 = vunpack.c.l.b16 %v793
    %v2651 = vunpack.c.h.b16 %v793
    %v2652 = vunpack.c.l.b16 %v794
    %v2653 = vunpack.c.h.b16 %v794
    %v2654 = vunpack.c.l.b16 %v795
    %v2655 = vunpack.c.h.b16 %v795
    %v2656 = vunpack.c.l.b16 %v796
    %v2657 = vunpack.c.h.b16 %v796
    %v2658 = vunpack.c.l.b16 %v797
    %v2659 = vunpack.c.h.b16 %v797
    %v2660 = vunpack.c.l.b16 %v798
    %v2661 = vunpack.c.h.b16 %v798
    %v2662 = vunpack.c.l.b16 %v799
    %v2663 = vunpack.c.h.b16 %v799
    %v2664 = vunpack.c.l.b16 %v800
    %v2665 = vunpack.c.h.b16 %v800
    %v2666 = vunpack.c.l.b16 %v801
    %v2667 = vunpack.c.h.b16 %v801
    %v2668 = vunpack.c.l.b16 %v802
    %v2669 = vunpack.c.h.b16 %v802
    %v2670 = vunpack.c.l.b16 %v803
    %v2671 = vunpack.c.h.b16 %v803
    %v2672 = vunpack.c.l.b16 %v804
    %v2673 = vunpack.c.h.b16 %v804
    %v2674 = vunpack.c.l.b16 %v805
    %v2675 = vunpack.c.h.b16 %v805
    %v2676 = vunpack.c.l.b16 %v806
    %v2677 = vunpack.c.h.b16 %v806
    %v2678 = vunpack.c.l.b16 %v807
    %v2679 = vunpack.c.h.b16 %v807
    %v2680 = vunpack.c.l.b16 %v808
    %v2681 = vunpack.c.h.b16 %v808
    %v2682 = vunpack.c.l.b16 %v809
    %v2683 = vunpack.c.h.b16 %v809
    %v2684 = vunpack.c.l.b16 %v810
    %v2685 = vunpack.c.h.b16 %v810
    %v2686 = vunpack.c.l.b16 %v811
    %v2687 = vunpack.c.h.b16 %v811
    %v2688 = vunpack.c.l.b16 %v812
    %v2689 = vunpack.c.h.b16 %v812
    %v2690 = vunpack.c.l.b16 %v813
    %v2691 = vunpack.c.h.b16 %v813
    %v2692 = vunpack.c.l.b16 %v814
    %v2693 = vunpack.c.h.b16 %v814
    %v2694 = vunpack.c.l.b16 %v815
    %v2695 = vunpack.c.h.b16 %v815
    %v2696 = vunpack.c.l.b16 %v816
    %v2697 = vunpack.c.h.b16 %v816
    %v2698 = vunpack.c.l.b16 %v817
    %v2699 = vunpack.c.h.b16 %v817
    %v2700 = vunpack.c.l.b16 %v818
    %v2701 = vunpack.c.h.b16 %v818
    %v2702 = vunpack.c.l.b16 %v819
    %v2703 = vunpack.c.h.b16 %v819
    %v2704 = vunpack.c.l.b16 %v820
    %v2705 = vunpack.c.h.b16 %v820
    %v2706 = vunpack.c.l.b16 %v821
    %v2707 = vunpack.c.h.b16 %v821
    %v2708 = vunpack.c.l.b16 %v822
    %v2709 = vunpack.c.h.b16 %v822
    %v2710 = vunpack.c.l.b16 %v823
    %v2711 = vunpack.c.h.b16 %v823
    %v2712 = vunpack.c.l.b16 %v824
    %v2713 = vunpack.c.h.b16 %v824
    %v2714 = vunpack.c.l.b16 %v825
    %v2715 = vunpack.c.h.b16 %v825
    %v2716 = vunpack.c.l.b16 %v826
    %v2717 = vunpack.c.h.b16 %v826
    %v2718 = vunpack.c.l.b16 %v827
    %v2719 = vunpack.c.h.b16 %v827
    %v2720 = vunpack.c.l.b16 %v828
    %v2721 = vunpack.c.h.b16 %v828
    %v2722 = vunpack.c.l.b16 %v829
    %v2723 = vunpack.c.h.b16 %v829
    %v2724 = vunpack.c.l.b16 %v830
    %v2725 = vunpack.c.h.b16 %v830
    %v2726 = vunpack.c.l.b16 %v831
    %v2727 = vunpack.c.h.b16 %v831
    %v2728 = vunpack.c.l.b16 %v832
    %v2729 = vunpack.c.h.b16 %v832
    %v2730 = vunpack.c.l.b16 %v833
    %v2731 = vunpack.c.h.b16 %v833
    %v2732 = vunpack.c.l.b16 %v834
    %v2733 = vunpack.c.h.b16 %v834
    %v2734 = vunpack.c.l.b16 %v835
    %v2735 = vunpack.c.h.b16 %v835
    %v2736 = vunpack.c.l.b16 %v836
    %v2737 = vunpack.c.h.b16 %v836
    %v2738 = vunpack.c.l.b16 %v837
    %v2739 = vunpack.c.h.b16 %v837
    %v2740 = vunpack.c.l.b16 %v838
    %v2741 = vunpack.c.h.b16 %v838
    %v2742 = vunpack.c.l.b16 %v839
    %v2743 = vunpack.c.h.b16 %v839
    %v2744 = vunpack.c.l.b16 %v840
    %v2745 = vunpack.c.h.b16 %v840
    %v2746 = vunpack.c.l.b16 %v841
    %v2747 = vunpack.c.h.b16 %v841
    %v2748 = vunpack.c.l.b16 %v842
    %v2749 = vunpack.c.h.b16 %v842
    %v2750 = vunpack.c.l.b16 %v843
    %v2751 = vunpack.c.h.b16 %v843
    %v2752 = vunpack.c.l.b16 %v844
    %v2753 = vunpack.c.h.b16 %v844
    %v2754 = vunpack.c.l.b16 %v845
    %v2755 = vunpack.c.h.b16 %v845
    %v2756 = vunpack.c.l.b16 %v846
    %v2757 = vunpack.c.h.b16 %v846
    %v2758 = vunpack.c.l.b16 %v847
    %v2759 = vunpack.c.h.b16 %v847
    %v2760 = vunpack.c.l.b16 %v848
    %v2761 = vunpack.c.h.b16 %v848
    %v2762 = vunpack.c.l.b16 %v849
    %v2763 = vunpack.c.h.b16 %v849
    %v2764 = vunpack.c.l.b16 %v850
    %v2765 = vunpack.c.h.b16 %v850
    %v2766 = vunpack.c.l.b16 %v851
    %v2767 = vunpack.c.h.b16 %v851
    %v2768 = vunpack.c.l.b16 %v852
    %v2769 = vunpack.c.h.b16 %v852
    %v2770 = vunpack.c.l.b16 %v853
    %v2771 = vunpack.c.h.b16 %v853
    %v2772 = vunpack.c.l.b16 %v854
    %v2773 = vunpack.c.h.b16 %v854
    %v2774 = vunpack.c.l.b16 %v855
    %v2775 = vunpack.c.h.b16 %v855
    %v2776 = vunpack.c.l.b16 %v856
    %v2777 = vunpack.c.h.b16 %v856
    %v2778 = vunpack.c.l.b16 %v857
    %v2779 = vunpack.c.h.b16 %v857
    %v2780 = vunpack.c.l.b16 %v858
    %v2781 = vunpack.c.h.b16 %v858
    %v2782 = vunpack.c.l.b16 %v859
    %v2783 = vunpack.c.h.b16 %v859
    %v2784 = vunpack.c.l.b16 %v860
    %v2785 = vunpack.c.h.b16 %v860
    %v2786 = vunpack.c.l.b16 %v861
    %v2787 = vunpack.c.h.b16 %v861
    %v2788 = vunpack.c.l.b16 %v862
    %v2789 = vunpack.c.h.b16 %v862
    %v2790 = vunpack.c.l.b16 %v863
    %v2791 = vunpack.c.h.b16 %v863
    %v2792 = vunpack.c.l.b16 %v864
    %v2793 = vunpack.c.h.b16 %v864
    %v2794 = vunpack.c.l.b16 %v865
    %v2795 = vunpack.c.h.b16 %v865
    %v2796 = vunpack.c.l.b16 %v866
    %v2797 = vunpack.c.h.b16 %v866
    %v2798 = vunpack.c.l.b16 %v867
    %v2799 = vunpack.c.h.b16 %v867
    %v2800 = vunpack.c.l.b16 %v868
    %v2801 = vunpack.c.h.b16 %v868
    %v2802 = vunpack.c.l.b16 %v869
    %v2803 = vunpack.c.h.b16 %v869
    %v2804 = vunpack.c.l.b16 %v870
    %v2805 = vunpack.c.h.b16 %v870
    %v2806 = vunpack.c.l.b16 %v871
    %v2807 = vunpack.c.h.b16 %v871
    %v2808 = vunpack.c.l.b16 %v872
    %v2809 = vunpack.c.h.b16 %v872
    %v2810 = vunpack.c.l.b16 %v873
    %v2811 = vunpack.c.h.b16 %v873
    %v2812 = vunpack.c.l.b16 %v874
    %v2813 = vunpack.c.h.b16 %v874
    %v2814 = vunpack.c.l.b16 %v875
    %v2815 = vunpack.c.h.b16 %v875
    %v2816 = vunpack.c.l.b16 %v876
    %v2817 = vunpack.c.h.b16 %v876
    %v2818 = vunpack.c.l.b16 %v877
    %v2819 = vunpack.c.h.b16 %v877
    %v2820 = vunpack.c.l.b16 %v878
    %v2821 = vunpack.c.h.b16 %v878
    %v2822 = vunpack.c.l.b16 %v879
    %v2823 = vunpack.c.h.b16 %v879
    %v2824 = vunpack.c.l.b16 %v880
    %v2825 = vunpack.c.h.b16 %v880
    %v2826 = vunpack.c.l.b16 %v881
    %v2827 = vunpack.c.h.b16 %v881
    %v2828 = vunpack.c.l.b16 %v882
    %v2829 = vunpack.c.h.b16 %v882
    %v2830 = vunpack.c.l.b16 %v883
    %v2831 = vunpack.c.h.b16 %v883
    %v2832 = vunpack.c.l.b16 %v884
    %v2833 = vunpack.c.h.b16 %v884
    %v2834 = vunpack.c.l.b16 %v885
    %v2835 = vunpack.c.h.b16 %v885
    %v2836 = vunpack.c.l.b16 %v886
    %v2837 = vunpack.c.h.b16 %v886
    %v2838 = vunpack.c.l.b16 %v887
    %v2839 = vunpack.c.h.b16 %v887
    %v2840 = vunpack.c.l.b16 %v888
    %v2841 = vunpack.c.h.b16 %v888
    %v2842 = vunpack.c.l.b16 %v889
    %v2843 = vunpack.c.h.b16 %v889
    %v2844 = vunpack.c.l.b16 %v890
    %v2845 = vunpack.c.h.b16 %v890
    %v2846 = vunpack.c.l.b16 %v891
    %v2847 = vunpack.c.h.b16 %v891
    %v2848 = vunpack.c.l.b16 %v892
    %v2849 = vunpack.c.h.b16 %v892
    %v2850 = vunpack.c.l.b16 %v893
    %v2851 = vunpack.c.h.b16 %v893
    %v2852 = vunpack.c.l.b16 %v894
    %v2853 = vunpack.c.h.b16 %v894
    %v2854 = vunpack.c.l.b16 %v895
    %v2855 = vunpack.c.h.b16 %v895
    %v2856 = vunpack.c.l.b16 %v896
    %v2857 = vunpack.c.h.b16 %v896
    %v2858 = vunpack.c.l.b16 %v897
    %v2859 = vunpack.c.h.b16 %v897
    %v2860 = vunpack.c.l.b16 %v898
    %v2861 = vunpack.c.h.b16 %v898
    %v2862 = vunpack.c.l.b16 %v899
    %v2863 = vunpack.c.h.b16 %v899
    %v2864 = vunpack.c.l.b16 %v900
    %v2865 = vunpack.c.h.b16 %v900
    %v2866 = vunpack.c.l.b16 %v901
    %v2867 = vunpack.c.h.b16 %v901
    %v2868 = vunpack.c.l.b16 %v902
    %v2869 = vunpack.c.h.b16 %v902
    %v2870 = vunpack.c.l.b16 %v903
    %v2871 = vunpack.c.h.b16 %v903
    %v2872 = vunpack.c.l.b16 %v904
    %v2873 = vunpack.c.h.b16 %v904
    %v2874 = vunpack.c.l.b16 %v905
    %v2875 = vunpack.c.h.b16 %v905
    %v2876 = vunpack.c.l.b16 %v906
    %v2877 = vunpack.c.h.b16 %v906
    %v2878 = vunpack.c.l.b16 %v907
    %v2879 = vunpack.c.h.b16 %v907
    %v2880 = vunpack.c.l.b16 %v908
    %v2881 = vunpack.c.h.b16 %v908
    %v2882 = vunpack.c.l.b16 %v909
    %v2883 = vunpack.c.h.b16 %v909
    %v2884 = vunpack.c.l.b16 %v910
    %v2885 = vunpack.c.h.b16 %v910
    %v2886 = vunpack.c.l.b16 %v911
    %v2887 = vunpack.c.h.b16 %v911
    %v2888 = vunpack.c.l.b16 %v912
    %v2889 = vunpack.c.h.b16 %v912
    %v2890 = vunpack.c.l.b16 %v913
    %v2891 = vunpack.c.h.b16 %v913
    %v2892 = vunpack.c.l.b16 %v914
    %v2893 = vunpack.c.h.b16 %v914
    %v2894 = vunpack.c.l.b16 %v915
    %v2895 = vunpack.c.h.b16 %v915
    %v2896 = vunpack.c.l.b16 %v916
    %v2897 = vunpack.c.h.b16 %v916
    %v2898 = vunpack.c.l.b16 %v917
    %v2899 = vunpack.c.h.b16 %v917
    %v2900 = vunpack.c.l.b16 %v918
    %v2901 = vunpack.c.h.b16 %v918
    %v2902 = vunpack.c.l.b16 %v919
    %v2903 = vunpack.c.h.b16 %v919
    %v2904 = vunpack.c.l.b16 %v920
    %v2905 = vunpack.c.h.b16 %v920
    %v2906 = vunpack.c.l.b16 %v921
    %v2907 = vunpack.c.h.b16 %v921
    %v2908 = vunpack.c.l.b16 %v922
    %v2909 = vunpack.c.h.b16 %v922
    %v2910 = vunpack.c.l.b16 %v923
    %v2911 = vunpack.c.h.b16 %v923
    %v2912 = vunpack.c.l.b16 %v924
    %v2913 = vunpack.c.h.b16 %v924
    %v2914 = vunpack.c.l.b16 %v925
    %v2915 = vunpack.c.h.b16 %v925
    %v2916 = vunpack.c.l.b16 %v926
    %v2917 = vunpack.c.h.b16 %v926
    %v2918 = vunpack.c.l.b16 %v927
    %v2919 = vunpack.c.h.b16 %v927
    %v2920 = vunpack.c.l.b16 %v928
    %v2921 = vunpack.c.h.b16 %v928
    %v2922 = vunpack.c.l.b16 %v929
    %v2923 = vunpack.c.h.b16 %v929
    %v2924 = vunpack.c.l.b16 %v930
    %v2925 = vunpack.c.h.b16 %v930
    %v2926 = vunpack.c.l.b16 %v931
    %v2927 = vunpack.c.h.b16 %v931
    %v2928 = vunpack.c.l.b16 %v932
    %v2929 = vunpack.c.h.b16 %v932
    %v2930 = vunpack.c.l.b16 %v933
    %v2931 = vunpack.c.h.b16 %v933
    %v2932 = vunpack.c.l.b16 %v934
    %v2933 = vunpack.c.h.b16 %v934
    %v2934 = vunpack.c.l.b16 %v935
    %v2935 = vunpack.c.h.b16 %v935
    %v2936 = vunpack.c.l.b16 %v936
    %v2937 = vunpack.c.h.b16 %v936
    %v2938 = vunpack.c.l.b16 %v937
    %v2939 = vunpack.c.h.b16 %v937
    %v2940 = vunpack.c.l.b16 %v938
    %v2941 = vunpack.c.h.b16 %v938
    %v2942 = vunpack.c.l.b16 %v939
    %v2943 = vunpack.c.h.b16 %v939
    %v2944 = vunpack.c.l.b16 %v940
    %v2945 = vunpack.c.h.b16 %v940
    %v2946 = vunpack.c.l.b16 %v941
    %v2947 = vunpack.c.h.b16 %v941
    %v2948 = vunpack.c.l.b16 %v942
    %v2949 = vunpack.c.h.b16 %v942
    %v2950 = vunpack.c.l.b16 %v943
    %v2951 = vunpack.c.h.b16 %v943
    %v2952 = vunpack.c.l.b16 %v944
    %v2953 = vunpack.c.h.b16 %v944
    %v2954 = vunpack.c.l.b16 %v945
    %v2955 = vunpack.c.h.b16 %v945
    %v2956 = vunpack.c.l.b16 %v946
    %v2957 = vunpack.c.h.b16 %v946
    %v2958 = vunpack.c.l.b16 %v947
    %v2959 = vunpack.c.h.b16 %v947
    %v2960 = vunpack.c.l.b16 %v948
    %v2961 = vunpack.c.h.b16 %v948
    %v2962 = vunpack.c.l.b16 %v949
    %v2963 = vunpack.c.h.b16 %v949
    %v2964 = vunpack.c.l.b16 %v950
    %v2965 = vunpack.c.h.b16 %v950
    %v2966 = vunpack.c.l.b16 %v951
    %v2967 = vunpack.c.h.b16 %v951
    %v2968 = vunpack.c.l.b16 %v952
    %v2969 = vunpack.c.h.b16 %v952
    %v2970 = vunpack.c.l.b16 %v953
    %v2971 = vunpack.c.h.b16 %v953
    %v2972 = vunpack.c.l.b16 %v954
    %v2973 = vunpack.c.h.b16 %v954
    %v2974 = vunpack.c.l.b16 %v955
    %v2975 = vunpack.c.h.b16 %v955
    %v2976 = vunpack.c.l.b16 %v956
    %v2977 = vunpack.c.h.b16 %v956
    %v2978 = vunpack.c.l.b16 %v957
    %v2979 = vunpack.c.h.b16 %v957
    %v2980 = vunpack.c.l.b16 %v958
    %v2981 = vunpack.c.h.b16 %v958
    %v2982 = vunpack.c.l.b16 %v959
    %v2983 = vunpack.c.h.b16 %v959
    %v2984 = vunpack.c.l.b16 %v960
    %v2985 = vunpack.c.h.b16 %v960
    %v2986 = vunpack.c.l.b16 %v961
    %v2987 = vunpack.c.h.b16 %v961
    %v2988 = vunpack.c.l.b16 %v962
    %v2989 = vunpack.c.h.b16 %v962
    %v2990 = vunpack.c.l.b16 %v963
    %v2991 = vunpack.c.h.b16 %v963
    %v2992 = vunpack.c.l.b16 %v964
    %v2993 = vunpack.c.h.b16 %v964
    %v2994 = vunpack.c.l.b16 %v965
    %v2995 = vunpack.c.h.b16 %v965
    %v2996 = vunpack.c.l.b16 %v966
    %v2997 = vunpack.c.h.b16 %v966
    %v2998 = vunpack.c.l.b16 %v967
    %v2999 = vunpack.c.h.b16 %v967
    %v3000 = vunpack.c.l.b16 %v968
    %v3001 = vunpack.c.h.b16 %v968
    %v3002 = vunpack.c.l.b16 %v969
    %v3003 = vunpack.c.h.b16 %v969
    %v3004 = vunpack.c.l.b16 %v970
    %v3005 = vunpack.c.h.b16 %v970
    %v3006 = vunpack.c.l.b16 %v971
    %v3007 = vunpack.c.h.b16 %v971
    %v3008 = vunpack.c.l.b16 %v972
    %v3009 = vunpack.c.h.b16 %v972
    %v3010 = vunpack.c.l.b16 %v973
    %v3011 = vunpack.c.h.b16 %v973
    %v3012 = vunpack.c.l.b16 %v974
    %v3013 = vunpack.c.h.b16 %v974
    %v3014 = vunpack.c.l.b16 %v975
    %v3015 = vunpack.c.h.b16 %v975
    %v3016 = vunpack.c.l.b16 %v976
    %v3017 = vunpack.c.h.b16 %v976
    %v3018 = vunpack.c.l.b16 %v977
    %v3019 = vunpack.c.h.b16 %v977
    %v3020 = vunpack.c.l.b16 %v978
    %v3021 = vunpack.c.h.b16 %v978
    %v3022 = vunpack.c.l.b16 %v979
    %v3023 = vunpack.c.h.b16 %v979
    %v3024 = vunpack.c.l.b16 %v980
    %v3025 = vunpack.c.h.b16 %v980
    %v3026 = vunpack.c.l.b16 %v981
    %v3027 = vunpack.c.h.b16 %v981
    %v3028 = vunpack.c.l.b16 %v982
    %v3029 = vunpack.c.h.b16 %v982
    %v3030 = vunpack.c.l.b16 %v983
    %v3031 = vunpack.c.h.b16 %v983
    %v3032 = vunpack.c.l.b16 %v984
    %v3033 = vunpack.c.h.b16 %v984
    %v3034 = vunpack.c.l.b16 %v985
    %v3035 = vunpack.c.h.b16 %v985
    %v3036 = vunpack.c.l.b16 %v986
    %v3037 = vunpack.c.h.b16 %v986
    %v3038 = vunpack.c.l.b16 %v987
    %v3039 = vunpack.c.h.b16 %v987
    %v3040 = vunpack.c.l.b16 %v988
    %v3041 = vunpack.c.h.b16 %v988
    %v3042 = vunpack.c.l.b16 %v989
    %v3043 = vunpack.c.h.b16 %v989
    %v3044 = vunpack.c.l.b16 %v990
    %v3045 = vunpack.c.h.b16 %v990
    %v3046 = vunpack.c.l.b16 %v991
    %v3047 = vunpack.c.h.b16 %v991
    %v3048 = vunpack.c.l.b16 %v992
    %v3049 = vunpack.c.h.b16 %v992
    %v3050 = vunpack.c.l.b16 %v993
    %v3051 = vunpack.c.h.b16 %v993
    %v3052 = vunpack.c.l.b16 %v994
    %v3053 = vunpack.c.h.b16 %v994
    %v3054 = vunpack.c.l.b16 %v995
    %v3055 = vunpack.c.h.b16 %v995
    %v3056 = vunpack.c.l.b16 %v996
    %v3057 = vunpack.c.h.b16 %v996
    %v3058 = vunpack.c.l.b16 %v997
    %v3059 = vunpack.c.h.b16 %v997
    %v3060 = vunpack.c.l.b16 %v998
    %v3061 = vunpack.c.h.b16 %v998
    %v3062 = vunpack.c.l.b16 %v999
    %v3063 = vunpack.c.h.b16 %v999
    %v3064 = vunpack.c.l.b16 %v1000
    %v3065 = vunpack.c.h.b16 %v1000
    %v3066 = vpack.c.b16 %v1728, %v1722
    %v3067 = vpack.c.b16 %v1729, %v1723
    %v3068 = vpack.c.b16 %v1730, %v1724
    %v3069 = vpack.c.b16 %v1731, %v1725
    %v3070 = vpack.c.b16 %v1732, %v1726
    %v3071 = vpack.c.b16 %v1733, %v1727
    %v3072 = vpack.c.b16 %v1740, %v1734
    %v3073 = vpack.c.b16 %v1741, %v1735
    %v3074 = vpack.c.b16 %v1742, %v1736
    %v3075 = vpack.c.b16 %v1743, %v1737
    %v3076 = vpack.c.b16 %v1744, %v1738
    %v3077 = vpack.c.b16 %v1745, %v1739
    %v3078 = vpack.c.b16 %v1752, %v1746
    %v3079 = vpack.c.b16 %v1753, %v1747
    %v3080 = vpack.c.b16 %v1754, %v1748
    %v3081 = vpack.c.b16 %v1755, %v1749
    %v3082 = vpack.c.b16 %v1756, %v1750
    %v3083 = vpack.c.b16 %v1757, %v1751
    %v3084 = vpack.c.b16 %v1764, %v1758
    %v3085 = vpack.c.b16 %v1765, %v1759
    %v3086 = vpack.c.b16 %v1766, %v1760
    %v3087 = vpack.c.b16 %v1767, %v1761
    %v3088 = vpack.c.b16 %v1768, %v1762
    %v3089 = vpack.c.b16 %v1769, %v1763
    %v3090 = vpack.c.b16 %v1776, %v1770
    %v3091 = vpack.c.b16 %v1777, %v1771
    %v3092 = vpack.c.b16 %v1778, %v1772
    %v3093 = vpack.c.b16 %v1779, %v1773
    %v3094 = vpack.c.b16 %v1780, %v1774
    %v3095 = vpack.c.b16 %v1781, %v1775
    %v3096 = vpack.c.b16 %v1788, %v1782
    %v3097 = vpack.c.b16 %v1789, %v1783
    %v3098 = vpack.c.b16 %v1790, %v1784
    %v3099 = vpack.c.b16 %v1791, %v1785
    %v3100 = vpack.c.b16 %v1792, %v1786
    %v3101 = vpack.c.b16 %v1793, %v1787
    %v3102 = vpack.c.b16 %v1800, %v1794
    %v3103 = vpack.c.b16 %v1801, %v1795
    %v3104 = vpack.c.b16 %v1802, %v1796
    %v3105 = vpack.c.b16 %v1803, %v1797
    %v3106 = vpack.c.b16 %v1804, %v1798
    %v3107 = vpack.c.b16 %v1805, %v1799
    %v3108 = vpack.c.b16 %v1812, %v1806
    %v3109 = vpack.c.b16 %v1813, %v1807
    %v3110 = vpack.c.b16 %v1814, %v1808
    %v3111 = vpack.c.b16 %v1815, %v1809
    %v3112 = vpack.c.b16 %v1816, %v1810
    %v3113 = vpack.c.b16 %v1817, %v1811
    %v3114 = vpack.c.b16 %v1824, %v1818
    %v3115 = vpack.c.b16 %v1825, %v1819
    %v3116 = vpack.c.b16 %v1826, %v1820
    %v3117 = vpack.c.b16 %v1827, %v1821
    %v3118 = vpack.c.b16 %v1828, %v1822
    %v3119 = vpack.c.b16 %v1829, %v1823
    %v3120 = vpack.c.b16 %v1836, %v1830
    %v3121 = vpack.c.b16 %v1837, %v1831
    %v3122 = vpack.c.b16 %v1838, %v1832
    %v3123 = vpack.c.b16 %v1839, %v1833
    %v3124 = vpack.c.b16 %v1840, %v1834
    %v3125 = vpack.c.b16 %v1841, %v1835
    %v3126 = vpack.c.b16 %v1848, %v1842
    %v3127 = vpack.c.b16 %v1849, %v1843
    %v3128 = vpack.c.b16 %v1850, %v1844
    %v3129 = vpack.c.b16 %v1851, %v1845
    %v3130 = vpack.c.b16 %v1852, %v1846
    %v3131 = vpack.c.b16 %v1853, %v1847
    %v3132 = vpack.c.b16 %v1860, %v1854
    %v3133 = vpack.c.b16 %v1861, %v1855
    %v3134 = vpack.c.b16 %v1862, %v1856
    %v3135 = vpack.c.b16 %v1863, %v1857
    %v3136 = vpack.c.b16 %v1864, %v1858
    %v3137 = vpack.c.b16 %v1865, %v1859
    %v3138 = vpack.c.b16 %v1872, %v1866
    %v3139 = vpack.c.b16 %v1873, %v1867
    %v3140 = vpack.c.b16 %v1874, %v1868
    %v3141 = vpack.c.b16 %v1875, %v1869
    %v3142 = vpack.c.b16 %v1876, %v1870
    %v3143 = vpack.c.b16 %v1877, %v1871
    %v3144 = vpack.c.b16 %v1884, %v1878
    %v3145 = vpack.c.b16 %v1885, %v1879
    %v3146 = vpack.c.b16 %v1886, %v1880
    %v3147 = vpack.c.b16 %v1887, %v1881
    %v3148 = vpack.c.b16 %v1888, %v1882
    %v3149 = vpack.c.b16 %v1889, %v1883
    %v3150 = vpack.c.b16 %v1896, %v1890
    %v3151 = vpack.c.b16 %v1897, %v1891
    %v3152 = vpack.c.b16 %v1898, %v1892
    %v3153 = vpack.c.b16 %v1899, %v1893
    %v3154 = vpack.c.b16 %v1900, %v1894
    %v3155 = vpack.c.b16 %v1901, %v1895
    %v3156 = vpack.c.b16 %v1908, %v1902
    %v3157 = vpack.c.b16 %v1909, %v1903
    %v3158 = vpack.c.b16 %v1910, %v1904
    %v3159 = vpack.c.b16 %v1911, %v1905
    %v3160 = vpack.c.b16 %v1912, %v1906
    %v3161 = vpack.c.b16 %v1913, %v1907
    %v3162 = vpack.c.b16 %v1920, %v1914
    %v3163 = vpack.c.b16 %v1921, %v1915
    %v3164 = vpack.c.b16 %v1922, %v1916
    %v3165 = vpack.c.b16 %v1923, %v1917
    %v3166 = vpack.c.b16 %v1924, %v1918
    %v3167 = vpack.c.b16 %v1925, %v1919
    %v3168 = vpack.c.b16 %v1932, %v1926
    %v3169 = vpack.c.b16 %v1933, %v1927
    %v3170 = vpack.c.b16 %v1934, %v1928
    %v3171 = vpack.c.b16 %v1935, %v1929
    %v3172 = vpack.c.b16 %v1936, %v1930
    %v3173 = vpack.c.b16 %v1937, %v1931
    %v3174 = vpack.c.b16 %v1944, %v1938
    %v3175 = vpack.c.b16 %v1945, %v1939
    %v3176 = vpack.c.b16 %v1946, %v1940
    %v3177 = vpack.c.b16 %v1947, %v1941
    %v3178 = vpack.c.b16 %v1948, %v1942
    %v3179 = vpack.c.b16 %v1949, %v1943
    %v3180 = vpack.c.b16 %v1956, %v1950
    %v3181 = vpack.c.b16 %v1957, %v1951
    %v3182 = vpack.c.b16 %v1958, %v1952
    %v3183 = vpack.c.b16 %v1959, %v1953
    %v3184 = vpack.c.b16 %v1960, %v1954
    %v3185 = vpack.c.b16 %v1961, %v1955
    %v3186 = vpack.c.b16 %v1968, %v1962
    %v3187 = vpack.c.b16 %v1969, %v1963
    %v3188 = vpack.c.b16 %v1970, %v1964
    %v3189 = vpack.c.b16 %v1971, %v1965
    %v3190 = vpack.c.b16 %v1972, %v1966
    %v3191 = vpack.c.b16 %v1973, %v1967
    %v3192 = vpack.c.b16 %v1980, %v1974
    %v3193 = vpack.c.b16 %v1981, %v1975
    %v3194 = vpack.c.b16 %v1982, %v1976
    %v3195 = vpack.c.b16 %v1983, %v1977
    %v3196 = vpack.c.b16 %v1984, %v1978
    %v3197 = vpack.c.b16 %v1985, %v1979
    %v3198 = vpack.c.b16 %v1992, %v1986
    %v3199 = vpack.c.b16 %v1993, %v1987
    %v3200 = vpack.c.b16 %v1994, %v1988
    %v3201 = vpack.c.b16 %v1995, %v1989
    %v3202 = vpack.c.b16 %v1996, %v1990
    %v3203 = vpack.c.b16 %v1997, %v1991
    %v3204 = vpack.c.b16 %v2004, %v1998
    %v3205 = vpack.c.b16 %v2005, %v1999
    %v3206 = vpack.c.b16 %v2006, %v2000
    %v3207 = vpack.c.b16 %v2007, %v2001
    %v3208 = vpack.c.b16 %v2008, %v2002
    %v3209 = vpack.c.b16 %v2009, %v2003
    %v3210 = vpack.c.b16 %v2016, %v2010
    %v3211 = vpack.c.b16 %v2017, %v2011
    %v3212 = vpack.c.b16 %v2018, %v2012
    %v3213 = vpack.c.b16 %v2019, %v2013
    %v3214 = vpack.c.b16 %v2020, %v2014
    %v3215 = vpack.c.b16 %v2021, %v2015
    %v3216 = vpack.c.b16 %v2028, %v2022
    %v3217 = vpack.c.b16 %v2029, %v2023
    %v3218 = vpack.c.b16 %v2030, %v2024
    %v3219 = vpack.c.b16 %v2031, %v2025
    %v3220 = vpack.c.b16 %v2032, %v2026
    %v3221 = vpack.c.b16 %v2033, %v2027
    %v3222 = vpack.c.b16 %v2040, %v2034
    %v3223 = vpack.c.b16 %v2041, %v2035
    %v3224 = vpack.c.b16 %v2042, %v2036
    %v3225 = vpack.c.b16 %v2043, %v2037
    %v3226 = vpack.c.b16 %v2044, %v2038
    %v3227 = vpack.c.b16 %v2045, %v2039
    %v3228 = vpack.c.b16 %v2052, %v2046
    %v3229 = vpack.c.b16 %v2053, %v2047
    %v3230 = vpack.c.b16 %v2054, %v2048
    %v3231 = vpack.c.b16 %v2055, %v2049
    %v3232 = vpack.c.b16 %v2056, %v2050
    %v3233 = vpack.c.b16 %v2057, %v2051
    %v3234 = vpack.c.b16 %v2064, %v2058
    %v3235 = vpack.c.b16 %v2065, %v2059
    %v3236 = vpack.c.b16 %v2066, %v2060
    %v3237 = vpack.c.b16 %v2067, %v2061
    %v3238 = vpack.c.b16 %v2068, %v2062
    %v3239 = vpack.c.b16 %v2069, %v2063
    %v3240 = vpack.c.b16 %v2076, %v2070
    %v3241 = vpack.c.b16 %v2077, %v2071
    %v3242 = vpack.c.b16 %v2078, %v2072
    %v3243 = vpack.c.b16 %v2079, %v2073
    %v3244 = vpack.c.b16 %v2080, %v2074
    %v3245 = vpack.c.b16 %v2081, %v2075
    %v3246 = vpack.c.b16 %v2088, %v2082
    %v3247 = vpack.c.b16 %v2089, %v2083
    %v3248 = vpack.c.b16 %v2090, %v2084
    %v3249 = vpack.c.b16 %v2091, %v2085
    %v3250 = vpack.c.b16 %v2092, %v2086
    %v3251 = vpack.c.b16 %v2093, %v2087
    %v3252 = vpack.c.b16 %v2100, %v2094
    %v3253 = vpack.c.b16 %v2101, %v2095
    %v3254 = vpack.c.b16 %v2102, %v2096
    %v3255 = vpack.c.b16 %v2103, %v2097
    %v3256 = vpack.c.b16 %v2104, %v2098
    %v3257 = vpack.c.b16 %v2105, %v2099
    %v3258 = vpack.c.b16 %v2112, %v2106
    %v3259 = vpack.c.b16 %v2113, %v2107
    %v3260 = vpack.c.b16 %v2114, %v2108
    %v3261 = vpack.c.b16 %v2115, %v2109
    %v3262 = vpack.c.b16 %v2116, %v2110
    %v3263 = vpack.c.b16 %v2117, %v2111
    %v3264 = vpack.c.b16 %v2124, %v2118
    %v3265 = vpack.c.b16 %v2125, %v2119
    %v3266 = vpack.c.b16 %v2126, %v2120
    %v3267 = vpack.c.b16 %v2127, %v2121
    %v3268 = vpack.c.b16 %v2128, %v2122
    %v3269 = vpack.c.b16 %v2129, %v2123
    %v3270 = vpack.c.b16 %v2136, %v2130
    %v3271 = vpack.c.b16 %v2137, %v2131
    %v3272 = vpack.c.b16 %v2138, %v2132
    %v3273 = vpack.c.b16 %v2139, %v2133
    %v3274 = vpack.c.b16 %v2140, %v2134
    %v3275 = vpack.c.b16 %v2141, %v2135
    %v3276 = vpack.c.b16 %v2148, %v2142
    %v3277 = vpack.c.b16 %v2149, %v2143
    %v3278 = vpack.c.b16 %v2150, %v2144
    %v3279 = vpack.c.b16 %v2151, %v2145
    %v3280 = vpack.c.b16 %v2152, %v2146
    %v3281 = vpack.c.b16 %v2153, %v2147
    %v3282 = vpack.c.b16 %v2160, %v2154
    %v3283 = vpack.c.b16 %v2161, %v2155
    %v3284 = vpack.c.b16 %v2162, %v2156
    %v3285 = vpack.c.b16 %v2163, %v2157
    %v3286 = vpack.c.b16 %v2164, %v2158
    %v3287 = vpack.c.b16 %v2165, %v2159
    %v3288 = vpack.c.b16 %v2172, %v2166
    %v3289 = vpack.c.b16 %v2173, %v2167
    %v3290 = vpack.c.b16 %v2174, %v2168
    %v3291 = vpack.c.b16 %v2175, %v2169
    %v3292 = vpack.c.b16 %v2176, %v2170
    %v3293 = vpack.c.b16 %v2177, %v2171
    %v3294 = vpack.c.b16 %v2184, %v2178
    %v3295 = vpack.c.b16 %v2185, %v2179
    %v3296 = vpack.c.b16 %v2186, %v2180
    %v3297 = vpack.c.b16 %v2187, %v2181
    %v3298 = vpack.c.b16 %v2188, %v2182
    %v3299 = vpack.c.b16 %v2189, %v2183
    %v3300 = vpack.c.b16 %v2196, %v2190
    %v3301 = vpack.c.b16 %v2197, %v2191
    %v3302 = vpack.c.b16 %v2198, %v2192
    %v3303 = vpack.c.b16 %v2199, %v2193
    %v3304 = vpack.c.b16 %v2200, %v2194
    %v3305 = vpack.c.b16 %v2201, %v2195
    %v3306 = vpack.c.b16 %v2208, %v2202
    %v3307 = vpack.c.b16 %v2209, %v2203
    %v3308 = vpack.c.b16 %v2210, %v2204
    %v3309 = vpack.c.b16 %v2211, %v2205
    %v3310 = vpack.c.b16 %v2212, %v2206
    %v3311 = vpack.c.b16 %v2213, %v2207
    %v3312 = vpack.c.b16 %v2220, %v2214
    %v3313 = vpack.c.b16 %v2221, %v2215
    %v3314 = vpack.c.b16 %v2222, %v2216
    %v3315 = vpack.c.b16 %v2223, %v2217
    %v3316 = vpack.c.b16 %v2224, %v2218
    %v3317 = vpack.c.b16 %v2225, %v2219
    %v3318 = vpack.c.b16 %v2232, %v2226
    %v3319 = vpack.c.b16 %v2233, %v2227
    %v3320 = vpack.c.b16 %v2234, %v2228
    %v3321 = vpack.c.b16 %v2235, %v2229
    %v3322 = vpack.c.b16 %v2236, %v2230
    %v3323 = vpack.c.b16 %v2237, %v2231
    %v3324 = vpack.c.b16 %v2244, %v2238
    %v3325 = vpack.c.b16 %v2245, %v2239
    %v3326 = vpack.c.b16 %v2246, %v2240
    %v3327 = vpack.c.b16 %v2247, %v2241
    %v3328 = vpack.c.b16 %v2248, %v2242
    %v3329 = vpack.c.b16 %v2249, %v2243
    %v3330 = vpack.c.b16 %v2256, %v2250
    %v3331 = vpack.c.b16 %v2257, %v2251
    %v3332 = vpack.c.b16 %v2258, %v2252
    %v3333 = vpack.c.b16 %v2259, %v2253
    %v3334 = vpack.c.b16 %v2260, %v2254
    %v3335 = vpack.c.b16 %v2261, %v2255
    %v3336 = vpack.c.b16 %v2268, %v2262
    %v3337 = vpack.c.b16 %v2269, %v2263
    %v3338 = vpack.c.b16 %v2270, %v2264
    %v3339 = vpack.c.b16 %v2271, %v2265
    %v3340 = vpack.c.b16 %v2272, %v2266
    %v3341 = vpack.c.b16 %v2273, %v2267
    %v3342 = vpack.c.b16 %v2280, %v2274
    %v3343 = vpack.c.b16 %v2281, %v2275
    %v3344 = vpack.c.b16 %v2282, %v2276
    %v3345 = vpack.c.b16 %v2283, %v2277
    %v3346 = vpack.c.b16 %v2284, %v2278
    %v3347 = vpack.c.b16 %v2285, %v2279
    %v3348 = vpack.c.b16 %v2292, %v2286
    %v3349 = vpack.c.b16 %v2293, %v2287
    %v3350 = vpack.c.b16 %v2294, %v2288
    %v3351 = vpack.c.b16 %v2295, %v2289
    %v3352 = vpack.c.b16 %v2296, %v2290
    %v3353 = vpack.c.b16 %v2297, %v2291
    %v3354 = vpack.c.b16 %v2304, %v2298
    %v3355 = vpack.c.b16 %v2305, %v2299
    %v3356 = vpack.c.b16 %v2306, %v2300
    %v3357 = vpack.c.b16 %v2307, %v2301
    %v3358 = vpack.c.b16 %v2308, %v2302
    %v3359 = vpack.c.b16 %v2309, %v2303
    %v3360 = vpack.c.b16 %v2316, %v2310
    %v3361 = vpack.c.b16 %v2317, %v2311
    %v3362 = vpack.c.b16 %v2318, %v2312
    %v3363 = vpack.c.b16 %v2319, %v2313
    %v3364 = vpack.c.b16 %v2320, %v2314
    %v3365 = vpack.c.b16 %v2321, %v2315
    %v3366 = vpack.c.b16 %v2328, %v2322
    %v3367 = vpack.c.b16 %v2329, %v2323
    %v3368 = vpack.c.b16 %v2330, %v2324
    %v3369 = vpack.c.b16 %v2331, %v2325
    %v3370 = vpack.c.b16 %v2332, %v2326
    %v3371 = vpack.c.b16 %v2333, %v2327
    %v3372 = vpack.c.b16 %v2340, %v2334
    %v3373 = vpack.c.b16 %v2341, %v2335
    %v3374 = vpack.c.b16 %v2342, %v2336
    %v3375 = vpack.c.b16 %v2343, %v2337
    %v3376 = vpack.c.b16 %v2344, %v2338
    %v3377 = vpack.c.b16 %v2345, %v2339
    %v3378 = vpack.c.b16 %v2352, %v2346
    %v3379 = vpack.c.b16 %v2353, %v2347
    %v3380 = vpack.c.b16 %v2354, %v2348
    %v3381 = vpack.c.b16 %v2355, %v2349
    %v3382 = vpack.c.b16 %v2356, %v2350
    %v3383 = vpack.c.b16 %v2357, %v2351
    %v3384 = vpack.c.b16 %v2364, %v2358
    %v3385 = vpack.c.b16 %v2365, %v2359
    %v3386 = vpack.c.b16 %v2366, %v2360
    %v3387 = vpack.c.b16 %v2367, %v2361
    %v3388 = vpack.c.b16 %v2368, %v2362
    %v3389 = vpack.c.b16 %v2369, %v2363
    %v3390 = vpack.c.b16 %v2376, %v2370
    %v3391 = vpack.c.b16 %v2377, %v2371
    %v3392 = vpack.c.b16 %v2378, %v2372
    %v3393 = vpack.c.b16 %v2379, %v2373
    %v3394 = vpack.c.b16 %v2380, %v2374
    %v3395 = vpack.c.b16 %v2381, %v2375
    %v3396 = vpack.c.b16 %v2388, %v2382
    %v3397 = vpack.c.b16 %v2389, %v2383
    %v3398 = vpack.c.b16 %v2390, %v2384
    %v3399 = vpack.c.b16 %v2391, %v2385
    %v3400 = vpack.c.b16 %v2392, %v2386
    %v3401 = vpack.c.b16 %v2393, %v2387
    %v3402 = vpack.c.b16 %v2400, %v2394
    %v3403 = vpack.c.b16 %v2401, %v2395
    %v3404 = vpack.c.b16 %v2402, %v2396
    %v3405 = vpack.c.b16 %v2403, %v2397
    %v3406 = vpack.c.b16 %v2404, %v2398
    %v3407 = vpack.c.b16 %v2405, %v2399
    %v3408 = vpack.c.b16 %v2412, %v2406
    %v3409 = vpack.c.b16 %v2413, %v2407
    %v3410 = vpack.c.b16 %v2414, %v2408
    %v3411 = vpack.c.b16 %v2415, %v2409
    %v3412 = vpack.c.b16 %v2416, %v2410
    %v3413 = vpack.c.b16 %v2417, %v2411
    %v3414 = vpack.c.b16 %v2424, %v2418
    %v3415 = vpack.c.b16 %v2425, %v2419
    %v3416 = vpack.c.b16 %v2426, %v2420
    %v3417 = vpack.c.b16 %v2427, %v2421
    %v3418 = vpack.c.b16 %v2428, %v2422
    %v3419 = vpack.c.b16 %v2429, %v2423
    %v3420 = vpack.c.b16 %v2436, %v2430
    %v3421 = vpack.c.b16 %v2437, %v2431
    %v3422 = vpack.c.b16 %v2438, %v2432
    %v3423 = vpack.c.b16 %v2439, %v2433
    %v3424 = vpack.c.b16 %v2440, %v2434
    %v3425 = vpack.c.b16 %v2441, %v2435
    %v3426 = vpack.c.b16 %v2448, %v2442
    %v3427 = vpack.c.b16 %v2449, %v2443
    %v3428 = vpack.c.b16 %v2450, %v2444
    %v3429 = vpack.c.b16 %v2451, %v2445
    %v3430 = vpack.c.b16 %v2452, %v2446
    %v3431 = vpack.c.b16 %v2453, %v2447
    %v3432 = vpack.c.b16 %v2460, %v2454
    %v3433 = vpack.c.b16 %v2461, %v2455
    %v3434 = vpack.c.b16 %v2462, %v2456
    %v3435 = vpack.c.b16 %v2463, %v2457
    %v3436 = vpack.c.b16 %v2464, %v2458
    %v3437 = vpack.c.b16 %v2465, %v2459
    %v3438 = vpack.c.b16 %v2472, %v2466
    %v3439 = vpack.c.b16 %v2473, %v2467
    %v3440 = vpack.c.b16 %v2474, %v2468
    %v3441 = vpack.c.b16 %v2475, %v2469
    %v3442 = vpack.c.b16 %v2476, %v2470
    %v3443 = vpack.c.b16 %v2477, %v2471
    %v3444 = vpack.c.b16 %v2484, %v2478
    %v3445 = vpack.c.b16 %v2485, %v2479
    %v3446 = vpack.c.b16 %v2486, %v2480
    %v3447 = vpack.c.b16 %v2487, %v2481
    %v3448 = vpack.c.b16 %v2488, %v2482
    %v3449 = vpack.c.b16 %v2489, %v2483
    %v3450 = vpack.c.b16 %v2496, %v2490
    %v3451 = vpack.c.b16 %v2497, %v2491
    %v3452 = vpack.c.b16 %v2498, %v2492
    %v3453 = vpack.c.b16 %v2499, %v2493
    %v3454 = vpack.c.b16 %v2500, %v2494
    %v3455 = vpack.c.b16 %v2501, %v2495
    %v3456 = vpack.c.b16 %v2508, %v2502
    %v3457 = vpack.c.b16 %v2509, %v2503
    %v3458 = vpack.c.b16 %v2510, %v2504
    %v3459 = vpack.c.b16 %v2511, %v2505
    %v3460 = vpack.c.b16 %v2512, %v2506
    %v3461 = vpack.c.b16 %v2513, %v2507
    %v3462 = vpack.c.b16 %v2520, %v2514
    %v3463 = vpack.c.b16 %v2521, %v2515
    %v3464 = vpack.c.b16 %v2522, %v2516
    %v3465 = vpack.c.b16 %v2523, %v2517
    %v3466 = vpack.c.b16 %v2524, %v2518
    %v3467 = vpack.c.b16 %v2525, %v2519
    %v3468 = vpack.c.b16 %v2532, %v2526
    %v3469 = vpack.c.b16 %v2533, %v2527
    %v3470 = vpack.c.b16 %v2534, %v2528
    %v3471 = vpack.c.b16 %v2535, %v2529
    %v3472 = vpack.c.b16 %v2536, %v2530
    %v3473 = vpack.c.b16 %v2537, %v2531
    %v3474 = vpack.c.b16 %v2544, %v2538
    %v3475 = vpack.c.b16 %v2545, %v2539
    %v3476 = vpack.c.b16 %v2546, %v2540
    %v3477 = vpack.c.b16 %v2547, %v2541
    %v3478 = vpack.c.b16 %v2548, %v2542
    %v3479 = vpack.c.b16 %v2549, %v2543
    %v3480 = vpack.c.b16 %v2556, %v2550
    %v3481 = vpack.c.b16 %v2557, %v2551
    %v3482 = vpack.c.b16 %v2558, %v2552
    %v3483 = vpack.c.b16 %v2559, %v2553
    %v3484 = vpack.c.b16 %v2560, %v2554
    %v3485 = vpack.c.b16 %v2561, %v2555
    %v3486 = vpack.c.b16 %v2568, %v2562
    %v3487 = vpack.c.b16 %v2569, %v2563
    %v3488 = vpack.c.b16 %v2570, %v2564
    %v3489 = vpack.c.b16 %v2571, %v2565
    %v3490 = vpack.c.b16 %v2572, %v2566
    %v3491 = vpack.c.b16 %v2573, %v2567
    %v3492 = vpack.c.b16 %v2580, %v2574
    %v3493 = vpack.c.b16 %v2581, %v2575
    %v3494 = vpack.c.b16 %v2582, %v2576
    %v3495 = vpack.c.b16 %v2583, %v2577
    %v3496 = vpack.c.b16 %v2584, %v2578
    %v3497 = vpack.c.b16 %v2585, %v2579
    %v3498 = vpack.c.b16 %v2592, %v2586
    %v3499 = vpack.c.b16 %v2593, %v2587
    %v3500 = vpack.c.b16 %v2594, %v2588
    %v3501 = vpack.c.b16 %v2595, %v2589
    %v3502 = vpack.c.b16 %v2596, %v2590
    %v3503 = vpack.c.b16 %v2597, %v2591
    %v3504 = vpack.c.b16 %v2604, %v2598
    %v3505 = vpack.c.b16 %v2605, %v2599
    %v3506 = vpack.c.b16 %v2606, %v2600
    %v3507 = vpack.c.b16 %v2607, %v2601
    %v3508 = vpack.c.b16 %v2608, %v2602
    %v3509 = vpack.c.b16 %v2609, %v2603
    %v3510 = vpack.c.b16 %v2616, %v2610
    %v3511 = vpack.c.b16 %v2617, %v2611
    %v3512 = vpack.c.b16 %v2618, %v2612
    %v3513 = vpack.c.b16 %v2619, %v2613
    %v3514 = vpack.c.b16 %v2620, %v2614
    %v3515 = vpack.c.b16 %v2621, %v2615
    %v3516 = vpack.c.b16 %v2628, %v2622
    %v3517 = vpack.c.b16 %v2629, %v2623
    %v3518 = vpack.c.b16 %v2630, %v2624
    %v3519 = vpack.c.b16 %v2631, %v2625
    %v3520 = vpack.c.b16 %v2632, %v2626
    %v3521 = vpack.c.b16 %v2633, %v2627
    %v3522 = vpack.c.b16 %v2640, %v2634
    %v3523 = vpack.c.b16 %v2641, %v2635
    %v3524 = vpack.c.b16 %v2642, %v2636
    %v3525 = vpack.c.b16 %v2643, %v2637
    %v3526 = vpack.c.b16 %v2644, %v2638
    %v3527 = vpack.c.b16 %v2645, %v2639
    %v3528 = vpack.c.b16 %v2652, %v2646
    %v3529 = vpack.c.b16 %v2653, %v2647
    %v3530 = vpack.c.b16 %v2654, %v2648
    %v3531 = vpack.c.b16 %v2655, %v2649
    %v3532 = vpack.c.b16 %v2656, %v2650
    %v3533 = vpack.c.b16 %v2657, %v2651
    %v3534 = vpack.c.b16 %v2664, %v2658
    %v3535 = vpack.c.b16 %v2665, %v2659
    %v3536 = vpack.c.b16 %v2666, %v2660
    %v3537 = vpack.c.b16 %v2667, %v2661
    %v3538 = vpack.c.b16 %v2668, %v2662
    %v3539 = vpack.c.b16 %v2669, %v2663
    %v3540 = vpack.c.b16 %v2676, %v2670
    %v3541 = vpack.c.b16 %v2677, %v2671
    %v3542 = vpack.c.b16 %v2678, %v2672
    %v3543 = vpack.c.b16 %v2679, %v2673
    %v3544 = vpack.c.b16 %v2680, %v2674
    %v3545 = vpack.c.b16 %v2681, %v2675
    %v3546 = vpack.c.b16 %v2688, %v2682
    %v3547 = vpack.c.b16 %v2689, %v2683
    %v3548 = vpack.c.b16 %v2690, %v2684
    %v3549 = vpack.c.b16 %v2691, %v2685
    %v3550 = vpack.c.b16 %v2692, %v2686
    %v3551 = vpack.c.b16 %v2693, %v2687
    %v3552 = vpack.c.b16 %v2700, %v2694
    %v3553 = vpack.c.b16 %v2701, %v2695
    %v3554 = vpack.c.b16 %v2702, %v2696
    %v3555 = vpack.c.b16 %v2703, %v2697
    %v3556 = vpack.c.b16 %v2704, %v2698
    %v3557 = vpack.c.b16 %v2705, %v2699
    %v3558 = vpack.c.b16 %v2712, %v2706
    %v3559 = vpack.c.b16 %v2713, %v2707
    %v3560 = vpack.c.b16 %v2714, %v2708
    %v3561 = vpack.c.b16 %v2715, %v2709
    %v3562 = vpack.c.b16 %v2716, %v2710
    %v3563 = vpack.c.b16 %v2717, %v2711
    %v3564 = vpack.c.b16 %v2724, %v2718
    %v3565 = vpack.c.b16 %v2725, %v2719
    %v3566 = vpack.c.b16 %v2726, %v2720
    %v3567 = vpack.c.b16 %v2727, %v2721
    %v3568 = vpack.c.b16 %v2728, %v2722
    %v3569 = vpack.c.b16 %v2729, %v2723
    %v3570 = vpack.c.b16 %v2736, %v2730
    %v3571 = vpack.c.b16 %v2737, %v2731
    %v3572 = vpack.c.b16 %v2738, %v2732
    %v3573 = vpack.c.b16 %v2739, %v2733
    %v3574 = vpack.c.b16 %v2740, %v2734
    %v3575 = vpack.c.b16 %v2741, %v2735
    %v3576 = vpack.c.b16 %v2748, %v2742
    %v3577 = vpack.c.b16 %v2749, %v2743
    %v3578 = vpack.c.b16 %v2750, %v2744
    %v3579 = vpack.c.b16 %v2751, %v2745
    %v3580 = vpack.c.b16 %v2752, %v2746
    %v3581 = vpack.c.b16 %v2753, %v2747
    %v3582 = vpack.c.b16 %v2760, %v2754
    %v3583 = vpack.c.b16 %v2761, %v2755
    %v3584 = vpack.c.b16 %v2762, %v2756
    %v3585 = vpack.c.b16 %v2763, %v2757
    %v3586 = vpack.c.b16 %v2764, %v2758
    %v3587 = vpack.c.b16 %v2765, %v2759
    %v3588 = vpack.c.b16 %v2772, %v2766
    %v3589 = vpack.c.b16 %v2773, %v2767
    %v3590 = vpack.c.b16 %v2774, %v2768
    %v3591 = vpack.c.b16 %v2775, %v2769
    %v3592 = vpack.c.b16 %v2776, %v2770
    %v3593 = vpack.c.b16 %v2777, %v2771
    %v3594 = vpack.c.b16 %v2784, %v2778
    %v3595 = vpack.c.b16 %v2785, %v2779
    %v3596 = vpack.c.b16 %v2786, %v2780
    %v3597 = vpack.c.b16 %v2787, %v2781
    %v3598 = vpack.c.b16 %v2788, %v2782
    %v3599 = vpack.c.b16 %v2789, %v2783
    %v3600 = vpack.c.b16 %v2796, %v2790
    %v3601 = vpack.c.b16 %v2797, %v2791
    %v3602 = vpack.c.b16 %v2798, %v2792
    %v3603 = vpack.c.b16 %v2799, %v2793
    %v3604 = vpack.c.b16 %v2800, %v2794
    %v3605 = vpack.c.b16 %v2801, %v2795
    %v3606 = vpack.c.b16 %v2808, %v2802
    %v3607 = vpack.c.b16 %v2809, %v2803
    %v3608 = vpack.c.b16 %v2810, %v2804
    %v3609 = vpack.c.b16 %v2811, %v2805
    %v3610 = vpack.c.b16 %v2812, %v2806
    %v3611 = vpack.c.b16 %v2813, %v2807
    %v3612 = vpack.c.b16 %v2820, %v2814
    %v3613 = vpack.c.b16 %v2821, %v2815
    %v3614 = vpack.c.b16 %v2822, %v2816
    %v3615 = vpack.c.b16 %v2823, %v2817
    %v3616 = vpack.c.b16 %v2824, %v2818
    %v3617 = vpack.c.b16 %v2825, %v2819
    %v3618 = vpack.c.b16 %v2832, %v2826
    %v3619 = vpack.c.b16 %v2833, %v2827
    %v3620 = vpack.c.b16 %v2834, %v2828
    %v3621 = vpack.c.b16 %v2835, %v2829
    %v3622 = vpack.c.b16 %v2836, %v2830
    %v3623 = vpack.c.b16 %v2837, %v2831
    %v3624 = vpack.c.b16 %v2844, %v2838
    %v3625 = vpack.c.b16 %v2845, %v2839
    %v3626 = vpack.c.b16 %v2846, %v2840
    %v3627 = vpack.c.b16 %v2847, %v2841
    %v3628 = vpack.c.b16 %v2848, %v2842
    %v3629 = vpack.c.b16 %v2849, %v2843
    %v3630 = vpack.c.b16 %v2856, %v2850
    %v3631 = vpack.c.b16 %v2857, %v2851
    %v3632 = vpack.c.b16 %v2858, %v2852
    %v3633 = vpack.c.b16 %v2859, %v2853
    %v3634 = vpack.c.b16 %v2860, %v2854
    %v3635 = vpack.c.b16 %v2861, %v2855
    %v3636 = vpack.c.b16 %v2868, %v2862
    %v3637 = vpack.c.b16 %v2869, %v2863
    %v3638 = vpack.c.b16 %v2870, %v2864
    %v3639 = vpack.c.b16 %v2871, %v2865
    %v3640 = vpack.c.b16 %v2872, %v2866
    %v3641 = vpack.c.b16 %v2873, %v2867
    %v3642 = vpack.c.b16 %v2880, %v2874
    %v3643 = vpack.c.b16 %v2881, %v2875
    %v3644 = vpack.c.b16 %v2882, %v2876
    %v3645 = vpack.c.b16 %v2883, %v2877
    %v3646 = vpack.c.b16 %v2884, %v2878
    %v3647 = vpack.c.b16 %v2885, %v2879
    %v3648 = vpack.c.b16 %v2892, %v2886
    %v3649 = vpack.c.b16 %v2893, %v2887
    %v3650 = vpack.c.b16 %v2894, %v2888
    %v3651 = vpack.c.b16 %v2895, %v2889
    %v3652 = vpack.c.b16 %v2896, %v2890
    %v3653 = vpack.c.b16 %v2897, %v2891
    %v3654 = vpack.c.b16 %v2904, %v2898
    %v3655 = vpack.c.b16 %v2905, %v2899
    %v3656 = vpack.c.b16 %v2906, %v2900
    %v3657 = vpack.c.b16 %v2907, %v2901
    %v3658 = vpack.c.b16 %v2908, %v2902
    %v3659 = vpack.c.b16 %v2909, %v2903
    %v3660 = vpack.c.b16 %v2916, %v2910
    %v3661 = vpack.c.b16 %v2917, %v2911
    %v3662 = vpack.c.b16 %v2918, %v2912
    %v3663 = vpack.c.b16 %v2919, %v2913
    %v3664 = vpack.c.b16 %v2920, %v2914
    %v3665 = vpack.c.b16 %v2921, %v2915
    %v3666 = vpack.c.b16 %v2928, %v2922
    %v3667 = vpack.c.b16 %v2929, %v2923
    %v3668 = vpack.c.b16 %v2930, %v2924
    %v3669 = vpack.c.b16 %v2931, %v2925
    %v3670 = vpack.c.b16 %v2932, %v2926
    %v3671 = vpack.c.b16 %v2933, %v2927
    %v3672 = vpack.c.b16 %v2940, %v2934
    %v3673 = vpack.c.b16 %v2941, %v2935
    %v3674 = vpack.c.b16 %v2942, %v2936
    %v3675 = vpack.c.b16 %v2943, %v2937
    %v3676 = vpack.c.b16 %v2944, %v2938
    %v3677 = vpack.c.b16 %v2945, %v2939
    %v3678 = vpack.c.b16 %v2952, %v2946
    %v3679 = vpack.c.b16 %v2953, %v2947
    %v3680 = vpack.c.b16 %v2954, %v2948
    %v3681 = vpack.c.b16 %v2955, %v2949
    %v3682 = vpack.c.b16 %v2956, %v2950
    %v3683 = vpack.c.b16 %v2957, %v2951
    %v3684 = vpack.c.b16 %v2964, %v2958
    %v3685 = vpack.c.b16 %v2965, %v2959
    %v3686 = vpack.c.b16 %v2966, %v2960
    %v3687 = vpack.c.b16 %v2967, %v2961
    %v3688 = vpack.c.b16 %v2968, %v2962
    %v3689 = vpack.c.b16 %v2969, %v2963
    %v3690 = vpack.c.b16 %v2976, %v2970
    %v3691 = vpack.c.b16 %v2977, %v2971
    %v3692 = vpack.c.b16 %v2978, %v2972
    %v3693 = vpack.c.b16 %v2979, %v2973
    %v3694 = vpack.c.b16 %v2980, %v2974
    %v3695 = vpack.c.b16 %v2981, %v2975
    %v3696 = vpack.c.b16 %v2988, %v2982
    %v3697 = vpack.c.b16 %v2989, %v2983
    %v3698 = vpack.c.b16 %v2990, %v2984
    %v3699 = vpack.c.b16 %v2991, %v2985
    %v3700 = vpack.c.b16 %v2992, %v2986
    %v3701 = vpack.c.b16 %v2993, %v2987
    %v3702 = vpack.c.b16 %v3000, %v2994
    %v3703 = vpack.c.b16 %v3001, %v2995
    %v3704 = vpack.c.b16 %v3002, %v2996
    %v3705 = vpack.c.b16 %v3003, %v2997
    %v3706 = vpack.c.b16 %v3004, %v2998
    %v3707 = vpack.c.b16 %v3005, %v2999
    %v3708 = vpack.c.b16 %v3012, %v3006
    %v3709 = vpack.c.b16 %v3013, %v3007
    %v3710 = vpack.c.b16 %v3014, %v3008
    %v3711 = vpack.c.b16 %v3015, %v3009
    %v3712 = vpack.c.b16 %v3016, %v3010
    %v3713 = vpack.c.b16 %v3017, %v3011
    %v3714 = vpack.c.b16 %v3024, %v3018
    %v3715 = vpack.c.b16 %v3025, %v3019
    %v3716 = vpack.c.b16 %v3026, %v3020
    %v3717 = vpack.c.b16 %v3027, %v3021
    %v3718 = vpack.c.b16 %v3028, %v3022
    %v3719 = vpack.c.b16 %v3029, %v3023
    %v3720 = vpack.c.b16 %v3036, %v3030
    %v3721 = vpack.c.b16 %v3037, %v3031
    %v3722 = vpack.c.b16 %v3038, %v3032
    %v3723 = vpack.c.b16 %v3039, %v3033
    %v3724 = vpack.c.b16 %v3040, %v3034
    %v3725 = vpack.c.b16 %v3041, %v3035
    %v3726 = vpack.c.b16 %v3048, %v3042
    %v3727 = vpack.c.b16 %v3049, %v3043
    %v3728 = vpack.c.b16 %v3050, %v3044
    %v3729 = vpack.c.b16 %v3051, %v3045
    %v3730 = vpack.c.b16 %v3052, %v3046
    %v3731 = vpack.c.b16 %v3053, %v3047
    %v3732 = vpack.c.b16 %v3060, %v3054
    %v3733 = vpack.c.b16 %v3061, %v3055
    %v3734 = vpack.c.b16 %v3062, %v3056
    %v3735 = vpack.c.b16 %v3063, %v3057
    %v3736 = vpack.c.b16 %v3064, %v3058
    %v3737 = vpack.c.b16 %v3065, %v3059
    %4410 = vmatprep.subr.bf16.mxu0 %v3109
    %4411 = vmatpush1.bf16.msra.mxu0 %v3108
    %4412 = vmatprep.subr.bf16.mxu0 %v3103
    %4413 = vmatpush1.bf16.msra.mxu0 %v3102
    %4414 = vmatprep.subr.bf16.mxu0 %v3097
    %4415 = vmatpush1.bf16.msra.mxu0 %v3096
    %4416 = vmatprep.subr.bf16.mxu0 %v3091
    %4417 = vmatpush1.bf16.msra.mxu0 %v3090
    %4418 = vmatprep.subr.bf16.mxu0 %v3085
    %4419 = vmatpush1.bf16.msra.mxu0 %v3084
    %4420 = vmatprep.subr.bf16.mxu0 %v3079
    %4421 = vmatpush1.bf16.msra.mxu0 %v3078
    %4422 = vmatprep.subr.bf16.mxu0 %v3073
    %4423 = vmatpush1.bf16.msra.mxu0 %v3072
    %4424 = vmatprep.subr.bf16.mxu0 %v3067
    %4425 = vmatpush1.bf16.msra.mxu0 %v3066
    %4426 = vmatprep.subr.bf16.mxu0 %v3157
    %4427 = vmatpush2.bf16.msra.mxu0 %v3156
    %4428 = vmatprep.subr.bf16.mxu0 %v3151
    %4429 = vmatpush2.bf16.msra.mxu0 %v3150
    %4430 = vmatprep.subr.bf16.mxu0 %v3145
    %4431 = vmatpush2.bf16.msra.mxu0 %v3144
    %4432 = vmatprep.subr.bf16.mxu0 %v3139
    %4433 = vmatpush2.bf16.msra.mxu0 %v3138
    %4434 = vmatprep.subr.bf16.mxu0 %v3133
    %4435 = vmatpush2.bf16.msra.mxu0 %v3132
    %4436 = vmatprep.subr.bf16.mxu0 %v3127
    %4437 = vmatpush2.bf16.msra.mxu0 %v3126
    %4438 = vmatprep.subr.bf16.mxu0 %v3121
    %4439 = vmatpush2.bf16.msra.mxu0 %v3120
    %4440 = vmatprep.subr.bf16.mxu0 %v3115
    %4441 = vmatpush2.bf16.msra.mxu0 %v3114
    %4442 = vmatprep.mubr.bf16.mxu0 %v1023
    %4443 = vmatmul.mubr.bf16.gmra.mxu0 %v1022
    %v4444 = vpop.f32.mrf.mxu0
    %v4445 = vadd.f32 0.0, %v4444
    %v4446 = vpop.f32.mrf.mxu0
    %v4447 = vadd.f32 0.0, %v4446
    %v4448 = vpop.f32.mrf.mxu0
    %v4449 = vpop.f32.mrf.mxu0
    %4450 = vdwg.mxu0
    %4451 = vmatprep.subr.bf16.mxu0 %v3205
    %4452 = vmatpush1.bf16.msra.mxu0 %v3204
    %4453 = vmatprep.subr.bf16.mxu0 %v3199
    %4454 = vmatpush1.bf16.msra.mxu0 %v3198
    %4455 = vmatprep.subr.bf16.mxu0 %v3193
    %4456 = vmatpush1.bf16.msra.mxu0 %v3192
    %4457 = vmatprep.subr.bf16.mxu0 %v3187
    %4458 = vmatpush1.bf16.msra.mxu0 %v3186
    %4459 = vmatprep.subr.bf16.mxu0 %v3181
    %4460 = vmatpush1.bf16.msra.mxu0 %v3180
    %4461 = vmatprep.subr.bf16.mxu0 %v3175
    %4462 = vmatpush1.bf16.msra.mxu0 %v3174
    %4463 = vmatprep.subr.bf16.mxu0 %v3169
    %4464 = vmatpush1.bf16.msra.mxu0 %v3168
    %4465 = vmatprep.subr.bf16.mxu0 %v3163
    %4466 = vmatpush1.bf16.msra.mxu0 %v3162
    %4467 = vmatprep.subr.bf16.mxu0 %v3253
    %4468 = vmatpush2.bf16.msra.mxu0 %v3252
    %4469 = vmatprep.subr.bf16.mxu0 %v3247
    %4470 = vmatpush2.bf16.msra.mxu0 %v3246
    %4471 = vmatprep.subr.bf16.mxu0 %v3241
    %4472 = vmatpush2.bf16.msra.mxu0 %v3240
    %4473 = vmatprep.subr.bf16.mxu0 %v3235
    %4474 = vmatpush2.bf16.msra.mxu0 %v3234
    %4475 = vmatprep.subr.bf16.mxu0 %v3229
    %4476 = vmatpush2.bf16.msra.mxu0 %v3228
    %4477 = vmatprep.subr.bf16.mxu0 %v3223
    %4478 = vmatpush2.bf16.msra.mxu0 %v3222
    %4479 = vmatprep.subr.bf16.mxu0 %v3217
    %4480 = vmatpush2.bf16.msra.mxu0 %v3216
    %4481 = vmatprep.subr.bf16.mxu0 %v3211
    %4482 = vmatpush2.bf16.msra.mxu0 %v3210
    %4483 = vmatprep.mubr.bf16.mxu0 %v1025
    %4484 = vmatmul.mubr.bf16.gmra.mxu0 %v1024
    %v4485 = vpop.f32.mrf.mxu0
    %v4486 = vadd.f32 %v4445, %v4485
    %v4487 = vpop.f32.mrf.mxu0
    %v4488 = vadd.f32 %v4447, %v4487
    %v4489 = vpop.f32.mrf.mxu0
    %v4490 = vpop.f32.mrf.mxu0
    %4491 = vdwg.mxu0
    %4492 = vmatprep.subr.bf16.mxu0 %v3301
    %4493 = vmatpush1.bf16.msra.mxu0 %v3300
    %4494 = vmatprep.subr.bf16.mxu0 %v3295
    %4495 = vmatpush1.bf16.msra.mxu0 %v3294
    %4496 = vmatprep.subr.bf16.mxu0 %v3289
    %4497 = vmatpush1.bf16.msra.mxu0 %v3288
    %4498 = vmatprep.subr.bf16.mxu0 %v3283
    %4499 = vmatpush1.bf16.msra.mxu0 %v3282
    %4500 = vmatprep.subr.bf16.mxu0 %v3277
    %4501 = vmatpush1.bf16.msra.mxu0 %v3276
    %4502 = vmatprep.subr.bf16.mxu0 %v3271
    %4503 = vmatpush1.bf16.msra.mxu0 %v3270
    %4504 = vmatprep.subr.bf16.mxu0 %v3265
    %4505 = vmatpush1.bf16.msra.mxu0 %v3264
    %4506 = vmatprep.subr.bf16.mxu0 %v3259
    %4507 = vmatpush1.bf16.msra.mxu0 %v3258
    %4508 = vmatprep.subr.bf16.mxu0 %v3349
    %4509 = vmatpush2.bf16.msra.mxu0 %v3348
    %4510 = vmatprep.subr.bf16.mxu0 %v3343
    %4511 = vmatpush2.bf16.msra.mxu0 %v3342
    %4512 = vmatprep.subr.bf16.mxu0 %v3337
    %4513 = vmatpush2.bf16.msra.mxu0 %v3336
    %4514 = vmatprep.subr.bf16.mxu0 %v3331
    %4515 = vmatpush2.bf16.msra.mxu0 %v3330
    %4516 = vmatprep.subr.bf16.mxu0 %v3325
    %4517 = vmatpush2.bf16.msra.mxu0 %v3324
    %4518 = vmatprep.subr.bf16.mxu0 %v3319
    %4519 = vmatpush2.bf16.msra.mxu0 %v3318
    %4520 = vmatprep.subr.bf16.mxu0 %v3313
    %4521 = vmatpush2.bf16.msra.mxu0 %v3312
    %4522 = vmatprep.subr.bf16.mxu0 %v3307
    %4523 = vmatpush2.bf16.msra.mxu0 %v3306
    %4524 = vmatprep.mubr.bf16.mxu0 %v1027
    %4525 = vmatmul.mubr.bf16.gmra.mxu0 %v1026
    %v4526 = vpop.f32.mrf.mxu0
    %v4527 = vadd.f32 %v4486, %v4526
    %v4528 = vpop.f32.mrf.mxu0
    %v4529 = vadd.f32 %v4488, %v4528
    %v4530 = vpop.f32.mrf.mxu0
    %v4531 = vpop.f32.mrf.mxu0
    %4532 = vdwg.mxu0
    %4533 = vmatprep.subr.bf16.mxu0 %v3397
    %4534 = vmatpush1.bf16.msra.mxu0 %v3396
    %4535 = vmatprep.subr.bf16.mxu0 %v3391
    %4536 = vmatpush1.bf16.msra.mxu0 %v3390
    %4537 = vmatprep.subr.bf16.mxu0 %v3385
    %4538 = vmatpush1.bf16.msra.mxu0 %v3384
    %4539 = vmatprep.subr.bf16.mxu0 %v3379
    %4540 = vmatpush1.bf16.msra.mxu0 %v3378
    %4541 = vmatprep.subr.bf16.mxu0 %v3373
    %4542 = vmatpush1.bf16.msra.mxu0 %v3372
    %4543 = vmatprep.subr.bf16.mxu0 %v3367
    %4544 = vmatpush1.bf16.msra.mxu0 %v3366
    %4545 = vmatprep.subr.bf16.mxu0 %v3361
    %4546 = vmatpush1.bf16.msra.mxu0 %v3360
    %4547 = vmatprep.subr.bf16.mxu0 %v3355
    %4548 = vmatpush1.bf16.msra.mxu0 %v3354
    %4549 = vmatprep.subr.bf16.mxu0 %v3445
    %4550 = vmatpush2.bf16.msra.mxu0 %v3444
    %4551 = vmatprep.subr.bf16.mxu0 %v3439
    %4552 = vmatpush2.bf16.msra.mxu0 %v3438
    %4553 = vmatprep.subr.bf16.mxu0 %v3433
    %4554 = vmatpush2.bf16.msra.mxu0 %v3432
    %4555 = vmatprep.subr.bf16.mxu0 %v3427
    %4556 = vmatpush2.bf16.msra.mxu0 %v3426
    %4557 = vmatprep.subr.bf16.mxu0 %v3421
    %4558 = vmatpush2.bf16.msra.mxu0 %v3420
    %4559 = vmatprep.subr.bf16.mxu0 %v3415
    %4560 = vmatpush2.bf16.msra.mxu0 %v3414
    %4561 = vmatprep.subr.bf16.mxu0 %v3409
    %4562 = vmatpush2.bf16.msra.mxu0 %v3408
    %4563 = vmatprep.subr.bf16.mxu0 %v3403
    %4564 = vmatpush2.bf16.msra.mxu0 %v3402
    %4565 = vmatprep.mubr.bf16.mxu0 %v1029
    %4566 = vmatmul.mubr.bf16.gmra.mxu0 %v1028
    %v4567 = vpop.f32.mrf.mxu0
    %v4568 = vadd.f32 %v4527, %v4567
    %v4569 = vpop.f32.mrf.mxu0
    %v4570 = vadd.f32 %v4529, %v4569
    %v4571 = vpop.f32.mrf.mxu0
    %v4572 = vpop.f32.mrf.mxu0
    %4573 = vdwg.mxu0
    %4574 = vmatprep.subr.bf16.mxu0 %v3493
    %4575 = vmatpush1.bf16.msra.mxu0 %v3492
    %4576 = vmatprep.subr.bf16.mxu0 %v3487
    %4577 = vmatpush1.bf16.msra.mxu0 %v3486
    %4578 = vmatprep.subr.bf16.mxu0 %v3481
    %4579 = vmatpush1.bf16.msra.mxu0 %v3480
    %4580 = vmatprep.subr.bf16.mxu0 %v3475
    %4581 = vmatpush1.bf16.msra.mxu0 %v3474
    %4582 = vmatprep.subr.bf16.mxu0 %v3469
    %4583 = vmatpush1.bf16.msra.mxu0 %v3468
    %4584 = vmatprep.subr.bf16.mxu0 %v3463
    %4585 = vmatpush1.bf16.msra.mxu0 %v3462
    %4586 = vmatprep.subr.bf16.mxu0 %v3457
    %4587 = vmatpush1.bf16.msra.mxu0 %v3456
    %4588 = vmatprep.subr.bf16.mxu0 %v3451
    %4589 = vmatpush1.bf16.msra.mxu0 %v3450
    %4590 = vmatprep.subr.bf16.mxu0 %v3541
    %4591 = vmatpush2.bf16.msra.mxu0 %v3540
    %4592 = vmatprep.subr.bf16.mxu0 %v3535
    %4593 = vmatpush2.bf16.msra.mxu0 %v3534
    %4594 = vmatprep.subr.bf16.mxu0 %v3529
    %4595 = vmatpush2.bf16.msra.mxu0 %v3528
    %4596 = vmatprep.subr.bf16.mxu0 %v3523
    %4597 = vmatpush2.bf16.msra.mxu0 %v3522
    %4598 = vmatprep.subr.bf16.mxu0 %v3517
    %4599 = vmatpush2.bf16.msra.mxu0 %v3516
    %4600 = vmatprep.subr.bf16.mxu0 %v3511
    %4601 = vmatpush2.bf16.msra.mxu0 %v3510
    %4602 = vmatprep.subr.bf16.mxu0 %v3505
    %4603 = vmatpush2.bf16.msra.mxu0 %v3504
    %4604 = vmatprep.subr.bf16.mxu0 %v3499
    %4605 = vmatpush2.bf16.msra.mxu0 %v3498
    %4606 = vmatprep.mubr.bf16.mxu0 %v1031
    %4607 = vmatmul.mubr.bf16.gmra.mxu0 %v1030
    %v4608 = vpop.f32.mrf.mxu0
    %v4609 = vadd.f32 %v4568, %v4608
    %v4610 = vpop.f32.mrf.mxu0
    %v4611 = vadd.f32 %v4570, %v4610
    %v4612 = vpop.f32.mrf.mxu0
    %v4613 = vpop.f32.mrf.mxu0
    %4614 = vdwg.mxu0
    %4615 = vmatprep.subr.bf16.mxu0 %v3589
    %4616 = vmatpush1.bf16.msra.mxu0 %v3588
    %4617 = vmatprep.subr.bf16.mxu0 %v3583
    %4618 = vmatpush1.bf16.msra.mxu0 %v3582
    %4619 = vmatprep.subr.bf16.mxu0 %v3577
    %4620 = vmatpush1.bf16.msra.mxu0 %v3576
    %4621 = vmatprep.subr.bf16.mxu0 %v3571
    %4622 = vmatpush1.bf16.msra.mxu0 %v3570
    %4623 = vmatprep.subr.bf16.mxu0 %v3565
    %4624 = vmatpush1.bf16.msra.mxu0 %v3564
    %4625 = vmatprep.subr.bf16.mxu0 %v3559
    %4626 = vmatpush1.bf16.msra.mxu0 %v3558
    %4627 = vmatprep.subr.bf16.mxu0 %v3553
    %4628 = vmatpush1.bf16.msra.mxu0 %v3552
    %4629 = vmatprep.subr.bf16.mxu0 %v3547
    %4630 = vmatpush1.bf16.msra.mxu0 %v3546
    %4631 = vmatprep.subr.bf16.mxu0 %v3637
    %4632 = vmatpush2.bf16.msra.mxu0 %v3636
    %4633 = vmatprep.subr.bf16.mxu0 %v3631
    %4634 = vmatpush2.bf16.msra.mxu0 %v3630
    %4635 = vmatprep.subr.bf16.mxu0 %v3625
    %4636 = vmatpush2.bf16.msra.mxu0 %v3624
    %4637 = vmatprep.subr.bf16.mxu0 %v3619
    %4638 = vmatpush2.bf16.msra.mxu0 %v3618
    %4639 = vmatprep.subr.bf16.mxu0 %v3613
    %4640 = vmatpush2.bf16.msra.mxu0 %v3612
    %4641 = vmatprep.subr.bf16.mxu0 %v3607
    %4642 = vmatpush2.bf16.msra.mxu0 %v3606
    %4643 = vmatprep.subr.bf16.mxu0 %v3601
    %4644 = vmatpush2.bf16.msra.mxu0 %v3600
    %4645 = vmatprep.subr.bf16.mxu0 %v3595
    %4646 = vmatpush2.bf16.msra.mxu0 %v3594
    %4647 = vmatprep.mubr.bf16.mxu0 %v1033
    %4648 = vmatmul.mubr.bf16.gmra.mxu0 %v1032
    %v4649 = vpop.f32.mrf.mxu0
    %v4650 = vadd.f32 %v4609, %v4649
    %v4651 = vpop.f32.mrf.mxu0
    %v4652 = vadd.f32 %v4611, %v4651
    %v4653 = vpop.f32.mrf.mxu0
    %v4654 = vpop.f32.mrf.mxu0
    %4655 = vdwg.mxu0
    %4656 = vmatprep.subr.bf16.mxu0 %v3685
    %4657 = vmatpush1.bf16.msra.mxu0 %v3684
    %4658 = vmatprep.subr.bf16.mxu0 %v3679
    %4659 = vmatpush1.bf16.msra.mxu0 %v3678
    %4660 = vmatprep.subr.bf16.mxu0 %v3673
    %4661 = vmatpush1.bf16.msra.mxu0 %v3672
    %4662 = vmatprep.subr.bf16.mxu0 %v3667
    %4663 = vmatpush1.bf16.msra.mxu0 %v3666
    %4664 = vmatprep.subr.bf16.mxu0 %v3661
    %4665 = vmatpush1.bf16.msra.mxu0 %v3660
    %4666 = vmatprep.subr.bf16.mxu0 %v3655
    %4667 = vmatpush1.bf16.msra.mxu0 %v3654
    %4668 = vmatprep.subr.bf16.mxu0 %v3649
    %4669 = vmatpush1.bf16.msra.mxu0 %v3648
    %4670 = vmatprep.subr.bf16.mxu0 %v3643
    %4671 = vmatpush1.bf16.msra.mxu0 %v3642
    %4672 = vmatprep.subr.bf16.mxu0 %v3733
    %4673 = vmatpush2.bf16.msra.mxu0 %v3732
    %4674 = vmatprep.subr.bf16.mxu0 %v3727
    %4675 = vmatpush2.bf16.msra.mxu0 %v3726
    %4676 = vmatprep.subr.bf16.mxu0 %v3721
    %4677 = vmatpush2.bf16.msra.mxu0 %v3720
    %4678 = vmatprep.subr.bf16.mxu0 %v3715
    %4679 = vmatpush2.bf16.msra.mxu0 %v3714
    %4680 = vmatprep.subr.bf16.mxu0 %v3709
    %4681 = vmatpush2.bf16.msra.mxu0 %v3708
    %4682 = vmatprep.subr.bf16.mxu0 %v3703
    %4683 = vmatpush2.bf16.msra.mxu0 %v3702
    %4684 = vmatprep.subr.bf16.mxu0 %v3697
    %4685 = vmatpush2.bf16.msra.mxu0 %v3696
    %4686 = vmatprep.subr.bf16.mxu0 %v3691
    %4687 = vmatpush2.bf16.msra.mxu0 %v3690
    %4688 = vmatprep.mubr.bf16.mxu0 %v1035
    %4689 = vmatmul.mubr.bf16.gmra.mxu0 %v1034
    %v4690 = vpop.f32.mrf.mxu0
    %v4691 = vadd.f32 %v4650, %v4690
    %v4692 = vpop.f32.mrf.mxu0
    %v4693 = vadd.f32 %v4652, %v4692
    %v4694 = vpop.f32.mrf.mxu0
    %v4695 = vpop.f32.mrf.mxu0
    %4696 = vdwg.mxu0
    %4697 = vmatprep.subr.bf16.mxu0 %v3111
    %4698 = vmatpush1.bf16.msra.mxu0 %v3110
    %4699 = vmatprep.subr.bf16.mxu0 %v3105
    %4700 = vmatpush1.bf16.msra.mxu0 %v3104
    %4701 = vmatprep.subr.bf16.mxu0 %v3099
    %4702 = vmatpush1.bf16.msra.mxu0 %v3098
    %4703 = vmatprep.subr.bf16.mxu0 %v3093
    %4704 = vmatpush1.bf16.msra.mxu0 %v3092
    %4705 = vmatprep.subr.bf16.mxu0 %v3087
    %4706 = vmatpush1.bf16.msra.mxu0 %v3086
    %4707 = vmatprep.subr.bf16.mxu0 %v3081
    %4708 = vmatpush1.bf16.msra.mxu0 %v3080
    %4709 = vmatprep.subr.bf16.mxu0 %v3075
    %4710 = vmatpush1.bf16.msra.mxu0 %v3074
    %4711 = vmatprep.subr.bf16.mxu0 %v3069
    %4712 = vmatpush1.bf16.msra.mxu0 %v3068
    %4713 = vmatprep.subr.bf16.mxu0 %v3159
    %4714 = vmatpush2.bf16.msra.mxu0 %v3158
    %4715 = vmatprep.subr.bf16.mxu0 %v3153
    %4716 = vmatpush2.bf16.msra.mxu0 %v3152
    %4717 = vmatprep.subr.bf16.mxu0 %v3147
    %4718 = vmatpush2.bf16.msra.mxu0 %v3146
    %4719 = vmatprep.subr.bf16.mxu0 %v3141
    %4720 = vmatpush2.bf16.msra.mxu0 %v3140
    %4721 = vmatprep.subr.bf16.mxu0 %v3135
    %4722 = vmatpush2.bf16.msra.mxu0 %v3134
    %4723 = vmatprep.subr.bf16.mxu0 %v3129
    %4724 = vmatpush2.bf16.msra.mxu0 %v3128
    %4725 = vmatprep.subr.bf16.mxu0 %v3123
    %4726 = vmatpush2.bf16.msra.mxu0 %v3122
    %4727 = vmatprep.subr.bf16.mxu0 %v3117
    %4728 = vmatpush2.bf16.msra.mxu0 %v3116
    %4729 = vmatprep.mubr.bf16.mxu0 %v1023
    %4730 = vmatmul.mubr.bf16.gmra.mxu0 %v1022
    %v4731 = vpop.f32.mrf.mxu0
    %v4732 = vadd.f32 0.0, %v4731
    %v4733 = vpop.f32.mrf.mxu0
    %v4734 = vadd.f32 0.0, %v4733
    %v4735 = vpop.f32.mrf.mxu0
    %v4736 = vpop.f32.mrf.mxu0
    %4737 = vdwg.mxu0
    %4738 = vmatprep.subr.bf16.mxu0 %v3207
    %4739 = vmatpush1.bf16.msra.mxu0 %v3206
    %4740 = vmatprep.subr.bf16.mxu0 %v3201
    %4741 = vmatpush1.bf16.msra.mxu0 %v3200
    %4742 = vmatprep.subr.bf16.mxu0 %v3195
    %4743 = vmatpush1.bf16.msra.mxu0 %v3194
    %4744 = vmatprep.subr.bf16.mxu0 %v3189
    %4745 = vmatpush1.bf16.msra.mxu0 %v3188
    %4746 = vmatprep.subr.bf16.mxu0 %v3183
    %4747 = vmatpush1.bf16.msra.mxu0 %v3182
    %4748 = vmatprep.subr.bf16.mxu0 %v3177
    %4749 = vmatpush1.bf16.msra.mxu0 %v3176
    %4750 = vmatprep.subr.bf16.mxu0 %v3171
    %4751 = vmatpush1.bf16.msra.mxu0 %v3170
    %4752 = vmatprep.subr.bf16.mxu0 %v3165
    %4753 = vmatpush1.bf16.msra.mxu0 %v3164
    %4754 = vmatprep.subr.bf16.mxu0 %v3255
    %4755 = vmatpush2.bf16.msra.mxu0 %v3254
    %4756 = vmatprep.subr.bf16.mxu0 %v3249
    %4757 = vmatpush2.bf16.msra.mxu0 %v3248
    %4758 = vmatprep.subr.bf16.mxu0 %v3243
    %4759 = vmatpush2.bf16.msra.mxu0 %v3242
    %4760 = vmatprep.subr.bf16.mxu0 %v3237
    %4761 = vmatpush2.bf16.msra.mxu0 %v3236
    %4762 = vmatprep.subr.bf16.mxu0 %v3231
    %4763 = vmatpush2.bf16.msra.mxu0 %v3230
    %4764 = vmatprep.subr.bf16.mxu0 %v3225
    %4765 = vmatpush2.bf16.msra.mxu0 %v3224
    %4766 = vmatprep.subr.bf16.mxu0 %v3219
    %4767 = vmatpush2.bf16.msra.mxu0 %v3218
    %4768 = vmatprep.subr.bf16.mxu0 %v3213
    %4769 = vmatpush2.bf16.msra.mxu0 %v3212
    %4770 = vmatprep.mubr.bf16.mxu0 %v1025
    %4771 = vmatmul.mubr.bf16.gmra.mxu0 %v1024
    %v4772 = vpop.f32.mrf.mxu0
    %v4773 = vadd.f32 %v4732, %v4772
    %v4774 = vpop.f32.mrf.mxu0
    %v4775 = vadd.f32 %v4734, %v4774
    %v4776 = vpop.f32.mrf.mxu0
    %v4777 = vpop.f32.mrf.mxu0
    %4778 = vdwg.mxu0
    %4779 = vmatprep.subr.bf16.mxu0 %v3303
    %4780 = vmatpush1.bf16.msra.mxu0 %v3302
    %4781 = vmatprep.subr.bf16.mxu0 %v3297
    %4782 = vmatpush1.bf16.msra.mxu0 %v3296
    %4783 = vmatprep.subr.bf16.mxu0 %v3291
    %4784 = vmatpush1.bf16.msra.mxu0 %v3290
    %4785 = vmatprep.subr.bf16.mxu0 %v3285
    %4786 = vmatpush1.bf16.msra.mxu0 %v3284
    %4787 = vmatprep.subr.bf16.mxu0 %v3279
    %4788 = vmatpush1.bf16.msra.mxu0 %v3278
    %4789 = vmatprep.subr.bf16.mxu0 %v3273
    %4790 = vmatpush1.bf16.msra.mxu0 %v3272
    %4791 = vmatprep.subr.bf16.mxu0 %v3267
    %4792 = vmatpush1.bf16.msra.mxu0 %v3266
    %4793 = vmatprep.subr.bf16.mxu0 %v3261
    %4794 = vmatpush1.bf16.msra.mxu0 %v3260
    %4795 = vmatprep.subr.bf16.mxu0 %v3351
    %4796 = vmatpush2.bf16.msra.mxu0 %v3350
    %4797 = vmatprep.subr.bf16.mxu0 %v3345
    %4798 = vmatpush2.bf16.msra.mxu0 %v3344
    %4799 = vmatprep.subr.bf16.mxu0 %v3339
    %4800 = vmatpush2.bf16.msra.mxu0 %v3338
    %4801 = vmatprep.subr.bf16.mxu0 %v3333
    %4802 = vmatpush2.bf16.msra.mxu0 %v3332
    %4803 = vmatprep.subr.bf16.mxu0 %v3327
    %4804 = vmatpush2.bf16.msra.mxu0 %v3326
    %4805 = vmatprep.subr.bf16.mxu0 %v3321
    %4806 = vmatpush2.bf16.msra.mxu0 %v3320
    %4807 = vmatprep.subr.bf16.mxu0 %v3315
    %4808 = vmatpush2.bf16.msra.mxu0 %v3314
    %4809 = vmatprep.subr.bf16.mxu0 %v3309
    %4810 = vmatpush2.bf16.msra.mxu0 %v3308
    %4811 = vmatprep.mubr.bf16.mxu0 %v1027
    %4812 = vmatmul.mubr.bf16.gmra.mxu0 %v1026
    %v4813 = vpop.f32.mrf.mxu0
    %v4814 = vadd.f32 %v4773, %v4813
    %v4815 = vpop.f32.mrf.mxu0
    %v4816 = vadd.f32 %v4775, %v4815
    %v4817 = vpop.f32.mrf.mxu0
    %v4818 = vpop.f32.mrf.mxu0
    %4819 = vdwg.mxu0
    %4820 = vmatprep.subr.bf16.mxu0 %v3399
    %4821 = vmatpush1.bf16.msra.mxu0 %v3398
    %4822 = vmatprep.subr.bf16.mxu0 %v3393
    %4823 = vmatpush1.bf16.msra.mxu0 %v3392
    %4824 = vmatprep.subr.bf16.mxu0 %v3387
    %4825 = vmatpush1.bf16.msra.mxu0 %v3386
    %4826 = vmatprep.subr.bf16.mxu0 %v3381
    %4827 = vmatpush1.bf16.msra.mxu0 %v3380
    %4828 = vmatprep.subr.bf16.mxu0 %v3375
    %4829 = vmatpush1.bf16.msra.mxu0 %v3374
    %4830 = vmatprep.subr.bf16.mxu0 %v3369
    %4831 = vmatpush1.bf16.msra.mxu0 %v3368
    %4832 = vmatprep.subr.bf16.mxu0 %v3363
    %4833 = vmatpush1.bf16.msra.mxu0 %v3362
    %4834 = vmatprep.subr.bf16.mxu0 %v3357
    %4835 = vmatpush1.bf16.msra.mxu0 %v3356
    %4836 = vmatprep.subr.bf16.mxu0 %v3447
    %4837 = vmatpush2.bf16.msra.mxu0 %v3446
    %4838 = vmatprep.subr.bf16.mxu0 %v3441
    %4839 = vmatpush2.bf16.msra.mxu0 %v3440
    %4840 = vmatprep.subr.bf16.mxu0 %v3435
    %4841 = vmatpush2.bf16.msra.mxu0 %v3434
    %4842 = vmatprep.subr.bf16.mxu0 %v3429
    %4843 = vmatpush2.bf16.msra.mxu0 %v3428
    %4844 = vmatprep.subr.bf16.mxu0 %v3423
    %4845 = vmatpush2.bf16.msra.mxu0 %v3422
    %4846 = vmatprep.subr.bf16.mxu0 %v3417
    %4847 = vmatpush2.bf16.msra.mxu0 %v3416
    %4848 = vmatprep.subr.bf16.mxu0 %v3411
    %4849 = vmatpush2.bf16.msra.mxu0 %v3410
    %4850 = vmatprep.subr.bf16.mxu0 %v3405
    %4851 = vmatpush2.bf16.msra.mxu0 %v3404
    %4852 = vmatprep.mubr.bf16.mxu0 %v1029
    %4853 = vmatmul.mubr.bf16.gmra.mxu0 %v1028
    %v4854 = vpop.f32.mrf.mxu0
    %v4855 = vadd.f32 %v4814, %v4854
    %v4856 = vpop.f32.mrf.mxu0
    %v4857 = vadd.f32 %v4816, %v4856
    %v4858 = vpop.f32.mrf.mxu0
    %v4859 = vpop.f32.mrf.mxu0
    %4860 = vdwg.mxu0
    %4861 = vmatprep.subr.bf16.mxu0 %v3495
    %4862 = vmatpush1.bf16.msra.mxu0 %v3494
    %4863 = vmatprep.subr.bf16.mxu0 %v3489
    %4864 = vmatpush1.bf16.msra.mxu0 %v3488
    %4865 = vmatprep.subr.bf16.mxu0 %v3483
    %4866 = vmatpush1.bf16.msra.mxu0 %v3482
    %4867 = vmatprep.subr.bf16.mxu0 %v3477
    %4868 = vmatpush1.bf16.msra.mxu0 %v3476
    %4869 = vmatprep.subr.bf16.mxu0 %v3471
    %4870 = vmatpush1.bf16.msra.mxu0 %v3470
    %4871 = vmatprep.subr.bf16.mxu0 %v3465
    %4872 = vmatpush1.bf16.msra.mxu0 %v3464
    %4873 = vmatprep.subr.bf16.mxu0 %v3459
    %4874 = vmatpush1.bf16.msra.mxu0 %v3458
    %4875 = vmatprep.subr.bf16.mxu0 %v3453
    %4876 = vmatpush1.bf16.msra.mxu0 %v3452
    %4877 = vmatprep.subr.bf16.mxu0 %v3543
    %4878 = vmatpush2.bf16.msra.mxu0 %v3542
    %4879 = vmatprep.subr.bf16.mxu0 %v3537
    %4880 = vmatpush2.bf16.msra.mxu0 %v3536
    %4881 = vmatprep.subr.bf16.mxu0 %v3531
    %4882 = vmatpush2.bf16.msra.mxu0 %v3530
    %4883 = vmatprep.subr.bf16.mxu0 %v3525
    %4884 = vmatpush2.bf16.msra.mxu0 %v3524
    %4885 = vmatprep.subr.bf16.mxu0 %v3519
    %4886 = vmatpush2.bf16.msra.mxu0 %v3518
    %4887 = vmatprep.subr.bf16.mxu0 %v3513
    %4888 = vmatpush2.bf16.msra.mxu0 %v3512
    %4889 = vmatprep.subr.bf16.mxu0 %v3507
    %4890 = vmatpush2.bf16.msra.mxu0 %v3506
    %4891 = vmatprep.subr.bf16.mxu0 %v3501
    %4892 = vmatpush2.bf16.msra.mxu0 %v3500
    %4893 = vmatprep.mubr.bf16.mxu0 %v1031
    %4894 = vmatmul.mubr.bf16.gmra.mxu0 %v1030
    %v4895 = vpop.f32.mrf.mxu0
    %v4896 = vadd.f32 %v4855, %v4895
    %v4897 = vpop.f32.mrf.mxu0
    %v4898 = vadd.f32 %v4857, %v4897
    %v4899 = vpop.f32.mrf.mxu0
    %v4900 = vpop.f32.mrf.mxu0
    %4901 = vdwg.mxu0
    %4902 = vmatprep.subr.bf16.mxu0 %v3591
    %4903 = vmatpush1.bf16.msra.mxu0 %v3590
    %4904 = vmatprep.subr.bf16.mxu0 %v3585
    %4905 = vmatpush1.bf16.msra.mxu0 %v3584
    %4906 = vmatprep.subr.bf16.mxu0 %v3579
    %4907 = vmatpush1.bf16.msra.mxu0 %v3578
    %4908 = vmatprep.subr.bf16.mxu0 %v3573
    %4909 = vmatpush1.bf16.msra.mxu0 %v3572
    %4910 = vmatprep.subr.bf16.mxu0 %v3567
    %4911 = vmatpush1.bf16.msra.mxu0 %v3566
    %4912 = vmatprep.subr.bf16.mxu0 %v3561
    %4913 = vmatpush1.bf16.msra.mxu0 %v3560
    %4914 = vmatprep.subr.bf16.mxu0 %v3555
    %4915 = vmatpush1.bf16.msra.mxu0 %v3554
    %4916 = vmatprep.subr.bf16.mxu0 %v3549
    %4917 = vmatpush1.bf16.msra.mxu0 %v3548
    %4918 = vmatprep.subr.bf16.mxu0 %v3639
    %4919 = vmatpush2.bf16.msra.mxu0 %v3638
    %4920 = vmatprep.subr.bf16.mxu0 %v3633
    %4921 = vmatpush2.bf16.msra.mxu0 %v3632
    %4922 = vmatprep.subr.bf16.mxu0 %v3627
    %4923 = vmatpush2.bf16.msra.mxu0 %v3626
    %4924 = vmatprep.subr.bf16.mxu0 %v3621
    %4925 = vmatpush2.bf16.msra.mxu0 %v3620
    %4926 = vmatprep.subr.bf16.mxu0 %v3615
    %4927 = vmatpush2.bf16.msra.mxu0 %v3614
    %4928 = vmatprep.subr.bf16.mxu0 %v3609
    %4929 = vmatpush2.bf16.msra.mxu0 %v3608
    %4930 = vmatprep.subr.bf16.mxu0 %v3603
    %4931 = vmatpush2.bf16.msra.mxu0 %v3602
    %4932 = vmatprep.subr.bf16.mxu0 %v3597
    %4933 = vmatpush2.bf16.msra.mxu0 %v3596
    %4934 = vmatprep.mubr.bf16.mxu0 %v1033
    %4935 = vmatmul.mubr.bf16.gmra.mxu0 %v1032
    %v4936 = vpop.f32.mrf.mxu0
    %v4937 = vadd.f32 %v4896, %v4936
    %v4938 = vpop.f32.mrf.mxu0
    %v4939 = vadd.f32 %v4898, %v4938
    %v4940 = vpop.f32.mrf.mxu0
    %v4941 = vpop.f32.mrf.mxu0
    %4942 = vdwg.mxu0
    %4943 = vmatprep.subr.bf16.mxu0 %v3687
    %4944 = vmatpush1.bf16.msra.mxu0 %v3686
    %4945 = vmatprep.subr.bf16.mxu0 %v3681
    %4946 = vmatpush1.bf16.msra.mxu0 %v3680
    %4947 = vmatprep.subr.bf16.mxu0 %v3675
    %4948 = vmatpush1.bf16.msra.mxu0 %v3674
    %4949 = vmatprep.subr.bf16.mxu0 %v3669
    %4950 = vmatpush1.bf16.msra.mxu0 %v3668
    %4951 = vmatprep.subr.bf16.mxu0 %v3663
    %4952 = vmatpush1.bf16.msra.mxu0 %v3662
    %4953 = vmatprep.subr.bf16.mxu0 %v3657
    %4954 = vmatpush1.bf16.msra.mxu0 %v3656
    %4955 = vmatprep.subr.bf16.mxu0 %v3651
    %4956 = vmatpush1.bf16.msra.mxu0 %v3650
    %4957 = vmatprep.subr.bf16.mxu0 %v3645
    %4958 = vmatpush1.bf16.msra.mxu0 %v3644
    %4959 = vmatprep.subr.bf16.mxu0 %v3735
    %4960 = vmatpush2.bf16.msra.mxu0 %v3734
    %4961 = vmatprep.subr.bf16.mxu0 %v3729
    %4962 = vmatpush2.bf16.msra.mxu0 %v3728
    %4963 = vmatprep.subr.bf16.mxu0 %v3723
    %4964 = vmatpush2.bf16.msra.mxu0 %v3722
    %4965 = vmatprep.subr.bf16.mxu0 %v3717
    %4966 = vmatpush2.bf16.msra.mxu0 %v3716
    %4967 = vmatprep.subr.bf16.mxu0 %v3711
    %4968 = vmatpush2.bf16.msra.mxu0 %v3710
    %4969 = vmatprep.subr.bf16.mxu0 %v3705
    %4970 = vmatpush2.bf16.msra.mxu0 %v3704
    %4971 = vmatprep.subr.bf16.mxu0 %v3699
    %4972 = vmatpush2.bf16.msra.mxu0 %v3698
    %4973 = vmatprep.subr.bf16.mxu0 %v3693
    %4974 = vmatpush2.bf16.msra.mxu0 %v3692
    %4975 = vmatprep.mubr.bf16.mxu0 %v1035
    %4976 = vmatmul.mubr.bf16.gmra.mxu0 %v1034
    %v4977 = vpop.f32.mrf.mxu0
    %v4978 = vadd.f32 %v4937, %v4977
    %v4979 = vpop.f32.mrf.mxu0
    %v4980 = vadd.f32 %v4939, %v4979
    %v4981 = vpop.f32.mrf.mxu0
    %v4982 = vpop.f32.mrf.mxu0
    %4983 = vdwg.mxu0
    %4984 = vmatprep.subr.bf16.mxu0 %v3113
    %4985 = vmatpush1.bf16.msra.mxu0 %v3112
    %4986 = vmatprep.subr.bf16.mxu0 %v3107
    %4987 = vmatpush1.bf16.msra.mxu0 %v3106
    %4988 = vmatprep.subr.bf16.mxu0 %v3101
    %4989 = vmatpush1.bf16.msra.mxu0 %v3100
    %4990 = vmatprep.subr.bf16.mxu0 %v3095
    %4991 = vmatpush1.bf16.msra.mxu0 %v3094
    %4992 = vmatprep.subr.bf16.mxu0 %v3089
    %4993 = vmatpush1.bf16.msra.mxu0 %v3088
    %4994 = vmatprep.subr.bf16.mxu0 %v3083
    %4995 = vmatpush1.bf16.msra.mxu0 %v3082
    %4996 = vmatprep.subr.bf16.mxu0 %v3077
    %4997 = vmatpush1.bf16.msra.mxu0 %v3076
    %4998 = vmatprep.subr.bf16.mxu0 %v3071
    %4999 = vmatpush1.bf16.msra.mxu0 %v3070
    %5000 = vmatprep.subr.bf16.mxu0 %v3161
    %5001 = vmatpush2.bf16.msra.mxu0 %v3160
    %5002 = vmatprep.subr.bf16.mxu0 %v3155
    %5003 = vmatpush2.bf16.msra.mxu0 %v3154
    %5004 = vmatprep.subr.bf16.mxu0 %v3149
    %5005 = vmatpush2.bf16.msra.mxu0 %v3148
    %5006 = vmatprep.subr.bf16.mxu0 %v3143
    %5007 = vmatpush2.bf16.msra.mxu0 %v3142
    %5008 = vmatprep.subr.bf16.mxu0 %v3137
    %5009 = vmatpush2.bf16.msra.mxu0 %v3136
    %5010 = vmatprep.subr.bf16.mxu0 %v3131
    %5011 = vmatpush2.bf16.msra.mxu0 %v3130
    %5012 = vmatprep.subr.bf16.mxu0 %v3125
    %5013 = vmatpush2.bf16.msra.mxu0 %v3124
    %5014 = vmatprep.subr.bf16.mxu0 %v3119
    %5015 = vmatpush2.bf16.msra.mxu0 %v3118
    %5016 = vmatprep.mubr.bf16.mxu0 %v1023
    %5017 = vmatmul.mubr.bf16.gmra.mxu0 %v1022
    %v5018 = vpop.f32.mrf.mxu0
    %v5019 = vadd.f32 0.0, %v5018
    %v5020 = vpop.f32.mrf.mxu0
    %v5021 = vadd.f32 0.0, %v5020
    %v5022 = vpop.f32.mrf.mxu0
    %v5023 = vpop.f32.mrf.mxu0
    %5024 = vdwg.mxu0
    %5025 = vmatprep.subr.bf16.mxu0 %v3209
    %5026 = vmatpush1.bf16.msra.mxu0 %v3208
    %5027 = vmatprep.subr.bf16.mxu0 %v3203
    %5028 = vmatpush1.bf16.msra.mxu0 %v3202
    %5029 = vmatprep.subr.bf16.mxu0 %v3197
    %5030 = vmatpush1.bf16.msra.mxu0 %v3196
    %5031 = vmatprep.subr.bf16.mxu0 %v3191
    %5032 = vmatpush1.bf16.msra.mxu0 %v3190
    %5033 = vmatprep.subr.bf16.mxu0 %v3185
    %5034 = vmatpush1.bf16.msra.mxu0 %v3184
    %5035 = vmatprep.subr.bf16.mxu0 %v3179
    %5036 = vmatpush1.bf16.msra.mxu0 %v3178
    %5037 = vmatprep.subr.bf16.mxu0 %v3173
    %5038 = vmatpush1.bf16.msra.mxu0 %v3172
    %5039 = vmatprep.subr.bf16.mxu0 %v3167
    %5040 = vmatpush1.bf16.msra.mxu0 %v3166
    %5041 = vmatprep.subr.bf16.mxu0 %v3257
    %5042 = vmatpush2.bf16.msra.mxu0 %v3256
    %5043 = vmatprep.subr.bf16.mxu0 %v3251
    %5044 = vmatpush2.bf16.msra.mxu0 %v3250
    %5045 = vmatprep.subr.bf16.mxu0 %v3245
    %5046 = vmatpush2.bf16.msra.mxu0 %v3244
    %5047 = vmatprep.subr.bf16.mxu0 %v3239
    %5048 = vmatpush2.bf16.msra.mxu0 %v3238
    %5049 = vmatprep.subr.bf16.mxu0 %v3233
    %5050 = vmatpush2.bf16.msra.mxu0 %v3232
    %5051 = vmatprep.subr.bf16.mxu0 %v3227
    %5052 = vmatpush2.bf16.msra.mxu0 %v3226
    %5053 = vmatprep.subr.bf16.mxu0 %v3221
    %5054 = vmatpush2.bf16.msra.mxu0 %v3220
    %5055 = vmatprep.subr.bf16.mxu0 %v3215
    %5056 = vmatpush2.bf16.msra.mxu0 %v3214
    %5057 = vmatprep.mubr.bf16.mxu0 %v1025
    %5058 = vmatmul.mubr.bf16.gmra.mxu0 %v1024
    %v5059 = vpop.f32.mrf.mxu0
    %v5060 = vadd.f32 %v5019, %v5059
    %v5061 = vpop.f32.mrf.mxu0
    %v5062 = vadd.f32 %v5021, %v5061
    %v5063 = vpop.f32.mrf.mxu0
    %v5064 = vpop.f32.mrf.mxu0
    %5065 = vdwg.mxu0
    %5066 = vmatprep.subr.bf16.mxu0 %v3305
    %5067 = vmatpush1.bf16.msra.mxu0 %v3304
    %5068 = vmatprep.subr.bf16.mxu0 %v3299
    %5069 = vmatpush1.bf16.msra.mxu0 %v3298
    %5070 = vmatprep.subr.bf16.mxu0 %v3293
    %5071 = vmatpush1.bf16.msra.mxu0 %v3292
    %5072 = vmatprep.subr.bf16.mxu0 %v3287
    %5073 = vmatpush1.bf16.msra.mxu0 %v3286
    %5074 = vmatprep.subr.bf16.mxu0 %v3281
    %5075 = vmatpush1.bf16.msra.mxu0 %v3280
    %5076 = vmatprep.subr.bf16.mxu0 %v3275
    %5077 = vmatpush1.bf16.msra.mxu0 %v3274
    %5078 = vmatprep.subr.bf16.mxu0 %v3269
    %5079 = vmatpush1.bf16.msra.mxu0 %v3268
    %5080 = vmatprep.subr.bf16.mxu0 %v3263
    %5081 = vmatpush1.bf16.msra.mxu0 %v3262
    %5082 = vmatprep.subr.bf16.mxu0 %v3353
    %5083 = vmatpush2.bf16.msra.mxu0 %v3352
    %5084 = vmatprep.subr.bf16.mxu0 %v3347
    %5085 = vmatpush2.bf16.msra.mxu0 %v3346
    %5086 = vmatprep.subr.bf16.mxu0 %v3341
    %5087 = vmatpush2.bf16.msra.mxu0 %v3340
    %5088 = vmatprep.subr.bf16.mxu0 %v3335
    %5089 = vmatpush2.bf16.msra.mxu0 %v3334
    %5090 = vmatprep.subr.bf16.mxu0 %v3329
    %5091 = vmatpush2.bf16.msra.mxu0 %v3328
    %5092 = vmatprep.subr.bf16.mxu0 %v3323
    %5093 = vmatpush2.bf16.msra.mxu0 %v3322
    %5094 = vmatprep.subr.bf16.mxu0 %v3317
    %5095 = vmatpush2.bf16.msra.mxu0 %v3316
    %5096 = vmatprep.subr.bf16.mxu0 %v3311
    %5097 = vmatpush2.bf16.msra.mxu0 %v3310
    %5098 = vmatprep.mubr.bf16.mxu0 %v1027
    %5099 = vmatmul.mubr.bf16.gmra.mxu0 %v1026
    %v5100 = vpop.f32.mrf.mxu0
    %v5101 = vadd.f32 %v5060, %v5100
    %v5102 = vpop.f32.mrf.mxu0
    %v5103 = vadd.f32 %v5062, %v5102
    %v5104 = vpop.f32.mrf.mxu0
    %v5105 = vpop.f32.mrf.mxu0
    %5106 = vdwg.mxu0
    %5107 = vmatprep.subr.bf16.mxu0 %v3401
    %5108 = vmatpush1.bf16.msra.mxu0 %v3400
    %5109 = vmatprep.subr.bf16.mxu0 %v3395
    %5110 = vmatpush1.bf16.msra.mxu0 %v3394
    %5111 = vmatprep.subr.bf16.mxu0 %v3389
    %5112 = vmatpush1.bf16.msra.mxu0 %v3388
    %5113 = vmatprep.subr.bf16.mxu0 %v3383
    %5114 = vmatpush1.bf16.msra.mxu0 %v3382
    %5115 = vmatprep.subr.bf16.mxu0 %v3377
    %5116 = vmatpush1.bf16.msra.mxu0 %v3376
    %5117 = vmatprep.subr.bf16.mxu0 %v3371
    %5118 = vmatpush1.bf16.msra.mxu0 %v3370
    %5119 = vmatprep.subr.bf16.mxu0 %v3365
    %5120 = vmatpush1.bf16.msra.mxu0 %v3364
    %5121 = vmatprep.subr.bf16.mxu0 %v3359
    %5122 = vmatpush1.bf16.msra.mxu0 %v3358
    %5123 = vmatprep.subr.bf16.mxu0 %v3449
    %5124 = vmatpush2.bf16.msra.mxu0 %v3448
    %5125 = vmatprep.subr.bf16.mxu0 %v3443
    %5126 = vmatpush2.bf16.msra.mxu0 %v3442
    %5127 = vmatprep.subr.bf16.mxu0 %v3437
    %5128 = vmatpush2.bf16.msra.mxu0 %v3436
    %5129 = vmatprep.subr.bf16.mxu0 %v3431
    %5130 = vmatpush2.bf16.msra.mxu0 %v3430
    %5131 = vmatprep.subr.bf16.mxu0 %v3425
    %5132 = vmatpush2.bf16.msra.mxu0 %v3424
    %5133 = vmatprep.subr.bf16.mxu0 %v3419
    %5134 = vmatpush2.bf16.msra.mxu0 %v3418
    %5135 = vmatprep.subr.bf16.mxu0 %v3413
    %5136 = vmatpush2.bf16.msra.mxu0 %v3412
    %5137 = vmatprep.subr.bf16.mxu0 %v3407
    %5138 = vmatpush2.bf16.msra.mxu0 %v3406
    %5139 = vmatprep.mubr.bf16.mxu0 %v1029
    %5140 = vmatmul.mubr.bf16.gmra.mxu0 %v1028
    %v5141 = vpop.f32.mrf.mxu0
    %v5142 = vadd.f32 %v5101, %v5141
    %v5143 = vpop.f32.mrf.mxu0
    %v5144 = vadd.f32 %v5103, %v5143
    %v5145 = vpop.f32.mrf.mxu0
    %v5146 = vpop.f32.mrf.mxu0
    %5147 = vdwg.mxu0
    %5148 = vmatprep.subr.bf16.mxu0 %v3497
    %5149 = vmatpush1.bf16.msra.mxu0 %v3496
    %5150 = vmatprep.subr.bf16.mxu0 %v3491
    %5151 = vmatpush1.bf16.msra.mxu0 %v3490
    %5152 = vmatprep.subr.bf16.mxu0 %v3485
    %5153 = vmatpush1.bf16.msra.mxu0 %v3484
    %5154 = vmatprep.subr.bf16.mxu0 %v3479
    %5155 = vmatpush1.bf16.msra.mxu0 %v3478
    %5156 = vmatprep.subr.bf16.mxu0 %v3473
    %5157 = vmatpush1.bf16.msra.mxu0 %v3472
    %5158 = vmatprep.subr.bf16.mxu0 %v3467
    %5159 = vmatpush1.bf16.msra.mxu0 %v3466
    %5160 = vmatprep.subr.bf16.mxu0 %v3461
    %5161 = vmatpush1.bf16.msra.mxu0 %v3460
    %5162 = vmatprep.subr.bf16.mxu0 %v3455
    %5163 = vmatpush1.bf16.msra.mxu0 %v3454
    %5164 = vmatprep.subr.bf16.mxu0 %v3545
    %5165 = vmatpush2.bf16.msra.mxu0 %v3544
    %5166 = vmatprep.subr.bf16.mxu0 %v3539
    %5167 = vmatpush2.bf16.msra.mxu0 %v3538
    %5168 = vmatprep.subr.bf16.mxu0 %v3533
    %5169 = vmatpush2.bf16.msra.mxu0 %v3532
    %5170 = vmatprep.subr.bf16.mxu0 %v3527
    %5171 = vmatpush2.bf16.msra.mxu0 %v3526
    %5172 = vmatprep.subr.bf16.mxu0 %v3521
    %5173 = vmatpush2.bf16.msra.mxu0 %v3520
    %5174 = vmatprep.subr.bf16.mxu0 %v3515
    %5175 = vmatpush2.bf16.msra.mxu0 %v3514
    %5176 = vmatprep.subr.bf16.mxu0 %v3509
    %5177 = vmatpush2.bf16.msra.mxu0 %v3508
    %5178 = vmatprep.subr.bf16.mxu0 %v3503
    %5179 = vmatpush2.bf16.msra.mxu0 %v3502
    %5180 = vmatprep.mubr.bf16.mxu0 %v1031
    %5181 = vmatmul.mubr.bf16.gmra.mxu0 %v1030
    %v5182 = vpop.f32.mrf.mxu0
    %v5183 = vadd.f32 %v5142, %v5182
    %v5184 = vpop.f32.mrf.mxu0
    %v5185 = vadd.f32 %v5144, %v5184
    %v5186 = vpop.f32.mrf.mxu0
    %v5187 = vpop.f32.mrf.mxu0
    %5188 = vdwg.mxu0
    %5189 = vmatprep.subr.bf16.mxu0 %v3593
    %5190 = vmatpush1.bf16.msra.mxu0 %v3592
    %5191 = vmatprep.subr.bf16.mxu0 %v3587
    %5192 = vmatpush1.bf16.msra.mxu0 %v3586
    %5193 = vmatprep.subr.bf16.mxu0 %v3581
    %5194 = vmatpush1.bf16.msra.mxu0 %v3580
    %5195 = vmatprep.subr.bf16.mxu0 %v3575
    %5196 = vmatpush1.bf16.msra.mxu0 %v3574
    %5197 = vmatprep.subr.bf16.mxu0 %v3569
    %5198 = vmatpush1.bf16.msra.mxu0 %v3568
    %5199 = vmatprep.subr.bf16.mxu0 %v3563
    %5200 = vmatpush1.bf16.msra.mxu0 %v3562
    %5201 = vmatprep.subr.bf16.mxu0 %v3557
    %5202 = vmatpush1.bf16.msra.mxu0 %v3556
    %5203 = vmatprep.subr.bf16.mxu0 %v3551
    %5204 = vmatpush1.bf16.msra.mxu0 %v3550
    %5205 = vmatprep.subr.bf16.mxu0 %v3641
    %5206 = vmatpush2.bf16.msra.mxu0 %v3640
    %5207 = vmatprep.subr.bf16.mxu0 %v3635
    %5208 = vmatpush2.bf16.msra.mxu0 %v3634
    %5209 = vmatprep.subr.bf16.mxu0 %v3629
    %5210 = vmatpush2.bf16.msra.mxu0 %v3628
    %5211 = vmatprep.subr.bf16.mxu0 %v3623
    %5212 = vmatpush2.bf16.msra.mxu0 %v3622
    %5213 = vmatprep.subr.bf16.mxu0 %v3617
    %5214 = vmatpush2.bf16.msra.mxu0 %v3616
    %5215 = vmatprep.subr.bf16.mxu0 %v3611
    %5216 = vmatpush2.bf16.msra.mxu0 %v3610
    %5217 = vmatprep.subr.bf16.mxu0 %v3605
    %5218 = vmatpush2.bf16.msra.mxu0 %v3604
    %5219 = vmatprep.subr.bf16.mxu0 %v3599
    %5220 = vmatpush2.bf16.msra.mxu0 %v3598
    %5221 = vmatprep.mubr.bf16.mxu0 %v1033
    %5222 = vmatmul.mubr.bf16.gmra.mxu0 %v1032
    %v5223 = vpop.f32.mrf.mxu0
    %v5224 = vadd.f32 %v5183, %v5223
    %v5225 = vpop.f32.mrf.mxu0
    %v5226 = vadd.f32 %v5185, %v5225
    %v5227 = vpop.f32.mrf.mxu0
    %v5228 = vpop.f32.mrf.mxu0
    %5229 = vdwg.mxu0
    %5230 = vmatprep.subr.bf16.mxu0 %v3689
    %5231 = vmatpush1.bf16.msra.mxu0 %v3688
    %5232 = vmatprep.subr.bf16.mxu0 %v3683
    %5233 = vmatpush1.bf16.msra.mxu0 %v3682
    %5234 = vmatprep.subr.bf16.mxu0 %v3677
    %5235 = vmatpush1.bf16.msra.mxu0 %v3676
    %5236 = vmatprep.subr.bf16.mxu0 %v3671
    %5237 = vmatpush1.bf16.msra.mxu0 %v3670
    %5238 = vmatprep.subr.bf16.mxu0 %v3665
    %5239 = vmatpush1.bf16.msra.mxu0 %v3664
    %5240 = vmatprep.subr.bf16.mxu0 %v3659
    %5241 = vmatpush1.bf16.msra.mxu0 %v3658
    %5242 = vmatprep.subr.bf16.mxu0 %v3653
    %5243 = vmatpush1.bf16.msra.mxu0 %v3652
    %5244 = vmatprep.subr.bf16.mxu0 %v3647
    %5245 = vmatpush1.bf16.msra.mxu0 %v3646
    %5246 = vmatprep.subr.bf16.mxu0 %v3737
    %5247 = vmatpush2.bf16.msra.mxu0 %v3736
    %5248 = vmatprep.subr.bf16.mxu0 %v3731
    %5249 = vmatpush2.bf16.msra.mxu0 %v3730
    %5250 = vmatprep.subr.bf16.mxu0 %v3725
    %5251 = vmatpush2.bf16.msra.mxu0 %v3724
    %5252 = vmatprep.subr.bf16.mxu0 %v3719
    %5253 = vmatpush2.bf16.msra.mxu0 %v3718
    %5254 = vmatprep.subr.bf16.mxu0 %v3713
    %5255 = vmatpush2.bf16.msra.mxu0 %v3712
    %5256 = vmatprep.subr.bf16.mxu0 %v3707
    %5257 = vmatpush2.bf16.msra.mxu0 %v3706
    %5258 = vmatprep.subr.bf16.mxu0 %v3701
    %5259 = vmatpush2.bf16.msra.mxu0 %v3700
    %5260 = vmatprep.subr.bf16.mxu0 %v3695
    %5261 = vmatpush2.bf16.msra.mxu0 %v3694
    %5262 = vmatprep.mubr.bf16.mxu0 %v1035
    %5263 = vmatmul.mubr.bf16.gmra.mxu0 %v1034
    %v5264 = vpop.f32.mrf.mxu0
    %v5265 = vadd.f32 %v5224, %v5264
    %v5266 = vpop.f32.mrf.mxu0
    %v5267 = vadd.f32 %v5226, %v5266
    %v5268 = vpop.f32.mrf.mxu0
    %v5269 = vpop.f32.mrf.mxu0
    %5270 = vdwg.mxu0
    %v5271 = vld [vmem:[#allocation10] sm:$0xff]
    %v5272 = vld [vmem:[#allocation10 + $0x8] sm:$0xff]
    %v5273 = vld [vmem:[#allocation10 + $0x10] sm:$0xff]
    %v5274 = vld [vmem:[#allocation10 + $0x18] sm:$0xff]
    %v5275 = vld [vmem:[#allocation10 + $0x20] sm:$0xff]
    %v5276 = vld [vmem:[#allocation10 + $0x28] sm:$0xff]
    %v5277 = vld [vmem:[#allocation10 + $0x30] sm:$0xff]
    %v5278 = vld [vmem:[#allocation10 + $0x38] sm:$0xff]
    %v5279 = vld [vmem:[#allocation10 + $0x40] sm:$0xff]
    %v5280 = vld [vmem:[#allocation10 + $0x48] sm:$0xff]
    %v5281 = vld [vmem:[#allocation10 + $0x50] sm:$0xff]
    %v5282 = vld [vmem:[#allocation10 + $0x58] sm:$0xff]
    %v5283 = vld [vmem:[#allocation10 + $0x60] sm:$0xff]
    %v5284 = vld [vmem:[#allocation10 + $0x68] sm:$0xff]
    %v5285 = vld [vmem:[#allocation10 + $0x70] sm:$0xff]
    %v5286 = vld [vmem:[#allocation10 + $0x78] sm:$0xff]
    %v5287 = vld [vmem:[#allocation10 + $0x80] sm:$0xff]
    %v5288 = vld [vmem:[#allocation10 + $0x88] sm:$0xff]
    %v5289 = vld [vmem:[#allocation10 + $0x90] sm:$0xff]
    %v5290 = vld [vmem:[#allocation10 + $0x98] sm:$0xff]
    %v5291 = vld [vmem:[#allocation10 + $0xa0] sm:$0xff]
    %v5292 = vld [vmem:[#allocation10 + $0xa8] sm:$0xff]
    %v5293 = vld [vmem:[#allocation10 + $0xb0] sm:$0xff]
    %v5294 = vld [vmem:[#allocation10 + $0xb8] sm:$0xff]
    %v5295 = vld [vmem:[#allocation10 + $0xc0] sm:$0xff]
    %v5296 = vld [vmem:[#allocation10 + $0xc8] sm:$0xff]
    %v5297 = vld [vmem:[#allocation10 + $0xd0] sm:$0xff]
    %v5298 = vld [vmem:[#allocation10 + $0xd8] sm:$0xff]
    %v5299 = vld [vmem:[#allocation10 + $0xe0] sm:$0xff]
    %v5300 = vld [vmem:[#allocation10 + $0xe8] sm:$0xff]
    %v5301 = vld [vmem:[#allocation10 + $0xf0] sm:$0xff]
    %v5302 = vld [vmem:[#allocation10 + $0xf8] sm:$0xff]
    %v5303 = vld [vmem:[#allocation10 + $0x100] sm:$0xff]
    %v5304 = vld [vmem:[#allocation10 + $0x108] sm:$0xff]
    %v5305 = vld [vmem:[#allocation10 + $0x110] sm:$0xff]
    %v5306 = vld [vmem:[#allocation10 + $0x118] sm:$0xff]
    %v5307 = vld [vmem:[#allocation10 + $0x120] sm:$0xff]
    %v5308 = vld [vmem:[#allocation10 + $0x128] sm:$0xff]
    %v5309 = vld [vmem:[#allocation10 + $0x130] sm:$0xff]
    %v5310 = vld [vmem:[#allocation10 + $0x138] sm:$0xff]
    %v5311 = vld [vmem:[#allocation10 + $0x140] sm:$0xff]
    %v5312 = vld [vmem:[#allocation10 + $0x148] sm:$0xff]
    %v5313 = vld [vmem:[#allocation10 + $0x150] sm:$0xff]
    %v5314 = vld [vmem:[#allocation10 + $0x158] sm:$0xff]
    %v5315 = vld [vmem:[#allocation10 + $0x160] sm:$0xff]
    %v5316 = vld [vmem:[#allocation10 + $0x168] sm:$0xff]
    %v5317 = vld [vmem:[#allocation10 + $0x170] sm:$0xff]
    %v5318 = vld [vmem:[#allocation10 + $0x178] sm:$0xff]
    %v5319 = vld [vmem:[#allocation10 + $0x180] sm:$0xff]
    %v5320 = vld [vmem:[#allocation10 + $0x188] sm:$0xff]
    %v5321 = vld [vmem:[#allocation10 + $0x190] sm:$0xff]
    %v5322 = vld [vmem:[#allocation10 + $0x198] sm:$0xff]
    %v5323 = vld [vmem:[#allocation10 + $0x1a0] sm:$0xff]
    %v5324 = vld [vmem:[#allocation10 + $0x1a8] sm:$0xff]
    %v5325 = vld [vmem:[#allocation10 + $0x1b0] sm:$0xff]
    %v5326 = vld [vmem:[#allocation10 + $0x1b8] sm:$0xff]
    %v5327 = vld [vmem:[#allocation10 + $0x1c0] sm:$0xff]
    %v5328 = vld [vmem:[#allocation10 + $0x1c8] sm:$0xff]
    %v5329 = vld [vmem:[#allocation10 + $0x1d0] sm:$0xff]
    %v5330 = vld [vmem:[#allocation10 + $0x1d8] sm:$0xff]
    %v5331 = vld [vmem:[#allocation10 + $0x1e0] sm:$0xff]
    %v5332 = vld [vmem:[#allocation10 + $0x1e8] sm:$0xff]
    %v5333 = vld [vmem:[#allocation10 + $0x1f0] sm:$0xff]
    %v5334 = vld [vmem:[#allocation10 + $0x1f8] sm:$0xff]
    %v5335 = vld [vmem:[#allocation10 + $0x200] sm:$0xff]
    %v5336 = vld [vmem:[#allocation10 + $0x208] sm:$0xff]
    %v5337 = vld [vmem:[#allocation10 + $0x210] sm:$0xff]
    %v5338 = vld [vmem:[#allocation10 + $0x218] sm:$0xff]
    %v5339 = vld [vmem:[#allocation10 + $0x220] sm:$0xff]
    %v5340 = vld [vmem:[#allocation10 + $0x228] sm:$0xff]
    %v5341 = vld [vmem:[#allocation10 + $0x230] sm:$0xff]
    %v5342 = vld [vmem:[#allocation10 + $0x238] sm:$0xff]
    %v5343 = vld [vmem:[#allocation10 + $0x240] sm:$0xff]
    %v5344 = vld [vmem:[#allocation10 + $0x248] sm:$0xff]
    %v5345 = vld [vmem:[#allocation10 + $0x250] sm:$0xff]
    %v5346 = vld [vmem:[#allocation10 + $0x258] sm:$0xff]
    %v5347 = vld [vmem:[#allocation10 + $0x260] sm:$0xff]
    %v5348 = vld [vmem:[#allocation10 + $0x268] sm:$0xff]
    %v5349 = vld [vmem:[#allocation10 + $0x270] sm:$0xff]
    %v5350 = vld [vmem:[#allocation10 + $0x278] sm:$0xff]
    %v5351 = vld [vmem:[#allocation10 + $0x280] sm:$0xff]
    %v5352 = vld [vmem:[#allocation10 + $0x288] sm:$0xff]
    %v5353 = vld [vmem:[#allocation10 + $0x290] sm:$0xff]
    %v5354 = vld [vmem:[#allocation10 + $0x298] sm:$0xff]
    %v5355 = vld [vmem:[#allocation10 + $0x2a0] sm:$0xff]
    %v5356 = vld [vmem:[#allocation10 + $0x2a8] sm:$0xff]
    %v5357 = vld [vmem:[#allocation10 + $0x2b0] sm:$0xff]
    %v5358 = vld [vmem:[#allocation10 + $0x2b8] sm:$0xff]
    %v5359 = vld [vmem:[#allocation10 + $0x2c0] sm:$0xff]
    %v5360 = vld [vmem:[#allocation10 + $0x2c8] sm:$0xff]
    %v5361 = vld [vmem:[#allocation10 + $0x2d0] sm:$0xff]
    %v5362 = vld [vmem:[#allocation10 + $0x2d8] sm:$0xff]
    %v5363 = vld [vmem:[#allocation10 + $0x2e0] sm:$0xff]
    %v5364 = vld [vmem:[#allocation10 + $0x2e8] sm:$0xff]
    %v5365 = vld [vmem:[#allocation10 + $0x2f0] sm:$0xff]
    %v5366 = vld [vmem:[#allocation10 + $0x2f8] sm:$0xff]
    %v5367 = vld [vmem:[#allocation10 + $0x300] sm:$0xff]
    %v5368 = vld [vmem:[#allocation10 + $0x308] sm:$0xff]
    %v5369 = vld [vmem:[#allocation10 + $0x310] sm:$0xff]
    %v5370 = vld [vmem:[#allocation10 + $0x318] sm:$0xff]
    %v5371 = vld [vmem:[#allocation10 + $0x320] sm:$0xff]
    %v5372 = vld [vmem:[#allocation10 + $0x328] sm:$0xff]
    %v5373 = vld [vmem:[#allocation10 + $0x330] sm:$0xff]
    %v5374 = vld [vmem:[#allocation10 + $0x338] sm:$0xff]
    %v5375 = vld [vmem:[#allocation10 + $0x340] sm:$0xff]
    %v5376 = vld [vmem:[#allocation10 + $0x348] sm:$0xff]
    %v5377 = vld [vmem:[#allocation10 + $0x350] sm:$0xff]
    %v5378 = vld [vmem:[#allocation10 + $0x358] sm:$0xff]
    %v5379 = vld [vmem:[#allocation10 + $0x360] sm:$0xff]
    %v5380 = vld [vmem:[#allocation10 + $0x368] sm:$0xff]
    %v5381 = vld [vmem:[#allocation10 + $0x370] sm:$0xff]
    %v5382 = vld [vmem:[#allocation10 + $0x378] sm:$0xff]
    %v5383 = vld [vmem:[#allocation10 + $0x380] sm:$0xff]
    %v5384 = vld [vmem:[#allocation10 + $0x388] sm:$0xff]
    %v5385 = vld [vmem:[#allocation10 + $0x390] sm:$0xff]
    %v5386 = vld [vmem:[#allocation10 + $0x398] sm:$0xff]
    %v5387 = vld [vmem:[#allocation10 + $0x3a0] sm:$0xff]
    %v5388 = vld [vmem:[#allocation10 + $0x3a8] sm:$0xff]
    %v5389 = vld [vmem:[#allocation10 + $0x3b0] sm:$0xff]
    %v5390 = vld [vmem:[#allocation10 + $0x3b8] sm:$0xff]
    %v5391 = vld [vmem:[#allocation10 + $0x3c0] sm:$0xff]
    %v5392 = vld [vmem:[#allocation10 + $0x3c8] sm:$0xff]
    %v5393 = vld [vmem:[#allocation10 + $0x3d0] sm:$0xff]
    %v5394 = vld [vmem:[#allocation10 + $0x3d8] sm:$0xff]
    %v5395 = vld [vmem:[#allocation10 + $0x3e0] sm:$0xff]
    %v5396 = vld [vmem:[#allocation10 + $0x3e8] sm:$0xff]
    %v5397 = vld [vmem:[#allocation10 + $0x3f0] sm:$0xff]
    %v5398 = vld [vmem:[#allocation10 + $0x3f8] sm:$0xff]
    %v5399 = vld [vmem:[#allocation10 + $0x400] sm:$0xff]
    %v5400 = vld [vmem:[#allocation10 + $0x408] sm:$0xff]
    %v5401 = vld [vmem:[#allocation10 + $0x410] sm:$0xff]
    %v5402 = vld [vmem:[#allocation10 + $0x418] sm:$0xff]
    %v5403 = vld [vmem:[#allocation10 + $0x420] sm:$0xff]
    %v5404 = vld [vmem:[#allocation10 + $0x428] sm:$0xff]
    %v5405 = vld [vmem:[#allocation10 + $0x430] sm:$0xff]
    %v5406 = vld [vmem:[#allocation10 + $0x438] sm:$0xff]
    %v5407 = vld [vmem:[#allocation10 + $0x440] sm:$0xff]
    %v5408 = vld [vmem:[#allocation10 + $0x448] sm:$0xff]
    %v5409 = vld [vmem:[#allocation10 + $0x450] sm:$0xff]
    %v5410 = vld [vmem:[#allocation10 + $0x458] sm:$0xff]
    %v5411 = vld [vmem:[#allocation10 + $0x460] sm:$0xff]
    %v5412 = vld [vmem:[#allocation10 + $0x468] sm:$0xff]
    %v5413 = vld [vmem:[#allocation10 + $0x470] sm:$0xff]
    %v5414 = vld [vmem:[#allocation10 + $0x478] sm:$0xff]
    %v5415 = vld [vmem:[#allocation10 + $0x480] sm:$0xff]
    %v5416 = vld [vmem:[#allocation10 + $0x488] sm:$0xff]
    %v5417 = vld [vmem:[#allocation10 + $0x490] sm:$0xff]
    %v5418 = vld [vmem:[#allocation10 + $0x498] sm:$0xff]
    %v5419 = vld [vmem:[#allocation10 + $0x4a0] sm:$0xff]
    %v5420 = vld [vmem:[#allocation10 + $0x4a8] sm:$0xff]
    %v5421 = vld [vmem:[#allocation10 + $0x4b0] sm:$0xff]
    %v5422 = vld [vmem:[#allocation10 + $0x4b8] sm:$0xff]
    %v5423 = vld [vmem:[#allocation10 + $0x4c0] sm:$0xff]
    %v5424 = vld [vmem:[#allocation10 + $0x4c8] sm:$0xff]
    %v5425 = vld [vmem:[#allocation10 + $0x4d0] sm:$0xff]
    %v5426 = vld [vmem:[#allocation10 + $0x4d8] sm:$0xff]
    %v5427 = vld [vmem:[#allocation10 + $0x4e0] sm:$0xff]
    %v5428 = vld [vmem:[#allocation10 + $0x4e8] sm:$0xff]
    %v5429 = vld [vmem:[#allocation10 + $0x4f0] sm:$0xff]
    %v5430 = vld [vmem:[#allocation10 + $0x4f8] sm:$0xff]
    %v5431 = vld [vmem:[#allocation10 + $0x500] sm:$0xff]
    %v5432 = vld [vmem:[#allocation10 + $0x508] sm:$0xff]
    %v5433 = vld [vmem:[#allocation10 + $0x510] sm:$0xff]
    %v5434 = vld [vmem:[#allocation10 + $0x518] sm:$0xff]
    %v5435 = vld [vmem:[#allocation10 + $0x520] sm:$0xff]
    %v5436 = vld [vmem:[#allocation10 + $0x528] sm:$0xff]
    %v5437 = vld [vmem:[#allocation10 + $0x530] sm:$0xff]
    %v5438 = vld [vmem:[#allocation10 + $0x538] sm:$0xff]
    %v5439 = vld [vmem:[#allocation10 + $0x540] sm:$0xff]
    %v5440 = vld [vmem:[#allocation10 + $0x548] sm:$0xff]
    %v5441 = vld [vmem:[#allocation10 + $0x550] sm:$0xff]
    %v5442 = vld [vmem:[#allocation10 + $0x558] sm:$0xff]
    %v5443 = vld [vmem:[#allocation10 + $0x560] sm:$0xff]
    %v5444 = vld [vmem:[#allocation10 + $0x568] sm:$0xff]
    %v5445 = vld [vmem:[#allocation10 + $0x570] sm:$0xff]
    %v5446 = vld [vmem:[#allocation10 + $0x578] sm:$0xff]
    %v5447 = vld [vmem:[#allocation10 + $0x580] sm:$0xff]
    %v5448 = vld [vmem:[#allocation10 + $0x588] sm:$0xff]
    %v5449 = vld [vmem:[#allocation10 + $0x590] sm:$0xff]
    %v5450 = vld [vmem:[#allocation10 + $0x598] sm:$0xff]
    %v5451 = vld [vmem:[#allocation10 + $0x5a0] sm:$0xff]
    %v5452 = vld [vmem:[#allocation10 + $0x5a8] sm:$0xff]
    %v5453 = vld [vmem:[#allocation10 + $0x5b0] sm:$0xff]
    %v5454 = vld [vmem:[#allocation10 + $0x5b8] sm:$0xff]
    %v5455 = vld [vmem:[#allocation10 + $0x5c0] sm:$0xff]
    %v5456 = vld [vmem:[#allocation10 + $0x5c8] sm:$0xff]
    %v5457 = vld [vmem:[#allocation10 + $0x5d0] sm:$0xff]
    %v5458 = vld [vmem:[#allocation10 + $0x5d8] sm:$0xff]
    %v5459 = vld [vmem:[#allocation10 + $0x5e0] sm:$0xff]
    %v5460 = vld [vmem:[#allocation10 + $0x5e8] sm:$0xff]
    %v5461 = vld [vmem:[#allocation10 + $0x5f0] sm:$0xff]
    %v5462 = vld [vmem:[#allocation10 + $0x5f8] sm:$0xff]
    %v5463 = vld [vmem:[#allocation10 + $0x600] sm:$0xff]
    %v5464 = vld [vmem:[#allocation10 + $0x608] sm:$0xff]
    %v5465 = vld [vmem:[#allocation10 + $0x610] sm:$0xff]
    %v5466 = vld [vmem:[#allocation10 + $0x618] sm:$0xff]
    %v5467 = vld [vmem:[#allocation10 + $0x620] sm:$0xff]
    %v5468 = vld [vmem:[#allocation10 + $0x628] sm:$0xff]
    %v5469 = vld [vmem:[#allocation10 + $0x630] sm:$0xff]
    %v5470 = vld [vmem:[#allocation10 + $0x638] sm:$0xff]
    %v5471 = vld [vmem:[#allocation10 + $0x640] sm:$0xff]
    %v5472 = vld [vmem:[#allocation10 + $0x648] sm:$0xff]
    %v5473 = vld [vmem:[#allocation10 + $0x650] sm:$0xff]
    %v5474 = vld [vmem:[#allocation10 + $0x658] sm:$0xff]
    %v5475 = vld [vmem:[#allocation10 + $0x660] sm:$0xff]
    %v5476 = vld [vmem:[#allocation10 + $0x668] sm:$0xff]
    %v5477 = vld [vmem:[#allocation10 + $0x670] sm:$0xff]
    %v5478 = vld [vmem:[#allocation10 + $0x678] sm:$0xff]
    %v5479 = vld [vmem:[#allocation10 + $0x680] sm:$0xff]
    %v5480 = vld [vmem:[#allocation10 + $0x688] sm:$0xff]
    %v5481 = vld [vmem:[#allocation10 + $0x690] sm:$0xff]
    %v5482 = vld [vmem:[#allocation10 + $0x698] sm:$0xff]
    %v5483 = vld [vmem:[#allocation10 + $0x6a0] sm:$0xff]
    %v5484 = vld [vmem:[#allocation10 + $0x6a8] sm:$0xff]
    %v5485 = vld [vmem:[#allocation10 + $0x6b0] sm:$0xff]
    %v5486 = vld [vmem:[#allocation10 + $0x6b8] sm:$0xff]
    %v5487 = vld [vmem:[#allocation10 + $0x6c0] sm:$0xff]
    %v5488 = vld [vmem:[#allocation10 + $0x6c8] sm:$0xff]
    %v5489 = vld [vmem:[#allocation10 + $0x6d0] sm:$0xff]
    %v5490 = vld [vmem:[#allocation10 + $0x6d8] sm:$0xff]
    %v5491 = vld [vmem:[#allocation10 + $0x6e0] sm:$0xff]
    %v5492 = vld [vmem:[#allocation10 + $0x6e8] sm:$0xff]
    %v5493 = vld [vmem:[#allocation10 + $0x6f0] sm:$0xff]
    %v5494 = vld [vmem:[#allocation10 + $0x6f8] sm:$0xff]
    %v5495 = vld [vmem:[#allocation10 + $0x700] sm:$0xff]
    %v5496 = vld [vmem:[#allocation10 + $0x708] sm:$0xff]
    %v5497 = vld [vmem:[#allocation10 + $0x710] sm:$0xff]
    %v5498 = vld [vmem:[#allocation10 + $0x718] sm:$0xff]
    %v5499 = vld [vmem:[#allocation10 + $0x720] sm:$0xff]
    %v5500 = vld [vmem:[#allocation10 + $0x728] sm:$0xff]
    %v5501 = vld [vmem:[#allocation10 + $0x730] sm:$0xff]
    %v5502 = vld [vmem:[#allocation10 + $0x738] sm:$0xff]
    %v5503 = vld [vmem:[#allocation10 + $0x740] sm:$0xff]
    %v5504 = vld [vmem:[#allocation10 + $0x748] sm:$0xff]
    %v5505 = vld [vmem:[#allocation10 + $0x750] sm:$0xff]
    %v5506 = vld [vmem:[#allocation10 + $0x758] sm:$0xff]
    %v5507 = vld [vmem:[#allocation10 + $0x760] sm:$0xff]
    %v5508 = vld [vmem:[#allocation10 + $0x768] sm:$0xff]
    %v5509 = vld [vmem:[#allocation10 + $0x770] sm:$0xff]
    %v5510 = vld [vmem:[#allocation10 + $0x778] sm:$0xff]
    %v5511 = vld [vmem:[#allocation10 + $0x780] sm:$0xff]
    %v5512 = vld [vmem:[#allocation10 + $0x788] sm:$0xff]
    %v5513 = vld [vmem:[#allocation10 + $0x790] sm:$0xff]
    %v5514 = vld [vmem:[#allocation10 + $0x798] sm:$0xff]
    %v5515 = vld [vmem:[#allocation10 + $0x7a0] sm:$0xff]
    %v5516 = vld [vmem:[#allocation10 + $0x7a8] sm:$0xff]
    %v5517 = vld [vmem:[#allocation10 + $0x7b0] sm:$0xff]
    %v5518 = vld [vmem:[#allocation10 + $0x7b8] sm:$0xff]
    %v5519 = vld [vmem:[#allocation10 + $0x7c0] sm:$0xff]
    %v5520 = vld [vmem:[#allocation10 + $0x7c8] sm:$0xff]
    %v5521 = vld [vmem:[#allocation10 + $0x7d0] sm:$0xff]
    %v5522 = vld [vmem:[#allocation10 + $0x7d8] sm:$0xff]
    %v5523 = vld [vmem:[#allocation10 + $0x7e0] sm:$0xff]
    %v5524 = vld [vmem:[#allocation10 + $0x7e8] sm:$0xff]
    %v5525 = vld [vmem:[#allocation10 + $0x7f0] sm:$0xff]
    %v5526 = vld [vmem:[#allocation10 + $0x7f8] sm:$0xff]
    %v5527 = vld [vmem:[#allocation10 + $0x800] sm:$0xff]
    %v5528 = vld [vmem:[#allocation10 + $0x808] sm:$0xff]
    %v5529 = vld [vmem:[#allocation10 + $0x810] sm:$0xff]
    %v5530 = vld [vmem:[#allocation10 + $0x818] sm:$0xff]
    %v5531 = vld [vmem:[#allocation10 + $0x820] sm:$0xff]
    %v5532 = vld [vmem:[#allocation10 + $0x828] sm:$0xff]
    %v5533 = vld [vmem:[#allocation10 + $0x830] sm:$0xff]
    %v5534 = vld [vmem:[#allocation10 + $0x838] sm:$0xff]
    %v5535 = vld [vmem:[#allocation10 + $0x840] sm:$0xff]
    %v5536 = vld [vmem:[#allocation10 + $0x848] sm:$0xff]
    %v5537 = vld [vmem:[#allocation10 + $0x850] sm:$0xff]
    %v5538 = vld [vmem:[#allocation10 + $0x858] sm:$0xff]
    %v5539 = vld [vmem:[#allocation10 + $0x860] sm:$0xff]
    %v5540 = vld [vmem:[#allocation10 + $0x868] sm:$0xff]
    %v5541 = vld [vmem:[#allocation10 + $0x870] sm:$0xff]
    %v5542 = vld [vmem:[#allocation10 + $0x878] sm:$0xff]
    %v5543 = vld [vmem:[#allocation10 + $0x880] sm:$0xff]
    %v5544 = vld [vmem:[#allocation10 + $0x888] sm:$0xff]
    %v5545 = vld [vmem:[#allocation10 + $0x890] sm:$0xff]
    %v5546 = vld [vmem:[#allocation10 + $0x898] sm:$0xff]
    %v5547 = vld [vmem:[#allocation10 + $0x8a0] sm:$0xff]
    %v5548 = vld [vmem:[#allocation10 + $0x8a8] sm:$0xff]
    %v5549 = vld [vmem:[#allocation10 + $0x8b0] sm:$0xff]
    %v5550 = vld [vmem:[#allocation10 + $0x8b8] sm:$0xff]
    %v5551 = vld [vmem:[#allocation10 + $0x8c0] sm:$0xff]
    %v5552 = vld [vmem:[#allocation10 + $0x8c8] sm:$0xff]
    %v5553 = vld [vmem:[#allocation10 + $0x8d0] sm:$0xff]
    %v5554 = vld [vmem:[#allocation10 + $0x8d8] sm:$0xff]
    %v5555 = vld [vmem:[#allocation10 + $0x8e0] sm:$0xff]
    %v5556 = vld [vmem:[#allocation10 + $0x8e8] sm:$0xff]
    %v5557 = vld [vmem:[#allocation10 + $0x8f0] sm:$0xff]
    %v5558 = vld [vmem:[#allocation10 + $0x8f8] sm:$0xff]
    %v5559 = vld [vmem:[#allocation10 + $0x900] sm:$0xff]
    %v5560 = vld [vmem:[#allocation10 + $0x908] sm:$0xff]
    %v5561 = vld [vmem:[#allocation10 + $0x910] sm:$0xff]
    %v5562 = vld [vmem:[#allocation10 + $0x918] sm:$0xff]
    %v5563 = vld [vmem:[#allocation10 + $0x920] sm:$0xff]
    %v5564 = vld [vmem:[#allocation10 + $0x928] sm:$0xff]
    %v5565 = vld [vmem:[#allocation10 + $0x930] sm:$0xff]
    %v5566 = vld [vmem:[#allocation10 + $0x938] sm:$0xff]
    %v5567 = vld [vmem:[#allocation10 + $0x940] sm:$0xff]
    %v5568 = vld [vmem:[#allocation10 + $0x948] sm:$0xff]
    %v5569 = vld [vmem:[#allocation10 + $0x950] sm:$0xff]
    %v5570 = vld [vmem:[#allocation10 + $0x958] sm:$0xff]
    %v5571 = vld [vmem:[#allocation10 + $0x960] sm:$0xff]
    %v5572 = vld [vmem:[#allocation10 + $0x968] sm:$0xff]
    %v5573 = vld [vmem:[#allocation10 + $0x970] sm:$0xff]
    %v5574 = vld [vmem:[#allocation10 + $0x978] sm:$0xff]
    %v5575 = vld [vmem:[#allocation10 + $0x980] sm:$0xff]
    %v5576 = vld [vmem:[#allocation10 + $0x988] sm:$0xff]
    %v5577 = vld [vmem:[#allocation10 + $0x990] sm:$0xff]
    %v5578 = vld [vmem:[#allocation10 + $0x998] sm:$0xff]
    %v5579 = vld [vmem:[#allocation10 + $0x9a0] sm:$0xff]
    %v5580 = vld [vmem:[#allocation10 + $0x9a8] sm:$0xff]
    %v5581 = vld [vmem:[#allocation10 + $0x9b0] sm:$0xff]
    %v5582 = vld [vmem:[#allocation10 + $0x9b8] sm:$0xff]
    %v5583 = vld [vmem:[#allocation10 + $0x9c0] sm:$0xff]
    %v5584 = vld [vmem:[#allocation10 + $0x9c8] sm:$0xff]
    %v5585 = vld [vmem:[#allocation10 + $0x9d0] sm:$0xff]
    %v5586 = vld [vmem:[#allocation10 + $0x9d8] sm:$0xff]
    %v5587 = vld [vmem:[#allocation10 + $0x9e0] sm:$0xff]
    %v5588 = vld [vmem:[#allocation10 + $0x9e8] sm:$0xff]
    %v5589 = vld [vmem:[#allocation10 + $0x9f0] sm:$0xff]
    %v5590 = vld [vmem:[#allocation10 + $0x9f8] sm:$0xff]
    %v5591 = vld [vmem:[#allocation10 + $0xa00] sm:$0xff]
    %v5592 = vld [vmem:[#allocation10 + $0xa08] sm:$0xff]
    %v5593 = vld [vmem:[#allocation10 + $0xa10] sm:$0xff]
    %v5594 = vld [vmem:[#allocation10 + $0xa18] sm:$0xff]
    %v5595 = vld [vmem:[#allocation10 + $0xa20] sm:$0xff]
    %v5596 = vld [vmem:[#allocation10 + $0xa28] sm:$0xff]
    %v5597 = vld [vmem:[#allocation10 + $0xa30] sm:$0xff]
    %v5598 = vld [vmem:[#allocation10 + $0xa38] sm:$0xff]
    %v5599 = vld [vmem:[#allocation10 + $0xa40] sm:$0xff]
    %v5600 = vld [vmem:[#allocation10 + $0xa48] sm:$0xff]
    %v5601 = vld [vmem:[#allocation10 + $0xa50] sm:$0xff]
    %v5602 = vld [vmem:[#allocation10 + $0xa58] sm:$0xff]
    %v5603 = vld [vmem:[#allocation10 + $0xa60] sm:$0xff]
    %v5604 = vld [vmem:[#allocation10 + $0xa68] sm:$0xff]
    %v5605 = vld [vmem:[#allocation10 + $0xa70] sm:$0xff]
    %v5606 = vld [vmem:[#allocation10 + $0xa78] sm:$0xff]
    %v5607 = vld [vmem:[#allocation10 + $0xa80] sm:$0xff]
    %v5608 = vld [vmem:[#allocation10 + $0xa88] sm:$0xff]
    %v5609 = vld [vmem:[#allocation10 + $0xa90] sm:$0xff]
    %v5610 = vld [vmem:[#allocation10 + $0xa98] sm:$0xff]
    %v5611 = vld [vmem:[#allocation10 + $0xaa0] sm:$0xff]
    %v5612 = vld [vmem:[#allocation10 + $0xaa8] sm:$0xff]
    %v5613 = vld [vmem:[#allocation10 + $0xab0] sm:$0xff]
    %v5614 = vld [vmem:[#allocation10 + $0xab8] sm:$0xff]
    %v5615 = vld [vmem:[#allocation10 + $0xac0] sm:$0xff]
    %v5616 = vld [vmem:[#allocation10 + $0xac8] sm:$0xff]
    %v5617 = vld [vmem:[#allocation10 + $0xad0] sm:$0xff]
    %v5618 = vld [vmem:[#allocation10 + $0xad8] sm:$0xff]
    %v5619 = vld [vmem:[#allocation10 + $0xae0] sm:$0xff]
    %v5620 = vld [vmem:[#allocation10 + $0xae8] sm:$0xff]
    %v5621 = vld [vmem:[#allocation10 + $0xaf0] sm:$0xff]
    %v5622 = vld [vmem:[#allocation10 + $0xaf8] sm:$0xff]
    %v5623 = vld [vmem:[#allocation10 + $0xb00] sm:$0xff]
    %v5624 = vld [vmem:[#allocation10 + $0xb08] sm:$0xff]
    %v5625 = vld [vmem:[#allocation10 + $0xb10] sm:$0xff]
    %v5626 = vld [vmem:[#allocation10 + $0xb18] sm:$0xff]
    %v5627 = vld [vmem:[#allocation10 + $0xb20] sm:$0xff]
    %v5628 = vld [vmem:[#allocation10 + $0xb28] sm:$0xff]
    %v5629 = vld [vmem:[#allocation10 + $0xb30] sm:$0xff]
    %v5630 = vld [vmem:[#allocation10 + $0xb38] sm:$0xff]
    %v5631 = vld [vmem:[#allocation10 + $0xb40] sm:$0xff]
    %v5632 = vld [vmem:[#allocation10 + $0xb48] sm:$0xff]
    %v5633 = vld [vmem:[#allocation10 + $0xb50] sm:$0xff]
    %v5634 = vld [vmem:[#allocation10 + $0xb58] sm:$0xff]
    %v5635 = vld [vmem:[#allocation10 + $0xb60] sm:$0xff]
    %v5636 = vld [vmem:[#allocation10 + $0xb68] sm:$0xff]
    %v5637 = vld [vmem:[#allocation10 + $0xb70] sm:$0xff]
    %v5638 = vld [vmem:[#allocation10 + $0xb78] sm:$0xff]
    %v5639 = vld [vmem:[#allocation10 + $0xb80] sm:$0xff]
    %v5640 = vld [vmem:[#allocation10 + $0xb88] sm:$0xff]
    %v5641 = vld [vmem:[#allocation10 + $0xb90] sm:$0xff]
    %v5642 = vld [vmem:[#allocation10 + $0xb98] sm:$0xff]
    %v5643 = vld [vmem:[#allocation10 + $0xba0] sm:$0xff]
    %v5644 = vld [vmem:[#allocation10 + $0xba8] sm:$0xff]
    %v5645 = vld [vmem:[#allocation10 + $0xbb0] sm:$0xff]
    %v5646 = vld [vmem:[#allocation10 + $0xbb8] sm:$0xff]
    %v5647 = vld [vmem:[#allocation10 + $0xbc0] sm:$0xff]
    %v5648 = vld [vmem:[#allocation10 + $0xbc8] sm:$0xff]
    %v5649 = vld [vmem:[#allocation10 + $0xbd0] sm:$0xff]
    %v5650 = vld [vmem:[#allocation10 + $0xbd8] sm:$0xff]
    %v5651 = vld [vmem:[#allocation10 + $0xbe0] sm:$0xff]
    %v5652 = vld [vmem:[#allocation10 + $0xbe8] sm:$0xff]
    %v5653 = vld [vmem:[#allocation10 + $0xbf0] sm:$0xff]
    %v5654 = vld [vmem:[#allocation10 + $0xbf8] sm:$0xff]
    %v5655 = vld [vmem:[#allocation10 + $0xc00] sm:$0xff]
    %v5656 = vld [vmem:[#allocation10 + $0xc08] sm:$0xff]
    %v5657 = vld [vmem:[#allocation10 + $0xc10] sm:$0xff]
    %v5658 = vld [vmem:[#allocation10 + $0xc18] sm:$0xff]
    %v5659 = vld [vmem:[#allocation10 + $0xc20] sm:$0xff]
    %v5660 = vld [vmem:[#allocation10 + $0xc28] sm:$0xff]
    %v5661 = vld [vmem:[#allocation10 + $0xc30] sm:$0xff]
    %v5662 = vld [vmem:[#allocation10 + $0xc38] sm:$0xff]
    %v5663 = vld [vmem:[#allocation10 + $0xc40] sm:$0xff]
    %v5664 = vld [vmem:[#allocation10 + $0xc48] sm:$0xff]
    %v5665 = vld [vmem:[#allocation10 + $0xc50] sm:$0xff]
    %v5666 = vld [vmem:[#allocation10 + $0xc58] sm:$0xff]
    %v5667 = vld [vmem:[#allocation10 + $0xc60] sm:$0xff]
    %v5668 = vld [vmem:[#allocation10 + $0xc68] sm:$0xff]
    %v5669 = vld [vmem:[#allocation10 + $0xc70] sm:$0xff]
    %v5670 = vld [vmem:[#allocation10 + $0xc78] sm:$0xff]
    %v5671 = vld [vmem:[#allocation10 + $0xc80] sm:$0xff]
    %v5672 = vld [vmem:[#allocation10 + $0xc88] sm:$0xff]
    %v5673 = vld [vmem:[#allocation10 + $0xc90] sm:$0xff]
    %v5674 = vld [vmem:[#allocation10 + $0xc98] sm:$0xff]
    %v5675 = vld [vmem:[#allocation10 + $0xca0] sm:$0xff]
    %v5676 = vld [vmem:[#allocation10 + $0xca8] sm:$0xff]
    %v5677 = vld [vmem:[#allocation10 + $0xcb0] sm:$0xff]
    %v5678 = vld [vmem:[#allocation10 + $0xcb8] sm:$0xff]
    %v5679 = vld [vmem:[#allocation10 + $0xcc0] sm:$0xff]
    %v5680 = vld [vmem:[#allocation10 + $0xcc8] sm:$0xff]
    %v5681 = vld [vmem:[#allocation10 + $0xcd0] sm:$0xff]
    %v5682 = vld [vmem:[#allocation10 + $0xcd8] sm:$0xff]
    %v5683 = vld [vmem:[#allocation10 + $0xce0] sm:$0xff]
    %v5684 = vld [vmem:[#allocation10 + $0xce8] sm:$0xff]
    %v5685 = vld [vmem:[#allocation10 + $0xcf0] sm:$0xff]
    %v5686 = vld [vmem:[#allocation10 + $0xcf8] sm:$0xff]
    %v5687 = vld [vmem:[#allocation10 + $0xd00] sm:$0xff]
    %v5688 = vld [vmem:[#allocation10 + $0xd08] sm:$0xff]
    %v5689 = vld [vmem:[#allocation10 + $0xd10] sm:$0xff]
    %v5690 = vld [vmem:[#allocation10 + $0xd18] sm:$0xff]
    %v5691 = vld [vmem:[#allocation10 + $0xd20] sm:$0xff]
    %v5692 = vld [vmem:[#allocation10 + $0xd28] sm:$0xff]
    %v5693 = vld [vmem:[#allocation10 + $0xd30] sm:$0xff]
    %v5694 = vld [vmem:[#allocation10 + $0xd38] sm:$0xff]
    %v5695 = vld [vmem:[#allocation10 + $0xd40] sm:$0xff]
    %v5696 = vld [vmem:[#allocation10 + $0xd48] sm:$0xff]
    %v5697 = vld [vmem:[#allocation10 + $0xd50] sm:$0xff]
    %v5698 = vld [vmem:[#allocation10 + $0xd58] sm:$0xff]
    %v5699 = vld [vmem:[#allocation10 + $0xd60] sm:$0xff]
    %v5700 = vld [vmem:[#allocation10 + $0xd68] sm:$0xff]
    %v5701 = vld [vmem:[#allocation10 + $0xd70] sm:$0xff]
    %v5702 = vld [vmem:[#allocation10 + $0xd78] sm:$0xff]
    %v5703 = vld [vmem:[#allocation10 + $0xd80] sm:$0xff]
    %v5704 = vld [vmem:[#allocation10 + $0xd88] sm:$0xff]
    %v5705 = vld [vmem:[#allocation10 + $0xd90] sm:$0xff]
    %v5706 = vld [vmem:[#allocation10 + $0xd98] sm:$0xff]
    %v5707 = vld [vmem:[#allocation10 + $0xda0] sm:$0xff]
    %v5708 = vld [vmem:[#allocation10 + $0xda8] sm:$0xff]
    %v5709 = vld [vmem:[#allocation10 + $0xdb0] sm:$0xff]
    %v5710 = vld [vmem:[#allocation10 + $0xdb8] sm:$0xff]
    %v5711 = vld [vmem:[#allocation10 + $0xdc0] sm:$0xff]
    %v5712 = vld [vmem:[#allocation10 + $0xdc8] sm:$0xff]
    %v5713 = vld [vmem:[#allocation10 + $0xdd0] sm:$0xff]
    %v5714 = vld [vmem:[#allocation10 + $0xdd8] sm:$0xff]
    %v5715 = vld [vmem:[#allocation10 + $0xde0] sm:$0xff]
    %v5716 = vld [vmem:[#allocation10 + $0xde8] sm:$0xff]
    %v5717 = vld [vmem:[#allocation10 + $0xdf0] sm:$0xff]
    %v5718 = vld [vmem:[#allocation10 + $0xdf8] sm:$0xff]
    %v5719 = vld [vmem:[#allocation10 + $0xe00] sm:$0xff]
    %v5720 = vld [vmem:[#allocation10 + $0xe08] sm:$0xff]
    %v5721 = vld [vmem:[#allocation10 + $0xe10] sm:$0xff]
    %v5722 = vld [vmem:[#allocation10 + $0xe18] sm:$0xff]
    %v5723 = vld [vmem:[#allocation10 + $0xe20] sm:$0xff]
    %v5724 = vld [vmem:[#allocation10 + $0xe28] sm:$0xff]
    %v5725 = vld [vmem:[#allocation10 + $0xe30] sm:$0xff]
    %v5726 = vld [vmem:[#allocation10 + $0xe38] sm:$0xff]
    %v5727 = vld [vmem:[#allocation10 + $0xe40] sm:$0xff]
    %v5728 = vld [vmem:[#allocation10 + $0xe48] sm:$0xff]
    %v5729 = vld [vmem:[#allocation10 + $0xe50] sm:$0xff]
    %v5730 = vld [vmem:[#allocation10 + $0xe58] sm:$0xff]
    %v5731 = vld [vmem:[#allocation10 + $0xe60] sm:$0xff]
    %v5732 = vld [vmem:[#allocation10 + $0xe68] sm:$0xff]
    %v5733 = vld [vmem:[#allocation10 + $0xe70] sm:$0xff]
    %v5734 = vld [vmem:[#allocation10 + $0xe78] sm:$0xff]
    %v5735 = vld [vmem:[#allocation10 + $0xe80] sm:$0xff]
    %v5736 = vld [vmem:[#allocation10 + $0xe88] sm:$0xff]
    %v5737 = vld [vmem:[#allocation10 + $0xe90] sm:$0xff]
    %v5738 = vld [vmem:[#allocation10 + $0xe98] sm:$0xff]
    %v5739 = vld [vmem:[#allocation10 + $0xea0] sm:$0xff]
    %v5740 = vld [vmem:[#allocation10 + $0xea8] sm:$0xff]
    %v5741 = vld [vmem:[#allocation10 + $0xeb0] sm:$0xff]
    %v5742 = vld [vmem:[#allocation10 + $0xeb8] sm:$0xff]
    %v5743 = vld [vmem:[#allocation10 + $0xec0] sm:$0xff]
    %v5744 = vld [vmem:[#allocation10 + $0xec8] sm:$0xff]
    %v5745 = vld [vmem:[#allocation10 + $0xed0] sm:$0xff]
    %v5746 = vld [vmem:[#allocation10 + $0xed8] sm:$0xff]
    %v5747 = vld [vmem:[#allocation10 + $0xee0] sm:$0xff]
    %v5748 = vld [vmem:[#allocation10 + $0xee8] sm:$0xff]
    %v5749 = vld [vmem:[#allocation10 + $0xef0] sm:$0xff]
    %v5750 = vld [vmem:[#allocation10 + $0xef8] sm:$0xff]
    %v5751 = vld [vmem:[#allocation10 + $0xf00] sm:$0xff]
    %v5752 = vld [vmem:[#allocation10 + $0xf08] sm:$0xff]
    %v5753 = vld [vmem:[#allocation10 + $0xf10] sm:$0xff]
    %v5754 = vld [vmem:[#allocation10 + $0xf18] sm:$0xff]
    %v5755 = vld [vmem:[#allocation10 + $0xf20] sm:$0xff]
    %v5756 = vld [vmem:[#allocation10 + $0xf28] sm:$0xff]
    %v5757 = vld [vmem:[#allocation10 + $0xf30] sm:$0xff]
    %v5758 = vld [vmem:[#allocation10 + $0xf38] sm:$0xff]
    %v5759 = vld [vmem:[#allocation10 + $0xf40] sm:$0xff]
    %v5760 = vld [vmem:[#allocation10 + $0xf48] sm:$0xff]
    %v5761 = vld [vmem:[#allocation10 + $0xf50] sm:$0xff]
    %v5762 = vld [vmem:[#allocation10 + $0xf58] sm:$0xff]
    %v5763 = vld [vmem:[#allocation10 + $0xf60] sm:$0xff]
    %v5764 = vld [vmem:[#allocation10 + $0xf68] sm:$0xff]
    %v5765 = vld [vmem:[#allocation10 + $0xf70] sm:$0xff]
    %v5766 = vld [vmem:[#allocation10 + $0xf78] sm:$0xff]
    %v5767 = vld [vmem:[#allocation10 + $0xf80] sm:$0xff]
    %v5768 = vld [vmem:[#allocation10 + $0xf88] sm:$0xff]
    %v5769 = vld [vmem:[#allocation10 + $0xf90] sm:$0xff]
    %v5770 = vld [vmem:[#allocation10 + $0xf98] sm:$0xff]
    %v5771 = vld [vmem:[#allocation10 + $0xfa0] sm:$0xff]
    %v5772 = vld [vmem:[#allocation10 + $0xfa8] sm:$0xff]
    %v5773 = vld [vmem:[#allocation10 + $0xfb0] sm:$0xff]
    %v5774 = vld [vmem:[#allocation10 + $0xfb8] sm:$0xff]
    %v5775 = vld [vmem:[#allocation10 + $0xfc0] sm:$0xff]
    %v5776 = vld [vmem:[#allocation10 + $0xfc8] sm:$0xff]
    %v5777 = vld [vmem:[#allocation10 + $0xfd0] sm:$0xff]
    %v5778 = vld [vmem:[#allocation10 + $0xfd8] sm:$0xff]
    %v5779 = vld [vmem:[#allocation10 + $0xfe0] sm:$0xff]
    %v5780 = vld [vmem:[#allocation10 + $0xfe8] sm:$0xff]
    %v5781 = vld [vmem:[#allocation10 + $0xff0] sm:$0xff]
    %v5782 = vld [vmem:[#allocation10 + $0xff8] sm:$0xff]
    %v5783 = vld [vmem:[#allocation10 + $0x1000] sm:$0xff]
    %v5784 = vld [vmem:[#allocation10 + $0x1008] sm:$0xff]
    %v5785 = vld [vmem:[#allocation10 + $0x1010] sm:$0xff]
    %v5786 = vld [vmem:[#allocation10 + $0x1018] sm:$0xff]
    %v5787 = vld [vmem:[#allocation10 + $0x1020] sm:$0xff]
    %v5788 = vld [vmem:[#allocation10 + $0x1028] sm:$0xff]
    %v5789 = vld [vmem:[#allocation10 + $0x1030] sm:$0xff]
    %v5790 = vld [vmem:[#allocation10 + $0x1038] sm:$0xff]
    %v5791 = vld [vmem:[#allocation10 + $0x1040] sm:$0xff]
    %v5792 = vld [vmem:[#allocation10 + $0x1048] sm:$0xff]
    %v5793 = vld [vmem:[#allocation10 + $0x1050] sm:$0xff]
    %v5794 = vld [vmem:[#allocation10 + $0x1058] sm:$0xff]
    %v5795 = vld [vmem:[#allocation10 + $0x1060] sm:$0xff]
    %v5796 = vld [vmem:[#allocation10 + $0x1068] sm:$0xff]
    %v5797 = vld [vmem:[#allocation10 + $0x1070] sm:$0xff]
    %v5798 = vld [vmem:[#allocation10 + $0x1078] sm:$0xff]
    %v5799 = vld [vmem:[#allocation10 + $0x1080] sm:$0xff]
    %v5800 = vld [vmem:[#allocation10 + $0x1088] sm:$0xff]
    %v5801 = vld [vmem:[#allocation10 + $0x1090] sm:$0xff]
    %v5802 = vld [vmem:[#allocation10 + $0x1098] sm:$0xff]
    %v5803 = vld [vmem:[#allocation10 + $0x10a0] sm:$0xff]
    %v5804 = vld [vmem:[#allocation10 + $0x10a8] sm:$0xff]
    %v5805 = vld [vmem:[#allocation10 + $0x10b0] sm:$0xff]
    %v5806 = vld [vmem:[#allocation10 + $0x10b8] sm:$0xff]
    %v5807 = vld [vmem:[#allocation10 + $0x10c0] sm:$0xff]
    %v5808 = vld [vmem:[#allocation10 + $0x10c8] sm:$0xff]
    %v5809 = vld [vmem:[#allocation10 + $0x10d0] sm:$0xff]
    %v5810 = vld [vmem:[#allocation10 + $0x10d8] sm:$0xff]
    %v5811 = vld [vmem:[#allocation10 + $0x10e0] sm:$0xff]
    %v5812 = vld [vmem:[#allocation10 + $0x10e8] sm:$0xff]
    %v5813 = vld [vmem:[#allocation10 + $0x10f0] sm:$0xff]
    %v5814 = vld [vmem:[#allocation10 + $0x10f8] sm:$0xff]
    %v5815 = vld [vmem:[#allocation10 + $0x1100] sm:$0xff]
    %v5816 = vld [vmem:[#allocation10 + $0x1108] sm:$0xff]
    %v5817 = vld [vmem:[#allocation10 + $0x1110] sm:$0xff]
    %v5818 = vld [vmem:[#allocation10 + $0x1118] sm:$0xff]
    %v5819 = vld [vmem:[#allocation10 + $0x1120] sm:$0xff]
    %v5820 = vld [vmem:[#allocation10 + $0x1128] sm:$0xff]
    %v5821 = vld [vmem:[#allocation10 + $0x1130] sm:$0xff]
    %v5822 = vld [vmem:[#allocation10 + $0x1138] sm:$0xff]
    %v5823 = vld [vmem:[#allocation10 + $0x1140] sm:$0xff]
    %v5824 = vld [vmem:[#allocation10 + $0x1148] sm:$0xff]
    %v5825 = vld [vmem:[#allocation10 + $0x1150] sm:$0xff]
    %v5826 = vld [vmem:[#allocation10 + $0x1158] sm:$0xff]
    %v5827 = vld [vmem:[#allocation10 + $0x1160] sm:$0xff]
    %v5828 = vld [vmem:[#allocation10 + $0x1168] sm:$0xff]
    %v5829 = vld [vmem:[#allocation10 + $0x1170] sm:$0xff]
    %v5830 = vld [vmem:[#allocation10 + $0x1178] sm:$0xff]
    %v5831 = vld [vmem:[#allocation10 + $0x1180] sm:$0xff]
    %v5832 = vld [vmem:[#allocation10 + $0x1188] sm:$0xff]
    %v5833 = vld [vmem:[#allocation10 + $0x1190] sm:$0xff]
    %v5834 = vld [vmem:[#allocation10 + $0x1198] sm:$0xff]
    %v5835 = vld [vmem:[#allocation10 + $0x11a0] sm:$0xff]
    %v5836 = vld [vmem:[#allocation10 + $0x11a8] sm:$0xff]
    %v5837 = vld [vmem:[#allocation10 + $0x11b0] sm:$0xff]
    %v5838 = vld [vmem:[#allocation10 + $0x11b8] sm:$0xff]
    %v5839 = vld [vmem:[#allocation10 + $0x11c0] sm:$0xff]
    %v5840 = vld [vmem:[#allocation10 + $0x11c8] sm:$0xff]
    %v5841 = vld [vmem:[#allocation10 + $0x11d0] sm:$0xff]
    %v5842 = vld [vmem:[#allocation10 + $0x11d8] sm:$0xff]
    %v5843 = vld [vmem:[#allocation10 + $0x11e0] sm:$0xff]
    %v5844 = vld [vmem:[#allocation10 + $0x11e8] sm:$0xff]
    %v5845 = vld [vmem:[#allocation10 + $0x11f0] sm:$0xff]
    %v5846 = vld [vmem:[#allocation10 + $0x11f8] sm:$0xff]
    %v5847 = vld [vmem:[#allocation10 + $0x1200] sm:$0xff]
    %v5848 = vld [vmem:[#allocation10 + $0x1208] sm:$0xff]
    %v5849 = vld [vmem:[#allocation10 + $0x1210] sm:$0xff]
    %v5850 = vld [vmem:[#allocation10 + $0x1218] sm:$0xff]
    %v5851 = vld [vmem:[#allocation10 + $0x1220] sm:$0xff]
    %v5852 = vld [vmem:[#allocation10 + $0x1228] sm:$0xff]
    %v5853 = vld [vmem:[#allocation10 + $0x1230] sm:$0xff]
    %v5854 = vld [vmem:[#allocation10 + $0x1238] sm:$0xff]
    %v5855 = vld [vmem:[#allocation10 + $0x1240] sm:$0xff]
    %v5856 = vld [vmem:[#allocation10 + $0x1248] sm:$0xff]
    %v5857 = vld [vmem:[#allocation10 + $0x1250] sm:$0xff]
    %v5858 = vld [vmem:[#allocation10 + $0x1258] sm:$0xff]
    %v5859 = vld [vmem:[#allocation10 + $0x1260] sm:$0xff]
    %v5860 = vld [vmem:[#allocation10 + $0x1268] sm:$0xff]
    %v5861 = vld [vmem:[#allocation10 + $0x1270] sm:$0xff]
    %v5862 = vld [vmem:[#allocation10 + $0x1278] sm:$0xff]
    %v5863 = vld [vmem:[#allocation10 + $0x1280] sm:$0xff]
    %v5864 = vld [vmem:[#allocation10 + $0x1288] sm:$0xff]
    %v5865 = vld [vmem:[#allocation10 + $0x1290] sm:$0xff]
    %v5866 = vld [vmem:[#allocation10 + $0x1298] sm:$0xff]
    %v5867 = vld [vmem:[#allocation10 + $0x12a0] sm:$0xff]
    %v5868 = vld [vmem:[#allocation10 + $0x12a8] sm:$0xff]
    %v5869 = vld [vmem:[#allocation10 + $0x12b0] sm:$0xff]
    %v5870 = vld [vmem:[#allocation10 + $0x12b8] sm:$0xff]
    %v5871 = vld [vmem:[#allocation10 + $0x12c0] sm:$0xff]
    %v5872 = vld [vmem:[#allocation10 + $0x12c8] sm:$0xff]
    %v5873 = vld [vmem:[#allocation10 + $0x12d0] sm:$0xff]
    %v5874 = vld [vmem:[#allocation10 + $0x12d8] sm:$0xff]
    %v5875 = vld [vmem:[#allocation10 + $0x12e0] sm:$0xff]
    %v5876 = vld [vmem:[#allocation10 + $0x12e8] sm:$0xff]
    %v5877 = vld [vmem:[#allocation10 + $0x12f0] sm:$0xff]
    %v5878 = vld [vmem:[#allocation10 + $0x12f8] sm:$0xff]
    %v5879 = vld [vmem:[#allocation10 + $0x1300] sm:$0xff]
    %v5880 = vld [vmem:[#allocation10 + $0x1308] sm:$0xff]
    %v5881 = vld [vmem:[#allocation10 + $0x1310] sm:$0xff]
    %v5882 = vld [vmem:[#allocation10 + $0x1318] sm:$0xff]
    %v5883 = vld [vmem:[#allocation10 + $0x1320] sm:$0xff]
    %v5884 = vld [vmem:[#allocation10 + $0x1328] sm:$0xff]
    %v5885 = vld [vmem:[#allocation10 + $0x1330] sm:$0xff]
    %v5886 = vld [vmem:[#allocation10 + $0x1338] sm:$0xff]
    %v5887 = vld [vmem:[#allocation10 + $0x1340] sm:$0xff]
    %v5888 = vld [vmem:[#allocation10 + $0x1348] sm:$0xff]
    %v5889 = vld [vmem:[#allocation10 + $0x1350] sm:$0xff]
    %v5890 = vld [vmem:[#allocation10 + $0x1358] sm:$0xff]
    %v5891 = vld [vmem:[#allocation10 + $0x1360] sm:$0xff]
    %v5892 = vld [vmem:[#allocation10 + $0x1368] sm:$0xff]
    %v5893 = vld [vmem:[#allocation10 + $0x1370] sm:$0xff]
    %v5894 = vld [vmem:[#allocation10 + $0x1378] sm:$0xff]
    %v5895 = vld [vmem:[#allocation10 + $0x1380] sm:$0xff]
    %v5896 = vld [vmem:[#allocation10 + $0x1388] sm:$0xff]
    %v5897 = vld [vmem:[#allocation10 + $0x1390] sm:$0xff]
    %v5898 = vld [vmem:[#allocation10 + $0x1398] sm:$0xff]
    %v5899 = vld [vmem:[#allocation10 + $0x13a0] sm:$0xff]
    %v5900 = vld [vmem:[#allocation10 + $0x13a8] sm:$0xff]
    %v5901 = vld [vmem:[#allocation10 + $0x13b0] sm:$0xff]
    %v5902 = vld [vmem:[#allocation10 + $0x13b8] sm:$0xff]
    %v5903 = vld [vmem:[#allocation10 + $0x13c0] sm:$0xff]
    %v5904 = vld [vmem:[#allocation10 + $0x13c8] sm:$0xff]
    %v5905 = vld [vmem:[#allocation10 + $0x13d0] sm:$0xff]
    %v5906 = vld [vmem:[#allocation10 + $0x13d8] sm:$0xff]
    %v5907 = vld [vmem:[#allocation10 + $0x13e0] sm:$0xff]
    %v5908 = vld [vmem:[#allocation10 + $0x13e8] sm:$0xff]
    %v5909 = vld [vmem:[#allocation10 + $0x13f0] sm:$0xff]
    %v5910 = vld [vmem:[#allocation10 + $0x13f8] sm:$0xff]
    %v5911 = vld [vmem:[#allocation10 + $0x1400] sm:$0xff]
    %v5912 = vld [vmem:[#allocation10 + $0x1408] sm:$0xff]
    %v5913 = vld [vmem:[#allocation10 + $0x1410] sm:$0xff]
    %v5914 = vld [vmem:[#allocation10 + $0x1418] sm:$0xff]
    %v5915 = vld [vmem:[#allocation10 + $0x1420] sm:$0xff]
    %v5916 = vld [vmem:[#allocation10 + $0x1428] sm:$0xff]
    %v5917 = vld [vmem:[#allocation10 + $0x1430] sm:$0xff]
    %v5918 = vld [vmem:[#allocation10 + $0x1438] sm:$0xff]
    %v5919 = vld [vmem:[#allocation10 + $0x1440] sm:$0xff]
    %v5920 = vld [vmem:[#allocation10 + $0x1448] sm:$0xff]
    %v5921 = vld [vmem:[#allocation10 + $0x1450] sm:$0xff]
    %v5922 = vld [vmem:[#allocation10 + $0x1458] sm:$0xff]
    %v5923 = vld [vmem:[#allocation10 + $0x1460] sm:$0xff]
    %v5924 = vld [vmem:[#allocation10 + $0x1468] sm:$0xff]
    %v5925 = vld [vmem:[#allocation10 + $0x1470] sm:$0xff]
    %v5926 = vld [vmem:[#allocation10 + $0x1478] sm:$0xff]
    %v5927 = vld [vmem:[#allocation10 + $0x1480] sm:$0xff]
    %v5928 = vld [vmem:[#allocation10 + $0x1488] sm:$0xff]
    %v5929 = vld [vmem:[#allocation10 + $0x1490] sm:$0xff]
    %v5930 = vld [vmem:[#allocation10 + $0x1498] sm:$0xff]
    %v5931 = vld [vmem:[#allocation10 + $0x14a0] sm:$0xff]
    %v5932 = vld [vmem:[#allocation10 + $0x14a8] sm:$0xff]
    %v5933 = vld [vmem:[#allocation10 + $0x14b0] sm:$0xff]
    %v5934 = vld [vmem:[#allocation10 + $0x14b8] sm:$0xff]
    %v5935 = vld [vmem:[#allocation10 + $0x14c0] sm:$0xff]
    %v5936 = vld [vmem:[#allocation10 + $0x14c8] sm:$0xff]
    %v5937 = vld [vmem:[#allocation10 + $0x14d0] sm:$0xff]
    %v5938 = vld [vmem:[#allocation10 + $0x14d8] sm:$0xff]
    %v5939 = vld [vmem:[#allocation10 + $0x14e0] sm:$0xff]
    %v5940 = vld [vmem:[#allocation10 + $0x14e8] sm:$0xff]
    %v5941 = vld [vmem:[#allocation10 + $0x14f0] sm:$0xff]
    %v5942 = vld [vmem:[#allocation10 + $0x14f8] sm:$0xff]
    %v6615 = vunpack.c.l.b16 %v5271
    %v6616 = vunpack.c.h.b16 %v5271
    %v6617 = vunpack.c.l.b16 %v5272
    %v6618 = vunpack.c.h.b16 %v5272
    %v6619 = vunpack.c.l.b16 %v5273
    %v6620 = vunpack.c.h.b16 %v5273
    %v6621 = vunpack.c.l.b16 %v5274
    %v6622 = vunpack.c.h.b16 %v5274
    %v6623 = vunpack.c.l.b16 %v5275
    %v6624 = vunpack.c.h.b16 %v5275
    %v6625 = vunpack.c.l.b16 %v5276
    %v6626 = vunpack.c.h.b16 %v5276
    %v6627 = vunpack.c.l.b16 %v5277
    %v6628 = vunpack.c.h.b16 %v5277
    %v6629 = vunpack.c.l.b16 %v5278
    %v6630 = vunpack.c.h.b16 %v5278
    %v6631 = vunpack.c.l.b16 %v5279
    %v6632 = vunpack.c.h.b16 %v5279
    %v6633 = vunpack.c.l.b16 %v5280
    %v6634 = vunpack.c.h.b16 %v5280
    %v6635 = vunpack.c.l.b16 %v5281
    %v6636 = vunpack.c.h.b16 %v5281
    %v6637 = vunpack.c.l.b16 %v5282
    %v6638 = vunpack.c.h.b16 %v5282
    %v6639 = vunpack.c.l.b16 %v5283
    %v6640 = vunpack.c.h.b16 %v5283
    %v6641 = vunpack.c.l.b16 %v5284
    %v6642 = vunpack.c.h.b16 %v5284
    %v6643 = vunpack.c.l.b16 %v5285
    %v6644 = vunpack.c.h.b16 %v5285
    %v6645 = vunpack.c.l.b16 %v5286
    %v6646 = vunpack.c.h.b16 %v5286
    %v6647 = vunpack.c.l.b16 %v5287
    %v6648 = vunpack.c.h.b16 %v5287
    %v6649 = vunpack.c.l.b16 %v5288
    %v6650 = vunpack.c.h.b16 %v5288
    %v6651 = vunpack.c.l.b16 %v5289
    %v6652 = vunpack.c.h.b16 %v5289
    %v6653 = vunpack.c.l.b16 %v5290
    %v6654 = vunpack.c.h.b16 %v5290
    %v6655 = vunpack.c.l.b16 %v5291
    %v6656 = vunpack.c.h.b16 %v5291
    %v6657 = vunpack.c.l.b16 %v5292
    %v6658 = vunpack.c.h.b16 %v5292
    %v6659 = vunpack.c.l.b16 %v5293
    %v6660 = vunpack.c.h.b16 %v5293
    %v6661 = vunpack.c.l.b16 %v5294
    %v6662 = vunpack.c.h.b16 %v5294
    %v6663 = vunpack.c.l.b16 %v5295
    %v6664 = vunpack.c.h.b16 %v5295
    %v6665 = vunpack.c.l.b16 %v5296
    %v6666 = vunpack.c.h.b16 %v5296
    %v6667 = vunpack.c.l.b16 %v5297
    %v6668 = vunpack.c.h.b16 %v5297
    %v6669 = vunpack.c.l.b16 %v5298
    %v6670 = vunpack.c.h.b16 %v5298
    %v6671 = vunpack.c.l.b16 %v5299
    %v6672 = vunpack.c.h.b16 %v5299
    %v6673 = vunpack.c.l.b16 %v5300
    %v6674 = vunpack.c.h.b16 %v5300
    %v6675 = vunpack.c.l.b16 %v5301
    %v6676 = vunpack.c.h.b16 %v5301
    %v6677 = vunpack.c.l.b16 %v5302
    %v6678 = vunpack.c.h.b16 %v5302
    %v6679 = vunpack.c.l.b16 %v5303
    %v6680 = vunpack.c.h.b16 %v5303
    %v6681 = vunpack.c.l.b16 %v5304
    %v6682 = vunpack.c.h.b16 %v5304
    %v6683 = vunpack.c.l.b16 %v5305
    %v6684 = vunpack.c.h.b16 %v5305
    %v6685 = vunpack.c.l.b16 %v5306
    %v6686 = vunpack.c.h.b16 %v5306
    %v6687 = vunpack.c.l.b16 %v5307
    %v6688 = vunpack.c.h.b16 %v5307
    %v6689 = vunpack.c.l.b16 %v5308
    %v6690 = vunpack.c.h.b16 %v5308
    %v6691 = vunpack.c.l.b16 %v5309
    %v6692 = vunpack.c.h.b16 %v5309
    %v6693 = vunpack.c.l.b16 %v5310
    %v6694 = vunpack.c.h.b16 %v5310
    %v6695 = vunpack.c.l.b16 %v5311
    %v6696 = vunpack.c.h.b16 %v5311
    %v6697 = vunpack.c.l.b16 %v5312
    %v6698 = vunpack.c.h.b16 %v5312
    %v6699 = vunpack.c.l.b16 %v5313
    %v6700 = vunpack.c.h.b16 %v5313
    %v6701 = vunpack.c.l.b16 %v5314
    %v6702 = vunpack.c.h.b16 %v5314
    %v6703 = vunpack.c.l.b16 %v5315
    %v6704 = vunpack.c.h.b16 %v5315
    %v6705 = vunpack.c.l.b16 %v5316
    %v6706 = vunpack.c.h.b16 %v5316
    %v6707 = vunpack.c.l.b16 %v5317
    %v6708 = vunpack.c.h.b16 %v5317
    %v6709 = vunpack.c.l.b16 %v5318
    %v6710 = vunpack.c.h.b16 %v5318
    %v6711 = vunpack.c.l.b16 %v5319
    %v6712 = vunpack.c.h.b16 %v5319
    %v6713 = vunpack.c.l.b16 %v5320
    %v6714 = vunpack.c.h.b16 %v5320
    %v6715 = vunpack.c.l.b16 %v5321
    %v6716 = vunpack.c.h.b16 %v5321
    %v6717 = vunpack.c.l.b16 %v5322
    %v6718 = vunpack.c.h.b16 %v5322
    %v6719 = vunpack.c.l.b16 %v5323
    %v6720 = vunpack.c.h.b16 %v5323
    %v6721 = vunpack.c.l.b16 %v5324
    %v6722 = vunpack.c.h.b16 %v5324
    %v6723 = vunpack.c.l.b16 %v5325
    %v6724 = vunpack.c.h.b16 %v5325
    %v6725 = vunpack.c.l.b16 %v5326
    %v6726 = vunpack.c.h.b16 %v5326
    %v6727 = vunpack.c.l.b16 %v5327
    %v6728 = vunpack.c.h.b16 %v5327
    %v6729 = vunpack.c.l.b16 %v5328
    %v6730 = vunpack.c.h.b16 %v5328
    %v6731 = vunpack.c.l.b16 %v5329
    %v6732 = vunpack.c.h.b16 %v5329
    %v6733 = vunpack.c.l.b16 %v5330
    %v6734 = vunpack.c.h.b16 %v5330
    %v6735 = vunpack.c.l.b16 %v5331
    %v6736 = vunpack.c.h.b16 %v5331
    %v6737 = vunpack.c.l.b16 %v5332
    %v6738 = vunpack.c.h.b16 %v5332
    %v6739 = vunpack.c.l.b16 %v5333
    %v6740 = vunpack.c.h.b16 %v5333
    %v6741 = vunpack.c.l.b16 %v5334
    %v6742 = vunpack.c.h.b16 %v5334
    %v6743 = vunpack.c.l.b16 %v5335
    %v6744 = vunpack.c.h.b16 %v5335
    %v6745 = vunpack.c.l.b16 %v5336
    %v6746 = vunpack.c.h.b16 %v5336
    %v6747 = vunpack.c.l.b16 %v5337
    %v6748 = vunpack.c.h.b16 %v5337
    %v6749 = vunpack.c.l.b16 %v5338
    %v6750 = vunpack.c.h.b16 %v5338
    %v6751 = vunpack.c.l.b16 %v5339
    %v6752 = vunpack.c.h.b16 %v5339
    %v6753 = vunpack.c.l.b16 %v5340
    %v6754 = vunpack.c.h.b16 %v5340
    %v6755 = vunpack.c.l.b16 %v5341
    %v6756 = vunpack.c.h.b16 %v5341
    %v6757 = vunpack.c.l.b16 %v5342
    %v6758 = vunpack.c.h.b16 %v5342
    %v6759 = vunpack.c.l.b16 %v5343
    %v6760 = vunpack.c.h.b16 %v5343
    %v6761 = vunpack.c.l.b16 %v5344
    %v6762 = vunpack.c.h.b16 %v5344
    %v6763 = vunpack.c.l.b16 %v5345
    %v6764 = vunpack.c.h.b16 %v5345
    %v6765 = vunpack.c.l.b16 %v5346
    %v6766 = vunpack.c.h.b16 %v5346
    %v6767 = vunpack.c.l.b16 %v5347
    %v6768 = vunpack.c.h.b16 %v5347
    %v6769 = vunpack.c.l.b16 %v5348
    %v6770 = vunpack.c.h.b16 %v5348
    %v6771 = vunpack.c.l.b16 %v5349
    %v6772 = vunpack.c.h.b16 %v5349
    %v6773 = vunpack.c.l.b16 %v5350
    %v6774 = vunpack.c.h.b16 %v5350
    %v6775 = vunpack.c.l.b16 %v5351
    %v6776 = vunpack.c.h.b16 %v5351
    %v6777 = vunpack.c.l.b16 %v5352
    %v6778 = vunpack.c.h.b16 %v5352
    %v6779 = vunpack.c.l.b16 %v5353
    %v6780 = vunpack.c.h.b16 %v5353
    %v6781 = vunpack.c.l.b16 %v5354
    %v6782 = vunpack.c.h.b16 %v5354
    %v6783 = vunpack.c.l.b16 %v5355
    %v6784 = vunpack.c.h.b16 %v5355
    %v6785 = vunpack.c.l.b16 %v5356
    %v6786 = vunpack.c.h.b16 %v5356
    %v6787 = vunpack.c.l.b16 %v5357
    %v6788 = vunpack.c.h.b16 %v5357
    %v6789 = vunpack.c.l.b16 %v5358
    %v6790 = vunpack.c.h.b16 %v5358
    %v6791 = vunpack.c.l.b16 %v5359
    %v6792 = vunpack.c.h.b16 %v5359
    %v6793 = vunpack.c.l.b16 %v5360
    %v6794 = vunpack.c.h.b16 %v5360
    %v6795 = vunpack.c.l.b16 %v5361
    %v6796 = vunpack.c.h.b16 %v5361
    %v6797 = vunpack.c.l.b16 %v5362
    %v6798 = vunpack.c.h.b16 %v5362
    %v6799 = vunpack.c.l.b16 %v5363
    %v6800 = vunpack.c.h.b16 %v5363
    %v6801 = vunpack.c.l.b16 %v5364
    %v6802 = vunpack.c.h.b16 %v5364
    %v6803 = vunpack.c.l.b16 %v5365
    %v6804 = vunpack.c.h.b16 %v5365
    %v6805 = vunpack.c.l.b16 %v5366
    %v6806 = vunpack.c.h.b16 %v5366
    %v6807 = vunpack.c.l.b16 %v5367
    %v6808 = vunpack.c.h.b16 %v5367
    %v6809 = vunpack.c.l.b16 %v5368
    %v6810 = vunpack.c.h.b16 %v5368
    %v6811 = vunpack.c.l.b16 %v5369
    %v6812 = vunpack.c.h.b16 %v5369
    %v6813 = vunpack.c.l.b16 %v5370
    %v6814 = vunpack.c.h.b16 %v5370
    %v6815 = vunpack.c.l.b16 %v5371
    %v6816 = vunpack.c.h.b16 %v5371
    %v6817 = vunpack.c.l.b16 %v5372
    %v6818 = vunpack.c.h.b16 %v5372
    %v6819 = vunpack.c.l.b16 %v5373
    %v6820 = vunpack.c.h.b16 %v5373
    %v6821 = vunpack.c.l.b16 %v5374
    %v6822 = vunpack.c.h.b16 %v5374
    %v6823 = vunpack.c.l.b16 %v5375
    %v6824 = vunpack.c.h.b16 %v5375
    %v6825 = vunpack.c.l.b16 %v5376
    %v6826 = vunpack.c.h.b16 %v5376
    %v6827 = vunpack.c.l.b16 %v5377
    %v6828 = vunpack.c.h.b16 %v5377
    %v6829 = vunpack.c.l.b16 %v5378
    %v6830 = vunpack.c.h.b16 %v5378
    %v6831 = vunpack.c.l.b16 %v5379
    %v6832 = vunpack.c.h.b16 %v5379
    %v6833 = vunpack.c.l.b16 %v5380
    %v6834 = vunpack.c.h.b16 %v5380
    %v6835 = vunpack.c.l.b16 %v5381
    %v6836 = vunpack.c.h.b16 %v5381
    %v6837 = vunpack.c.l.b16 %v5382
    %v6838 = vunpack.c.h.b16 %v5382
    %v6839 = vunpack.c.l.b16 %v5383
    %v6840 = vunpack.c.h.b16 %v5383
    %v6841 = vunpack.c.l.b16 %v5384
    %v6842 = vunpack.c.h.b16 %v5384
    %v6843 = vunpack.c.l.b16 %v5385
    %v6844 = vunpack.c.h.b16 %v5385
    %v6845 = vunpack.c.l.b16 %v5386
    %v6846 = vunpack.c.h.b16 %v5386
    %v6847 = vunpack.c.l.b16 %v5387
    %v6848 = vunpack.c.h.b16 %v5387
    %v6849 = vunpack.c.l.b16 %v5388
    %v6850 = vunpack.c.h.b16 %v5388
    %v6851 = vunpack.c.l.b16 %v5389
    %v6852 = vunpack.c.h.b16 %v5389
    %v6853 = vunpack.c.l.b16 %v5390
    %v6854 = vunpack.c.h.b16 %v5390
    %v6855 = vunpack.c.l.b16 %v5391
    %v6856 = vunpack.c.h.b16 %v5391
    %v6857 = vunpack.c.l.b16 %v5392
    %v6858 = vunpack.c.h.b16 %v5392
    %v6859 = vunpack.c.l.b16 %v5393
    %v6860 = vunpack.c.h.b16 %v5393
    %v6861 = vunpack.c.l.b16 %v5394
    %v6862 = vunpack.c.h.b16 %v5394
    %v6863 = vunpack.c.l.b16 %v5395
    %v6864 = vunpack.c.h.b16 %v5395
    %v6865 = vunpack.c.l.b16 %v5396
    %v6866 = vunpack.c.h.b16 %v5396
    %v6867 = vunpack.c.l.b16 %v5397
    %v6868 = vunpack.c.h.b16 %v5397
    %v6869 = vunpack.c.l.b16 %v5398
    %v6870 = vunpack.c.h.b16 %v5398
    %v6871 = vunpack.c.l.b16 %v5399
    %v6872 = vunpack.c.h.b16 %v5399
    %v6873 = vunpack.c.l.b16 %v5400
    %v6874 = vunpack.c.h.b16 %v5400
    %v6875 = vunpack.c.l.b16 %v5401
    %v6876 = vunpack.c.h.b16 %v5401
    %v6877 = vunpack.c.l.b16 %v5402
    %v6878 = vunpack.c.h.b16 %v5402
    %v6879 = vunpack.c.l.b16 %v5403
    %v6880 = vunpack.c.h.b16 %v5403
    %v6881 = vunpack.c.l.b16 %v5404
    %v6882 = vunpack.c.h.b16 %v5404
    %v6883 = vunpack.c.l.b16 %v5405
    %v6884 = vunpack.c.h.b16 %v5405
    %v6885 = vunpack.c.l.b16 %v5406
    %v6886 = vunpack.c.h.b16 %v5406
    %v6887 = vunpack.c.l.b16 %v5407
    %v6888 = vunpack.c.h.b16 %v5407
    %v6889 = vunpack.c.l.b16 %v5408
    %v6890 = vunpack.c.h.b16 %v5408
    %v6891 = vunpack.c.l.b16 %v5409
    %v6892 = vunpack.c.h.b16 %v5409
    %v6893 = vunpack.c.l.b16 %v5410
    %v6894 = vunpack.c.h.b16 %v5410
    %v6895 = vunpack.c.l.b16 %v5411
    %v6896 = vunpack.c.h.b16 %v5411
    %v6897 = vunpack.c.l.b16 %v5412
    %v6898 = vunpack.c.h.b16 %v5412
    %v6899 = vunpack.c.l.b16 %v5413
    %v6900 = vunpack.c.h.b16 %v5413
    %v6901 = vunpack.c.l.b16 %v5414
    %v6902 = vunpack.c.h.b16 %v5414
    %v6903 = vunpack.c.l.b16 %v5415
    %v6904 = vunpack.c.h.b16 %v5415
    %v6905 = vunpack.c.l.b16 %v5416
    %v6906 = vunpack.c.h.b16 %v5416
    %v6907 = vunpack.c.l.b16 %v5417
    %v6908 = vunpack.c.h.b16 %v5417
    %v6909 = vunpack.c.l.b16 %v5418
    %v6910 = vunpack.c.h.b16 %v5418
    %v6911 = vunpack.c.l.b16 %v5419
    %v6912 = vunpack.c.h.b16 %v5419
    %v6913 = vunpack.c.l.b16 %v5420
    %v6914 = vunpack.c.h.b16 %v5420
    %v6915 = vunpack.c.l.b16 %v5421
    %v6916 = vunpack.c.h.b16 %v5421
    %v6917 = vunpack.c.l.b16 %v5422
    %v6918 = vunpack.c.h.b16 %v5422
    %v6919 = vunpack.c.l.b16 %v5423
    %v6920 = vunpack.c.h.b16 %v5423
    %v6921 = vunpack.c.l.b16 %v5424
    %v6922 = vunpack.c.h.b16 %v5424
    %v6923 = vunpack.c.l.b16 %v5425
    %v6924 = vunpack.c.h.b16 %v5425
    %v6925 = vunpack.c.l.b16 %v5426
    %v6926 = vunpack.c.h.b16 %v5426
    %v6927 = vunpack.c.l.b16 %v5427
    %v6928 = vunpack.c.h.b16 %v5427
    %v6929 = vunpack.c.l.b16 %v5428
    %v6930 = vunpack.c.h.b16 %v5428
    %v6931 = vunpack.c.l.b16 %v5429
    %v6932 = vunpack.c.h.b16 %v5429
    %v6933 = vunpack.c.l.b16 %v5430
    %v6934 = vunpack.c.h.b16 %v5430
    %v6935 = vunpack.c.l.b16 %v5431
    %v6936 = vunpack.c.h.b16 %v5431
    %v6937 = vunpack.c.l.b16 %v5432
    %v6938 = vunpack.c.h.b16 %v5432
    %v6939 = vunpack.c.l.b16 %v5433
    %v6940 = vunpack.c.h.b16 %v5433
    %v6941 = vunpack.c.l.b16 %v5434
    %v6942 = vunpack.c.h.b16 %v5434
    %v6943 = vunpack.c.l.b16 %v5435
    %v6944 = vunpack.c.h.b16 %v5435
    %v6945 = vunpack.c.l.b16 %v5436
    %v6946 = vunpack.c.h.b16 %v5436
    %v6947 = vunpack.c.l.b16 %v5437
    %v6948 = vunpack.c.h.b16 %v5437
    %v6949 = vunpack.c.l.b16 %v5438
    %v6950 = vunpack.c.h.b16 %v5438
    %v6951 = vunpack.c.l.b16 %v5439
    %v6952 = vunpack.c.h.b16 %v5439
    %v6953 = vunpack.c.l.b16 %v5440
    %v6954 = vunpack.c.h.b16 %v5440
    %v6955 = vunpack.c.l.b16 %v5441
    %v6956 = vunpack.c.h.b16 %v5441
    %v6957 = vunpack.c.l.b16 %v5442
    %v6958 = vunpack.c.h.b16 %v5442
    %v6959 = vunpack.c.l.b16 %v5443
    %v6960 = vunpack.c.h.b16 %v5443
    %v6961 = vunpack.c.l.b16 %v5444
    %v6962 = vunpack.c.h.b16 %v5444
    %v6963 = vunpack.c.l.b16 %v5445
    %v6964 = vunpack.c.h.b16 %v5445
    %v6965 = vunpack.c.l.b16 %v5446
    %v6966 = vunpack.c.h.b16 %v5446
    %v6967 = vunpack.c.l.b16 %v5447
    %v6968 = vunpack.c.h.b16 %v5447
    %v6969 = vunpack.c.l.b16 %v5448
    %v6970 = vunpack.c.h.b16 %v5448
    %v6971 = vunpack.c.l.b16 %v5449
    %v6972 = vunpack.c.h.b16 %v5449
    %v6973 = vunpack.c.l.b16 %v5450
    %v6974 = vunpack.c.h.b16 %v5450
    %v6975 = vunpack.c.l.b16 %v5451
    %v6976 = vunpack.c.h.b16 %v5451
    %v6977 = vunpack.c.l.b16 %v5452
    %v6978 = vunpack.c.h.b16 %v5452
    %v6979 = vunpack.c.l.b16 %v5453
    %v6980 = vunpack.c.h.b16 %v5453
    %v6981 = vunpack.c.l.b16 %v5454
    %v6982 = vunpack.c.h.b16 %v5454
    %v6983 = vunpack.c.l.b16 %v5455
    %v6984 = vunpack.c.h.b16 %v5455
    %v6985 = vunpack.c.l.b16 %v5456
    %v6986 = vunpack.c.h.b16 %v5456
    %v6987 = vunpack.c.l.b16 %v5457
    %v6988 = vunpack.c.h.b16 %v5457
    %v6989 = vunpack.c.l.b16 %v5458
    %v6990 = vunpack.c.h.b16 %v5458
    %v6991 = vunpack.c.l.b16 %v5459
    %v6992 = vunpack.c.h.b16 %v5459
    %v6993 = vunpack.c.l.b16 %v5460
    %v6994 = vunpack.c.h.b16 %v5460
    %v6995 = vunpack.c.l.b16 %v5461
    %v6996 = vunpack.c.h.b16 %v5461
    %v6997 = vunpack.c.l.b16 %v5462
    %v6998 = vunpack.c.h.b16 %v5462
    %v6999 = vunpack.c.l.b16 %v5463
    %v7000 = vunpack.c.h.b16 %v5463
    %v7001 = vunpack.c.l.b16 %v5464
    %v7002 = vunpack.c.h.b16 %v5464
    %v7003 = vunpack.c.l.b16 %v5465
    %v7004 = vunpack.c.h.b16 %v5465
    %v7005 = vunpack.c.l.b16 %v5466
    %v7006 = vunpack.c.h.b16 %v5466
    %v7007 = vunpack.c.l.b16 %v5467
    %v7008 = vunpack.c.h.b16 %v5467
    %v7009 = vunpack.c.l.b16 %v5468
    %v7010 = vunpack.c.h.b16 %v5468
    %v7011 = vunpack.c.l.b16 %v5469
    %v7012 = vunpack.c.h.b16 %v5469
    %v7013 = vunpack.c.l.b16 %v5470
    %v7014 = vunpack.c.h.b16 %v5470
    %v7015 = vunpack.c.l.b16 %v5471
    %v7016 = vunpack.c.h.b16 %v5471
    %v7017 = vunpack.c.l.b16 %v5472
    %v7018 = vunpack.c.h.b16 %v5472
    %v7019 = vunpack.c.l.b16 %v5473
    %v7020 = vunpack.c.h.b16 %v5473
    %v7021 = vunpack.c.l.b16 %v5474
    %v7022 = vunpack.c.h.b16 %v5474
    %v7023 = vunpack.c.l.b16 %v5475
    %v7024 = vunpack.c.h.b16 %v5475
    %v7025 = vunpack.c.l.b16 %v5476
    %v7026 = vunpack.c.h.b16 %v5476
    %v7027 = vunpack.c.l.b16 %v5477
    %v7028 = vunpack.c.h.b16 %v5477
    %v7029 = vunpack.c.l.b16 %v5478
    %v7030 = vunpack.c.h.b16 %v5478
    %v7031 = vunpack.c.l.b16 %v5479
    %v7032 = vunpack.c.h.b16 %v5479
    %v7033 = vunpack.c.l.b16 %v5480
    %v7034 = vunpack.c.h.b16 %v5480
    %v7035 = vunpack.c.l.b16 %v5481
    %v7036 = vunpack.c.h.b16 %v5481
    %v7037 = vunpack.c.l.b16 %v5482
    %v7038 = vunpack.c.h.b16 %v5482
    %v7039 = vunpack.c.l.b16 %v5483
    %v7040 = vunpack.c.h.b16 %v5483
    %v7041 = vunpack.c.l.b16 %v5484
    %v7042 = vunpack.c.h.b16 %v5484
    %v7043 = vunpack.c.l.b16 %v5485
    %v7044 = vunpack.c.h.b16 %v5485
    %v7045 = vunpack.c.l.b16 %v5486
    %v7046 = vunpack.c.h.b16 %v5486
    %v7047 = vunpack.c.l.b16 %v5487
    %v7048 = vunpack.c.h.b16 %v5487
    %v7049 = vunpack.c.l.b16 %v5488
    %v7050 = vunpack.c.h.b16 %v5488
    %v7051 = vunpack.c.l.b16 %v5489
    %v7052 = vunpack.c.h.b16 %v5489
    %v7053 = vunpack.c.l.b16 %v5490
    %v7054 = vunpack.c.h.b16 %v5490
    %v7055 = vunpack.c.l.b16 %v5491
    %v7056 = vunpack.c.h.b16 %v5491
    %v7057 = vunpack.c.l.b16 %v5492
    %v7058 = vunpack.c.h.b16 %v5492
    %v7059 = vunpack.c.l.b16 %v5493
    %v7060 = vunpack.c.h.b16 %v5493
    %v7061 = vunpack.c.l.b16 %v5494
    %v7062 = vunpack.c.h.b16 %v5494
    %v7063 = vunpack.c.l.b16 %v5495
    %v7064 = vunpack.c.h.b16 %v5495
    %v7065 = vunpack.c.l.b16 %v5496
    %v7066 = vunpack.c.h.b16 %v5496
    %v7067 = vunpack.c.l.b16 %v5497
    %v7068 = vunpack.c.h.b16 %v5497
    %v7069 = vunpack.c.l.b16 %v5498
    %v7070 = vunpack.c.h.b16 %v5498
    %v7071 = vunpack.c.l.b16 %v5499
    %v7072 = vunpack.c.h.b16 %v5499
    %v7073 = vunpack.c.l.b16 %v5500
    %v7074 = vunpack.c.h.b16 %v5500
    %v7075 = vunpack.c.l.b16 %v5501
    %v7076 = vunpack.c.h.b16 %v5501
    %v7077 = vunpack.c.l.b16 %v5502
    %v7078 = vunpack.c.h.b16 %v5502
    %v7079 = vunpack.c.l.b16 %v5503
    %v7080 = vunpack.c.h.b16 %v5503
    %v7081 = vunpack.c.l.b16 %v5504
    %v7082 = vunpack.c.h.b16 %v5504
    %v7083 = vunpack.c.l.b16 %v5505
    %v7084 = vunpack.c.h.b16 %v5505
    %v7085 = vunpack.c.l.b16 %v5506
    %v7086 = vunpack.c.h.b16 %v5506
    %v7087 = vunpack.c.l.b16 %v5507
    %v7088 = vunpack.c.h.b16 %v5507
    %v7089 = vunpack.c.l.b16 %v5508
    %v7090 = vunpack.c.h.b16 %v5508
    %v7091 = vunpack.c.l.b16 %v5509
    %v7092 = vunpack.c.h.b16 %v5509
    %v7093 = vunpack.c.l.b16 %v5510
    %v7094 = vunpack.c.h.b16 %v5510
    %v7095 = vunpack.c.l.b16 %v5511
    %v7096 = vunpack.c.h.b16 %v5511
    %v7097 = vunpack.c.l.b16 %v5512
    %v7098 = vunpack.c.h.b16 %v5512
    %v7099 = vunpack.c.l.b16 %v5513
    %v7100 = vunpack.c.h.b16 %v5513
    %v7101 = vunpack.c.l.b16 %v5514
    %v7102 = vunpack.c.h.b16 %v5514
    %v7103 = vunpack.c.l.b16 %v5515
    %v7104 = vunpack.c.h.b16 %v5515
    %v7105 = vunpack.c.l.b16 %v5516
    %v7106 = vunpack.c.h.b16 %v5516
    %v7107 = vunpack.c.l.b16 %v5517
    %v7108 = vunpack.c.h.b16 %v5517
    %v7109 = vunpack.c.l.b16 %v5518
    %v7110 = vunpack.c.h.b16 %v5518
    %v7111 = vunpack.c.l.b16 %v5519
    %v7112 = vunpack.c.h.b16 %v5519
    %v7113 = vunpack.c.l.b16 %v5520
    %v7114 = vunpack.c.h.b16 %v5520
    %v7115 = vunpack.c.l.b16 %v5521
    %v7116 = vunpack.c.h.b16 %v5521
    %v7117 = vunpack.c.l.b16 %v5522
    %v7118 = vunpack.c.h.b16 %v5522
    %v7119 = vunpack.c.l.b16 %v5523
    %v7120 = vunpack.c.h.b16 %v5523
    %v7121 = vunpack.c.l.b16 %v5524
    %v7122 = vunpack.c.h.b16 %v5524
    %v7123 = vunpack.c.l.b16 %v5525
    %v7124 = vunpack.c.h.b16 %v5525
    %v7125 = vunpack.c.l.b16 %v5526
    %v7126 = vunpack.c.h.b16 %v5526
    %v7127 = vunpack.c.l.b16 %v5527
    %v7128 = vunpack.c.h.b16 %v5527
    %v7129 = vunpack.c.l.b16 %v5528
    %v7130 = vunpack.c.h.b16 %v5528
    %v7131 = vunpack.c.l.b16 %v5529
    %v7132 = vunpack.c.h.b16 %v5529
    %v7133 = vunpack.c.l.b16 %v5530
    %v7134 = vunpack.c.h.b16 %v5530
    %v7135 = vunpack.c.l.b16 %v5531
    %v7136 = vunpack.c.h.b16 %v5531
    %v7137 = vunpack.c.l.b16 %v5532
    %v7138 = vunpack.c.h.b16 %v5532
    %v7139 = vunpack.c.l.b16 %v5533
    %v7140 = vunpack.c.h.b16 %v5533
    %v7141 = vunpack.c.l.b16 %v5534
    %v7142 = vunpack.c.h.b16 %v5534
    %v7143 = vunpack.c.l.b16 %v5535
    %v7144 = vunpack.c.h.b16 %v5535
    %v7145 = vunpack.c.l.b16 %v5536
    %v7146 = vunpack.c.h.b16 %v5536
    %v7147 = vunpack.c.l.b16 %v5537
    %v7148 = vunpack.c.h.b16 %v5537
    %v7149 = vunpack.c.l.b16 %v5538
    %v7150 = vunpack.c.h.b16 %v5538
    %v7151 = vunpack.c.l.b16 %v5539
    %v7152 = vunpack.c.h.b16 %v5539
    %v7153 = vunpack.c.l.b16 %v5540
    %v7154 = vunpack.c.h.b16 %v5540
    %v7155 = vunpack.c.l.b16 %v5541
    %v7156 = vunpack.c.h.b16 %v5541
    %v7157 = vunpack.c.l.b16 %v5542
    %v7158 = vunpack.c.h.b16 %v5542
    %v7159 = vunpack.c.l.b16 %v5543
    %v7160 = vunpack.c.h.b16 %v5543
    %v7161 = vunpack.c.l.b16 %v5544
    %v7162 = vunpack.c.h.b16 %v5544
    %v7163 = vunpack.c.l.b16 %v5545
    %v7164 = vunpack.c.h.b16 %v5545
    %v7165 = vunpack.c.l.b16 %v5546
    %v7166 = vunpack.c.h.b16 %v5546
    %v7167 = vunpack.c.l.b16 %v5547
    %v7168 = vunpack.c.h.b16 %v5547
    %v7169 = vunpack.c.l.b16 %v5548
    %v7170 = vunpack.c.h.b16 %v5548
    %v7171 = vunpack.c.l.b16 %v5549
    %v7172 = vunpack.c.h.b16 %v5549
    %v7173 = vunpack.c.l.b16 %v5550
    %v7174 = vunpack.c.h.b16 %v5550
    %v7175 = vunpack.c.l.b16 %v5551
    %v7176 = vunpack.c.h.b16 %v5551
    %v7177 = vunpack.c.l.b16 %v5552
    %v7178 = vunpack.c.h.b16 %v5552
    %v7179 = vunpack.c.l.b16 %v5553
    %v7180 = vunpack.c.h.b16 %v5553
    %v7181 = vunpack.c.l.b16 %v5554
    %v7182 = vunpack.c.h.b16 %v5554
    %v7183 = vunpack.c.l.b16 %v5555
    %v7184 = vunpack.c.h.b16 %v5555
    %v7185 = vunpack.c.l.b16 %v5556
    %v7186 = vunpack.c.h.b16 %v5556
    %v7187 = vunpack.c.l.b16 %v5557
    %v7188 = vunpack.c.h.b16 %v5557
    %v7189 = vunpack.c.l.b16 %v5558
    %v7190 = vunpack.c.h.b16 %v5558
    %v7191 = vunpack.c.l.b16 %v5559
    %v7192 = vunpack.c.h.b16 %v5559
    %v7193 = vunpack.c.l.b16 %v5560
    %v7194 = vunpack.c.h.b16 %v5560
    %v7195 = vunpack.c.l.b16 %v5561
    %v7196 = vunpack.c.h.b16 %v5561
    %v7197 = vunpack.c.l.b16 %v5562
    %v7198 = vunpack.c.h.b16 %v5562
    %v7199 = vunpack.c.l.b16 %v5563
    %v7200 = vunpack.c.h.b16 %v5563
    %v7201 = vunpack.c.l.b16 %v5564
    %v7202 = vunpack.c.h.b16 %v5564
    %v7203 = vunpack.c.l.b16 %v5565
    %v7204 = vunpack.c.h.b16 %v5565
    %v7205 = vunpack.c.l.b16 %v5566
    %v7206 = vunpack.c.h.b16 %v5566
    %v7207 = vunpack.c.l.b16 %v5567
    %v7208 = vunpack.c.h.b16 %v5567
    %v7209 = vunpack.c.l.b16 %v5568
    %v7210 = vunpack.c.h.b16 %v5568
    %v7211 = vunpack.c.l.b16 %v5569
    %v7212 = vunpack.c.h.b16 %v5569
    %v7213 = vunpack.c.l.b16 %v5570
    %v7214 = vunpack.c.h.b16 %v5570
    %v7215 = vunpack.c.l.b16 %v5571
    %v7216 = vunpack.c.h.b16 %v5571
    %v7217 = vunpack.c.l.b16 %v5572
    %v7218 = vunpack.c.h.b16 %v5572
    %v7219 = vunpack.c.l.b16 %v5573
    %v7220 = vunpack.c.h.b16 %v5573
    %v7221 = vunpack.c.l.b16 %v5574
    %v7222 = vunpack.c.h.b16 %v5574
    %v7223 = vunpack.c.l.b16 %v5575
    %v7224 = vunpack.c.h.b16 %v5575
    %v7225 = vunpack.c.l.b16 %v5576
    %v7226 = vunpack.c.h.b16 %v5576
    %v7227 = vunpack.c.l.b16 %v5577
    %v7228 = vunpack.c.h.b16 %v5577
    %v7229 = vunpack.c.l.b16 %v5578
    %v7230 = vunpack.c.h.b16 %v5578
    %v7231 = vunpack.c.l.b16 %v5579
    %v7232 = vunpack.c.h.b16 %v5579
    %v7233 = vunpack.c.l.b16 %v5580
    %v7234 = vunpack.c.h.b16 %v5580
    %v7235 = vunpack.c.l.b16 %v5581
    %v7236 = vunpack.c.h.b16 %v5581
    %v7237 = vunpack.c.l.b16 %v5582
    %v7238 = vunpack.c.h.b16 %v5582
    %v7239 = vunpack.c.l.b16 %v5583
    %v7240 = vunpack.c.h.b16 %v5583
    %v7241 = vunpack.c.l.b16 %v5584
    %v7242 = vunpack.c.h.b16 %v5584
    %v7243 = vunpack.c.l.b16 %v5585
    %v7244 = vunpack.c.h.b16 %v5585
    %v7245 = vunpack.c.l.b16 %v5586
    %v7246 = vunpack.c.h.b16 %v5586
    %v7247 = vunpack.c.l.b16 %v5587
    %v7248 = vunpack.c.h.b16 %v5587
    %v7249 = vunpack.c.l.b16 %v5588
    %v7250 = vunpack.c.h.b16 %v5588
    %v7251 = vunpack.c.l.b16 %v5589
    %v7252 = vunpack.c.h.b16 %v5589
    %v7253 = vunpack.c.l.b16 %v5590
    %v7254 = vunpack.c.h.b16 %v5590
    %v7255 = vunpack.c.l.b16 %v5591
    %v7256 = vunpack.c.h.b16 %v5591
    %v7257 = vunpack.c.l.b16 %v5592
    %v7258 = vunpack.c.h.b16 %v5592
    %v7259 = vunpack.c.l.b16 %v5593
    %v7260 = vunpack.c.h.b16 %v5593
    %v7261 = vunpack.c.l.b16 %v5594
    %v7262 = vunpack.c.h.b16 %v5594
    %v7263 = vunpack.c.l.b16 %v5595
    %v7264 = vunpack.c.h.b16 %v5595
    %v7265 = vunpack.c.l.b16 %v5596
    %v7266 = vunpack.c.h.b16 %v5596
    %v7267 = vunpack.c.l.b16 %v5597
    %v7268 = vunpack.c.h.b16 %v5597
    %v7269 = vunpack.c.l.b16 %v5598
    %v7270 = vunpack.c.h.b16 %v5598
    %v7271 = vunpack.c.l.b16 %v5599
    %v7272 = vunpack.c.h.b16 %v5599
    %v7273 = vunpack.c.l.b16 %v5600
    %v7274 = vunpack.c.h.b16 %v5600
    %v7275 = vunpack.c.l.b16 %v5601
    %v7276 = vunpack.c.h.b16 %v5601
    %v7277 = vunpack.c.l.b16 %v5602
    %v7278 = vunpack.c.h.b16 %v5602
    %v7279 = vunpack.c.l.b16 %v5603
    %v7280 = vunpack.c.h.b16 %v5603
    %v7281 = vunpack.c.l.b16 %v5604
    %v7282 = vunpack.c.h.b16 %v5604
    %v7283 = vunpack.c.l.b16 %v5605
    %v7284 = vunpack.c.h.b16 %v5605
    %v7285 = vunpack.c.l.b16 %v5606
    %v7286 = vunpack.c.h.b16 %v5606
    %v7287 = vunpack.c.l.b16 %v5607
    %v7288 = vunpack.c.h.b16 %v5607
    %v7289 = vunpack.c.l.b16 %v5608
    %v7290 = vunpack.c.h.b16 %v5608
    %v7291 = vunpack.c.l.b16 %v5609
    %v7292 = vunpack.c.h.b16 %v5609
    %v7293 = vunpack.c.l.b16 %v5610
    %v7294 = vunpack.c.h.b16 %v5610
    %v7295 = vunpack.c.l.b16 %v5611
    %v7296 = vunpack.c.h.b16 %v5611
    %v7297 = vunpack.c.l.b16 %v5612
    %v7298 = vunpack.c.h.b16 %v5612
    %v7299 = vunpack.c.l.b16 %v5613
    %v7300 = vunpack.c.h.b16 %v5613
    %v7301 = vunpack.c.l.b16 %v5614
    %v7302 = vunpack.c.h.b16 %v5614
    %v7303 = vunpack.c.l.b16 %v5615
    %v7304 = vunpack.c.h.b16 %v5615
    %v7305 = vunpack.c.l.b16 %v5616
    %v7306 = vunpack.c.h.b16 %v5616
    %v7307 = vunpack.c.l.b16 %v5617
    %v7308 = vunpack.c.h.b16 %v5617
    %v7309 = vunpack.c.l.b16 %v5618
    %v7310 = vunpack.c.h.b16 %v5618
    %v7311 = vunpack.c.l.b16 %v5619
    %v7312 = vunpack.c.h.b16 %v5619
    %v7313 = vunpack.c.l.b16 %v5620
    %v7314 = vunpack.c.h.b16 %v5620
    %v7315 = vunpack.c.l.b16 %v5621
    %v7316 = vunpack.c.h.b16 %v5621
    %v7317 = vunpack.c.l.b16 %v5622
    %v7318 = vunpack.c.h.b16 %v5622
    %v7319 = vunpack.c.l.b16 %v5623
    %v7320 = vunpack.c.h.b16 %v5623
    %v7321 = vunpack.c.l.b16 %v5624
    %v7322 = vunpack.c.h.b16 %v5624
    %v7323 = vunpack.c.l.b16 %v5625
    %v7324 = vunpack.c.h.b16 %v5625
    %v7325 = vunpack.c.l.b16 %v5626
    %v7326 = vunpack.c.h.b16 %v5626
    %v7327 = vunpack.c.l.b16 %v5627
    %v7328 = vunpack.c.h.b16 %v5627
    %v7329 = vunpack.c.l.b16 %v5628
    %v7330 = vunpack.c.h.b16 %v5628
    %v7331 = vunpack.c.l.b16 %v5629
    %v7332 = vunpack.c.h.b16 %v5629
    %v7333 = vunpack.c.l.b16 %v5630
    %v7334 = vunpack.c.h.b16 %v5630
    %v7335 = vunpack.c.l.b16 %v5631
    %v7336 = vunpack.c.h.b16 %v5631
    %v7337 = vunpack.c.l.b16 %v5632
    %v7338 = vunpack.c.h.b16 %v5632
    %v7339 = vunpack.c.l.b16 %v5633
    %v7340 = vunpack.c.h.b16 %v5633
    %v7341 = vunpack.c.l.b16 %v5634
    %v7342 = vunpack.c.h.b16 %v5634
    %v7343 = vunpack.c.l.b16 %v5635
    %v7344 = vunpack.c.h.b16 %v5635
    %v7345 = vunpack.c.l.b16 %v5636
    %v7346 = vunpack.c.h.b16 %v5636
    %v7347 = vunpack.c.l.b16 %v5637
    %v7348 = vunpack.c.h.b16 %v5637
    %v7349 = vunpack.c.l.b16 %v5638
    %v7350 = vunpack.c.h.b16 %v5638
    %v7351 = vunpack.c.l.b16 %v5639
    %v7352 = vunpack.c.h.b16 %v5639
    %v7353 = vunpack.c.l.b16 %v5640
    %v7354 = vunpack.c.h.b16 %v5640
    %v7355 = vunpack.c.l.b16 %v5641
    %v7356 = vunpack.c.h.b16 %v5641
    %v7357 = vunpack.c.l.b16 %v5642
    %v7358 = vunpack.c.h.b16 %v5642
    %v7359 = vunpack.c.l.b16 %v5643
    %v7360 = vunpack.c.h.b16 %v5643
    %v7361 = vunpack.c.l.b16 %v5644
    %v7362 = vunpack.c.h.b16 %v5644
    %v7363 = vunpack.c.l.b16 %v5645
    %v7364 = vunpack.c.h.b16 %v5645
    %v7365 = vunpack.c.l.b16 %v5646
    %v7366 = vunpack.c.h.b16 %v5646
    %v7367 = vunpack.c.l.b16 %v5647
    %v7368 = vunpack.c.h.b16 %v5647
    %v7369 = vunpack.c.l.b16 %v5648
    %v7370 = vunpack.c.h.b16 %v5648
    %v7371 = vunpack.c.l.b16 %v5649
    %v7372 = vunpack.c.h.b16 %v5649
    %v7373 = vunpack.c.l.b16 %v5650
    %v7374 = vunpack.c.h.b16 %v5650
    %v7375 = vunpack.c.l.b16 %v5651
    %v7376 = vunpack.c.h.b16 %v5651
    %v7377 = vunpack.c.l.b16 %v5652
    %v7378 = vunpack.c.h.b16 %v5652
    %v7379 = vunpack.c.l.b16 %v5653
    %v7380 = vunpack.c.h.b16 %v5653
    %v7381 = vunpack.c.l.b16 %v5654
    %v7382 = vunpack.c.h.b16 %v5654
    %v7383 = vunpack.c.l.b16 %v5655
    %v7384 = vunpack.c.h.b16 %v5655
    %v7385 = vunpack.c.l.b16 %v5656
    %v7386 = vunpack.c.h.b16 %v5656
    %v7387 = vunpack.c.l.b16 %v5657
    %v7388 = vunpack.c.h.b16 %v5657
    %v7389 = vunpack.c.l.b16 %v5658
    %v7390 = vunpack.c.h.b16 %v5658
    %v7391 = vunpack.c.l.b16 %v5659
    %v7392 = vunpack.c.h.b16 %v5659
    %v7393 = vunpack.c.l.b16 %v5660
    %v7394 = vunpack.c.h.b16 %v5660
    %v7395 = vunpack.c.l.b16 %v5661
    %v7396 = vunpack.c.h.b16 %v5661
    %v7397 = vunpack.c.l.b16 %v5662
    %v7398 = vunpack.c.h.b16 %v5662
    %v7399 = vunpack.c.l.b16 %v5663
    %v7400 = vunpack.c.h.b16 %v5663
    %v7401 = vunpack.c.l.b16 %v5664
    %v7402 = vunpack.c.h.b16 %v5664
    %v7403 = vunpack.c.l.b16 %v5665
    %v7404 = vunpack.c.h.b16 %v5665
    %v7405 = vunpack.c.l.b16 %v5666
    %v7406 = vunpack.c.h.b16 %v5666
    %v7407 = vunpack.c.l.b16 %v5667
    %v7408 = vunpack.c.h.b16 %v5667
    %v7409 = vunpack.c.l.b16 %v5668
    %v7410 = vunpack.c.h.b16 %v5668
    %v7411 = vunpack.c.l.b16 %v5669
    %v7412 = vunpack.c.h.b16 %v5669
    %v7413 = vunpack.c.l.b16 %v5670
    %v7414 = vunpack.c.h.b16 %v5670
    %v7415 = vunpack.c.l.b16 %v5671
    %v7416 = vunpack.c.h.b16 %v5671
    %v7417 = vunpack.c.l.b16 %v5672
    %v7418 = vunpack.c.h.b16 %v5672
    %v7419 = vunpack.c.l.b16 %v5673
    %v7420 = vunpack.c.h.b16 %v5673
    %v7421 = vunpack.c.l.b16 %v5674
    %v7422 = vunpack.c.h.b16 %v5674
    %v7423 = vunpack.c.l.b16 %v5675
    %v7424 = vunpack.c.h.b16 %v5675
    %v7425 = vunpack.c.l.b16 %v5676
    %v7426 = vunpack.c.h.b16 %v5676
    %v7427 = vunpack.c.l.b16 %v5677
    %v7428 = vunpack.c.h.b16 %v5677
    %v7429 = vunpack.c.l.b16 %v5678
    %v7430 = vunpack.c.h.b16 %v5678
    %v7431 = vunpack.c.l.b16 %v5679
    %v7432 = vunpack.c.h.b16 %v5679
    %v7433 = vunpack.c.l.b16 %v5680
    %v7434 = vunpack.c.h.b16 %v5680
    %v7435 = vunpack.c.l.b16 %v5681
    %v7436 = vunpack.c.h.b16 %v5681
    %v7437 = vunpack.c.l.b16 %v5682
    %v7438 = vunpack.c.h.b16 %v5682
    %v7439 = vunpack.c.l.b16 %v5683
    %v7440 = vunpack.c.h.b16 %v5683
    %v7441 = vunpack.c.l.b16 %v5684
    %v7442 = vunpack.c.h.b16 %v5684
    %v7443 = vunpack.c.l.b16 %v5685
    %v7444 = vunpack.c.h.b16 %v5685
    %v7445 = vunpack.c.l.b16 %v5686
    %v7446 = vunpack.c.h.b16 %v5686
    %v7447 = vunpack.c.l.b16 %v5687
    %v7448 = vunpack.c.h.b16 %v5687
    %v7449 = vunpack.c.l.b16 %v5688
    %v7450 = vunpack.c.h.b16 %v5688
    %v7451 = vunpack.c.l.b16 %v5689
    %v7452 = vunpack.c.h.b16 %v5689
    %v7453 = vunpack.c.l.b16 %v5690
    %v7454 = vunpack.c.h.b16 %v5690
    %v7455 = vunpack.c.l.b16 %v5691
    %v7456 = vunpack.c.h.b16 %v5691
    %v7457 = vunpack.c.l.b16 %v5692
    %v7458 = vunpack.c.h.b16 %v5692
    %v7459 = vunpack.c.l.b16 %v5693
    %v7460 = vunpack.c.h.b16 %v5693
    %v7461 = vunpack.c.l.b16 %v5694
    %v7462 = vunpack.c.h.b16 %v5694
    %v7463 = vunpack.c.l.b16 %v5695
    %v7464 = vunpack.c.h.b16 %v5695
    %v7465 = vunpack.c.l.b16 %v5696
    %v7466 = vunpack.c.h.b16 %v5696
    %v7467 = vunpack.c.l.b16 %v5697
    %v7468 = vunpack.c.h.b16 %v5697
    %v7469 = vunpack.c.l.b16 %v5698
    %v7470 = vunpack.c.h.b16 %v5698
    %v7471 = vunpack.c.l.b16 %v5699
    %v7472 = vunpack.c.h.b16 %v5699
    %v7473 = vunpack.c.l.b16 %v5700
    %v7474 = vunpack.c.h.b16 %v5700
    %v7475 = vunpack.c.l.b16 %v5701
    %v7476 = vunpack.c.h.b16 %v5701
    %v7477 = vunpack.c.l.b16 %v5702
    %v7478 = vunpack.c.h.b16 %v5702
    %v7479 = vunpack.c.l.b16 %v5703
    %v7480 = vunpack.c.h.b16 %v5703
    %v7481 = vunpack.c.l.b16 %v5704
    %v7482 = vunpack.c.h.b16 %v5704
    %v7483 = vunpack.c.l.b16 %v5705
    %v7484 = vunpack.c.h.b16 %v5705
    %v7485 = vunpack.c.l.b16 %v5706
    %v7486 = vunpack.c.h.b16 %v5706
    %v7487 = vunpack.c.l.b16 %v5707
    %v7488 = vunpack.c.h.b16 %v5707
    %v7489 = vunpack.c.l.b16 %v5708
    %v7490 = vunpack.c.h.b16 %v5708
    %v7491 = vunpack.c.l.b16 %v5709
    %v7492 = vunpack.c.h.b16 %v5709
    %v7493 = vunpack.c.l.b16 %v5710
    %v7494 = vunpack.c.h.b16 %v5710
    %v7495 = vunpack.c.l.b16 %v5711
    %v7496 = vunpack.c.h.b16 %v5711
    %v7497 = vunpack.c.l.b16 %v5712
    %v7498 = vunpack.c.h.b16 %v5712
    %v7499 = vunpack.c.l.b16 %v5713
    %v7500 = vunpack.c.h.b16 %v5713
    %v7501 = vunpack.c.l.b16 %v5714
    %v7502 = vunpack.c.h.b16 %v5714
    %v7503 = vunpack.c.l.b16 %v5715
    %v7504 = vunpack.c.h.b16 %v5715
    %v7505 = vunpack.c.l.b16 %v5716
    %v7506 = vunpack.c.h.b16 %v5716
    %v7507 = vunpack.c.l.b16 %v5717
    %v7508 = vunpack.c.h.b16 %v5717
    %v7509 = vunpack.c.l.b16 %v5718
    %v7510 = vunpack.c.h.b16 %v5718
    %v7511 = vunpack.c.l.b16 %v5719
    %v7512 = vunpack.c.h.b16 %v5719
    %v7513 = vunpack.c.l.b16 %v5720
    %v7514 = vunpack.c.h.b16 %v5720
    %v7515 = vunpack.c.l.b16 %v5721
    %v7516 = vunpack.c.h.b16 %v5721
    %v7517 = vunpack.c.l.b16 %v5722
    %v7518 = vunpack.c.h.b16 %v5722
    %v7519 = vunpack.c.l.b16 %v5723
    %v7520 = vunpack.c.h.b16 %v5723
    %v7521 = vunpack.c.l.b16 %v5724
    %v7522 = vunpack.c.h.b16 %v5724
    %v7523 = vunpack.c.l.b16 %v5725
    %v7524 = vunpack.c.h.b16 %v5725
    %v7525 = vunpack.c.l.b16 %v5726
    %v7526 = vunpack.c.h.b16 %v5726
    %v7527 = vunpack.c.l.b16 %v5727
    %v7528 = vunpack.c.h.b16 %v5727
    %v7529 = vunpack.c.l.b16 %v5728
    %v7530 = vunpack.c.h.b16 %v5728
    %v7531 = vunpack.c.l.b16 %v5729
    %v7532 = vunpack.c.h.b16 %v5729
    %v7533 = vunpack.c.l.b16 %v5730
    %v7534 = vunpack.c.h.b16 %v5730
    %v7535 = vunpack.c.l.b16 %v5731
    %v7536 = vunpack.c.h.b16 %v5731
    %v7537 = vunpack.c.l.b16 %v5732
    %v7538 = vunpack.c.h.b16 %v5732
    %v7539 = vunpack.c.l.b16 %v5733
    %v7540 = vunpack.c.h.b16 %v5733
    %v7541 = vunpack.c.l.b16 %v5734
    %v7542 = vunpack.c.h.b16 %v5734
    %v7543 = vunpack.c.l.b16 %v5735
    %v7544 = vunpack.c.h.b16 %v5735
    %v7545 = vunpack.c.l.b16 %v5736
    %v7546 = vunpack.c.h.b16 %v5736
    %v7547 = vunpack.c.l.b16 %v5737
    %v7548 = vunpack.c.h.b16 %v5737
    %v7549 = vunpack.c.l.b16 %v5738
    %v7550 = vunpack.c.h.b16 %v5738
    %v7551 = vunpack.c.l.b16 %v5739
    %v7552 = vunpack.c.h.b16 %v5739
    %v7553 = vunpack.c.l.b16 %v5740
    %v7554 = vunpack.c.h.b16 %v5740
    %v7555 = vunpack.c.l.b16 %v5741
    %v7556 = vunpack.c.h.b16 %v5741
    %v7557 = vunpack.c.l.b16 %v5742
    %v7558 = vunpack.c.h.b16 %v5742
    %v7559 = vunpack.c.l.b16 %v5743
    %v7560 = vunpack.c.h.b16 %v5743
    %v7561 = vunpack.c.l.b16 %v5744
    %v7562 = vunpack.c.h.b16 %v5744
    %v7563 = vunpack.c.l.b16 %v5745
    %v7564 = vunpack.c.h.b16 %v5745
    %v7565 = vunpack.c.l.b16 %v5746
    %v7566 = vunpack.c.h.b16 %v5746
    %v7567 = vunpack.c.l.b16 %v5747
    %v7568 = vunpack.c.h.b16 %v5747
    %v7569 = vunpack.c.l.b16 %v5748
    %v7570 = vunpack.c.h.b16 %v5748
    %v7571 = vunpack.c.l.b16 %v5749
    %v7572 = vunpack.c.h.b16 %v5749
    %v7573 = vunpack.c.l.b16 %v5750
    %v7574 = vunpack.c.h.b16 %v5750
    %v7575 = vunpack.c.l.b16 %v5751
    %v7576 = vunpack.c.h.b16 %v5751
    %v7577 = vunpack.c.l.b16 %v5752
    %v7578 = vunpack.c.h.b16 %v5752
    %v7579 = vunpack.c.l.b16 %v5753
    %v7580 = vunpack.c.h.b16 %v5753
    %v7581 = vunpack.c.l.b16 %v5754
    %v7582 = vunpack.c.h.b16 %v5754
    %v7583 = vunpack.c.l.b16 %v5755
    %v7584 = vunpack.c.h.b16 %v5755
    %v7585 = vunpack.c.l.b16 %v5756
    %v7586 = vunpack.c.h.b16 %v5756
    %v7587 = vunpack.c.l.b16 %v5757
    %v7588 = vunpack.c.h.b16 %v5757
    %v7589 = vunpack.c.l.b16 %v5758
    %v7590 = vunpack.c.h.b16 %v5758
    %v7591 = vunpack.c.l.b16 %v5759
    %v7592 = vunpack.c.h.b16 %v5759
    %v7593 = vunpack.c.l.b16 %v5760
    %v7594 = vunpack.c.h.b16 %v5760
    %v7595 = vunpack.c.l.b16 %v5761
    %v7596 = vunpack.c.h.b16 %v5761
    %v7597 = vunpack.c.l.b16 %v5762
    %v7598 = vunpack.c.h.b16 %v5762
    %v7599 = vunpack.c.l.b16 %v5763
    %v7600 = vunpack.c.h.b16 %v5763
    %v7601 = vunpack.c.l.b16 %v5764
    %v7602 = vunpack.c.h.b16 %v5764
    %v7603 = vunpack.c.l.b16 %v5765
    %v7604 = vunpack.c.h.b16 %v5765
    %v7605 = vunpack.c.l.b16 %v5766
    %v7606 = vunpack.c.h.b16 %v5766
    %v7607 = vunpack.c.l.b16 %v5767
    %v7608 = vunpack.c.h.b16 %v5767
    %v7609 = vunpack.c.l.b16 %v5768
    %v7610 = vunpack.c.h.b16 %v5768
    %v7611 = vunpack.c.l.b16 %v5769
    %v7612 = vunpack.c.h.b16 %v5769
    %v7613 = vunpack.c.l.b16 %v5770
    %v7614 = vunpack.c.h.b16 %v5770
    %v7615 = vunpack.c.l.b16 %v5771
    %v7616 = vunpack.c.h.b16 %v5771
    %v7617 = vunpack.c.l.b16 %v5772
    %v7618 = vunpack.c.h.b16 %v5772
    %v7619 = vunpack.c.l.b16 %v5773
    %v7620 = vunpack.c.h.b16 %v5773
    %v7621 = vunpack.c.l.b16 %v5774
    %v7622 = vunpack.c.h.b16 %v5774
    %v7623 = vunpack.c.l.b16 %v5775
    %v7624 = vunpack.c.h.b16 %v5775
    %v7625 = vunpack.c.l.b16 %v5776
    %v7626 = vunpack.c.h.b16 %v5776
    %v7627 = vunpack.c.l.b16 %v5777
    %v7628 = vunpack.c.h.b16 %v5777
    %v7629 = vunpack.c.l.b16 %v5778
    %v7630 = vunpack.c.h.b16 %v5778
    %v7631 = vunpack.c.l.b16 %v5779
    %v7632 = vunpack.c.h.b16 %v5779
    %v7633 = vunpack.c.l.b16 %v5780
    %v7634 = vunpack.c.h.b16 %v5780
    %v7635 = vunpack.c.l.b16 %v5781
    %v7636 = vunpack.c.h.b16 %v5781
    %v7637 = vunpack.c.l.b16 %v5782
    %v7638 = vunpack.c.h.b16 %v5782
    %v7639 = vunpack.c.l.b16 %v5783
    %v7640 = vunpack.c.h.b16 %v5783
    %v7641 = vunpack.c.l.b16 %v5784
    %v7642 = vunpack.c.h.b16 %v5784
    %v7643 = vunpack.c.l.b16 %v5785
    %v7644 = vunpack.c.h.b16 %v5785
    %v7645 = vunpack.c.l.b16 %v5786
    %v7646 = vunpack.c.h.b16 %v5786
    %v7647 = vunpack.c.l.b16 %v5787
    %v7648 = vunpack.c.h.b16 %v5787
    %v7649 = vunpack.c.l.b16 %v5788
    %v7650 = vunpack.c.h.b16 %v5788
    %v7651 = vunpack.c.l.b16 %v5789
    %v7652 = vunpack.c.h.b16 %v5789
    %v7653 = vunpack.c.l.b16 %v5790
    %v7654 = vunpack.c.h.b16 %v5790
    %v7655 = vunpack.c.l.b16 %v5791
    %v7656 = vunpack.c.h.b16 %v5791
    %v7657 = vunpack.c.l.b16 %v5792
    %v7658 = vunpack.c.h.b16 %v5792
    %v7659 = vunpack.c.l.b16 %v5793
    %v7660 = vunpack.c.h.b16 %v5793
    %v7661 = vunpack.c.l.b16 %v5794
    %v7662 = vunpack.c.h.b16 %v5794
    %v7663 = vunpack.c.l.b16 %v5795
    %v7664 = vunpack.c.h.b16 %v5795
    %v7665 = vunpack.c.l.b16 %v5796
    %v7666 = vunpack.c.h.b16 %v5796
    %v7667 = vunpack.c.l.b16 %v5797
    %v7668 = vunpack.c.h.b16 %v5797
    %v7669 = vunpack.c.l.b16 %v5798
    %v7670 = vunpack.c.h.b16 %v5798
    %v7671 = vunpack.c.l.b16 %v5799
    %v7672 = vunpack.c.h.b16 %v5799
    %v7673 = vunpack.c.l.b16 %v5800
    %v7674 = vunpack.c.h.b16 %v5800
    %v7675 = vunpack.c.l.b16 %v5801
    %v7676 = vunpack.c.h.b16 %v5801
    %v7677 = vunpack.c.l.b16 %v5802
    %v7678 = vunpack.c.h.b16 %v5802
    %v7679 = vunpack.c.l.b16 %v5803
    %v7680 = vunpack.c.h.b16 %v5803
    %v7681 = vunpack.c.l.b16 %v5804
    %v7682 = vunpack.c.h.b16 %v5804
    %v7683 = vunpack.c.l.b16 %v5805
    %v7684 = vunpack.c.h.b16 %v5805
    %v7685 = vunpack.c.l.b16 %v5806
    %v7686 = vunpack.c.h.b16 %v5806
    %v7687 = vunpack.c.l.b16 %v5807
    %v7688 = vunpack.c.h.b16 %v5807
    %v7689 = vunpack.c.l.b16 %v5808
    %v7690 = vunpack.c.h.b16 %v5808
    %v7691 = vunpack.c.l.b16 %v5809
    %v7692 = vunpack.c.h.b16 %v5809
    %v7693 = vunpack.c.l.b16 %v5810
    %v7694 = vunpack.c.h.b16 %v5810
    %v7695 = vunpack.c.l.b16 %v5811
    %v7696 = vunpack.c.h.b16 %v5811
    %v7697 = vunpack.c.l.b16 %v5812
    %v7698 = vunpack.c.h.b16 %v5812
    %v7699 = vunpack.c.l.b16 %v5813
    %v7700 = vunpack.c.h.b16 %v5813
    %v7701 = vunpack.c.l.b16 %v5814
    %v7702 = vunpack.c.h.b16 %v5814
    %v7703 = vunpack.c.l.b16 %v5815
    %v7704 = vunpack.c.h.b16 %v5815
    %v7705 = vunpack.c.l.b16 %v5816
    %v7706 = vunpack.c.h.b16 %v5816
    %v7707 = vunpack.c.l.b16 %v5817
    %v7708 = vunpack.c.h.b16 %v5817
    %v7709 = vunpack.c.l.b16 %v5818
    %v7710 = vunpack.c.h.b16 %v5818
    %v7711 = vunpack.c.l.b16 %v5819
    %v7712 = vunpack.c.h.b16 %v5819
    %v7713 = vunpack.c.l.b16 %v5820
    %v7714 = vunpack.c.h.b16 %v5820
    %v7715 = vunpack.c.l.b16 %v5821
    %v7716 = vunpack.c.h.b16 %v5821
    %v7717 = vunpack.c.l.b16 %v5822
    %v7718 = vunpack.c.h.b16 %v5822
    %v7719 = vunpack.c.l.b16 %v5823
    %v7720 = vunpack.c.h.b16 %v5823
    %v7721 = vunpack.c.l.b16 %v5824
    %v7722 = vunpack.c.h.b16 %v5824
    %v7723 = vunpack.c.l.b16 %v5825
    %v7724 = vunpack.c.h.b16 %v5825
    %v7725 = vunpack.c.l.b16 %v5826
    %v7726 = vunpack.c.h.b16 %v5826
    %v7727 = vunpack.c.l.b16 %v5827
    %v7728 = vunpack.c.h.b16 %v5827
    %v7729 = vunpack.c.l.b16 %v5828
    %v7730 = vunpack.c.h.b16 %v5828
    %v7731 = vunpack.c.l.b16 %v5829
    %v7732 = vunpack.c.h.b16 %v5829
    %v7733 = vunpack.c.l.b16 %v5830
    %v7734 = vunpack.c.h.b16 %v5830
    %v7735 = vunpack.c.l.b16 %v5831
    %v7736 = vunpack.c.h.b16 %v5831
    %v7737 = vunpack.c.l.b16 %v5832
    %v7738 = vunpack.c.h.b16 %v5832
    %v7739 = vunpack.c.l.b16 %v5833
    %v7740 = vunpack.c.h.b16 %v5833
    %v7741 = vunpack.c.l.b16 %v5834
    %v7742 = vunpack.c.h.b16 %v5834
    %v7743 = vunpack.c.l.b16 %v5835
    %v7744 = vunpack.c.h.b16 %v5835
    %v7745 = vunpack.c.l.b16 %v5836
    %v7746 = vunpack.c.h.b16 %v5836
    %v7747 = vunpack.c.l.b16 %v5837
    %v7748 = vunpack.c.h.b16 %v5837
    %v7749 = vunpack.c.l.b16 %v5838
    %v7750 = vunpack.c.h.b16 %v5838
    %v7751 = vunpack.c.l.b16 %v5839
    %v7752 = vunpack.c.h.b16 %v5839
    %v7753 = vunpack.c.l.b16 %v5840
    %v7754 = vunpack.c.h.b16 %v5840
    %v7755 = vunpack.c.l.b16 %v5841
    %v7756 = vunpack.c.h.b16 %v5841
    %v7757 = vunpack.c.l.b16 %v5842
    %v7758 = vunpack.c.h.b16 %v5842
    %v7759 = vunpack.c.l.b16 %v5843
    %v7760 = vunpack.c.h.b16 %v5843
    %v7761 = vunpack.c.l.b16 %v5844
    %v7762 = vunpack.c.h.b16 %v5844
    %v7763 = vunpack.c.l.b16 %v5845
    %v7764 = vunpack.c.h.b16 %v5845
    %v7765 = vunpack.c.l.b16 %v5846
    %v7766 = vunpack.c.h.b16 %v5846
    %v7767 = vunpack.c.l.b16 %v5847
    %v7768 = vunpack.c.h.b16 %v5847
    %v7769 = vunpack.c.l.b16 %v5848
    %v7770 = vunpack.c.h.b16 %v5848
    %v7771 = vunpack.c.l.b16 %v5849
    %v7772 = vunpack.c.h.b16 %v5849
    %v7773 = vunpack.c.l.b16 %v5850
    %v7774 = vunpack.c.h.b16 %v5850
    %v7775 = vunpack.c.l.b16 %v5851
    %v7776 = vunpack.c.h.b16 %v5851
    %v7777 = vunpack.c.l.b16 %v5852
    %v7778 = vunpack.c.h.b16 %v5852
    %v7779 = vunpack.c.l.b16 %v5853
    %v7780 = vunpack.c.h.b16 %v5853
    %v7781 = vunpack.c.l.b16 %v5854
    %v7782 = vunpack.c.h.b16 %v5854
    %v7783 = vunpack.c.l.b16 %v5855
    %v7784 = vunpack.c.h.b16 %v5855
    %v7785 = vunpack.c.l.b16 %v5856
    %v7786 = vunpack.c.h.b16 %v5856
    %v7787 = vunpack.c.l.b16 %v5857
    %v7788 = vunpack.c.h.b16 %v5857
    %v7789 = vunpack.c.l.b16 %v5858
    %v7790 = vunpack.c.h.b16 %v5858
    %v7791 = vunpack.c.l.b16 %v5859
    %v7792 = vunpack.c.h.b16 %v5859
    %v7793 = vunpack.c.l.b16 %v5860
    %v7794 = vunpack.c.h.b16 %v5860
    %v7795 = vunpack.c.l.b16 %v5861
    %v7796 = vunpack.c.h.b16 %v5861
    %v7797 = vunpack.c.l.b16 %v5862
    %v7798 = vunpack.c.h.b16 %v5862
    %v7799 = vunpack.c.l.b16 %v5863
    %v7800 = vunpack.c.h.b16 %v5863
    %v7801 = vunpack.c.l.b16 %v5864
    %v7802 = vunpack.c.h.b16 %v5864
    %v7803 = vunpack.c.l.b16 %v5865
    %v7804 = vunpack.c.h.b16 %v5865
    %v7805 = vunpack.c.l.b16 %v5866
    %v7806 = vunpack.c.h.b16 %v5866
    %v7807 = vunpack.c.l.b16 %v5867
    %v7808 = vunpack.c.h.b16 %v5867
    %v7809 = vunpack.c.l.b16 %v5868
    %v7810 = vunpack.c.h.b16 %v5868
    %v7811 = vunpack.c.l.b16 %v5869
    %v7812 = vunpack.c.h.b16 %v5869
    %v7813 = vunpack.c.l.b16 %v5870
    %v7814 = vunpack.c.h.b16 %v5870
    %v7815 = vunpack.c.l.b16 %v5871
    %v7816 = vunpack.c.h.b16 %v5871
    %v7817 = vunpack.c.l.b16 %v5872
    %v7818 = vunpack.c.h.b16 %v5872
    %v7819 = vunpack.c.l.b16 %v5873
    %v7820 = vunpack.c.h.b16 %v5873
    %v7821 = vunpack.c.l.b16 %v5874
    %v7822 = vunpack.c.h.b16 %v5874
    %v7823 = vunpack.c.l.b16 %v5875
    %v7824 = vunpack.c.h.b16 %v5875
    %v7825 = vunpack.c.l.b16 %v5876
    %v7826 = vunpack.c.h.b16 %v5876
    %v7827 = vunpack.c.l.b16 %v5877
    %v7828 = vunpack.c.h.b16 %v5877
    %v7829 = vunpack.c.l.b16 %v5878
    %v7830 = vunpack.c.h.b16 %v5878
    %v7831 = vunpack.c.l.b16 %v5879
    %v7832 = vunpack.c.h.b16 %v5879
    %v7833 = vunpack.c.l.b16 %v5880
    %v7834 = vunpack.c.h.b16 %v5880
    %v7835 = vunpack.c.l.b16 %v5881
    %v7836 = vunpack.c.h.b16 %v5881
    %v7837 = vunpack.c.l.b16 %v5882
    %v7838 = vunpack.c.h.b16 %v5882
    %v7839 = vunpack.c.l.b16 %v5883
    %v7840 = vunpack.c.h.b16 %v5883
    %v7841 = vunpack.c.l.b16 %v5884
    %v7842 = vunpack.c.h.b16 %v5884
    %v7843 = vunpack.c.l.b16 %v5885
    %v7844 = vunpack.c.h.b16 %v5885
    %v7845 = vunpack.c.l.b16 %v5886
    %v7846 = vunpack.c.h.b16 %v5886
    %v7847 = vunpack.c.l.b16 %v5887
    %v7848 = vunpack.c.h.b16 %v5887
    %v7849 = vunpack.c.l.b16 %v5888
    %v7850 = vunpack.c.h.b16 %v5888
    %v7851 = vunpack.c.l.b16 %v5889
    %v7852 = vunpack.c.h.b16 %v5889
    %v7853 = vunpack.c.l.b16 %v5890
    %v7854 = vunpack.c.h.b16 %v5890
    %v7855 = vunpack.c.l.b16 %v5891
    %v7856 = vunpack.c.h.b16 %v5891
    %v7857 = vunpack.c.l.b16 %v5892
    %v7858 = vunpack.c.h.b16 %v5892
    %v7859 = vunpack.c.l.b16 %v5893
    %v7860 = vunpack.c.h.b16 %v5893
    %v7861 = vunpack.c.l.b16 %v5894
    %v7862 = vunpack.c.h.b16 %v5894
    %v7863 = vunpack.c.l.b16 %v5895
    %v7864 = vunpack.c.h.b16 %v5895
    %v7865 = vunpack.c.l.b16 %v5896
    %v7866 = vunpack.c.h.b16 %v5896
    %v7867 = vunpack.c.l.b16 %v5897
    %v7868 = vunpack.c.h.b16 %v5897
    %v7869 = vunpack.c.l.b16 %v5898
    %v7870 = vunpack.c.h.b16 %v5898
    %v7871 = vunpack.c.l.b16 %v5899
    %v7872 = vunpack.c.h.b16 %v5899
    %v7873 = vunpack.c.l.b16 %v5900
    %v7874 = vunpack.c.h.b16 %v5900
    %v7875 = vunpack.c.l.b16 %v5901
    %v7876 = vunpack.c.h.b16 %v5901
    %v7877 = vunpack.c.l.b16 %v5902
    %v7878 = vunpack.c.h.b16 %v5902
    %v7879 = vunpack.c.l.b16 %v5903
    %v7880 = vunpack.c.h.b16 %v5903
    %v7881 = vunpack.c.l.b16 %v5904
    %v7882 = vunpack.c.h.b16 %v5904
    %v7883 = vunpack.c.l.b16 %v5905
    %v7884 = vunpack.c.h.b16 %v5905
    %v7885 = vunpack.c.l.b16 %v5906
    %v7886 = vunpack.c.h.b16 %v5906
    %v7887 = vunpack.c.l.b16 %v5907
    %v7888 = vunpack.c.h.b16 %v5907
    %v7889 = vunpack.c.l.b16 %v5908
    %v7890 = vunpack.c.h.b16 %v5908
    %v7891 = vunpack.c.l.b16 %v5909
    %v7892 = vunpack.c.h.b16 %v5909
    %v7893 = vunpack.c.l.b16 %v5910
    %v7894 = vunpack.c.h.b16 %v5910
    %v7895 = vunpack.c.l.b16 %v5911
    %v7896 = vunpack.c.h.b16 %v5911
    %v7897 = vunpack.c.l.b16 %v5912
    %v7898 = vunpack.c.h.b16 %v5912
    %v7899 = vunpack.c.l.b16 %v5913
    %v7900 = vunpack.c.h.b16 %v5913
    %v7901 = vunpack.c.l.b16 %v5914
    %v7902 = vunpack.c.h.b16 %v5914
    %v7903 = vunpack.c.l.b16 %v5915
    %v7904 = vunpack.c.h.b16 %v5915
    %v7905 = vunpack.c.l.b16 %v5916
    %v7906 = vunpack.c.h.b16 %v5916
    %v7907 = vunpack.c.l.b16 %v5917
    %v7908 = vunpack.c.h.b16 %v5917
    %v7909 = vunpack.c.l.b16 %v5918
    %v7910 = vunpack.c.h.b16 %v5918
    %v7911 = vunpack.c.l.b16 %v5919
    %v7912 = vunpack.c.h.b16 %v5919
    %v7913 = vunpack.c.l.b16 %v5920
    %v7914 = vunpack.c.h.b16 %v5920
    %v7915 = vunpack.c.l.b16 %v5921
    %v7916 = vunpack.c.h.b16 %v5921
    %v7917 = vunpack.c.l.b16 %v5922
    %v7918 = vunpack.c.h.b16 %v5922
    %v7919 = vunpack.c.l.b16 %v5923
    %v7920 = vunpack.c.h.b16 %v5923
    %v7921 = vunpack.c.l.b16 %v5924
    %v7922 = vunpack.c.h.b16 %v5924
    %v7923 = vunpack.c.l.b16 %v5925
    %v7924 = vunpack.c.h.b16 %v5925
    %v7925 = vunpack.c.l.b16 %v5926
    %v7926 = vunpack.c.h.b16 %v5926
    %v7927 = vunpack.c.l.b16 %v5927
    %v7928 = vunpack.c.h.b16 %v5927
    %v7929 = vunpack.c.l.b16 %v5928
    %v7930 = vunpack.c.h.b16 %v5928
    %v7931 = vunpack.c.l.b16 %v5929
    %v7932 = vunpack.c.h.b16 %v5929
    %v7933 = vunpack.c.l.b16 %v5930
    %v7934 = vunpack.c.h.b16 %v5930
    %v7935 = vunpack.c.l.b16 %v5931
    %v7936 = vunpack.c.h.b16 %v5931
    %v7937 = vunpack.c.l.b16 %v5932
    %v7938 = vunpack.c.h.b16 %v5932
    %v7939 = vunpack.c.l.b16 %v5933
    %v7940 = vunpack.c.h.b16 %v5933
    %v7941 = vunpack.c.l.b16 %v5934
    %v7942 = vunpack.c.h.b16 %v5934
    %v7943 = vunpack.c.l.b16 %v5935
    %v7944 = vunpack.c.h.b16 %v5935
    %v7945 = vunpack.c.l.b16 %v5936
    %v7946 = vunpack.c.h.b16 %v5936
    %v7947 = vunpack.c.l.b16 %v5937
    %v7948 = vunpack.c.h.b16 %v5937
    %v7949 = vunpack.c.l.b16 %v5938
    %v7950 = vunpack.c.h.b16 %v5938
    %v7951 = vunpack.c.l.b16 %v5939
    %v7952 = vunpack.c.h.b16 %v5939
    %v7953 = vunpack.c.l.b16 %v5940
    %v7954 = vunpack.c.h.b16 %v5940
    %v7955 = vunpack.c.l.b16 %v5941
    %v7956 = vunpack.c.h.b16 %v5941
    %v7957 = vunpack.c.l.b16 %v5942
    %v7958 = vunpack.c.h.b16 %v5942
    %v7959 = vpack.c.b16 %v6621, %v6615
    %v7960 = vpack.c.b16 %v6622, %v6616
    %v7961 = vpack.c.b16 %v6623, %v6617
    %v7962 = vpack.c.b16 %v6624, %v6618
    %v7963 = vpack.c.b16 %v6625, %v6619
    %v7964 = vpack.c.b16 %v6626, %v6620
    %v7965 = vpack.c.b16 %v6633, %v6627
    %v7966 = vpack.c.b16 %v6634, %v6628
    %v7967 = vpack.c.b16 %v6635, %v6629
    %v7968 = vpack.c.b16 %v6636, %v6630
    %v7969 = vpack.c.b16 %v6637, %v6631
    %v7970 = vpack.c.b16 %v6638, %v6632
    %v7971 = vpack.c.b16 %v6645, %v6639
    %v7972 = vpack.c.b16 %v6646, %v6640
    %v7973 = vpack.c.b16 %v6647, %v6641
    %v7974 = vpack.c.b16 %v6648, %v6642
    %v7975 = vpack.c.b16 %v6649, %v6643
    %v7976 = vpack.c.b16 %v6650, %v6644
    %v7977 = vpack.c.b16 %v6657, %v6651
    %v7978 = vpack.c.b16 %v6658, %v6652
    %v7979 = vpack.c.b16 %v6659, %v6653
    %v7980 = vpack.c.b16 %v6660, %v6654
    %v7981 = vpack.c.b16 %v6661, %v6655
    %v7982 = vpack.c.b16 %v6662, %v6656
    %v7983 = vpack.c.b16 %v6669, %v6663
    %v7984 = vpack.c.b16 %v6670, %v6664
    %v7985 = vpack.c.b16 %v6671, %v6665
    %v7986 = vpack.c.b16 %v6672, %v6666
    %v7987 = vpack.c.b16 %v6673, %v6667
    %v7988 = vpack.c.b16 %v6674, %v6668
    %v7989 = vpack.c.b16 %v6681, %v6675
    %v7990 = vpack.c.b16 %v6682, %v6676
    %v7991 = vpack.c.b16 %v6683, %v6677
    %v7992 = vpack.c.b16 %v6684, %v6678
    %v7993 = vpack.c.b16 %v6685, %v6679
    %v7994 = vpack.c.b16 %v6686, %v6680
    %v7995 = vpack.c.b16 %v6693, %v6687
    %v7996 = vpack.c.b16 %v6694, %v6688
    %v7997 = vpack.c.b16 %v6695, %v6689
    %v7998 = vpack.c.b16 %v6696, %v6690
    %v7999 = vpack.c.b16 %v6697, %v6691
    %v8000 = vpack.c.b16 %v6698, %v6692
    %v8001 = vpack.c.b16 %v6705, %v6699
    %v8002 = vpack.c.b16 %v6706, %v6700
    %v8003 = vpack.c.b16 %v6707, %v6701
    %v8004 = vpack.c.b16 %v6708, %v6702
    %v8005 = vpack.c.b16 %v6709, %v6703
    %v8006 = vpack.c.b16 %v6710, %v6704
    %v8007 = vpack.c.b16 %v6717, %v6711
    %v8008 = vpack.c.b16 %v6718, %v6712
    %v8009 = vpack.c.b16 %v6719, %v6713
    %v8010 = vpack.c.b16 %v6720, %v6714
    %v8011 = vpack.c.b16 %v6721, %v6715
    %v8012 = vpack.c.b16 %v6722, %v6716
    %v8013 = vpack.c.b16 %v6729, %v6723
    %v8014 = vpack.c.b16 %v6730, %v6724
    %v8015 = vpack.c.b16 %v6731, %v6725
    %v8016 = vpack.c.b16 %v6732, %v6726
    %v8017 = vpack.c.b16 %v6733, %v6727
    %v8018 = vpack.c.b16 %v6734, %v6728
    %v8019 = vpack.c.b16 %v6741, %v6735
    %v8020 = vpack.c.b16 %v6742, %v6736
    %v8021 = vpack.c.b16 %v6743, %v6737
    %v8022 = vpack.c.b16 %v6744, %v6738
    %v8023 = vpack.c.b16 %v6745, %v6739
    %v8024 = vpack.c.b16 %v6746, %v6740
    %v8025 = vpack.c.b16 %v6753, %v6747
    %v8026 = vpack.c.b16 %v6754, %v6748
    %v8027 = vpack.c.b16 %v6755, %v6749
    %v8028 = vpack.c.b16 %v6756, %v6750
    %v8029 = vpack.c.b16 %v6757, %v6751
    %v8030 = vpack.c.b16 %v6758, %v6752
    %v8031 = vpack.c.b16 %v6765, %v6759
    %v8032 = vpack.c.b16 %v6766, %v6760
    %v8033 = vpack.c.b16 %v6767, %v6761
    %v8034 = vpack.c.b16 %v6768, %v6762
    %v8035 = vpack.c.b16 %v6769, %v6763
    %v8036 = vpack.c.b16 %v6770, %v6764
    %v8037 = vpack.c.b16 %v6777, %v6771
    %v8038 = vpack.c.b16 %v6778, %v6772
    %v8039 = vpack.c.b16 %v6779, %v6773
    %v8040 = vpack.c.b16 %v6780, %v6774
    %v8041 = vpack.c.b16 %v6781, %v6775
    %v8042 = vpack.c.b16 %v6782, %v6776
    %v8043 = vpack.c.b16 %v6789, %v6783
    %v8044 = vpack.c.b16 %v6790, %v6784
    %v8045 = vpack.c.b16 %v6791, %v6785
    %v8046 = vpack.c.b16 %v6792, %v6786
    %v8047 = vpack.c.b16 %v6793, %v6787
    %v8048 = vpack.c.b16 %v6794, %v6788
    %v8049 = vpack.c.b16 %v6801, %v6795
    %v8050 = vpack.c.b16 %v6802, %v6796
    %v8051 = vpack.c.b16 %v6803, %v6797
    %v8052 = vpack.c.b16 %v6804, %v6798
    %v8053 = vpack.c.b16 %v6805, %v6799
    %v8054 = vpack.c.b16 %v6806, %v6800
    %v8055 = vpack.c.b16 %v6813, %v6807
    %v8056 = vpack.c.b16 %v6814, %v6808
    %v8057 = vpack.c.b16 %v6815, %v6809
    %v8058 = vpack.c.b16 %v6816, %v6810
    %v8059 = vpack.c.b16 %v6817, %v6811
    %v8060 = vpack.c.b16 %v6818, %v6812
    %v8061 = vpack.c.b16 %v6825, %v6819
    %v8062 = vpack.c.b16 %v6826, %v6820
    %v8063 = vpack.c.b16 %v6827, %v6821
    %v8064 = vpack.c.b16 %v6828, %v6822
    %v8065 = vpack.c.b16 %v6829, %v6823
    %v8066 = vpack.c.b16 %v6830, %v6824
    %v8067 = vpack.c.b16 %v6837, %v6831
    %v8068 = vpack.c.b16 %v6838, %v6832
    %v8069 = vpack.c.b16 %v6839, %v6833
    %v8070 = vpack.c.b16 %v6840, %v6834
    %v8071 = vpack.c.b16 %v6841, %v6835
    %v8072 = vpack.c.b16 %v6842, %v6836
    %v8073 = vpack.c.b16 %v6849, %v6843
    %v8074 = vpack.c.b16 %v6850, %v6844
    %v8075 = vpack.c.b16 %v6851, %v6845
    %v8076 = vpack.c.b16 %v6852, %v6846
    %v8077 = vpack.c.b16 %v6853, %v6847
    %v8078 = vpack.c.b16 %v6854, %v6848
    %v8079 = vpack.c.b16 %v6861, %v6855
    %v8080 = vpack.c.b16 %v6862, %v6856
    %v8081 = vpack.c.b16 %v6863, %v6857
    %v8082 = vpack.c.b16 %v6864, %v6858
    %v8083 = vpack.c.b16 %v6865, %v6859
    %v8084 = vpack.c.b16 %v6866, %v6860
    %v8085 = vpack.c.b16 %v6873, %v6867
    %v8086 = vpack.c.b16 %v6874, %v6868
    %v8087 = vpack.c.b16 %v6875, %v6869
    %v8088 = vpack.c.b16 %v6876, %v6870
    %v8089 = vpack.c.b16 %v6877, %v6871
    %v8090 = vpack.c.b16 %v6878, %v6872
    %v8091 = vpack.c.b16 %v6885, %v6879
    %v8092 = vpack.c.b16 %v6886, %v6880
    %v8093 = vpack.c.b16 %v6887, %v6881
    %v8094 = vpack.c.b16 %v6888, %v6882
    %v8095 = vpack.c.b16 %v6889, %v6883
    %v8096 = vpack.c.b16 %v6890, %v6884
    %v8097 = vpack.c.b16 %v6897, %v6891
    %v8098 = vpack.c.b16 %v6898, %v6892
    %v8099 = vpack.c.b16 %v6899, %v6893
    %v8100 = vpack.c.b16 %v6900, %v6894
    %v8101 = vpack.c.b16 %v6901, %v6895
    %v8102 = vpack.c.b16 %v6902, %v6896
    %v8103 = vpack.c.b16 %v6909, %v6903
    %v8104 = vpack.c.b16 %v6910, %v6904
    %v8105 = vpack.c.b16 %v6911, %v6905
    %v8106 = vpack.c.b16 %v6912, %v6906
    %v8107 = vpack.c.b16 %v6913, %v6907
    %v8108 = vpack.c.b16 %v6914, %v6908
    %v8109 = vpack.c.b16 %v6921, %v6915
    %v8110 = vpack.c.b16 %v6922, %v6916
    %v8111 = vpack.c.b16 %v6923, %v6917
    %v8112 = vpack.c.b16 %v6924, %v6918
    %v8113 = vpack.c.b16 %v6925, %v6919
    %v8114 = vpack.c.b16 %v6926, %v6920
    %v8115 = vpack.c.b16 %v6933, %v6927
    %v8116 = vpack.c.b16 %v6934, %v6928
    %v8117 = vpack.c.b16 %v6935, %v6929
    %v8118 = vpack.c.b16 %v6936, %v6930
    %v8119 = vpack.c.b16 %v6937, %v6931
    %v8120 = vpack.c.b16 %v6938, %v6932
    %v8121 = vpack.c.b16 %v6945, %v6939
    %v8122 = vpack.c.b16 %v6946, %v6940
    %v8123 = vpack.c.b16 %v6947, %v6941
    %v8124 = vpack.c.b16 %v6948, %v6942
    %v8125 = vpack.c.b16 %v6949, %v6943
    %v8126 = vpack.c.b16 %v6950, %v6944
    %v8127 = vpack.c.b16 %v6957, %v6951
    %v8128 = vpack.c.b16 %v6958, %v6952
    %v8129 = vpack.c.b16 %v6959, %v6953
    %v8130 = vpack.c.b16 %v6960, %v6954
    %v8131 = vpack.c.b16 %v6961, %v6955
    %v8132 = vpack.c.b16 %v6962, %v6956
    %v8133 = vpack.c.b16 %v6969, %v6963
    %v8134 = vpack.c.b16 %v6970, %v6964
    %v8135 = vpack.c.b16 %v6971, %v6965
    %v8136 = vpack.c.b16 %v6972, %v6966
    %v8137 = vpack.c.b16 %v6973, %v6967
    %v8138 = vpack.c.b16 %v6974, %v6968
    %v8139 = vpack.c.b16 %v6981, %v6975
    %v8140 = vpack.c.b16 %v6982, %v6976
    %v8141 = vpack.c.b16 %v6983, %v6977
    %v8142 = vpack.c.b16 %v6984, %v6978
    %v8143 = vpack.c.b16 %v6985, %v6979
    %v8144 = vpack.c.b16 %v6986, %v6980
    %v8145 = vpack.c.b16 %v6993, %v6987
    %v8146 = vpack.c.b16 %v6994, %v6988
    %v8147 = vpack.c.b16 %v6995, %v6989
    %v8148 = vpack.c.b16 %v6996, %v6990
    %v8149 = vpack.c.b16 %v6997, %v6991
    %v8150 = vpack.c.b16 %v6998, %v6992
    %v8151 = vpack.c.b16 %v7005, %v6999
    %v8152 = vpack.c.b16 %v7006, %v7000
    %v8153 = vpack.c.b16 %v7007, %v7001
    %v8154 = vpack.c.b16 %v7008, %v7002
    %v8155 = vpack.c.b16 %v7009, %v7003
    %v8156 = vpack.c.b16 %v7010, %v7004
    %v8157 = vpack.c.b16 %v7017, %v7011
    %v8158 = vpack.c.b16 %v7018, %v7012
    %v8159 = vpack.c.b16 %v7019, %v7013
    %v8160 = vpack.c.b16 %v7020, %v7014
    %v8161 = vpack.c.b16 %v7021, %v7015
    %v8162 = vpack.c.b16 %v7022, %v7016
    %v8163 = vpack.c.b16 %v7029, %v7023
    %v8164 = vpack.c.b16 %v7030, %v7024
    %v8165 = vpack.c.b16 %v7031, %v7025
    %v8166 = vpack.c.b16 %v7032, %v7026
    %v8167 = vpack.c.b16 %v7033, %v7027
    %v8168 = vpack.c.b16 %v7034, %v7028
    %v8169 = vpack.c.b16 %v7041, %v7035
    %v8170 = vpack.c.b16 %v7042, %v7036
    %v8171 = vpack.c.b16 %v7043, %v7037
    %v8172 = vpack.c.b16 %v7044, %v7038
    %v8173 = vpack.c.b16 %v7045, %v7039
    %v8174 = vpack.c.b16 %v7046, %v7040
    %v8175 = vpack.c.b16 %v7053, %v7047
    %v8176 = vpack.c.b16 %v7054, %v7048
    %v8177 = vpack.c.b16 %v7055, %v7049
    %v8178 = vpack.c.b16 %v7056, %v7050
    %v8179 = vpack.c.b16 %v7057, %v7051
    %v8180 = vpack.c.b16 %v7058, %v7052
    %v8181 = vpack.c.b16 %v7065, %v7059
    %v8182 = vpack.c.b16 %v7066, %v7060
    %v8183 = vpack.c.b16 %v7067, %v7061
    %v8184 = vpack.c.b16 %v7068, %v7062
    %v8185 = vpack.c.b16 %v7069, %v7063
    %v8186 = vpack.c.b16 %v7070, %v7064
    %v8187 = vpack.c.b16 %v7077, %v7071
    %v8188 = vpack.c.b16 %v7078, %v7072
    %v8189 = vpack.c.b16 %v7079, %v7073
    %v8190 = vpack.c.b16 %v7080, %v7074
    %v8191 = vpack.c.b16 %v7081, %v7075
    %v8192 = vpack.c.b16 %v7082, %v7076
    %v8193 = vpack.c.b16 %v7089, %v7083
    %v8194 = vpack.c.b16 %v7090, %v7084
    %v8195 = vpack.c.b16 %v7091, %v7085
    %v8196 = vpack.c.b16 %v7092, %v7086
    %v8197 = vpack.c.b16 %v7093, %v7087
    %v8198 = vpack.c.b16 %v7094, %v7088
    %v8199 = vpack.c.b16 %v7101, %v7095
    %v8200 = vpack.c.b16 %v7102, %v7096
    %v8201 = vpack.c.b16 %v7103, %v7097
    %v8202 = vpack.c.b16 %v7104, %v7098
    %v8203 = vpack.c.b16 %v7105, %v7099
    %v8204 = vpack.c.b16 %v7106, %v7100
    %v8205 = vpack.c.b16 %v7113, %v7107
    %v8206 = vpack.c.b16 %v7114, %v7108
    %v8207 = vpack.c.b16 %v7115, %v7109
    %v8208 = vpack.c.b16 %v7116, %v7110
    %v8209 = vpack.c.b16 %v7117, %v7111
    %v8210 = vpack.c.b16 %v7118, %v7112
    %v8211 = vpack.c.b16 %v7125, %v7119
    %v8212 = vpack.c.b16 %v7126, %v7120
    %v8213 = vpack.c.b16 %v7127, %v7121
    %v8214 = vpack.c.b16 %v7128, %v7122
    %v8215 = vpack.c.b16 %v7129, %v7123
    %v8216 = vpack.c.b16 %v7130, %v7124
    %v8217 = vpack.c.b16 %v7137, %v7131
    %v8218 = vpack.c.b16 %v7138, %v7132
    %v8219 = vpack.c.b16 %v7139, %v7133
    %v8220 = vpack.c.b16 %v7140, %v7134
    %v8221 = vpack.c.b16 %v7141, %v7135
    %v8222 = vpack.c.b16 %v7142, %v7136
    %v8223 = vpack.c.b16 %v7149, %v7143
    %v8224 = vpack.c.b16 %v7150, %v7144
    %v8225 = vpack.c.b16 %v7151, %v7145
    %v8226 = vpack.c.b16 %v7152, %v7146
    %v8227 = vpack.c.b16 %v7153, %v7147
    %v8228 = vpack.c.b16 %v7154, %v7148
    %v8229 = vpack.c.b16 %v7161, %v7155
    %v8230 = vpack.c.b16 %v7162, %v7156
    %v8231 = vpack.c.b16 %v7163, %v7157
    %v8232 = vpack.c.b16 %v7164, %v7158
    %v8233 = vpack.c.b16 %v7165, %v7159
    %v8234 = vpack.c.b16 %v7166, %v7160
    %v8235 = vpack.c.b16 %v7173, %v7167
    %v8236 = vpack.c.b16 %v7174, %v7168
    %v8237 = vpack.c.b16 %v7175, %v7169
    %v8238 = vpack.c.b16 %v7176, %v7170
    %v8239 = vpack.c.b16 %v7177, %v7171
    %v8240 = vpack.c.b16 %v7178, %v7172
    %v8241 = vpack.c.b16 %v7185, %v7179
    %v8242 = vpack.c.b16 %v7186, %v7180
    %v8243 = vpack.c.b16 %v7187, %v7181
    %v8244 = vpack.c.b16 %v7188, %v7182
    %v8245 = vpack.c.b16 %v7189, %v7183
    %v8246 = vpack.c.b16 %v7190, %v7184
    %v8247 = vpack.c.b16 %v7197, %v7191
    %v8248 = vpack.c.b16 %v7198, %v7192
    %v8249 = vpack.c.b16 %v7199, %v7193
    %v8250 = vpack.c.b16 %v7200, %v7194
    %v8251 = vpack.c.b16 %v7201, %v7195
    %v8252 = vpack.c.b16 %v7202, %v7196
    %v8253 = vpack.c.b16 %v7209, %v7203
    %v8254 = vpack.c.b16 %v7210, %v7204
    %v8255 = vpack.c.b16 %v7211, %v7205
    %v8256 = vpack.c.b16 %v7212, %v7206
    %v8257 = vpack.c.b16 %v7213, %v7207
    %v8258 = vpack.c.b16 %v7214, %v7208
    %v8259 = vpack.c.b16 %v7221, %v7215
    %v8260 = vpack.c.b16 %v7222, %v7216
    %v8261 = vpack.c.b16 %v7223, %v7217
    %v8262 = vpack.c.b16 %v7224, %v7218
    %v8263 = vpack.c.b16 %v7225, %v7219
    %v8264 = vpack.c.b16 %v7226, %v7220
    %v8265 = vpack.c.b16 %v7233, %v7227
    %v8266 = vpack.c.b16 %v7234, %v7228
    %v8267 = vpack.c.b16 %v7235, %v7229
    %v8268 = vpack.c.b16 %v7236, %v7230
    %v8269 = vpack.c.b16 %v7237, %v7231
    %v8270 = vpack.c.b16 %v7238, %v7232
    %v8271 = vpack.c.b16 %v7245, %v7239
    %v8272 = vpack.c.b16 %v7246, %v7240
    %v8273 = vpack.c.b16 %v7247, %v7241
    %v8274 = vpack.c.b16 %v7248, %v7242
    %v8275 = vpack.c.b16 %v7249, %v7243
    %v8276 = vpack.c.b16 %v7250, %v7244
    %v8277 = vpack.c.b16 %v7257, %v7251
    %v8278 = vpack.c.b16 %v7258, %v7252
    %v8279 = vpack.c.b16 %v7259, %v7253
    %v8280 = vpack.c.b16 %v7260, %v7254
    %v8281 = vpack.c.b16 %v7261, %v7255
    %v8282 = vpack.c.b16 %v7262, %v7256
    %v8283 = vpack.c.b16 %v7269, %v7263
    %v8284 = vpack.c.b16 %v7270, %v7264
    %v8285 = vpack.c.b16 %v7271, %v7265
    %v8286 = vpack.c.b16 %v7272, %v7266
    %v8287 = vpack.c.b16 %v7273, %v7267
    %v8288 = vpack.c.b16 %v7274, %v7268
    %v8289 = vpack.c.b16 %v7281, %v7275
    %v8290 = vpack.c.b16 %v7282, %v7276
    %v8291 = vpack.c.b16 %v7283, %v7277
    %v8292 = vpack.c.b16 %v7284, %v7278
    %v8293 = vpack.c.b16 %v7285, %v7279
    %v8294 = vpack.c.b16 %v7286, %v7280
    %v8295 = vpack.c.b16 %v7293, %v7287
    %v8296 = vpack.c.b16 %v7294, %v7288
    %v8297 = vpack.c.b16 %v7295, %v7289
    %v8298 = vpack.c.b16 %v7296, %v7290
    %v8299 = vpack.c.b16 %v7297, %v7291
    %v8300 = vpack.c.b16 %v7298, %v7292
    %v8301 = vpack.c.b16 %v7305, %v7299
    %v8302 = vpack.c.b16 %v7306, %v7300
    %v8303 = vpack.c.b16 %v7307, %v7301
    %v8304 = vpack.c.b16 %v7308, %v7302
    %v8305 = vpack.c.b16 %v7309, %v7303
    %v8306 = vpack.c.b16 %v7310, %v7304
    %v8307 = vpack.c.b16 %v7317, %v7311
    %v8308 = vpack.c.b16 %v7318, %v7312
    %v8309 = vpack.c.b16 %v7319, %v7313
    %v8310 = vpack.c.b16 %v7320, %v7314
    %v8311 = vpack.c.b16 %v7321, %v7315
    %v8312 = vpack.c.b16 %v7322, %v7316
    %v8313 = vpack.c.b16 %v7329, %v7323
    %v8314 = vpack.c.b16 %v7330, %v7324
    %v8315 = vpack.c.b16 %v7331, %v7325
    %v8316 = vpack.c.b16 %v7332, %v7326
    %v8317 = vpack.c.b16 %v7333, %v7327
    %v8318 = vpack.c.b16 %v7334, %v7328
    %v8319 = vpack.c.b16 %v7341, %v7335
    %v8320 = vpack.c.b16 %v7342, %v7336
    %v8321 = vpack.c.b16 %v7343, %v7337
    %v8322 = vpack.c.b16 %v7344, %v7338
    %v8323 = vpack.c.b16 %v7345, %v7339
    %v8324 = vpack.c.b16 %v7346, %v7340
    %v8325 = vpack.c.b16 %v7353, %v7347
    %v8326 = vpack.c.b16 %v7354, %v7348
    %v8327 = vpack.c.b16 %v7355, %v7349
    %v8328 = vpack.c.b16 %v7356, %v7350
    %v8329 = vpack.c.b16 %v7357, %v7351
    %v8330 = vpack.c.b16 %v7358, %v7352
    %v8331 = vpack.c.b16 %v7365, %v7359
    %v8332 = vpack.c.b16 %v7366, %v7360
    %v8333 = vpack.c.b16 %v7367, %v7361
    %v8334 = vpack.c.b16 %v7368, %v7362
    %v8335 = vpack.c.b16 %v7369, %v7363
    %v8336 = vpack.c.b16 %v7370, %v7364
    %v8337 = vpack.c.b16 %v7377, %v7371
    %v8338 = vpack.c.b16 %v7378, %v7372
    %v8339 = vpack.c.b16 %v7379, %v7373
    %v8340 = vpack.c.b16 %v7380, %v7374
    %v8341 = vpack.c.b16 %v7381, %v7375
    %v8342 = vpack.c.b16 %v7382, %v7376
    %v8343 = vpack.c.b16 %v7389, %v7383
    %v8344 = vpack.c.b16 %v7390, %v7384
    %v8345 = vpack.c.b16 %v7391, %v7385
    %v8346 = vpack.c.b16 %v7392, %v7386
    %v8347 = vpack.c.b16 %v7393, %v7387
    %v8348 = vpack.c.b16 %v7394, %v7388
    %v8349 = vpack.c.b16 %v7401, %v7395
    %v8350 = vpack.c.b16 %v7402, %v7396
    %v8351 = vpack.c.b16 %v7403, %v7397
    %v8352 = vpack.c.b16 %v7404, %v7398
    %v8353 = vpack.c.b16 %v7405, %v7399
    %v8354 = vpack.c.b16 %v7406, %v7400
    %v8355 = vpack.c.b16 %v7413, %v7407
    %v8356 = vpack.c.b16 %v7414, %v7408
    %v8357 = vpack.c.b16 %v7415, %v7409
    %v8358 = vpack.c.b16 %v7416, %v7410
    %v8359 = vpack.c.b16 %v7417, %v7411
    %v8360 = vpack.c.b16 %v7418, %v7412
    %v8361 = vpack.c.b16 %v7425, %v7419
    %v8362 = vpack.c.b16 %v7426, %v7420
    %v8363 = vpack.c.b16 %v7427, %v7421
    %v8364 = vpack.c.b16 %v7428, %v7422
    %v8365 = vpack.c.b16 %v7429, %v7423
    %v8366 = vpack.c.b16 %v7430, %v7424
    %v8367 = vpack.c.b16 %v7437, %v7431
    %v8368 = vpack.c.b16 %v7438, %v7432
    %v8369 = vpack.c.b16 %v7439, %v7433
    %v8370 = vpack.c.b16 %v7440, %v7434
    %v8371 = vpack.c.b16 %v7441, %v7435
    %v8372 = vpack.c.b16 %v7442, %v7436
    %v8373 = vpack.c.b16 %v7449, %v7443
    %v8374 = vpack.c.b16 %v7450, %v7444
    %v8375 = vpack.c.b16 %v7451, %v7445
    %v8376 = vpack.c.b16 %v7452, %v7446
    %v8377 = vpack.c.b16 %v7453, %v7447
    %v8378 = vpack.c.b16 %v7454, %v7448
    %v8379 = vpack.c.b16 %v7461, %v7455
    %v8380 = vpack.c.b16 %v7462, %v7456
    %v8381 = vpack.c.b16 %v7463, %v7457
    %v8382 = vpack.c.b16 %v7464, %v7458
    %v8383 = vpack.c.b16 %v7465, %v7459
    %v8384 = vpack.c.b16 %v7466, %v7460
    %v8385 = vpack.c.b16 %v7473, %v7467
    %v8386 = vpack.c.b16 %v7474, %v7468
    %v8387 = vpack.c.b16 %v7475, %v7469
    %v8388 = vpack.c.b16 %v7476, %v7470
    %v8389 = vpack.c.b16 %v7477, %v7471
    %v8390 = vpack.c.b16 %v7478, %v7472
    %v8391 = vpack.c.b16 %v7485, %v7479
    %v8392 = vpack.c.b16 %v7486, %v7480
    %v8393 = vpack.c.b16 %v7487, %v7481
    %v8394 = vpack.c.b16 %v7488, %v7482
    %v8395 = vpack.c.b16 %v7489, %v7483
    %v8396 = vpack.c.b16 %v7490, %v7484
    %v8397 = vpack.c.b16 %v7497, %v7491
    %v8398 = vpack.c.b16 %v7498, %v7492
    %v8399 = vpack.c.b16 %v7499, %v7493
    %v8400 = vpack.c.b16 %v7500, %v7494
    %v8401 = vpack.c.b16 %v7501, %v7495
    %v8402 = vpack.c.b16 %v7502, %v7496
    %v8403 = vpack.c.b16 %v7509, %v7503
    %v8404 = vpack.c.b16 %v7510, %v7504
    %v8405 = vpack.c.b16 %v7511, %v7505
    %v8406 = vpack.c.b16 %v7512, %v7506
    %v8407 = vpack.c.b16 %v7513, %v7507
    %v8408 = vpack.c.b16 %v7514, %v7508
    %v8409 = vpack.c.b16 %v7521, %v7515
    %v8410 = vpack.c.b16 %v7522, %v7516
    %v8411 = vpack.c.b16 %v7523, %v7517
    %v8412 = vpack.c.b16 %v7524, %v7518
    %v8413 = vpack.c.b16 %v7525, %v7519
    %v8414 = vpack.c.b16 %v7526, %v7520
    %v8415 = vpack.c.b16 %v7533, %v7527
    %v8416 = vpack.c.b16 %v7534, %v7528
    %v8417 = vpack.c.b16 %v7535, %v7529
    %v8418 = vpack.c.b16 %v7536, %v7530
    %v8419 = vpack.c.b16 %v7537, %v7531
    %v8420 = vpack.c.b16 %v7538, %v7532
    %v8421 = vpack.c.b16 %v7545, %v7539
    %v8422 = vpack.c.b16 %v7546, %v7540
    %v8423 = vpack.c.b16 %v7547, %v7541
    %v8424 = vpack.c.b16 %v7548, %v7542
    %v8425 = vpack.c.b16 %v7549, %v7543
    %v8426 = vpack.c.b16 %v7550, %v7544
    %v8427 = vpack.c.b16 %v7557, %v7551
    %v8428 = vpack.c.b16 %v7558, %v7552
    %v8429 = vpack.c.b16 %v7559, %v7553
    %v8430 = vpack.c.b16 %v7560, %v7554
    %v8431 = vpack.c.b16 %v7561, %v7555
    %v8432 = vpack.c.b16 %v7562, %v7556
    %v8433 = vpack.c.b16 %v7569, %v7563
    %v8434 = vpack.c.b16 %v7570, %v7564
    %v8435 = vpack.c.b16 %v7571, %v7565
    %v8436 = vpack.c.b16 %v7572, %v7566
    %v8437 = vpack.c.b16 %v7573, %v7567
    %v8438 = vpack.c.b16 %v7574, %v7568
    %v8439 = vpack.c.b16 %v7581, %v7575
    %v8440 = vpack.c.b16 %v7582, %v7576
    %v8441 = vpack.c.b16 %v7583, %v7577
    %v8442 = vpack.c.b16 %v7584, %v7578
    %v8443 = vpack.c.b16 %v7585, %v7579
    %v8444 = vpack.c.b16 %v7586, %v7580
    %v8445 = vpack.c.b16 %v7593, %v7587
    %v8446 = vpack.c.b16 %v7594, %v7588
    %v8447 = vpack.c.b16 %v7595, %v7589
    %v8448 = vpack.c.b16 %v7596, %v7590
    %v8449 = vpack.c.b16 %v7597, %v7591
    %v8450 = vpack.c.b16 %v7598, %v7592
    %v8451 = vpack.c.b16 %v7605, %v7599
    %v8452 = vpack.c.b16 %v7606, %v7600
    %v8453 = vpack.c.b16 %v7607, %v7601
    %v8454 = vpack.c.b16 %v7608, %v7602
    %v8455 = vpack.c.b16 %v7609, %v7603
    %v8456 = vpack.c.b16 %v7610, %v7604
    %v8457 = vpack.c.b16 %v7617, %v7611
    %v8458 = vpack.c.b16 %v7618, %v7612
    %v8459 = vpack.c.b16 %v7619, %v7613
    %v8460 = vpack.c.b16 %v7620, %v7614
    %v8461 = vpack.c.b16 %v7621, %v7615
    %v8462 = vpack.c.b16 %v7622, %v7616
    %v8463 = vpack.c.b16 %v7629, %v7623
    %v8464 = vpack.c.b16 %v7630, %v7624
    %v8465 = vpack.c.b16 %v7631, %v7625
    %v8466 = vpack.c.b16 %v7632, %v7626
    %v8467 = vpack.c.b16 %v7633, %v7627
    %v8468 = vpack.c.b16 %v7634, %v7628
    %v8469 = vpack.c.b16 %v7641, %v7635
    %v8470 = vpack.c.b16 %v7642, %v7636
    %v8471 = vpack.c.b16 %v7643, %v7637
    %v8472 = vpack.c.b16 %v7644, %v7638
    %v8473 = vpack.c.b16 %v7645, %v7639
    %v8474 = vpack.c.b16 %v7646, %v7640
    %v8475 = vpack.c.b16 %v7653, %v7647
    %v8476 = vpack.c.b16 %v7654, %v7648
    %v8477 = vpack.c.b16 %v7655, %v7649
    %v8478 = vpack.c.b16 %v7656, %v7650
    %v8479 = vpack.c.b16 %v7657, %v7651
    %v8480 = vpack.c.b16 %v7658, %v7652
    %v8481 = vpack.c.b16 %v7665, %v7659
    %v8482 = vpack.c.b16 %v7666, %v7660
    %v8483 = vpack.c.b16 %v7667, %v7661
    %v8484 = vpack.c.b16 %v7668, %v7662
    %v8485 = vpack.c.b16 %v7669, %v7663
    %v8486 = vpack.c.b16 %v7670, %v7664
    %v8487 = vpack.c.b16 %v7677, %v7671
    %v8488 = vpack.c.b16 %v7678, %v7672
    %v8489 = vpack.c.b16 %v7679, %v7673
    %v8490 = vpack.c.b16 %v7680, %v7674
    %v8491 = vpack.c.b16 %v7681, %v7675
    %v8492 = vpack.c.b16 %v7682, %v7676
    %v8493 = vpack.c.b16 %v7689, %v7683
    %v8494 = vpack.c.b16 %v7690, %v7684
    %v8495 = vpack.c.b16 %v7691, %v7685
    %v8496 = vpack.c.b16 %v7692, %v7686
    %v8497 = vpack.c.b16 %v7693, %v7687
    %v8498 = vpack.c.b16 %v7694, %v7688
    %v8499 = vpack.c.b16 %v7701, %v7695
    %v8500 = vpack.c.b16 %v7702, %v7696
    %v8501 = vpack.c.b16 %v7703, %v7697
    %v8502 = vpack.c.b16 %v7704, %v7698
    %v8503 = vpack.c.b16 %v7705, %v7699
    %v8504 = vpack.c.b16 %v7706, %v7700
    %v8505 = vpack.c.b16 %v7713, %v7707
    %v8506 = vpack.c.b16 %v7714, %v7708
    %v8507 = vpack.c.b16 %v7715, %v7709
    %v8508 = vpack.c.b16 %v7716, %v7710
    %v8509 = vpack.c.b16 %v7717, %v7711
    %v8510 = vpack.c.b16 %v7718, %v7712
    %v8511 = vpack.c.b16 %v7725, %v7719
    %v8512 = vpack.c.b16 %v7726, %v7720
    %v8513 = vpack.c.b16 %v7727, %v7721
    %v8514 = vpack.c.b16 %v7728, %v7722
    %v8515 = vpack.c.b16 %v7729, %v7723
    %v8516 = vpack.c.b16 %v7730, %v7724
    %v8517 = vpack.c.b16 %v7737, %v7731
    %v8518 = vpack.c.b16 %v7738, %v7732
    %v8519 = vpack.c.b16 %v7739, %v7733
    %v8520 = vpack.c.b16 %v7740, %v7734
    %v8521 = vpack.c.b16 %v7741, %v7735
    %v8522 = vpack.c.b16 %v7742, %v7736
    %v8523 = vpack.c.b16 %v7749, %v7743
    %v8524 = vpack.c.b16 %v7750, %v7744
    %v8525 = vpack.c.b16 %v7751, %v7745
    %v8526 = vpack.c.b16 %v7752, %v7746
    %v8527 = vpack.c.b16 %v7753, %v7747
    %v8528 = vpack.c.b16 %v7754, %v7748
    %v8529 = vpack.c.b16 %v7761, %v7755
    %v8530 = vpack.c.b16 %v7762, %v7756
    %v8531 = vpack.c.b16 %v7763, %v7757
    %v8532 = vpack.c.b16 %v7764, %v7758
    %v8533 = vpack.c.b16 %v7765, %v7759
    %v8534 = vpack.c.b16 %v7766, %v7760
    %v8535 = vpack.c.b16 %v7773, %v7767
    %v8536 = vpack.c.b16 %v7774, %v7768
    %v8537 = vpack.c.b16 %v7775, %v7769
    %v8538 = vpack.c.b16 %v7776, %v7770
    %v8539 = vpack.c.b16 %v7777, %v7771
    %v8540 = vpack.c.b16 %v7778, %v7772
    %v8541 = vpack.c.b16 %v7785, %v7779
    %v8542 = vpack.c.b16 %v7786, %v7780
    %v8543 = vpack.c.b16 %v7787, %v7781
    %v8544 = vpack.c.b16 %v7788, %v7782
    %v8545 = vpack.c.b16 %v7789, %v7783
    %v8546 = vpack.c.b16 %v7790, %v7784
    %v8547 = vpack.c.b16 %v7797, %v7791
    %v8548 = vpack.c.b16 %v7798, %v7792
    %v8549 = vpack.c.b16 %v7799, %v7793
    %v8550 = vpack.c.b16 %v7800, %v7794
    %v8551 = vpack.c.b16 %v7801, %v7795
    %v8552 = vpack.c.b16 %v7802, %v7796
    %v8553 = vpack.c.b16 %v7809, %v7803
    %v8554 = vpack.c.b16 %v7810, %v7804
    %v8555 = vpack.c.b16 %v7811, %v7805
    %v8556 = vpack.c.b16 %v7812, %v7806
    %v8557 = vpack.c.b16 %v7813, %v7807
    %v8558 = vpack.c.b16 %v7814, %v7808
    %v8559 = vpack.c.b16 %v7821, %v7815
    %v8560 = vpack.c.b16 %v7822, %v7816
    %v8561 = vpack.c.b16 %v7823, %v7817
    %v8562 = vpack.c.b16 %v7824, %v7818
    %v8563 = vpack.c.b16 %v7825, %v7819
    %v8564 = vpack.c.b16 %v7826, %v7820
    %v8565 = vpack.c.b16 %v7833, %v7827
    %v8566 = vpack.c.b16 %v7834, %v7828
    %v8567 = vpack.c.b16 %v7835, %v7829
    %v8568 = vpack.c.b16 %v7836, %v7830
    %v8569 = vpack.c.b16 %v7837, %v7831
    %v8570 = vpack.c.b16 %v7838, %v7832
    %v8571 = vpack.c.b16 %v7845, %v7839
    %v8572 = vpack.c.b16 %v7846, %v7840
    %v8573 = vpack.c.b16 %v7847, %v7841
    %v8574 = vpack.c.b16 %v7848, %v7842
    %v8575 = vpack.c.b16 %v7849, %v7843
    %v8576 = vpack.c.b16 %v7850, %v7844
    %v8577 = vpack.c.b16 %v7857, %v7851
    %v8578 = vpack.c.b16 %v7858, %v7852
    %v8579 = vpack.c.b16 %v7859, %v7853
    %v8580 = vpack.c.b16 %v7860, %v7854
    %v8581 = vpack.c.b16 %v7861, %v7855
    %v8582 = vpack.c.b16 %v7862, %v7856
    %v8583 = vpack.c.b16 %v7869, %v7863
    %v8584 = vpack.c.b16 %v7870, %v7864
    %v8585 = vpack.c.b16 %v7871, %v7865
    %v8586 = vpack.c.b16 %v7872, %v7866
    %v8587 = vpack.c.b16 %v7873, %v7867
    %v8588 = vpack.c.b16 %v7874, %v7868
    %v8589 = vpack.c.b16 %v7881, %v7875
    %v8590 = vpack.c.b16 %v7882, %v7876
    %v8591 = vpack.c.b16 %v7883, %v7877
    %v8592 = vpack.c.b16 %v7884, %v7878
    %v8593 = vpack.c.b16 %v7885, %v7879
    %v8594 = vpack.c.b16 %v7886, %v7880
    %v8595 = vpack.c.b16 %v7893, %v7887
    %v8596 = vpack.c.b16 %v7894, %v7888
    %v8597 = vpack.c.b16 %v7895, %v7889
    %v8598 = vpack.c.b16 %v7896, %v7890
    %v8599 = vpack.c.b16 %v7897, %v7891
    %v8600 = vpack.c.b16 %v7898, %v7892
    %v8601 = vpack.c.b16 %v7905, %v7899
    %v8602 = vpack.c.b16 %v7906, %v7900
    %v8603 = vpack.c.b16 %v7907, %v7901
    %v8604 = vpack.c.b16 %v7908, %v7902
    %v8605 = vpack.c.b16 %v7909, %v7903
    %v8606 = vpack.c.b16 %v7910, %v7904
    %v8607 = vpack.c.b16 %v7917, %v7911
    %v8608 = vpack.c.b16 %v7918, %v7912
    %v8609 = vpack.c.b16 %v7919, %v7913
    %v8610 = vpack.c.b16 %v7920, %v7914
    %v8611 = vpack.c.b16 %v7921, %v7915
    %v8612 = vpack.c.b16 %v7922, %v7916
    %v8613 = vpack.c.b16 %v7929, %v7923
    %v8614 = vpack.c.b16 %v7930, %v7924
    %v8615 = vpack.c.b16 %v7931, %v7925
    %v8616 = vpack.c.b16 %v7932, %v7926
    %v8617 = vpack.c.b16 %v7933, %v7927
    %v8618 = vpack.c.b16 %v7934, %v7928
    %v8619 = vpack.c.b16 %v7941, %v7935
    %v8620 = vpack.c.b16 %v7942, %v7936
    %v8621 = vpack.c.b16 %v7943, %v7937
    %v8622 = vpack.c.b16 %v7944, %v7938
    %v8623 = vpack.c.b16 %v7945, %v7939
    %v8624 = vpack.c.b16 %v7946, %v7940
    %v8625 = vpack.c.b16 %v7953, %v7947
    %v8626 = vpack.c.b16 %v7954, %v7948
    %v8627 = vpack.c.b16 %v7955, %v7949
    %v8628 = vpack.c.b16 %v7956, %v7950
    %v8629 = vpack.c.b16 %v7957, %v7951
    %v8630 = vpack.c.b16 %v7958, %v7952
    %9303 = vmatprep.subr.bf16.mxu0 %v8002
    %9304 = vmatpush1.bf16.msra.mxu0 %v8001
    %9305 = vmatprep.subr.bf16.mxu0 %v7996
    %9306 = vmatpush1.bf16.msra.mxu0 %v7995
    %9307 = vmatprep.subr.bf16.mxu0 %v7990
    %9308 = vmatpush1.bf16.msra.mxu0 %v7989
    %9309 = vmatprep.subr.bf16.mxu0 %v7984
    %9310 = vmatpush1.bf16.msra.mxu0 %v7983
    %9311 = vmatprep.subr.bf16.mxu0 %v7978
    %9312 = vmatpush1.bf16.msra.mxu0 %v7977
    %9313 = vmatprep.subr.bf16.mxu0 %v7972
    %9314 = vmatpush1.bf16.msra.mxu0 %v7971
    %9315 = vmatprep.subr.bf16.mxu0 %v7966
    %9316 = vmatpush1.bf16.msra.mxu0 %v7965
    %9317 = vmatprep.subr.bf16.mxu0 %v7960
    %9318 = vmatpush1.bf16.msra.mxu0 %v7959
    %9319 = vmatprep.subr.bf16.mxu0 %v8050
    %9320 = vmatpush2.bf16.msra.mxu0 %v8049
    %9321 = vmatprep.subr.bf16.mxu0 %v8044
    %9322 = vmatpush2.bf16.msra.mxu0 %v8043
    %9323 = vmatprep.subr.bf16.mxu0 %v8038
    %9324 = vmatpush2.bf16.msra.mxu0 %v8037
    %9325 = vmatprep.subr.bf16.mxu0 %v8032
    %9326 = vmatpush2.bf16.msra.mxu0 %v8031
    %9327 = vmatprep.subr.bf16.mxu0 %v8026
    %9328 = vmatpush2.bf16.msra.mxu0 %v8025
    %9329 = vmatprep.subr.bf16.mxu0 %v8020
    %9330 = vmatpush2.bf16.msra.mxu0 %v8019
    %9331 = vmatprep.subr.bf16.mxu0 %v8014
    %9332 = vmatpush2.bf16.msra.mxu0 %v8013
    %9333 = vmatprep.subr.bf16.mxu0 %v8008
    %9334 = vmatpush2.bf16.msra.mxu0 %v8007
    %9335 = vmatprep.mubr.bf16.mxu0 %v1023
    %9336 = vmatmul.mubr.bf16.gmra.mxu0 %v1022
    %v9337 = vpop.f32.mrf.mxu0
    %v9338 = vadd.f32 0.0, %v9337
    %v9339 = vpop.f32.mrf.mxu0
    %v9340 = vadd.f32 0.0, %v9339
    %v9341 = vpop.f32.mrf.mxu0
    %v9342 = vpop.f32.mrf.mxu0
    %9343 = vdwg.mxu0
    %9344 = vmatprep.subr.bf16.mxu0 %v8098
    %9345 = vmatpush1.bf16.msra.mxu0 %v8097
    %9346 = vmatprep.subr.bf16.mxu0 %v8092
    %9347 = vmatpush1.bf16.msra.mxu0 %v8091
    %9348 = vmatprep.subr.bf16.mxu0 %v8086
    %9349 = vmatpush1.bf16.msra.mxu0 %v8085
    %9350 = vmatprep.subr.bf16.mxu0 %v8080
    %9351 = vmatpush1.bf16.msra.mxu0 %v8079
    %9352 = vmatprep.subr.bf16.mxu0 %v8074
    %9353 = vmatpush1.bf16.msra.mxu0 %v8073
    %9354 = vmatprep.subr.bf16.mxu0 %v8068
    %9355 = vmatpush1.bf16.msra.mxu0 %v8067
    %9356 = vmatprep.subr.bf16.mxu0 %v8062
    %9357 = vmatpush1.bf16.msra.mxu0 %v8061
    %9358 = vmatprep.subr.bf16.mxu0 %v8056
    %9359 = vmatpush1.bf16.msra.mxu0 %v8055
    %9360 = vmatprep.subr.bf16.mxu0 %v8146
    %9361 = vmatpush2.bf16.msra.mxu0 %v8145
    %9362 = vmatprep.subr.bf16.mxu0 %v8140
    %9363 = vmatpush2.bf16.msra.mxu0 %v8139
    %9364 = vmatprep.subr.bf16.mxu0 %v8134
    %9365 = vmatpush2.bf16.msra.mxu0 %v8133
    %9366 = vmatprep.subr.bf16.mxu0 %v8128
    %9367 = vmatpush2.bf16.msra.mxu0 %v8127
    %9368 = vmatprep.subr.bf16.mxu0 %v8122
    %9369 = vmatpush2.bf16.msra.mxu0 %v8121
    %9370 = vmatprep.subr.bf16.mxu0 %v8116
    %9371 = vmatpush2.bf16.msra.mxu0 %v8115
    %9372 = vmatprep.subr.bf16.mxu0 %v8110
    %9373 = vmatpush2.bf16.msra.mxu0 %v8109
    %9374 = vmatprep.subr.bf16.mxu0 %v8104
    %9375 = vmatpush2.bf16.msra.mxu0 %v8103
    %9376 = vmatprep.mubr.bf16.mxu0 %v1025
    %9377 = vmatmul.mubr.bf16.gmra.mxu0 %v1024
    %v9378 = vpop.f32.mrf.mxu0
    %v9379 = vadd.f32 %v9338, %v9378
    %v9380 = vpop.f32.mrf.mxu0
    %v9381 = vadd.f32 %v9340, %v9380
    %v9382 = vpop.f32.mrf.mxu0
    %v9383 = vpop.f32.mrf.mxu0
    %9384 = vdwg.mxu0
    %9385 = vmatprep.subr.bf16.mxu0 %v8194
    %9386 = vmatpush1.bf16.msra.mxu0 %v8193
    %9387 = vmatprep.subr.bf16.mxu0 %v8188
    %9388 = vmatpush1.bf16.msra.mxu0 %v8187
    %9389 = vmatprep.subr.bf16.mxu0 %v8182
    %9390 = vmatpush1.bf16.msra.mxu0 %v8181
    %9391 = vmatprep.subr.bf16.mxu0 %v8176
    %9392 = vmatpush1.bf16.msra.mxu0 %v8175
    %9393 = vmatprep.subr.bf16.mxu0 %v8170
    %9394 = vmatpush1.bf16.msra.mxu0 %v8169
    %9395 = vmatprep.subr.bf16.mxu0 %v8164
    %9396 = vmatpush1.bf16.msra.mxu0 %v8163
    %9397 = vmatprep.subr.bf16.mxu0 %v8158
    %9398 = vmatpush1.bf16.msra.mxu0 %v8157
    %9399 = vmatprep.subr.bf16.mxu0 %v8152
    %9400 = vmatpush1.bf16.msra.mxu0 %v8151
    %9401 = vmatprep.subr.bf16.mxu0 %v8242
    %9402 = vmatpush2.bf16.msra.mxu0 %v8241
    %9403 = vmatprep.subr.bf16.mxu0 %v8236
    %9404 = vmatpush2.bf16.msra.mxu0 %v8235
    %9405 = vmatprep.subr.bf16.mxu0 %v8230
    %9406 = vmatpush2.bf16.msra.mxu0 %v8229
    %9407 = vmatprep.subr.bf16.mxu0 %v8224
    %9408 = vmatpush2.bf16.msra.mxu0 %v8223
    %9409 = vmatprep.subr.bf16.mxu0 %v8218
    %9410 = vmatpush2.bf16.msra.mxu0 %v8217
    %9411 = vmatprep.subr.bf16.mxu0 %v8212
    %9412 = vmatpush2.bf16.msra.mxu0 %v8211
    %9413 = vmatprep.subr.bf16.mxu0 %v8206
    %9414 = vmatpush2.bf16.msra.mxu0 %v8205
    %9415 = vmatprep.subr.bf16.mxu0 %v8200
    %9416 = vmatpush2.bf16.msra.mxu0 %v8199
    %9417 = vmatprep.mubr.bf16.mxu0 %v1027
    %9418 = vmatmul.mubr.bf16.gmra.mxu0 %v1026
    %v9419 = vpop.f32.mrf.mxu0
    %v9420 = vadd.f32 %v9379, %v9419
    %v9421 = vpop.f32.mrf.mxu0
    %v9422 = vadd.f32 %v9381, %v9421
    %v9423 = vpop.f32.mrf.mxu0
    %v9424 = vpop.f32.mrf.mxu0
    %9425 = vdwg.mxu0
    %9426 = vmatprep.subr.bf16.mxu0 %v8290
    %9427 = vmatpush1.bf16.msra.mxu0 %v8289
    %9428 = vmatprep.subr.bf16.mxu0 %v8284
    %9429 = vmatpush1.bf16.msra.mxu0 %v8283
    %9430 = vmatprep.subr.bf16.mxu0 %v8278
    %9431 = vmatpush1.bf16.msra.mxu0 %v8277
    %9432 = vmatprep.subr.bf16.mxu0 %v8272
    %9433 = vmatpush1.bf16.msra.mxu0 %v8271
    %9434 = vmatprep.subr.bf16.mxu0 %v8266
    %9435 = vmatpush1.bf16.msra.mxu0 %v8265
    %9436 = vmatprep.subr.bf16.mxu0 %v8260
    %9437 = vmatpush1.bf16.msra.mxu0 %v8259
    %9438 = vmatprep.subr.bf16.mxu0 %v8254
    %9439 = vmatpush1.bf16.msra.mxu0 %v8253
    %9440 = vmatprep.subr.bf16.mxu0 %v8248
    %9441 = vmatpush1.bf16.msra.mxu0 %v8247
    %9442 = vmatprep.subr.bf16.mxu0 %v8338
    %9443 = vmatpush2.bf16.msra.mxu0 %v8337
    %9444 = vmatprep.subr.bf16.mxu0 %v8332
    %9445 = vmatpush2.bf16.msra.mxu0 %v8331
    %9446 = vmatprep.subr.bf16.mxu0 %v8326
    %9447 = vmatpush2.bf16.msra.mxu0 %v8325
    %9448 = vmatprep.subr.bf16.mxu0 %v8320
    %9449 = vmatpush2.bf16.msra.mxu0 %v8319
    %9450 = vmatprep.subr.bf16.mxu0 %v8314
    %9451 = vmatpush2.bf16.msra.mxu0 %v8313
    %9452 = vmatprep.subr.bf16.mxu0 %v8308
    %9453 = vmatpush2.bf16.msra.mxu0 %v8307
    %9454 = vmatprep.subr.bf16.mxu0 %v8302
    %9455 = vmatpush2.bf16.msra.mxu0 %v8301
    %9456 = vmatprep.subr.bf16.mxu0 %v8296
    %9457 = vmatpush2.bf16.msra.mxu0 %v8295
    %9458 = vmatprep.mubr.bf16.mxu0 %v1029
    %9459 = vmatmul.mubr.bf16.gmra.mxu0 %v1028
    %v9460 = vpop.f32.mrf.mxu0
    %v9461 = vadd.f32 %v9420, %v9460
    %v9462 = vpop.f32.mrf.mxu0
    %v9463 = vadd.f32 %v9422, %v9462
    %v9464 = vpop.f32.mrf.mxu0
    %v9465 = vpop.f32.mrf.mxu0
    %9466 = vdwg.mxu0
    %9467 = vmatprep.subr.bf16.mxu0 %v8386
    %9468 = vmatpush1.bf16.msra.mxu0 %v8385
    %9469 = vmatprep.subr.bf16.mxu0 %v8380
    %9470 = vmatpush1.bf16.msra.mxu0 %v8379
    %9471 = vmatprep.subr.bf16.mxu0 %v8374
    %9472 = vmatpush1.bf16.msra.mxu0 %v8373
    %9473 = vmatprep.subr.bf16.mxu0 %v8368
    %9474 = vmatpush1.bf16.msra.mxu0 %v8367
    %9475 = vmatprep.subr.bf16.mxu0 %v8362
    %9476 = vmatpush1.bf16.msra.mxu0 %v8361
    %9477 = vmatprep.subr.bf16.mxu0 %v8356
    %9478 = vmatpush1.bf16.msra.mxu0 %v8355
    %9479 = vmatprep.subr.bf16.mxu0 %v8350
    %9480 = vmatpush1.bf16.msra.mxu0 %v8349
    %9481 = vmatprep.subr.bf16.mxu0 %v8344
    %9482 = vmatpush1.bf16.msra.mxu0 %v8343
    %9483 = vmatprep.subr.bf16.mxu0 %v8434
    %9484 = vmatpush2.bf16.msra.mxu0 %v8433
    %9485 = vmatprep.subr.bf16.mxu0 %v8428
    %9486 = vmatpush2.bf16.msra.mxu0 %v8427
    %9487 = vmatprep.subr.bf16.mxu0 %v8422
    %9488 = vmatpush2.bf16.msra.mxu0 %v8421
    %9489 = vmatprep.subr.bf16.mxu0 %v8416
    %9490 = vmatpush2.bf16.msra.mxu0 %v8415
    %9491 = vmatprep.subr.bf16.mxu0 %v8410
    %9492 = vmatpush2.bf16.msra.mxu0 %v8409
    %9493 = vmatprep.subr.bf16.mxu0 %v8404
    %9494 = vmatpush2.bf16.msra.mxu0 %v8403
    %9495 = vmatprep.subr.bf16.mxu0 %v8398
    %9496 = vmatpush2.bf16.msra.mxu0 %v8397
    %9497 = vmatprep.subr.bf16.mxu0 %v8392
    %9498 = vmatpush2.bf16.msra.mxu0 %v8391
    %9499 = vmatprep.mubr.bf16.mxu0 %v1031
    %9500 = vmatmul.mubr.bf16.gmra.mxu0 %v1030
    %v9501 = vpop.f32.mrf.mxu0
    %v9502 = vadd.f32 %v9461, %v9501
    %v9503 = vpop.f32.mrf.mxu0
    %v9504 = vadd.f32 %v9463, %v9503
    %v9505 = vpop.f32.mrf.mxu0
    %v9506 = vpop.f32.mrf.mxu0
    %9507 = vdwg.mxu0
    %9508 = vmatprep.subr.bf16.mxu0 %v8482
    %9509 = vmatpush1.bf16.msra.mxu0 %v8481
    %9510 = vmatprep.subr.bf16.mxu0 %v8476
    %9511 = vmatpush1.bf16.msra.mxu0 %v8475
    %9512 = vmatprep.subr.bf16.mxu0 %v8470
    %9513 = vmatpush1.bf16.msra.mxu0 %v8469
    %9514 = vmatprep.subr.bf16.mxu0 %v8464
    %9515 = vmatpush1.bf16.msra.mxu0 %v8463
    %9516 = vmatprep.subr.bf16.mxu0 %v8458
    %9517 = vmatpush1.bf16.msra.mxu0 %v8457
    %9518 = vmatprep.subr.bf16.mxu0 %v8452
    %9519 = vmatpush1.bf16.msra.mxu0 %v8451
    %9520 = vmatprep.subr.bf16.mxu0 %v8446
    %9521 = vmatpush1.bf16.msra.mxu0 %v8445
    %9522 = vmatprep.subr.bf16.mxu0 %v8440
    %9523 = vmatpush1.bf16.msra.mxu0 %v8439
    %9524 = vmatprep.subr.bf16.mxu0 %v8530
    %9525 = vmatpush2.bf16.msra.mxu0 %v8529
    %9526 = vmatprep.subr.bf16.mxu0 %v8524
    %9527 = vmatpush2.bf16.msra.mxu0 %v8523
    %9528 = vmatprep.subr.bf16.mxu0 %v8518
    %9529 = vmatpush2.bf16.msra.mxu0 %v8517
    %9530 = vmatprep.subr.bf16.mxu0 %v8512
    %9531 = vmatpush2.bf16.msra.mxu0 %v8511
    %9532 = vmatprep.subr.bf16.mxu0 %v8506
    %9533 = vmatpush2.bf16.msra.mxu0 %v8505
    %9534 = vmatprep.subr.bf16.mxu0 %v8500
    %9535 = vmatpush2.bf16.msra.mxu0 %v8499
    %9536 = vmatprep.subr.bf16.mxu0 %v8494
    %9537 = vmatpush2.bf16.msra.mxu0 %v8493
    %9538 = vmatprep.subr.bf16.mxu0 %v8488
    %9539 = vmatpush2.bf16.msra.mxu0 %v8487
    %9540 = vmatprep.mubr.bf16.mxu0 %v1033
    %9541 = vmatmul.mubr.bf16.gmra.mxu0 %v1032
    %v9542 = vpop.f32.mrf.mxu0
    %v9543 = vadd.f32 %v9502, %v9542
    %v9544 = vpop.f32.mrf.mxu0
    %v9545 = vadd.f32 %v9504, %v9544
    %v9546 = vpop.f32.mrf.mxu0
    %v9547 = vpop.f32.mrf.mxu0
    %9548 = vdwg.mxu0
    %9549 = vmatprep.subr.bf16.mxu0 %v8578
    %9550 = vmatpush1.bf16.msra.mxu0 %v8577
    %9551 = vmatprep.subr.bf16.mxu0 %v8572
    %9552 = vmatpush1.bf16.msra.mxu0 %v8571
    %9553 = vmatprep.subr.bf16.mxu0 %v8566
    %9554 = vmatpush1.bf16.msra.mxu0 %v8565
    %9555 = vmatprep.subr.bf16.mxu0 %v8560
    %9556 = vmatpush1.bf16.msra.mxu0 %v8559
    %9557 = vmatprep.subr.bf16.mxu0 %v8554
    %9558 = vmatpush1.bf16.msra.mxu0 %v8553
    %9559 = vmatprep.subr.bf16.mxu0 %v8548
    %9560 = vmatpush1.bf16.msra.mxu0 %v8547
    %9561 = vmatprep.subr.bf16.mxu0 %v8542
    %9562 = vmatpush1.bf16.msra.mxu0 %v8541
    %9563 = vmatprep.subr.bf16.mxu0 %v8536
    %9564 = vmatpush1.bf16.msra.mxu0 %v8535
    %9565 = vmatprep.subr.bf16.mxu0 %v8626
    %9566 = vmatpush2.bf16.msra.mxu0 %v8625
    %9567 = vmatprep.subr.bf16.mxu0 %v8620
    %9568 = vmatpush2.bf16.msra.mxu0 %v8619
    %9569 = vmatprep.subr.bf16.mxu0 %v8614
    %9570 = vmatpush2.bf16.msra.mxu0 %v8613
    %9571 = vmatprep.subr.bf16.mxu0 %v8608
    %9572 = vmatpush2.bf16.msra.mxu0 %v8607
    %9573 = vmatprep.subr.bf16.mxu0 %v8602
    %9574 = vmatpush2.bf16.msra.mxu0 %v8601
    %9575 = vmatprep.subr.bf16.mxu0 %v8596
    %9576 = vmatpush2.bf16.msra.mxu0 %v8595
    %9577 = vmatprep.subr.bf16.mxu0 %v8590
    %9578 = vmatpush2.bf16.msra.mxu0 %v8589
    %9579 = vmatprep.subr.bf16.mxu0 %v8584
    %9580 = vmatpush2.bf16.msra.mxu0 %v8583
    %9581 = vmatprep.mubr.bf16.mxu0 %v1035
    %9582 = vmatmul.mubr.bf16.gmra.mxu0 %v1034
    %v9583 = vpop.f32.mrf.mxu0
    %v9584 = vadd.f32 %v9543, %v9583
    %v9585 = vpop.f32.mrf.mxu0
    %v9586 = vadd.f32 %v9545, %v9585
    %v9587 = vpop.f32.mrf.mxu0
    %v9588 = vpop.f32.mrf.mxu0
    %9589 = vdwg.mxu0
    %9590 = vmatprep.subr.bf16.mxu0 %v8004
    %9591 = vmatpush1.bf16.msra.mxu0 %v8003
    %9592 = vmatprep.subr.bf16.mxu0 %v7998
    %9593 = vmatpush1.bf16.msra.mxu0 %v7997
    %9594 = vmatprep.subr.bf16.mxu0 %v7992
    %9595 = vmatpush1.bf16.msra.mxu0 %v7991
    %9596 = vmatprep.subr.bf16.mxu0 %v7986
    %9597 = vmatpush1.bf16.msra.mxu0 %v7985
    %9598 = vmatprep.subr.bf16.mxu0 %v7980
    %9599 = vmatpush1.bf16.msra.mxu0 %v7979
    %9600 = vmatprep.subr.bf16.mxu0 %v7974
    %9601 = vmatpush1.bf16.msra.mxu0 %v7973
    %9602 = vmatprep.subr.bf16.mxu0 %v7968
    %9603 = vmatpush1.bf16.msra.mxu0 %v7967
    %9604 = vmatprep.subr.bf16.mxu0 %v7962
    %9605 = vmatpush1.bf16.msra.mxu0 %v7961
    %9606 = vmatprep.subr.bf16.mxu0 %v8052
    %9607 = vmatpush2.bf16.msra.mxu0 %v8051
    %9608 = vmatprep.subr.bf16.mxu0 %v8046
    %9609 = vmatpush2.bf16.msra.mxu0 %v8045
    %9610 = vmatprep.subr.bf16.mxu0 %v8040
    %9611 = vmatpush2.bf16.msra.mxu0 %v8039
    %9612 = vmatprep.subr.bf16.mxu0 %v8034
    %9613 = vmatpush2.bf16.msra.mxu0 %v8033
    %9614 = vmatprep.subr.bf16.mxu0 %v8028
    %9615 = vmatpush2.bf16.msra.mxu0 %v8027
    %9616 = vmatprep.subr.bf16.mxu0 %v8022
    %9617 = vmatpush2.bf16.msra.mxu0 %v8021
    %9618 = vmatprep.subr.bf16.mxu0 %v8016
    %9619 = vmatpush2.bf16.msra.mxu0 %v8015
    %9620 = vmatprep.subr.bf16.mxu0 %v8010
    %9621 = vmatpush2.bf16.msra.mxu0 %v8009
    %9622 = vmatprep.mubr.bf16.mxu0 %v1023
    %9623 = vmatmul.mubr.bf16.gmra.mxu0 %v1022
    %v9624 = vpop.f32.mrf.mxu0
    %v9625 = vadd.f32 0.0, %v9624
    %v9626 = vpop.f32.mrf.mxu0
    %v9627 = vadd.f32 0.0, %v9626
    %v9628 = vpop.f32.mrf.mxu0
    %v9629 = vpop.f32.mrf.mxu0
    %9630 = vdwg.mxu0
    %9631 = vmatprep.subr.bf16.mxu0 %v8100
    %9632 = vmatpush1.bf16.msra.mxu0 %v8099
    %9633 = vmatprep.subr.bf16.mxu0 %v8094
    %9634 = vmatpush1.bf16.msra.mxu0 %v8093
    %9635 = vmatprep.subr.bf16.mxu0 %v8088
    %9636 = vmatpush1.bf16.msra.mxu0 %v8087
    %9637 = vmatprep.subr.bf16.mxu0 %v8082
    %9638 = vmatpush1.bf16.msra.mxu0 %v8081
    %9639 = vmatprep.subr.bf16.mxu0 %v8076
    %9640 = vmatpush1.bf16.msra.mxu0 %v8075
    %9641 = vmatprep.subr.bf16.mxu0 %v8070
    %9642 = vmatpush1.bf16.msra.mxu0 %v8069
    %9643 = vmatprep.subr.bf16.mxu0 %v8064
    %9644 = vmatpush1.bf16.msra.mxu0 %v8063
    %9645 = vmatprep.subr.bf16.mxu0 %v8058
    %9646 = vmatpush1.bf16.msra.mxu0 %v8057
    %9647 = vmatprep.subr.bf16.mxu0 %v8148
    %9648 = vmatpush2.bf16.msra.mxu0 %v8147
    %9649 = vmatprep.subr.bf16.mxu0 %v8142
    %9650 = vmatpush2.bf16.msra.mxu0 %v8141
    %9651 = vmatprep.subr.bf16.mxu0 %v8136
    %9652 = vmatpush2.bf16.msra.mxu0 %v8135
    %9653 = vmatprep.subr.bf16.mxu0 %v8130
    %9654 = vmatpush2.bf16.msra.mxu0 %v8129
    %9655 = vmatprep.subr.bf16.mxu0 %v8124
    %9656 = vmatpush2.bf16.msra.mxu0 %v8123
    %9657 = vmatprep.subr.bf16.mxu0 %v8118
    %9658 = vmatpush2.bf16.msra.mxu0 %v8117
    %9659 = vmatprep.subr.bf16.mxu0 %v8112
    %9660 = vmatpush2.bf16.msra.mxu0 %v8111
    %9661 = vmatprep.subr.bf16.mxu0 %v8106
    %9662 = vmatpush2.bf16.msra.mxu0 %v8105
    %9663 = vmatprep.mubr.bf16.mxu0 %v1025
    %9664 = vmatmul.mubr.bf16.gmra.mxu0 %v1024
    %v9665 = vpop.f32.mrf.mxu0
    %v9666 = vadd.f32 %v9625, %v9665
    %v9667 = vpop.f32.mrf.mxu0
    %v9668 = vadd.f32 %v9627, %v9667
    %v9669 = vpop.f32.mrf.mxu0
    %v9670 = vpop.f32.mrf.mxu0
    %9671 = vdwg.mxu0
    %9672 = vmatprep.subr.bf16.mxu0 %v8196
    %9673 = vmatpush1.bf16.msra.mxu0 %v8195
    %9674 = vmatprep.subr.bf16.mxu0 %v8190
    %9675 = vmatpush1.bf16.msra.mxu0 %v8189
    %9676 = vmatprep.subr.bf16.mxu0 %v8184
    %9677 = vmatpush1.bf16.msra.mxu0 %v8183
    %9678 = vmatprep.subr.bf16.mxu0 %v8178
    %9679 = vmatpush1.bf16.msra.mxu0 %v8177
    %9680 = vmatprep.subr.bf16.mxu0 %v8172
    %9681 = vmatpush1.bf16.msra.mxu0 %v8171
    %9682 = vmatprep.subr.bf16.mxu0 %v8166
    %9683 = vmatpush1.bf16.msra.mxu0 %v8165
    %9684 = vmatprep.subr.bf16.mxu0 %v8160
    %9685 = vmatpush1.bf16.msra.mxu0 %v8159
    %9686 = vmatprep.subr.bf16.mxu0 %v8154
    %9687 = vmatpush1.bf16.msra.mxu0 %v8153
    %9688 = vmatprep.subr.bf16.mxu0 %v8244
    %9689 = vmatpush2.bf16.msra.mxu0 %v8243
    %9690 = vmatprep.subr.bf16.mxu0 %v8238
    %9691 = vmatpush2.bf16.msra.mxu0 %v8237
    %9692 = vmatprep.subr.bf16.mxu0 %v8232
    %9693 = vmatpush2.bf16.msra.mxu0 %v8231
    %9694 = vmatprep.subr.bf16.mxu0 %v8226
    %9695 = vmatpush2.bf16.msra.mxu0 %v8225
    %9696 = vmatprep.subr.bf16.mxu0 %v8220
    %9697 = vmatpush2.bf16.msra.mxu0 %v8219
    %9698 = vmatprep.subr.bf16.mxu0 %v8214
    %9699 = vmatpush2.bf16.msra.mxu0 %v8213
    %9700 = vmatprep.subr.bf16.mxu0 %v8208
    %9701 = vmatpush2.bf16.msra.mxu0 %v8207
    %9702 = vmatprep.subr.bf16.mxu0 %v8202
    %9703 = vmatpush2.bf16.msra.mxu0 %v8201
    %9704 = vmatprep.mubr.bf16.mxu0 %v1027
    %9705 = vmatmul.mubr.bf16.gmra.mxu0 %v1026
    %v9706 = vpop.f32.mrf.mxu0
    %v9707 = vadd.f32 %v9666, %v9706
    %v9708 = vpop.f32.mrf.mxu0
    %v9709 = vadd.f32 %v9668, %v9708
    %v9710 = vpop.f32.mrf.mxu0
    %v9711 = vpop.f32.mrf.mxu0
    %9712 = vdwg.mxu0
    %9713 = vmatprep.subr.bf16.mxu0 %v8292
    %9714 = vmatpush1.bf16.msra.mxu0 %v8291
    %9715 = vmatprep.subr.bf16.mxu0 %v8286
    %9716 = vmatpush1.bf16.msra.mxu0 %v8285
    %9717 = vmatprep.subr.bf16.mxu0 %v8280
    %9718 = vmatpush1.bf16.msra.mxu0 %v8279
    %9719 = vmatprep.subr.bf16.mxu0 %v8274
    %9720 = vmatpush1.bf16.msra.mxu0 %v8273
    %9721 = vmatprep.subr.bf16.mxu0 %v8268
    %9722 = vmatpush1.bf16.msra.mxu0 %v8267
    %9723 = vmatprep.subr.bf16.mxu0 %v8262
    %9724 = vmatpush1.bf16.msra.mxu0 %v8261
    %9725 = vmatprep.subr.bf16.mxu0 %v8256
    %9726 = vmatpush1.bf16.msra.mxu0 %v8255
    %9727 = vmatprep.subr.bf16.mxu0 %v8250
    %9728 = vmatpush1.bf16.msra.mxu0 %v8249
    %9729 = vmatprep.subr.bf16.mxu0 %v8340
    %9730 = vmatpush2.bf16.msra.mxu0 %v8339
    %9731 = vmatprep.subr.bf16.mxu0 %v8334
    %9732 = vmatpush2.bf16.msra.mxu0 %v8333
    %9733 = vmatprep.subr.bf16.mxu0 %v8328
    %9734 = vmatpush2.bf16.msra.mxu0 %v8327
    %9735 = vmatprep.subr.bf16.mxu0 %v8322
    %9736 = vmatpush2.bf16.msra.mxu0 %v8321
    %9737 = vmatprep.subr.bf16.mxu0 %v8316
    %9738 = vmatpush2.bf16.msra.mxu0 %v8315
    %9739 = vmatprep.subr.bf16.mxu0 %v8310
    %9740 = vmatpush2.bf16.msra.mxu0 %v8309
    %9741 = vmatprep.subr.bf16.mxu0 %v8304
    %9742 = vmatpush2.bf16.msra.mxu0 %v8303
    %9743 = vmatprep.subr.bf16.mxu0 %v8298
    %9744 = vmatpush2.bf16.msra.mxu0 %v8297
    %9745 = vmatprep.mubr.bf16.mxu0 %v1029
    %9746 = vmatmul.mubr.bf16.gmra.mxu0 %v1028
    %v9747 = vpop.f32.mrf.mxu0
    %v9748 = vadd.f32 %v9707, %v9747
    %v9749 = vpop.f32.mrf.mxu0
    %v9750 = vadd.f32 %v9709, %v9749
    %v9751 = vpop.f32.mrf.mxu0
    %v9752 = vpop.f32.mrf.mxu0
    %9753 = vdwg.mxu0
    %9754 = vmatprep.subr.bf16.mxu0 %v8388
    %9755 = vmatpush1.bf16.msra.mxu0 %v8387
    %9756 = vmatprep.subr.bf16.mxu0 %v8382
    %9757 = vmatpush1.bf16.msra.mxu0 %v8381
    %9758 = vmatprep.subr.bf16.mxu0 %v8376
    %9759 = vmatpush1.bf16.msra.mxu0 %v8375
    %9760 = vmatprep.subr.bf16.mxu0 %v8370
    %9761 = vmatpush1.bf16.msra.mxu0 %v8369
    %9762 = vmatprep.subr.bf16.mxu0 %v8364
    %9763 = vmatpush1.bf16.msra.mxu0 %v8363
    %9764 = vmatprep.subr.bf16.mxu0 %v8358
    %9765 = vmatpush1.bf16.msra.mxu0 %v8357
    %9766 = vmatprep.subr.bf16.mxu0 %v8352
    %9767 = vmatpush1.bf16.msra.mxu0 %v8351
    %9768 = vmatprep.subr.bf16.mxu0 %v8346
    %9769 = vmatpush1.bf16.msra.mxu0 %v8345
    %9770 = vmatprep.subr.bf16.mxu0 %v8436
    %9771 = vmatpush2.bf16.msra.mxu0 %v8435
    %9772 = vmatprep.subr.bf16.mxu0 %v8430
    %9773 = vmatpush2.bf16.msra.mxu0 %v8429
    %9774 = vmatprep.subr.bf16.mxu0 %v8424
    %9775 = vmatpush2.bf16.msra.mxu0 %v8423
    %9776 = vmatprep.subr.bf16.mxu0 %v8418
    %9777 = vmatpush2.bf16.msra.mxu0 %v8417
    %9778 = vmatprep.subr.bf16.mxu0 %v8412
    %9779 = vmatpush2.bf16.msra.mxu0 %v8411
    %9780 = vmatprep.subr.bf16.mxu0 %v8406
    %9781 = vmatpush2.bf16.msra.mxu0 %v8405
    %9782 = vmatprep.subr.bf16.mxu0 %v8400
    %9783 = vmatpush2.bf16.msra.mxu0 %v8399
    %9784 = vmatprep.subr.bf16.mxu0 %v8394
    %9785 = vmatpush2.bf16.msra.mxu0 %v8393
    %9786 = vmatprep.mubr.bf16.mxu0 %v1031
    %9787 = vmatmul.mubr.bf16.gmra.mxu0 %v1030
    %v9788 = vpop.f32.mrf.mxu0
    %v9789 = vadd.f32 %v9748, %v9788
    %v9790 = vpop.f32.mrf.mxu0
    %v9791 = vadd.f32 %v9750, %v9790
    %v9792 = vpop.f32.mrf.mxu0
    %v9793 = vpop.f32.mrf.mxu0
    %9794 = vdwg.mxu0
    %9795 = vmatprep.subr.bf16.mxu0 %v8484
    %9796 = vmatpush1.bf16.msra.mxu0 %v8483
    %9797 = vmatprep.subr.bf16.mxu0 %v8478
    %9798 = vmatpush1.bf16.msra.mxu0 %v8477
    %9799 = vmatprep.subr.bf16.mxu0 %v8472
    %9800 = vmatpush1.bf16.msra.mxu0 %v8471
    %9801 = vmatprep.subr.bf16.mxu0 %v8466
    %9802 = vmatpush1.bf16.msra.mxu0 %v8465
    %9803 = vmatprep.subr.bf16.mxu0 %v8460
    %9804 = vmatpush1.bf16.msra.mxu0 %v8459
    %9805 = vmatprep.subr.bf16.mxu0 %v8454
    %9806 = vmatpush1.bf16.msra.mxu0 %v8453
    %9807 = vmatprep.subr.bf16.mxu0 %v8448
    %9808 = vmatpush1.bf16.msra.mxu0 %v8447
    %9809 = vmatprep.subr.bf16.mxu0 %v8442
    %9810 = vmatpush1.bf16.msra.mxu0 %v8441
    %9811 = vmatprep.subr.bf16.mxu0 %v8532
    %9812 = vmatpush2.bf16.msra.mxu0 %v8531
    %9813 = vmatprep.subr.bf16.mxu0 %v8526
    %9814 = vmatpush2.bf16.msra.mxu0 %v8525
    %9815 = vmatprep.subr.bf16.mxu0 %v8520
    %9816 = vmatpush2.bf16.msra.mxu0 %v8519
    %9817 = vmatprep.subr.bf16.mxu0 %v8514
    %9818 = vmatpush2.bf16.msra.mxu0 %v8513
    %9819 = vmatprep.subr.bf16.mxu0 %v8508
    %9820 = vmatpush2.bf16.msra.mxu0 %v8507
    %9821 = vmatprep.subr.bf16.mxu0 %v8502
    %9822 = vmatpush2.bf16.msra.mxu0 %v8501
    %9823 = vmatprep.subr.bf16.mxu0 %v8496
    %9824 = vmatpush2.bf16.msra.mxu0 %v8495
    %9825 = vmatprep.subr.bf16.mxu0 %v8490
    %9826 = vmatpush2.bf16.msra.mxu0 %v8489
    %9827 = vmatprep.mubr.bf16.mxu0 %v1033
    %9828 = vmatmul.mubr.bf16.gmra.mxu0 %v1032
    %v9829 = vpop.f32.mrf.mxu0
    %v9830 = vadd.f32 %v9789, %v9829
    %v9831 = vpop.f32.mrf.mxu0
    %v9832 = vadd.f32 %v9791, %v9831
    %v9833 = vpop.f32.mrf.mxu0
    %v9834 = vpop.f32.mrf.mxu0
    %9835 = vdwg.mxu0
    %9836 = vmatprep.subr.bf16.mxu0 %v8580
    %9837 = vmatpush1.bf16.msra.mxu0 %v8579
    %9838 = vmatprep.subr.bf16.mxu0 %v8574
    %9839 = vmatpush1.bf16.msra.mxu0 %v8573
    %9840 = vmatprep.subr.bf16.mxu0 %v8568
    %9841 = vmatpush1.bf16.msra.mxu0 %v8567
    %9842 = vmatprep.subr.bf16.mxu0 %v8562
    %9843 = vmatpush1.bf16.msra.mxu0 %v8561
    %9844 = vmatprep.subr.bf16.mxu0 %v8556
    %9845 = vmatpush1.bf16.msra.mxu0 %v8555
    %9846 = vmatprep.subr.bf16.mxu0 %v8550
    %9847 = vmatpush1.bf16.msra.mxu0 %v8549
    %9848 = vmatprep.subr.bf16.mxu0 %v8544
    %9849 = vmatpush1.bf16.msra.mxu0 %v8543
    %9850 = vmatprep.subr.bf16.mxu0 %v8538
    %9851 = vmatpush1.bf16.msra.mxu0 %v8537
    %9852 = vmatprep.subr.bf16.mxu0 %v8628
    %9853 = vmatpush2.bf16.msra.mxu0 %v8627
    %9854 = vmatprep.subr.bf16.mxu0 %v8622
    %9855 = vmatpush2.bf16.msra.mxu0 %v8621
    %9856 = vmatprep.subr.bf16.mxu0 %v8616
    %9857 = vmatpush2.bf16.msra.mxu0 %v8615
    %9858 = vmatprep.subr.bf16.mxu0 %v8610
    %9859 = vmatpush2.bf16.msra.mxu0 %v8609
    %9860 = vmatprep.subr.bf16.mxu0 %v8604
    %9861 = vmatpush2.bf16.msra.mxu0 %v8603
    %9862 = vmatprep.subr.bf16.mxu0 %v8598
    %9863 = vmatpush2.bf16.msra.mxu0 %v8597
    %9864 = vmatprep.subr.bf16.mxu0 %v8592
    %9865 = vmatpush2.bf16.msra.mxu0 %v8591
    %9866 = vmatprep.subr.bf16.mxu0 %v8586
    %9867 = vmatpush2.bf16.msra.mxu0 %v8585
    %9868 = vmatprep.mubr.bf16.mxu0 %v1035
    %9869 = vmatmul.mubr.bf16.gmra.mxu0 %v1034
    %v9870 = vpop.f32.mrf.mxu0
    %v9871 = vadd.f32 %v9830, %v9870
    %v9872 = vpop.f32.mrf.mxu0
    %v9873 = vadd.f32 %v9832, %v9872
    %v9874 = vpop.f32.mrf.mxu0
    %v9875 = vpop.f32.mrf.mxu0
    %9876 = vdwg.mxu0
    %9877 = vmatprep.subr.bf16.mxu0 %v8006
    %9878 = vmatpush1.bf16.msra.mxu0 %v8005
    %9879 = vmatprep.subr.bf16.mxu0 %v8000
    %9880 = vmatpush1.bf16.msra.mxu0 %v7999
    %9881 = vmatprep.subr.bf16.mxu0 %v7994
    %9882 = vmatpush1.bf16.msra.mxu0 %v7993
    %9883 = vmatprep.subr.bf16.mxu0 %v7988
    %9884 = vmatpush1.bf16.msra.mxu0 %v7987
    %9885 = vmatprep.subr.bf16.mxu0 %v7982
    %9886 = vmatpush1.bf16.msra.mxu0 %v7981
    %9887 = vmatprep.subr.bf16.mxu0 %v7976
    %9888 = vmatpush1.bf16.msra.mxu0 %v7975
    %9889 = vmatprep.subr.bf16.mxu0 %v7970
    %9890 = vmatpush1.bf16.msra.mxu0 %v7969
    %9891 = vmatprep.subr.bf16.mxu0 %v7964
    %9892 = vmatpush1.bf16.msra.mxu0 %v7963
    %9893 = vmatprep.subr.bf16.mxu0 %v8054
    %9894 = vmatpush2.bf16.msra.mxu0 %v8053
    %9895 = vmatprep.subr.bf16.mxu0 %v8048
    %9896 = vmatpush2.bf16.msra.mxu0 %v8047
    %9897 = vmatprep.subr.bf16.mxu0 %v8042
    %9898 = vmatpush2.bf16.msra.mxu0 %v8041
    %9899 = vmatprep.subr.bf16.mxu0 %v8036
    %9900 = vmatpush2.bf16.msra.mxu0 %v8035
    %9901 = vmatprep.subr.bf16.mxu0 %v8030
    %9902 = vmatpush2.bf16.msra.mxu0 %v8029
    %9903 = vmatprep.subr.bf16.mxu0 %v8024
    %9904 = vmatpush2.bf16.msra.mxu0 %v8023
    %9905 = vmatprep.subr.bf16.mxu0 %v8018
    %9906 = vmatpush2.bf16.msra.mxu0 %v8017
    %9907 = vmatprep.subr.bf16.mxu0 %v8012
    %9908 = vmatpush2.bf16.msra.mxu0 %v8011
    %9909 = vmatprep.mubr.bf16.mxu0 %v1023
    %9910 = vmatmul.mubr.bf16.gmra.mxu0 %v1022
    %v9911 = vpop.f32.mrf.mxu0
    %v9912 = vadd.f32 0.0, %v9911
    %v9913 = vpop.f32.mrf.mxu0
    %v9914 = vadd.f32 0.0, %v9913
    %v9915 = vpop.f32.mrf.mxu0
    %v9916 = vpop.f32.mrf.mxu0
    %9917 = vdwg.mxu0
    %9918 = vmatprep.subr.bf16.mxu0 %v8102
    %9919 = vmatpush1.bf16.msra.mxu0 %v8101
    %9920 = vmatprep.subr.bf16.mxu0 %v8096
    %9921 = vmatpush1.bf16.msra.mxu0 %v8095
    %9922 = vmatprep.subr.bf16.mxu0 %v8090
    %9923 = vmatpush1.bf16.msra.mxu0 %v8089
    %9924 = vmatprep.subr.bf16.mxu0 %v8084
    %9925 = vmatpush1.bf16.msra.mxu0 %v8083
    %9926 = vmatprep.subr.bf16.mxu0 %v8078
    %9927 = vmatpush1.bf16.msra.mxu0 %v8077
    %9928 = vmatprep.subr.bf16.mxu0 %v8072
    %9929 = vmatpush1.bf16.msra.mxu0 %v8071
    %9930 = vmatprep.subr.bf16.mxu0 %v8066
    %9931 = vmatpush1.bf16.msra.mxu0 %v8065
    %9932 = vmatprep.subr.bf16.mxu0 %v8060
    %9933 = vmatpush1.bf16.msra.mxu0 %v8059
    %9934 = vmatprep.subr.bf16.mxu0 %v8150
    %9935 = vmatpush2.bf16.msra.mxu0 %v8149
    %9936 = vmatprep.subr.bf16.mxu0 %v8144
    %9937 = vmatpush2.bf16.msra.mxu0 %v8143
    %9938 = vmatprep.subr.bf16.mxu0 %v8138
    %9939 = vmatpush2.bf16.msra.mxu0 %v8137
    %9940 = vmatprep.subr.bf16.mxu0 %v8132
    %9941 = vmatpush2.bf16.msra.mxu0 %v8131
    %9942 = vmatprep.subr.bf16.mxu0 %v8126
    %9943 = vmatpush2.bf16.msra.mxu0 %v8125
    %9944 = vmatprep.subr.bf16.mxu0 %v8120
    %9945 = vmatpush2.bf16.msra.mxu0 %v8119
    %9946 = vmatprep.subr.bf16.mxu0 %v8114
    %9947 = vmatpush2.bf16.msra.mxu0 %v8113
    %9948 = vmatprep.subr.bf16.mxu0 %v8108
    %9949 = vmatpush2.bf16.msra.mxu0 %v8107
    %9950 = vmatprep.mubr.bf16.mxu0 %v1025
    %9951 = vmatmul.mubr.bf16.gmra.mxu0 %v1024
    %v9952 = vpop.f32.mrf.mxu0
    %v9953 = vadd.f32 %v9912, %v9952
    %v9954 = vpop.f32.mrf.mxu0
    %v9955 = vadd.f32 %v9914, %v9954
    %v9956 = vpop.f32.mrf.mxu0
    %v9957 = vpop.f32.mrf.mxu0
    %9958 = vdwg.mxu0
    %9959 = vmatprep.subr.bf16.mxu0 %v8198
    %9960 = vmatpush1.bf16.msra.mxu0 %v8197
    %9961 = vmatprep.subr.bf16.mxu0 %v8192
    %9962 = vmatpush1.bf16.msra.mxu0 %v8191
    %9963 = vmatprep.subr.bf16.mxu0 %v8186
    %9964 = vmatpush1.bf16.msra.mxu0 %v8185
    %9965 = vmatprep.subr.bf16.mxu0 %v8180
    %9966 = vmatpush1.bf16.msra.mxu0 %v8179
    %9967 = vmatprep.subr.bf16.mxu0 %v8174
    %9968 = vmatpush1.bf16.msra.mxu0 %v8173
    %9969 = vmatprep.subr.bf16.mxu0 %v8168
    %9970 = vmatpush1.bf16.msra.mxu0 %v8167
    %9971 = vmatprep.subr.bf16.mxu0 %v8162
    %9972 = vmatpush1.bf16.msra.mxu0 %v8161
    %9973 = vmatprep.subr.bf16.mxu0 %v8156
    %9974 = vmatpush1.bf16.msra.mxu0 %v8155
    %9975 = vmatprep.subr.bf16.mxu0 %v8246
    %9976 = vmatpush2.bf16.msra.mxu0 %v8245
    %9977 = vmatprep.subr.bf16.mxu0 %v8240
    %9978 = vmatpush2.bf16.msra.mxu0 %v8239
    %9979 = vmatprep.subr.bf16.mxu0 %v8234
    %9980 = vmatpush2.bf16.msra.mxu0 %v8233
    %9981 = vmatprep.subr.bf16.mxu0 %v8228
    %9982 = vmatpush2.bf16.msra.mxu0 %v8227
    %9983 = vmatprep.subr.bf16.mxu0 %v8222
    %9984 = vmatpush2.bf16.msra.mxu0 %v8221
    %9985 = vmatprep.subr.bf16.mxu0 %v8216
    %9986 = vmatpush2.bf16.msra.mxu0 %v8215
    %9987 = vmatprep.subr.bf16.mxu0 %v8210
    %9988 = vmatpush2.bf16.msra.mxu0 %v8209
    %9989 = vmatprep.subr.bf16.mxu0 %v8204
    %9990 = vmatpush2.bf16.msra.mxu0 %v8203
    %9991 = vmatprep.mubr.bf16.mxu0 %v1027
    %9992 = vmatmul.mubr.bf16.gmra.mxu0 %v1026
    %v9993 = vpop.f32.mrf.mxu0
    %v9994 = vadd.f32 %v9953, %v9993
    %v9995 = vpop.f32.mrf.mxu0
    %v9996 = vadd.f32 %v9955, %v9995
    %v9997 = vpop.f32.mrf.mxu0
    %v9998 = vpop.f32.mrf.mxu0
    %9999 = vdwg.mxu0
    %10000 = vmatprep.subr.bf16.mxu0 %v8294
    %10001 = vmatpush1.bf16.msra.mxu0 %v8293
    %10002 = vmatprep.subr.bf16.mxu0 %v8288
    %10003 = vmatpush1.bf16.msra.mxu0 %v8287
    %10004 = vmatprep.subr.bf16.mxu0 %v8282
    %10005 = vmatpush1.bf16.msra.mxu0 %v8281
    %10006 = vmatprep.subr.bf16.mxu0 %v8276
    %10007 = vmatpush1.bf16.msra.mxu0 %v8275
    %10008 = vmatprep.subr.bf16.mxu0 %v8270
    %10009 = vmatpush1.bf16.msra.mxu0 %v8269
    %10010 = vmatprep.subr.bf16.mxu0 %v8264
    %10011 = vmatpush1.bf16.msra.mxu0 %v8263
    %10012 = vmatprep.subr.bf16.mxu0 %v8258
    %10013 = vmatpush1.bf16.msra.mxu0 %v8257
    %10014 = vmatprep.subr.bf16.mxu0 %v8252
    %10015 = vmatpush1.bf16.msra.mxu0 %v8251
    %10016 = vmatprep.subr.bf16.mxu0 %v8342
    %10017 = vmatpush2.bf16.msra.mxu0 %v8341
    %10018 = vmatprep.subr.bf16.mxu0 %v8336
    %10019 = vmatpush2.bf16.msra.mxu0 %v8335
    %10020 = vmatprep.subr.bf16.mxu0 %v8330
    %10021 = vmatpush2.bf16.msra.mxu0 %v8329
    %10022 = vmatprep.subr.bf16.mxu0 %v8324
    %10023 = vmatpush2.bf16.msra.mxu0 %v8323
    %10024 = vmatprep.subr.bf16.mxu0 %v8318
    %10025 = vmatpush2.bf16.msra.mxu0 %v8317
    %10026 = vmatprep.subr.bf16.mxu0 %v8312
    %10027 = vmatpush2.bf16.msra.mxu0 %v8311
    %10028 = vmatprep.subr.bf16.mxu0 %v8306
    %10029 = vmatpush2.bf16.msra.mxu0 %v8305
    %10030 = vmatprep.subr.bf16.mxu0 %v8300
    %10031 = vmatpush2.bf16.msra.mxu0 %v8299
    %10032 = vmatprep.mubr.bf16.mxu0 %v1029
    %10033 = vmatmul.mubr.bf16.gmra.mxu0 %v1028
    %v10034 = vpop.f32.mrf.mxu0
    %v10035 = vadd.f32 %v9994, %v10034
    %v10036 = vpop.f32.mrf.mxu0
    %v10037 = vadd.f32 %v9996, %v10036
    %v10038 = vpop.f32.mrf.mxu0
    %v10039 = vpop.f32.mrf.mxu0
    %10040 = vdwg.mxu0
    %10041 = vmatprep.subr.bf16.mxu0 %v8390
    %10042 = vmatpush1.bf16.msra.mxu0 %v8389
    %10043 = vmatprep.subr.bf16.mxu0 %v8384
    %10044 = vmatpush1.bf16.msra.mxu0 %v8383
    %10045 = vmatprep.subr.bf16.mxu0 %v8378
    %10046 = vmatpush1.bf16.msra.mxu0 %v8377
    %10047 = vmatprep.subr.bf16.mxu0 %v8372
    %10048 = vmatpush1.bf16.msra.mxu0 %v8371
    %10049 = vmatprep.subr.bf16.mxu0 %v8366
    %10050 = vmatpush1.bf16.msra.mxu0 %v8365
    %10051 = vmatprep.subr.bf16.mxu0 %v8360
    %10052 = vmatpush1.bf16.msra.mxu0 %v8359
    %10053 = vmatprep.subr.bf16.mxu0 %v8354
    %10054 = vmatpush1.bf16.msra.mxu0 %v8353
    %10055 = vmatprep.subr.bf16.mxu0 %v8348
    %10056 = vmatpush1.bf16.msra.mxu0 %v8347
    %10057 = vmatprep.subr.bf16.mxu0 %v8438
    %10058 = vmatpush2.bf16.msra.mxu0 %v8437
    %10059 = vmatprep.subr.bf16.mxu0 %v8432
    %10060 = vmatpush2.bf16.msra.mxu0 %v8431
    %10061 = vmatprep.subr.bf16.mxu0 %v8426
    %10062 = vmatpush2.bf16.msra.mxu0 %v8425
    %10063 = vmatprep.subr.bf16.mxu0 %v8420
    %10064 = vmatpush2.bf16.msra.mxu0 %v8419
    %10065 = vmatprep.subr.bf16.mxu0 %v8414
    %10066 = vmatpush2.bf16.msra.mxu0 %v8413
    %10067 = vmatprep.subr.bf16.mxu0 %v8408
    %10068 = vmatpush2.bf16.msra.mxu0 %v8407
    %10069 = vmatprep.subr.bf16.mxu0 %v8402
    %10070 = vmatpush2.bf16.msra.mxu0 %v8401
    %10071 = vmatprep.subr.bf16.mxu0 %v8396
    %10072 = vmatpush2.bf16.msra.mxu0 %v8395
    %10073 = vmatprep.mubr.bf16.mxu0 %v1031
    %10074 = vmatmul.mubr.bf16.gmra.mxu0 %v1030
    %v10075 = vpop.f32.mrf.mxu0
    %v10076 = vadd.f32 %v10035, %v10075
    %v10077 = vpop.f32.mrf.mxu0
    %v10078 = vadd.f32 %v10037, %v10077
    %v10079 = vpop.f32.mrf.mxu0
    %v10080 = vpop.f32.mrf.mxu0
    %10081 = vdwg.mxu0
    %10082 = vmatprep.subr.bf16.mxu0 %v8486
    %10083 = vmatpush1.bf16.msra.mxu0 %v8485
    %10084 = vmatprep.subr.bf16.mxu0 %v8480
    %10085 = vmatpush1.bf16.msra.mxu0 %v8479
    %10086 = vmatprep.subr.bf16.mxu0 %v8474
    %10087 = vmatpush1.bf16.msra.mxu0 %v8473
    %10088 = vmatprep.subr.bf16.mxu0 %v8468
    %10089 = vmatpush1.bf16.msra.mxu0 %v8467
    %10090 = vmatprep.subr.bf16.mxu0 %v8462
    %10091 = vmatpush1.bf16.msra.mxu0 %v8461
    %10092 = vmatprep.subr.bf16.mxu0 %v8456
    %10093 = vmatpush1.bf16.msra.mxu0 %v8455
    %10094 = vmatprep.subr.bf16.mxu0 %v8450
    %10095 = vmatpush1.bf16.msra.mxu0 %v8449
    %10096 = vmatprep.subr.bf16.mxu0 %v8444
    %10097 = vmatpush1.bf16.msra.mxu0 %v8443
    %10098 = vmatprep.subr.bf16.mxu0 %v8534
    %10099 = vmatpush2.bf16.msra.mxu0 %v8533
    %10100 = vmatprep.subr.bf16.mxu0 %v8528
    %10101 = vmatpush2.bf16.msra.mxu0 %v8527
    %10102 = vmatprep.subr.bf16.mxu0 %v8522
    %10103 = vmatpush2.bf16.msra.mxu0 %v8521
    %10104 = vmatprep.subr.bf16.mxu0 %v8516
    %10105 = vmatpush2.bf16.msra.mxu0 %v8515
    %10106 = vmatprep.subr.bf16.mxu0 %v8510
    %10107 = vmatpush2.bf16.msra.mxu0 %v8509
    %10108 = vmatprep.subr.bf16.mxu0 %v8504
    %10109 = vmatpush2.bf16.msra.mxu0 %v8503
    %10110 = vmatprep.subr.bf16.mxu0 %v8498
    %10111 = vmatpush2.bf16.msra.mxu0 %v8497
    %10112 = vmatprep.subr.bf16.mxu0 %v8492
    %10113 = vmatpush2.bf16.msra.mxu0 %v8491
    %10114 = vmatprep.mubr.bf16.mxu0 %v1033
    %10115 = vmatmul.mubr.bf16.gmra.mxu0 %v1032
    %v10116 = vpop.f32.mrf.mxu0
    %v10117 = vadd.f32 %v10076, %v10116
    %v10118 = vpop.f32.mrf.mxu0
    %v10119 = vadd.f32 %v10078, %v10118
    %v10120 = vpop.f32.mrf.mxu0
    %v10121 = vpop.f32.mrf.mxu0
    %10122 = vdwg.mxu0
    %10123 = vmatprep.subr.bf16.mxu0 %v8582
    %10124 = vmatpush1.bf16.msra.mxu0 %v8581
    %10125 = vmatprep.subr.bf16.mxu0 %v8576
    %10126 = vmatpush1.bf16.msra.mxu0 %v8575
    %10127 = vmatprep.subr.bf16.mxu0 %v8570
    %10128 = vmatpush1.bf16.msra.mxu0 %v8569
    %10129 = vmatprep.subr.bf16.mxu0 %v8564
    %10130 = vmatpush1.bf16.msra.mxu0 %v8563
    %10131 = vmatprep.subr.bf16.mxu0 %v8558
    %10132 = vmatpush1.bf16.msra.mxu0 %v8557
    %10133 = vmatprep.subr.bf16.mxu0 %v8552
    %10134 = vmatpush1.bf16.msra.mxu0 %v8551
    %10135 = vmatprep.subr.bf16.mxu0 %v8546
    %10136 = vmatpush1.bf16.msra.mxu0 %v8545
    %10137 = vmatprep.subr.bf16.mxu0 %v8540
    %10138 = vmatpush1.bf16.msra.mxu0 %v8539
    %10139 = vmatprep.subr.bf16.mxu0 %v8630
    %10140 = vmatpush2.bf16.msra.mxu0 %v8629
    %10141 = vmatprep.subr.bf16.mxu0 %v8624
    %10142 = vmatpush2.bf16.msra.mxu0 %v8623
    %10143 = vmatprep.subr.bf16.mxu0 %v8618
    %10144 = vmatpush2.bf16.msra.mxu0 %v8617
    %10145 = vmatprep.subr.bf16.mxu0 %v8612
    %10146 = vmatpush2.bf16.msra.mxu0 %v8611
    %10147 = vmatprep.subr.bf16.mxu0 %v8606
    %10148 = vmatpush2.bf16.msra.mxu0 %v8605
    %10149 = vmatprep.subr.bf16.mxu0 %v8600
    %10150 = vmatpush2.bf16.msra.mxu0 %v8599
    %10151 = vmatprep.subr.bf16.mxu0 %v8594
    %10152 = vmatpush2.bf16.msra.mxu0 %v8593
    %10153 = vmatprep.subr.bf16.mxu0 %v8588
    %10154 = vmatpush2.bf16.msra.mxu0 %v8587
    %10155 = vmatprep.mubr.bf16.mxu0 %v1035
    %10156 = vmatmul.mubr.bf16.gmra.mxu0 %v1034
    %v10157 = vpop.f32.mrf.mxu0
    %v10158 = vadd.f32 %v10117, %v10157
    %v10159 = vpop.f32.mrf.mxu0
    %v10160 = vadd.f32 %v10119, %v10159
    %v10161 = vpop.f32.mrf.mxu0
    %v10162 = vpop.f32.mrf.mxu0
    %10163 = vdwg.mxu0
    %v10164 = vmax.f32 %v4691, %v9584
    %v10165 = vmax.f32 %v4693, %v9586
    %v10166 = vmax.f32 %v4978, %v9871
    %v10167 = vmax.f32 %v4980, %v9873
    %v10168 = vmax.f32 %v5265, %v10158
    %v10169 = vmax.f32 %v5267, %v10160
    %v10170 = vld [vmem:[#allocation11] sm:$0x3f]
    %v10172 = vlaneseq
    %v10173 = vshrl.u32 %v10172, 7
    %v10174 = vsub.s32 0, %v10173
    %v10175 = vrot.slane %v10170, %v10174
    %v10176 = vlaneseq
    %v10177 = vshrl.u32 %v10176, 7
    %v10178 = vsub.s32 1, %v10177
    %v10179 = vrot.slane %v10170, %v10178
    %v10180 = vlaneseq
    %v10181 = vshrl.u32 %v10180, 7
    %v10182 = vsub.s32 2, %v10181
    %v10183 = vrot.slane %v10170, %v10182
    %v10184 = vlaneseq
    %v10185 = vshrl.u32 %v10184, 7
    %v10186 = vsub.s32 3, %v10185
    %v10187 = vrot.slane %v10170, %v10186
    %v10188 = vlaneseq
    %v10189 = vshrl.u32 %v10188, 7
    %v10190 = vsub.s32 4, %v10189
    %v10191 = vrot.slane %v10170, %v10190
    %v10192 = vlaneseq
    %v10193 = vshrl.u32 %v10192, 7
    %v10194 = vsub.s32 5, %v10193
    %v10195 = vrot.slane %v10170, %v10194
    %v10202 = vadd.f32 %v10164, %v10175
    %v10203 = vadd.f32 %v10165, %v10179
    %v10204 = vadd.f32 %v10166, %v10183
    %v10205 = vadd.f32 %v10167, %v10187
    %v10206 = vadd.f32 %v10168, %v10191
    %v10207 = vadd.f32 %v10169, %v10195
    %v10208 = vpack.c.bf16 %v10202, %v10202
    %v10209 = vpack.c.bf16 %v10203, %v10203
    %v10210 = vpack.c.bf16 %v10204, %v10204
    %v10211 = vpack.c.bf16 %v10205, %v10205
    %v10212 = vpack.c.bf16 %v10206, %v10206
    %v10213 = vpack.c.bf16 %v10207, %v10207
    %v10214 = vld [vmem:[#allocation13] sm:$0xff]
    %v10215 = vld [vmem:[#allocation13 + $0x8] sm:$0xff]
    %v10216 = vld [vmem:[#allocation13 + $0x10] sm:$0xff]
    %v10217 = vld [vmem:[#allocation13 + $0x18] sm:$0xff]
    %v10218 = vld [vmem:[#allocation13 + $0x20] sm:$0xff]
    %v10219 = vld [vmem:[#allocation13 + $0x28] sm:$0xff]
    %v10220 = vld [vmem:[#allocation13 + $0x30] sm:$0xff]
    %v10221 = vld [vmem:[#allocation13 + $0x38] sm:$0xff]
    %v10222 = vld [vmem:[#allocation13 + $0x40] sm:$0xff]
    %v10223 = vld [vmem:[#allocation13 + $0x48] sm:$0xff]
    %v10224 = vld [vmem:[#allocation13 + $0x50] sm:$0xff]
    %v10225 = vld [vmem:[#allocation13 + $0x58] sm:$0xff]
    %v10226 = vld [vmem:[#allocation13 + $0x60] sm:$0xff]
    %v10227 = vld [vmem:[#allocation13 + $0x68] sm:$0xff]
    %v10228 = vld [vmem:[#allocation13 + $0x70] sm:$0xff]
    %v10229 = vld [vmem:[#allocation13 + $0x78] sm:$0xff]
    %v10230 = vld [vmem:[#allocation13 + $0x80] sm:$0xff]
    %v10231 = vld [vmem:[#allocation13 + $0x88] sm:$0xff]
    %v10232 = vld [vmem:[#allocation13 + $0x90] sm:$0xff]
    %v10233 = vld [vmem:[#allocation13 + $0x98] sm:$0xff]
    %v10234 = vld [vmem:[#allocation13 + $0xa0] sm:$0xff]
    %v10235 = vld [vmem:[#allocation13 + $0xa8] sm:$0xff]
    %v10236 = vld [vmem:[#allocation13 + $0xb0] sm:$0xff]
    %v10237 = vld [vmem:[#allocation13 + $0xb8] sm:$0xff]
    %v10238 = vld [vmem:[#allocation13 + $0xc0] sm:$0xff]
    %v10239 = vld [vmem:[#allocation13 + $0xc8] sm:$0xff]
    %v10240 = vld [vmem:[#allocation13 + $0xd0] sm:$0xff]
    %v10241 = vld [vmem:[#allocation13 + $0xd8] sm:$0xff]
    %v10242 = vld [vmem:[#allocation13 + $0xe0] sm:$0xff]
    %v10243 = vld [vmem:[#allocation13 + $0xe8] sm:$0xff]
    %v10244 = vld [vmem:[#allocation13 + $0xf0] sm:$0xff]
    %v10245 = vld [vmem:[#allocation13 + $0xf8] sm:$0xff]
    %v10246 = vld [vmem:[#allocation13 + $0x100] sm:$0xff]
    %v10247 = vld [vmem:[#allocation13 + $0x108] sm:$0xff]
    %v10248 = vld [vmem:[#allocation13 + $0x110] sm:$0xff]
    %v10249 = vld [vmem:[#allocation13 + $0x118] sm:$0xff]
    %v10250 = vld [vmem:[#allocation13 + $0x120] sm:$0xff]
    %v10251 = vld [vmem:[#allocation13 + $0x128] sm:$0xff]
    %v10252 = vld [vmem:[#allocation13 + $0x130] sm:$0xff]
    %v10253 = vld [vmem:[#allocation13 + $0x138] sm:$0xff]
    %v10254 = vld [vmem:[#allocation13 + $0x140] sm:$0xff]
    %v10255 = vld [vmem:[#allocation13 + $0x148] sm:$0xff]
    %v10256 = vld [vmem:[#allocation13 + $0x150] sm:$0xff]
    %v10257 = vld [vmem:[#allocation13 + $0x158] sm:$0xff]
    %v10258 = vld [vmem:[#allocation13 + $0x160] sm:$0xff]
    %v10259 = vld [vmem:[#allocation13 + $0x168] sm:$0xff]
    %v10260 = vld [vmem:[#allocation13 + $0x170] sm:$0xff]
    %v10261 = vld [vmem:[#allocation13 + $0x178] sm:$0xff]
    %v10262 = vld [vmem:[#allocation13 + $0x180] sm:$0xff]
    %v10263 = vld [vmem:[#allocation13 + $0x188] sm:$0xff]
    %v10264 = vld [vmem:[#allocation13 + $0x190] sm:$0xff]
    %v10265 = vld [vmem:[#allocation13 + $0x198] sm:$0xff]
    %v10266 = vld [vmem:[#allocation13 + $0x1a0] sm:$0xff]
    %v10267 = vld [vmem:[#allocation13 + $0x1a8] sm:$0xff]
    %v10268 = vld [vmem:[#allocation13 + $0x1b0] sm:$0xff]
    %v10269 = vld [vmem:[#allocation13 + $0x1b8] sm:$0xff]
    %v10270 = vld [vmem:[#allocation13 + $0x1c0] sm:$0xff]
    %v10271 = vld [vmem:[#allocation13 + $0x1c8] sm:$0xff]
    %v10272 = vld [vmem:[#allocation13 + $0x1d0] sm:$0xff]
    %v10273 = vld [vmem:[#allocation13 + $0x1d8] sm:$0xff]
    %v10274 = vld [vmem:[#allocation13 + $0x1e0] sm:$0xff]
    %v10275 = vld [vmem:[#allocation13 + $0x1e8] sm:$0xff]
    %v10276 = vld [vmem:[#allocation13 + $0x1f0] sm:$0xff]
    %v10277 = vld [vmem:[#allocation13 + $0x1f8] sm:$0xff]
    %v10278 = vld [vmem:[#allocation13 + $0x200] sm:$0xff]
    %v10279 = vld [vmem:[#allocation13 + $0x208] sm:$0xff]
    %v10280 = vld [vmem:[#allocation13 + $0x210] sm:$0xff]
    %v10281 = vld [vmem:[#allocation13 + $0x218] sm:$0xff]
    %v10282 = vld [vmem:[#allocation13 + $0x220] sm:$0xff]
    %v10283 = vld [vmem:[#allocation13 + $0x228] sm:$0xff]
    %v10284 = vld [vmem:[#allocation13 + $0x230] sm:$0xff]
    %v10285 = vld [vmem:[#allocation13 + $0x238] sm:$0xff]
    %v10286 = vld [vmem:[#allocation13 + $0x240] sm:$0xff]
    %v10287 = vld [vmem:[#allocation13 + $0x248] sm:$0xff]
    %v10288 = vld [vmem:[#allocation13 + $0x250] sm:$0xff]
    %v10289 = vld [vmem:[#allocation13 + $0x258] sm:$0xff]
    %v10290 = vld [vmem:[#allocation13 + $0x260] sm:$0xff]
    %v10291 = vld [vmem:[#allocation13 + $0x268] sm:$0xff]
    %v10292 = vld [vmem:[#allocation13 + $0x270] sm:$0xff]
    %v10293 = vld [vmem:[#allocation13 + $0x278] sm:$0xff]
    %v10294 = vld [vmem:[#allocation13 + $0x280] sm:$0xff]
    %v10295 = vld [vmem:[#allocation13 + $0x288] sm:$0xff]
    %v10296 = vld [vmem:[#allocation13 + $0x290] sm:$0xff]
    %v10297 = vld [vmem:[#allocation13 + $0x298] sm:$0xff]
    %v10298 = vld [vmem:[#allocation13 + $0x2a0] sm:$0xff]
    %v10299 = vld [vmem:[#allocation13 + $0x2a8] sm:$0xff]
    %v10300 = vld [vmem:[#allocation13 + $0x2b0] sm:$0xff]
    %v10301 = vld [vmem:[#allocation13 + $0x2b8] sm:$0xff]
    %v10302 = vld [vmem:[#allocation13 + $0x2c0] sm:$0xff]
    %v10303 = vld [vmem:[#allocation13 + $0x2c8] sm:$0xff]
    %v10304 = vld [vmem:[#allocation13 + $0x2d0] sm:$0xff]
    %v10305 = vld [vmem:[#allocation13 + $0x2d8] sm:$0xff]
    %v10306 = vld [vmem:[#allocation13 + $0x2e0] sm:$0xff]
    %v10307 = vld [vmem:[#allocation13 + $0x2e8] sm:$0xff]
    %v10308 = vld [vmem:[#allocation13 + $0x2f0] sm:$0xff]
    %v10309 = vld [vmem:[#allocation13 + $0x2f8] sm:$0xff]
    %v10406 = vunpack.c.l.b16 %v10214
    %v10407 = vunpack.c.h.b16 %v10214
    %v10408 = vunpack.c.l.b16 %v10215
    %v10409 = vunpack.c.h.b16 %v10215
    %v10410 = vunpack.c.l.b16 %v10216
    %v10411 = vunpack.c.h.b16 %v10216
    %v10412 = vunpack.c.l.b16 %v10217
    %v10413 = vunpack.c.h.b16 %v10217
    %v10414 = vunpack.c.l.b16 %v10218
    %v10415 = vunpack.c.h.b16 %v10218
    %v10416 = vunpack.c.l.b16 %v10219
    %v10417 = vunpack.c.h.b16 %v10219
    %v10418 = vunpack.c.l.b16 %v10220
    %v10419 = vunpack.c.h.b16 %v10220
    %v10420 = vunpack.c.l.b16 %v10221
    %v10421 = vunpack.c.h.b16 %v10221
    %v10422 = vunpack.c.l.b16 %v10222
    %v10423 = vunpack.c.h.b16 %v10222
    %v10424 = vunpack.c.l.b16 %v10223
    %v10425 = vunpack.c.h.b16 %v10223
    %v10426 = vunpack.c.l.b16 %v10224
    %v10427 = vunpack.c.h.b16 %v10224
    %v10428 = vunpack.c.l.b16 %v10225
    %v10429 = vunpack.c.h.b16 %v10225
    %v10430 = vunpack.c.l.b16 %v10226
    %v10431 = vunpack.c.h.b16 %v10226
    %v10432 = vunpack.c.l.b16 %v10227
    %v10433 = vunpack.c.h.b16 %v10227
    %v10434 = vunpack.c.l.b16 %v10228
    %v10435 = vunpack.c.h.b16 %v10228
    %v10436 = vunpack.c.l.b16 %v10229
    %v10437 = vunpack.c.h.b16 %v10229
    %v10438 = vunpack.c.l.b16 %v10230
    %v10439 = vunpack.c.h.b16 %v10230
    %v10440 = vunpack.c.l.b16 %v10231
    %v10441 = vunpack.c.h.b16 %v10231
    %v10442 = vunpack.c.l.b16 %v10232
    %v10443 = vunpack.c.h.b16 %v10232
    %v10444 = vunpack.c.l.b16 %v10233
    %v10445 = vunpack.c.h.b16 %v10233
    %v10446 = vunpack.c.l.b16 %v10234
    %v10447 = vunpack.c.h.b16 %v10234
    %v10448 = vunpack.c.l.b16 %v10235
    %v10449 = vunpack.c.h.b16 %v10235
    %v10450 = vunpack.c.l.b16 %v10236
    %v10451 = vunpack.c.h.b16 %v10236
    %v10452 = vunpack.c.l.b16 %v10237
    %v10453 = vunpack.c.h.b16 %v10237
    %v10454 = vunpack.c.l.b16 %v10238
    %v10455 = vunpack.c.h.b16 %v10238
    %v10456 = vunpack.c.l.b16 %v10239
    %v10457 = vunpack.c.h.b16 %v10239
    %v10458 = vunpack.c.l.b16 %v10240
    %v10459 = vunpack.c.h.b16 %v10240
    %v10460 = vunpack.c.l.b16 %v10241
    %v10461 = vunpack.c.h.b16 %v10241
    %v10462 = vunpack.c.l.b16 %v10242
    %v10463 = vunpack.c.h.b16 %v10242
    %v10464 = vunpack.c.l.b16 %v10243
    %v10465 = vunpack.c.h.b16 %v10243
    %v10466 = vunpack.c.l.b16 %v10244
    %v10467 = vunpack.c.h.b16 %v10244
    %v10468 = vunpack.c.l.b16 %v10245
    %v10469 = vunpack.c.h.b16 %v10245
    %v10470 = vunpack.c.l.b16 %v10246
    %v10471 = vunpack.c.h.b16 %v10246
    %v10472 = vunpack.c.l.b16 %v10247
    %v10473 = vunpack.c.h.b16 %v10247
    %v10474 = vunpack.c.l.b16 %v10248
    %v10475 = vunpack.c.h.b16 %v10248
    %v10476 = vunpack.c.l.b16 %v10249
    %v10477 = vunpack.c.h.b16 %v10249
    %v10478 = vunpack.c.l.b16 %v10250
    %v10479 = vunpack.c.h.b16 %v10250
    %v10480 = vunpack.c.l.b16 %v10251
    %v10481 = vunpack.c.h.b16 %v10251
    %v10482 = vunpack.c.l.b16 %v10252
    %v10483 = vunpack.c.h.b16 %v10252
    %v10484 = vunpack.c.l.b16 %v10253
    %v10485 = vunpack.c.h.b16 %v10253
    %v10486 = vunpack.c.l.b16 %v10254
    %v10487 = vunpack.c.h.b16 %v10254
    %v10488 = vunpack.c.l.b16 %v10255
    %v10489 = vunpack.c.h.b16 %v10255
    %v10490 = vunpack.c.l.b16 %v10256
    %v10491 = vunpack.c.h.b16 %v10256
    %v10492 = vunpack.c.l.b16 %v10257
    %v10493 = vunpack.c.h.b16 %v10257
    %v10494 = vunpack.c.l.b16 %v10258
    %v10495 = vunpack.c.h.b16 %v10258
    %v10496 = vunpack.c.l.b16 %v10259
    %v10497 = vunpack.c.h.b16 %v10259
    %v10498 = vunpack.c.l.b16 %v10260
    %v10499 = vunpack.c.h.b16 %v10260
    %v10500 = vunpack.c.l.b16 %v10261
    %v10501 = vunpack.c.h.b16 %v10261
    %v10502 = vunpack.c.l.b16 %v10262
    %v10503 = vunpack.c.h.b16 %v10262
    %v10504 = vunpack.c.l.b16 %v10263
    %v10505 = vunpack.c.h.b16 %v10263
    %v10506 = vunpack.c.l.b16 %v10264
    %v10507 = vunpack.c.h.b16 %v10264
    %v10508 = vunpack.c.l.b16 %v10265
    %v10509 = vunpack.c.h.b16 %v10265
    %v10510 = vunpack.c.l.b16 %v10266
    %v10511 = vunpack.c.h.b16 %v10266
    %v10512 = vunpack.c.l.b16 %v10267
    %v10513 = vunpack.c.h.b16 %v10267
    %v10514 = vunpack.c.l.b16 %v10268
    %v10515 = vunpack.c.h.b16 %v10268
    %v10516 = vunpack.c.l.b16 %v10269
    %v10517 = vunpack.c.h.b16 %v10269
    %v10518 = vunpack.c.l.b16 %v10270
    %v10519 = vunpack.c.h.b16 %v10270
    %v10520 = vunpack.c.l.b16 %v10271
    %v10521 = vunpack.c.h.b16 %v10271
    %v10522 = vunpack.c.l.b16 %v10272
    %v10523 = vunpack.c.h.b16 %v10272
    %v10524 = vunpack.c.l.b16 %v10273
    %v10525 = vunpack.c.h.b16 %v10273
    %v10526 = vunpack.c.l.b16 %v10274
    %v10527 = vunpack.c.h.b16 %v10274
    %v10528 = vunpack.c.l.b16 %v10275
    %v10529 = vunpack.c.h.b16 %v10275
    %v10530 = vunpack.c.l.b16 %v10276
    %v10531 = vunpack.c.h.b16 %v10276
    %v10532 = vunpack.c.l.b16 %v10277
    %v10533 = vunpack.c.h.b16 %v10277
    %v10534 = vunpack.c.l.b16 %v10278
    %v10535 = vunpack.c.h.b16 %v10278
    %v10536 = vunpack.c.l.b16 %v10279
    %v10537 = vunpack.c.h.b16 %v10279
    %v10538 = vunpack.c.l.b16 %v10280
    %v10539 = vunpack.c.h.b16 %v10280
    %v10540 = vunpack.c.l.b16 %v10281
    %v10541 = vunpack.c.h.b16 %v10281
    %v10542 = vunpack.c.l.b16 %v10282
    %v10543 = vunpack.c.h.b16 %v10282
    %v10544 = vunpack.c.l.b16 %v10283
    %v10545 = vunpack.c.h.b16 %v10283
    %v10546 = vunpack.c.l.b16 %v10284
    %v10547 = vunpack.c.h.b16 %v10284
    %v10548 = vunpack.c.l.b16 %v10285
    %v10549 = vunpack.c.h.b16 %v10285
    %v10550 = vunpack.c.l.b16 %v10286
    %v10551 = vunpack.c.h.b16 %v10286
    %v10552 = vunpack.c.l.b16 %v10287
    %v10553 = vunpack.c.h.b16 %v10287
    %v10554 = vunpack.c.l.b16 %v10288
    %v10555 = vunpack.c.h.b16 %v10288
    %v10556 = vunpack.c.l.b16 %v10289
    %v10557 = vunpack.c.h.b16 %v10289
    %v10558 = vunpack.c.l.b16 %v10290
    %v10559 = vunpack.c.h.b16 %v10290
    %v10560 = vunpack.c.l.b16 %v10291
    %v10561 = vunpack.c.h.b16 %v10291
    %v10562 = vunpack.c.l.b16 %v10292
    %v10563 = vunpack.c.h.b16 %v10292
    %v10564 = vunpack.c.l.b16 %v10293
    %v10565 = vunpack.c.h.b16 %v10293
    %v10566 = vunpack.c.l.b16 %v10294
    %v10567 = vunpack.c.h.b16 %v10294
    %v10568 = vunpack.c.l.b16 %v10295
    %v10569 = vunpack.c.h.b16 %v10295
    %v10570 = vunpack.c.l.b16 %v10296
    %v10571 = vunpack.c.h.b16 %v10296
    %v10572 = vunpack.c.l.b16 %v10297
    %v10573 = vunpack.c.h.b16 %v10297
    %v10574 = vunpack.c.l.b16 %v10298
    %v10575 = vunpack.c.h.b16 %v10298
    %v10576 = vunpack.c.l.b16 %v10299
    %v10577 = vunpack.c.h.b16 %v10299
    %v10578 = vunpack.c.l.b16 %v10300
    %v10579 = vunpack.c.h.b16 %v10300
    %v10580 = vunpack.c.l.b16 %v10301
    %v10581 = vunpack.c.h.b16 %v10301
    %v10582 = vunpack.c.l.b16 %v10302
    %v10583 = vunpack.c.h.b16 %v10302
    %v10584 = vunpack.c.l.b16 %v10303
    %v10585 = vunpack.c.h.b16 %v10303
    %v10586 = vunpack.c.l.b16 %v10304
    %v10587 = vunpack.c.h.b16 %v10304
    %v10588 = vunpack.c.l.b16 %v10305
    %v10589 = vunpack.c.h.b16 %v10305
    %v10590 = vunpack.c.l.b16 %v10306
    %v10591 = vunpack.c.h.b16 %v10306
    %v10592 = vunpack.c.l.b16 %v10307
    %v10593 = vunpack.c.h.b16 %v10307
    %v10594 = vunpack.c.l.b16 %v10308
    %v10595 = vunpack.c.h.b16 %v10308
    %v10596 = vunpack.c.l.b16 %v10309
    %v10597 = vunpack.c.h.b16 %v10309
    %v10598 = vpack.c.b16 %v10408, %v10406
    %v10599 = vpack.c.b16 %v10409, %v10407
    %v10600 = vpack.c.b16 %v10412, %v10410
    %v10601 = vpack.c.b16 %v10413, %v10411
    %v10602 = vpack.c.b16 %v10416, %v10414
    %v10603 = vpack.c.b16 %v10417, %v10415
    %v10604 = vpack.c.b16 %v10420, %v10418
    %v10605 = vpack.c.b16 %v10421, %v10419
    %v10606 = vpack.c.b16 %v10424, %v10422
    %v10607 = vpack.c.b16 %v10425, %v10423
    %v10608 = vpack.c.b16 %v10428, %v10426
    %v10609 = vpack.c.b16 %v10429, %v10427
    %v10610 = vpack.c.b16 %v10432, %v10430
    %v10611 = vpack.c.b16 %v10433, %v10431
    %v10612 = vpack.c.b16 %v10436, %v10434
    %v10613 = vpack.c.b16 %v10437, %v10435
    %v10614 = vpack.c.b16 %v10440, %v10438
    %v10615 = vpack.c.b16 %v10441, %v10439
    %v10616 = vpack.c.b16 %v10444, %v10442
    %v10617 = vpack.c.b16 %v10445, %v10443
    %v10618 = vpack.c.b16 %v10448, %v10446
    %v10619 = vpack.c.b16 %v10449, %v10447
    %v10620 = vpack.c.b16 %v10452, %v10450
    %v10621 = vpack.c.b16 %v10453, %v10451
    %v10622 = vpack.c.b16 %v10456, %v10454
    %v10623 = vpack.c.b16 %v10457, %v10455
    %v10624 = vpack.c.b16 %v10460, %v10458
    %v10625 = vpack.c.b16 %v10461, %v10459
    %v10626 = vpack.c.b16 %v10464, %v10462
    %v10627 = vpack.c.b16 %v10465, %v10463
    %v10628 = vpack.c.b16 %v10468, %v10466
    %v10629 = vpack.c.b16 %v10469, %v10467
    %v10630 = vpack.c.b16 %v10472, %v10470
    %v10631 = vpack.c.b16 %v10473, %v10471
    %v10632 = vpack.c.b16 %v10476, %v10474
    %v10633 = vpack.c.b16 %v10477, %v10475
    %v10634 = vpack.c.b16 %v10480, %v10478
    %v10635 = vpack.c.b16 %v10481, %v10479
    %v10636 = vpack.c.b16 %v10484, %v10482
    %v10637 = vpack.c.b16 %v10485, %v10483
    %v10638 = vpack.c.b16 %v10488, %v10486
    %v10639 = vpack.c.b16 %v10489, %v10487
    %v10640 = vpack.c.b16 %v10492, %v10490
    %v10641 = vpack.c.b16 %v10493, %v10491
    %v10642 = vpack.c.b16 %v10496, %v10494
    %v10643 = vpack.c.b16 %v10497, %v10495
    %v10644 = vpack.c.b16 %v10500, %v10498
    %v10645 = vpack.c.b16 %v10501, %v10499
    %v10646 = vpack.c.b16 %v10504, %v10502
    %v10647 = vpack.c.b16 %v10505, %v10503
    %v10648 = vpack.c.b16 %v10508, %v10506
    %v10649 = vpack.c.b16 %v10509, %v10507
    %v10650 = vpack.c.b16 %v10512, %v10510
    %v10651 = vpack.c.b16 %v10513, %v10511
    %v10652 = vpack.c.b16 %v10516, %v10514
    %v10653 = vpack.c.b16 %v10517, %v10515
    %v10654 = vpack.c.b16 %v10520, %v10518
    %v10655 = vpack.c.b16 %v10521, %v10519
    %v10656 = vpack.c.b16 %v10524, %v10522
    %v10657 = vpack.c.b16 %v10525, %v10523
    %v10658 = vpack.c.b16 %v10528, %v10526
    %v10659 = vpack.c.b16 %v10529, %v10527
    %v10660 = vpack.c.b16 %v10532, %v10530
    %v10661 = vpack.c.b16 %v10533, %v10531
    %v10662 = vpack.c.b16 %v10536, %v10534
    %v10663 = vpack.c.b16 %v10537, %v10535
    %v10664 = vpack.c.b16 %v10540, %v10538
    %v10665 = vpack.c.b16 %v10541, %v10539
    %v10666 = vpack.c.b16 %v10544, %v10542
    %v10667 = vpack.c.b16 %v10545, %v10543
    %v10668 = vpack.c.b16 %v10548, %v10546
    %v10669 = vpack.c.b16 %v10549, %v10547
    %v10670 = vpack.c.b16 %v10552, %v10550
    %v10671 = vpack.c.b16 %v10553, %v10551
    %v10672 = vpack.c.b16 %v10556, %v10554
    %v10673 = vpack.c.b16 %v10557, %v10555
    %v10674 = vpack.c.b16 %v10560, %v10558
    %v10675 = vpack.c.b16 %v10561, %v10559
    %v10676 = vpack.c.b16 %v10564, %v10562
    %v10677 = vpack.c.b16 %v10565, %v10563
    %v10678 = vpack.c.b16 %v10568, %v10566
    %v10679 = vpack.c.b16 %v10569, %v10567
    %v10680 = vpack.c.b16 %v10572, %v10570
    %v10681 = vpack.c.b16 %v10573, %v10571
    %v10682 = vpack.c.b16 %v10576, %v10574
    %v10683 = vpack.c.b16 %v10577, %v10575
    %v10684 = vpack.c.b16 %v10580, %v10578
    %v10685 = vpack.c.b16 %v10581, %v10579
    %v10686 = vpack.c.b16 %v10584, %v10582
    %v10687 = vpack.c.b16 %v10585, %v10583
    %v10688 = vpack.c.b16 %v10588, %v10586
    %v10689 = vpack.c.b16 %v10589, %v10587
    %v10690 = vpack.c.b16 %v10592, %v10590
    %v10691 = vpack.c.b16 %v10593, %v10591
    %v10692 = vpack.c.b16 %v10596, %v10594
    %v10693 = vpack.c.b16 %v10597, %v10595
    %10790 = vmatprep.subr.bf16.mxu0 %v10613
    %10791 = vmatpush1.bf16.msra.mxu0 %v10612
    %10792 = vmatprep.subr.bf16.mxu0 %v10611
    %10793 = vmatpush1.bf16.msra.mxu0 %v10610
    %10794 = vmatprep.subr.bf16.mxu0 %v10609
    %10795 = vmatpush1.bf16.msra.mxu0 %v10608
    %10796 = vmatprep.subr.bf16.mxu0 %v10607
    %10797 = vmatpush1.bf16.msra.mxu0 %v10606
    %10798 = vmatprep.subr.bf16.mxu0 %v10605
    %10799 = vmatpush1.bf16.msra.mxu0 %v10604
    %10800 = vmatprep.subr.bf16.mxu0 %v10603
    %10801 = vmatpush1.bf16.msra.mxu0 %v10602
    %10802 = vmatprep.subr.bf16.mxu0 %v10601
    %10803 = vmatpush1.bf16.msra.mxu0 %v10600
    %10804 = vmatprep.subr.bf16.mxu0 %v10599
    %10805 = vmatpush1.bf16.msra.mxu0 %v10598
    %10806 = vmatprep.subr.bf16.mxu0 %v10629
    %10807 = vmatpush2.bf16.msra.mxu0 %v10628
    %10808 = vmatprep.subr.bf16.mxu0 %v10627
    %10809 = vmatpush2.bf16.msra.mxu0 %v10626
    %10810 = vmatprep.subr.bf16.mxu0 %v10625
    %10811 = vmatpush2.bf16.msra.mxu0 %v10624
    %10812 = vmatprep.subr.bf16.mxu0 %v10623
    %10813 = vmatpush2.bf16.msra.mxu0 %v10622
    %10814 = vmatprep.subr.bf16.mxu0 %v10621
    %10815 = vmatpush2.bf16.msra.mxu0 %v10620
    %10816 = vmatprep.subr.bf16.mxu0 %v10619
    %10817 = vmatpush2.bf16.msra.mxu0 %v10618
    %10818 = vmatprep.subr.bf16.mxu0 %v10617
    %10819 = vmatpush2.bf16.msra.mxu0 %v10616
    %10820 = vmatprep.subr.bf16.mxu0 %v10615
    %10821 = vmatpush2.bf16.msra.mxu0 %v10614
    %10822 = vmatprep.mubr.bf16.mxu0 %v10209
    %10823 = vmatmul.mubr.bf16.gmra.mxu0 %v10208
    %v10824 = vpop.f32.mrf.mxu0
    %v10825 = vadd.f32 0.0, %v10824
    %v10826 = vpop.f32.mrf.mxu0
    %v10827 = vadd.f32 0.0, %v10826
    %v10828 = vpop.f32.mrf.mxu0
    %v10829 = vpop.f32.mrf.mxu0
    %10830 = vdwg.mxu0
    %10831 = vmatprep.subr.bf16.mxu0 %v10645
    %10832 = vmatpush1.bf16.msra.mxu0 %v10644
    %10833 = vmatprep.subr.bf16.mxu0 %v10643
    %10834 = vmatpush1.bf16.msra.mxu0 %v10642
    %10835 = vmatprep.subr.bf16.mxu0 %v10641
    %10836 = vmatpush1.bf16.msra.mxu0 %v10640
    %10837 = vmatprep.subr.bf16.mxu0 %v10639
    %10838 = vmatpush1.bf16.msra.mxu0 %v10638
    %10839 = vmatprep.subr.bf16.mxu0 %v10637
    %10840 = vmatpush1.bf16.msra.mxu0 %v10636
    %10841 = vmatprep.subr.bf16.mxu0 %v10635
    %10842 = vmatpush1.bf16.msra.mxu0 %v10634
    %10843 = vmatprep.subr.bf16.mxu0 %v10633
    %10844 = vmatpush1.bf16.msra.mxu0 %v10632
    %10845 = vmatprep.subr.bf16.mxu0 %v10631
    %10846 = vmatpush1.bf16.msra.mxu0 %v10630
    %10847 = vmatprep.subr.bf16.mxu0 %v10661
    %10848 = vmatpush2.bf16.msra.mxu0 %v10660
    %10849 = vmatprep.subr.bf16.mxu0 %v10659
    %10850 = vmatpush2.bf16.msra.mxu0 %v10658
    %10851 = vmatprep.subr.bf16.mxu0 %v10657
    %10852 = vmatpush2.bf16.msra.mxu0 %v10656
    %10853 = vmatprep.subr.bf16.mxu0 %v10655
    %10854 = vmatpush2.bf16.msra.mxu0 %v10654
    %10855 = vmatprep.subr.bf16.mxu0 %v10653
    %10856 = vmatpush2.bf16.msra.mxu0 %v10652
    %10857 = vmatprep.subr.bf16.mxu0 %v10651
    %10858 = vmatpush2.bf16.msra.mxu0 %v10650
    %10859 = vmatprep.subr.bf16.mxu0 %v10649
    %10860 = vmatpush2.bf16.msra.mxu0 %v10648
    %10861 = vmatprep.subr.bf16.mxu0 %v10647
    %10862 = vmatpush2.bf16.msra.mxu0 %v10646
    %10863 = vmatprep.mubr.bf16.mxu0 %v10211
    %10864 = vmatmul.mubr.bf16.gmra.mxu0 %v10210
    %v10865 = vpop.f32.mrf.mxu0
    %v10866 = vadd.f32 %v10825, %v10865
    %v10867 = vpop.f32.mrf.mxu0
    %v10868 = vadd.f32 %v10827, %v10867
    %v10869 = vpop.f32.mrf.mxu0
    %v10870 = vpop.f32.mrf.mxu0
    %10871 = vdwg.mxu0
    %10872 = vmatprep.subr.bf16.mxu0 %v10677
    %10873 = vmatpush1.bf16.msra.mxu0 %v10676
    %10874 = vmatprep.subr.bf16.mxu0 %v10675
    %10875 = vmatpush1.bf16.msra.mxu0 %v10674
    %10876 = vmatprep.subr.bf16.mxu0 %v10673
    %10877 = vmatpush1.bf16.msra.mxu0 %v10672
    %10878 = vmatprep.subr.bf16.mxu0 %v10671
    %10879 = vmatpush1.bf16.msra.mxu0 %v10670
    %10880 = vmatprep.subr.bf16.mxu0 %v10669
    %10881 = vmatpush1.bf16.msra.mxu0 %v10668
    %10882 = vmatprep.subr.bf16.mxu0 %v10667
    %10883 = vmatpush1.bf16.msra.mxu0 %v10666
    %10884 = vmatprep.subr.bf16.mxu0 %v10665
    %10885 = vmatpush1.bf16.msra.mxu0 %v10664
    %10886 = vmatprep.subr.bf16.mxu0 %v10663
    %10887 = vmatpush1.bf16.msra.mxu0 %v10662
    %10888 = vmatprep.subr.bf16.mxu0 %v10693
    %10889 = vmatpush2.bf16.msra.mxu0 %v10692
    %10890 = vmatprep.subr.bf16.mxu0 %v10691
    %10891 = vmatpush2.bf16.msra.mxu0 %v10690
    %10892 = vmatprep.subr.bf16.mxu0 %v10689
    %10893 = vmatpush2.bf16.msra.mxu0 %v10688
    %10894 = vmatprep.subr.bf16.mxu0 %v10687
    %10895 = vmatpush2.bf16.msra.mxu0 %v10686
    %10896 = vmatprep.subr.bf16.mxu0 %v10685
    %10897 = vmatpush2.bf16.msra.mxu0 %v10684
    %10898 = vmatprep.subr.bf16.mxu0 %v10683
    %10899 = vmatpush2.bf16.msra.mxu0 %v10682
    %10900 = vmatprep.subr.bf16.mxu0 %v10681
    %10901 = vmatpush2.bf16.msra.mxu0 %v10680
    %10902 = vmatprep.subr.bf16.mxu0 %v10679
    %10903 = vmatpush2.bf16.msra.mxu0 %v10678
    %10904 = vmatprep.mubr.bf16.mxu0 %v10213
    %10905 = vmatmul.mubr.bf16.gmra.mxu0 %v10212
    %v10906 = vpop.f32.mrf.mxu0
    %v10907 = vadd.f32 %v10866, %v10906
    %v10908 = vpop.f32.mrf.mxu0
    %v10909 = vadd.f32 %v10868, %v10908
    %v10910 = vpop.f32.mrf.mxu0
    %v10911 = vpop.f32.mrf.mxu0
    %10912 = vdwg.mxu0
    %v10913 = vld [vmem:[#allocation14] sm:$0xff]
    %v10914 = vld [vmem:[#allocation14 + $0x8] sm:$0xff]
    %v10915 = vld [vmem:[#allocation14 + $0x10] sm:$0xff]
    %v10916 = vld [vmem:[#allocation14 + $0x18] sm:$0xff]
    %v10917 = vld [vmem:[#allocation14 + $0x20] sm:$0xff]
    %v10918 = vld [vmem:[#allocation14 + $0x28] sm:$0xff]
    %v10919 = vld [vmem:[#allocation14 + $0x30] sm:$0xff]
    %v10920 = vld [vmem:[#allocation14 + $0x38] sm:$0xff]
    %v10921 = vld [vmem:[#allocation14 + $0x40] sm:$0xff]
    %v10922 = vld [vmem:[#allocation14 + $0x48] sm:$0xff]
    %v10923 = vld [vmem:[#allocation14 + $0x50] sm:$0xff]
    %v10924 = vld [vmem:[#allocation14 + $0x58] sm:$0xff]
    %v10925 = vld [vmem:[#allocation14 + $0x60] sm:$0xff]
    %v10926 = vld [vmem:[#allocation14 + $0x68] sm:$0xff]
    %v10927 = vld [vmem:[#allocation14 + $0x70] sm:$0xff]
    %v10928 = vld [vmem:[#allocation14 + $0x78] sm:$0xff]
    %v10929 = vld [vmem:[#allocation14 + $0x80] sm:$0xff]
    %v10930 = vld [vmem:[#allocation14 + $0x88] sm:$0xff]
    %v10931 = vld [vmem:[#allocation14 + $0x90] sm:$0xff]
    %v10932 = vld [vmem:[#allocation14 + $0x98] sm:$0xff]
    %v10933 = vld [vmem:[#allocation14 + $0xa0] sm:$0xff]
    %v10934 = vld [vmem:[#allocation14 + $0xa8] sm:$0xff]
    %v10935 = vld [vmem:[#allocation14 + $0xb0] sm:$0xff]
    %v10936 = vld [vmem:[#allocation14 + $0xb8] sm:$0xff]
    %v10937 = vld [vmem:[#allocation14 + $0xc0] sm:$0xff]
    %v10938 = vld [vmem:[#allocation14 + $0xc8] sm:$0xff]
    %v10939 = vld [vmem:[#allocation14 + $0xd0] sm:$0xff]
    %v10940 = vld [vmem:[#allocation14 + $0xd8] sm:$0xff]
    %v10941 = vld [vmem:[#allocation14 + $0xe0] sm:$0xff]
    %v10942 = vld [vmem:[#allocation14 + $0xe8] sm:$0xff]
    %v10943 = vld [vmem:[#allocation14 + $0xf0] sm:$0xff]
    %v10944 = vld [vmem:[#allocation14 + $0xf8] sm:$0xff]
    %v10945 = vld [vmem:[#allocation14 + $0x100] sm:$0xff]
    %v10946 = vld [vmem:[#allocation14 + $0x108] sm:$0xff]
    %v10947 = vld [vmem:[#allocation14 + $0x110] sm:$0xff]
    %v10948 = vld [vmem:[#allocation14 + $0x118] sm:$0xff]
    %v10949 = vld [vmem:[#allocation14 + $0x120] sm:$0xff]
    %v10950 = vld [vmem:[#allocation14 + $0x128] sm:$0xff]
    %v10951 = vld [vmem:[#allocation14 + $0x130] sm:$0xff]
    %v10952 = vld [vmem:[#allocation14 + $0x138] sm:$0xff]
    %v10953 = vld [vmem:[#allocation14 + $0x140] sm:$0xff]
    %v10954 = vld [vmem:[#allocation14 + $0x148] sm:$0xff]
    %v10955 = vld [vmem:[#allocation14 + $0x150] sm:$0xff]
    %v10956 = vld [vmem:[#allocation14 + $0x158] sm:$0xff]
    %v10957 = vld [vmem:[#allocation14 + $0x160] sm:$0xff]
    %v10958 = vld [vmem:[#allocation14 + $0x168] sm:$0xff]
    %v10959 = vld [vmem:[#allocation14 + $0x170] sm:$0xff]
    %v10960 = vld [vmem:[#allocation14 + $0x178] sm:$0xff]
    %v10961 = vld [vmem:[#allocation14 + $0x180] sm:$0xff]
    %v10962 = vld [vmem:[#allocation14 + $0x188] sm:$0xff]
    %v10963 = vld [vmem:[#allocation14 + $0x190] sm:$0xff]
    %v10964 = vld [vmem:[#allocation14 + $0x198] sm:$0xff]
    %v10965 = vld [vmem:[#allocation14 + $0x1a0] sm:$0xff]
    %v10966 = vld [vmem:[#allocation14 + $0x1a8] sm:$0xff]
    %v10967 = vld [vmem:[#allocation14 + $0x1b0] sm:$0xff]
    %v10968 = vld [vmem:[#allocation14 + $0x1b8] sm:$0xff]
    %v10969 = vld [vmem:[#allocation14 + $0x1c0] sm:$0xff]
    %v10970 = vld [vmem:[#allocation14 + $0x1c8] sm:$0xff]
    %v10971 = vld [vmem:[#allocation14 + $0x1d0] sm:$0xff]
    %v10972 = vld [vmem:[#allocation14 + $0x1d8] sm:$0xff]
    %v10973 = vld [vmem:[#allocation14 + $0x1e0] sm:$0xff]
    %v10974 = vld [vmem:[#allocation14 + $0x1e8] sm:$0xff]
    %v10975 = vld [vmem:[#allocation14 + $0x1f0] sm:$0xff]
    %v10976 = vld [vmem:[#allocation14 + $0x1f8] sm:$0xff]
    %v10977 = vld [vmem:[#allocation14 + $0x200] sm:$0xff]
    %v10978 = vld [vmem:[#allocation14 + $0x208] sm:$0xff]
    %v10979 = vld [vmem:[#allocation14 + $0x210] sm:$0xff]
    %v10980 = vld [vmem:[#allocation14 + $0x218] sm:$0xff]
    %v10981 = vld [vmem:[#allocation14 + $0x220] sm:$0xff]
    %v10982 = vld [vmem:[#allocation14 + $0x228] sm:$0xff]
    %v10983 = vld [vmem:[#allocation14 + $0x230] sm:$0xff]
    %v10984 = vld [vmem:[#allocation14 + $0x238] sm:$0xff]
    %v10985 = vld [vmem:[#allocation14 + $0x240] sm:$0xff]
    %v10986 = vld [vmem:[#allocation14 + $0x248] sm:$0xff]
    %v10987 = vld [vmem:[#allocation14 + $0x250] sm:$0xff]
    %v10988 = vld [vmem:[#allocation14 + $0x258] sm:$0xff]
    %v10989 = vld [vmem:[#allocation14 + $0x260] sm:$0xff]
    %v10990 = vld [vmem:[#allocation14 + $0x268] sm:$0xff]
    %v10991 = vld [vmem:[#allocation14 + $0x270] sm:$0xff]
    %v10992 = vld [vmem:[#allocation14 + $0x278] sm:$0xff]
    %v10993 = vld [vmem:[#allocation14 + $0x280] sm:$0xff]
    %v10994 = vld [vmem:[#allocation14 + $0x288] sm:$0xff]
    %v10995 = vld [vmem:[#allocation14 + $0x290] sm:$0xff]
    %v10996 = vld [vmem:[#allocation14 + $0x298] sm:$0xff]
    %v10997 = vld [vmem:[#allocation14 + $0x2a0] sm:$0xff]
    %v10998 = vld [vmem:[#allocation14 + $0x2a8] sm:$0xff]
    %v10999 = vld [vmem:[#allocation14 + $0x2b0] sm:$0xff]
    %v11000 = vld [vmem:[#allocation14 + $0x2b8] sm:$0xff]
    %v11001 = vld [vmem:[#allocation14 + $0x2c0] sm:$0xff]
    %v11002 = vld [vmem:[#allocation14 + $0x2c8] sm:$0xff]
    %v11003 = vld [vmem:[#allocation14 + $0x2d0] sm:$0xff]
    %v11004 = vld [vmem:[#allocation14 + $0x2d8] sm:$0xff]
    %v11005 = vld [vmem:[#allocation14 + $0x2e0] sm:$0xff]
    %v11006 = vld [vmem:[#allocation14 + $0x2e8] sm:$0xff]
    %v11007 = vld [vmem:[#allocation14 + $0x2f0] sm:$0xff]
    %v11008 = vld [vmem:[#allocation14 + $0x2f8] sm:$0xff]
    %v11105 = vunpack.c.l.b16 %v10913
    %v11106 = vunpack.c.h.b16 %v10913
    %v11107 = vunpack.c.l.b16 %v10914
    %v11108 = vunpack.c.h.b16 %v10914
    %v11109 = vunpack.c.l.b16 %v10915
    %v11110 = vunpack.c.h.b16 %v10915
    %v11111 = vunpack.c.l.b16 %v10916
    %v11112 = vunpack.c.h.b16 %v10916
    %v11113 = vunpack.c.l.b16 %v10917
    %v11114 = vunpack.c.h.b16 %v10917
    %v11115 = vunpack.c.l.b16 %v10918
    %v11116 = vunpack.c.h.b16 %v10918
    %v11117 = vunpack.c.l.b16 %v10919
    %v11118 = vunpack.c.h.b16 %v10919
    %v11119 = vunpack.c.l.b16 %v10920
    %v11120 = vunpack.c.h.b16 %v10920
    %v11121 = vunpack.c.l.b16 %v10921
    %v11122 = vunpack.c.h.b16 %v10921
    %v11123 = vunpack.c.l.b16 %v10922
    %v11124 = vunpack.c.h.b16 %v10922
    %v11125 = vunpack.c.l.b16 %v10923
    %v11126 = vunpack.c.h.b16 %v10923
    %v11127 = vunpack.c.l.b16 %v10924
    %v11128 = vunpack.c.h.b16 %v10924
    %v11129 = vunpack.c.l.b16 %v10925
    %v11130 = vunpack.c.h.b16 %v10925
    %v11131 = vunpack.c.l.b16 %v10926
    %v11132 = vunpack.c.h.b16 %v10926
    %v11133 = vunpack.c.l.b16 %v10927
    %v11134 = vunpack.c.h.b16 %v10927
    %v11135 = vunpack.c.l.b16 %v10928
    %v11136 = vunpack.c.h.b16 %v10928
    %v11137 = vunpack.c.l.b16 %v10929
    %v11138 = vunpack.c.h.b16 %v10929
    %v11139 = vunpack.c.l.b16 %v10930
    %v11140 = vunpack.c.h.b16 %v10930
    %v11141 = vunpack.c.l.b16 %v10931
    %v11142 = vunpack.c.h.b16 %v10931
    %v11143 = vunpack.c.l.b16 %v10932
    %v11144 = vunpack.c.h.b16 %v10932
    %v11145 = vunpack.c.l.b16 %v10933
    %v11146 = vunpack.c.h.b16 %v10933
    %v11147 = vunpack.c.l.b16 %v10934
    %v11148 = vunpack.c.h.b16 %v10934
    %v11149 = vunpack.c.l.b16 %v10935
    %v11150 = vunpack.c.h.b16 %v10935
    %v11151 = vunpack.c.l.b16 %v10936
    %v11152 = vunpack.c.h.b16 %v10936
    %v11153 = vunpack.c.l.b16 %v10937
    %v11154 = vunpack.c.h.b16 %v10937
    %v11155 = vunpack.c.l.b16 %v10938
    %v11156 = vunpack.c.h.b16 %v10938
    %v11157 = vunpack.c.l.b16 %v10939
    %v11158 = vunpack.c.h.b16 %v10939
    %v11159 = vunpack.c.l.b16 %v10940
    %v11160 = vunpack.c.h.b16 %v10940
    %v11161 = vunpack.c.l.b16 %v10941
    %v11162 = vunpack.c.h.b16 %v10941
    %v11163 = vunpack.c.l.b16 %v10942
    %v11164 = vunpack.c.h.b16 %v10942
    %v11165 = vunpack.c.l.b16 %v10943
    %v11166 = vunpack.c.h.b16 %v10943
    %v11167 = vunpack.c.l.b16 %v10944
    %v11168 = vunpack.c.h.b16 %v10944
    %v11169 = vunpack.c.l.b16 %v10945
    %v11170 = vunpack.c.h.b16 %v10945
    %v11171 = vunpack.c.l.b16 %v10946
    %v11172 = vunpack.c.h.b16 %v10946
    %v11173 = vunpack.c.l.b16 %v10947
    %v11174 = vunpack.c.h.b16 %v10947
    %v11175 = vunpack.c.l.b16 %v10948
    %v11176 = vunpack.c.h.b16 %v10948
    %v11177 = vunpack.c.l.b16 %v10949
    %v11178 = vunpack.c.h.b16 %v10949
    %v11179 = vunpack.c.l.b16 %v10950
    %v11180 = vunpack.c.h.b16 %v10950
    %v11181 = vunpack.c.l.b16 %v10951
    %v11182 = vunpack.c.h.b16 %v10951
    %v11183 = vunpack.c.l.b16 %v10952
    %v11184 = vunpack.c.h.b16 %v10952
    %v11185 = vunpack.c.l.b16 %v10953
    %v11186 = vunpack.c.h.b16 %v10953
    %v11187 = vunpack.c.l.b16 %v10954
    %v11188 = vunpack.c.h.b16 %v10954
    %v11189 = vunpack.c.l.b16 %v10955
    %v11190 = vunpack.c.h.b16 %v10955
    %v11191 = vunpack.c.l.b16 %v10956
    %v11192 = vunpack.c.h.b16 %v10956
    %v11193 = vunpack.c.l.b16 %v10957
    %v11194 = vunpack.c.h.b16 %v10957
    %v11195 = vunpack.c.l.b16 %v10958
    %v11196 = vunpack.c.h.b16 %v10958
    %v11197 = vunpack.c.l.b16 %v10959
    %v11198 = vunpack.c.h.b16 %v10959
    %v11199 = vunpack.c.l.b16 %v10960
    %v11200 = vunpack.c.h.b16 %v10960
    %v11201 = vunpack.c.l.b16 %v10961
    %v11202 = vunpack.c.h.b16 %v10961
    %v11203 = vunpack.c.l.b16 %v10962
    %v11204 = vunpack.c.h.b16 %v10962
    %v11205 = vunpack.c.l.b16 %v10963
    %v11206 = vunpack.c.h.b16 %v10963
    %v11207 = vunpack.c.l.b16 %v10964
    %v11208 = vunpack.c.h.b16 %v10964
    %v11209 = vunpack.c.l.b16 %v10965
    %v11210 = vunpack.c.h.b16 %v10965
    %v11211 = vunpack.c.l.b16 %v10966
    %v11212 = vunpack.c.h.b16 %v10966
    %v11213 = vunpack.c.l.b16 %v10967
    %v11214 = vunpack.c.h.b16 %v10967
    %v11215 = vunpack.c.l.b16 %v10968
    %v11216 = vunpack.c.h.b16 %v10968
    %v11217 = vunpack.c.l.b16 %v10969
    %v11218 = vunpack.c.h.b16 %v10969
    %v11219 = vunpack.c.l.b16 %v10970
    %v11220 = vunpack.c.h.b16 %v10970
    %v11221 = vunpack.c.l.b16 %v10971
    %v11222 = vunpack.c.h.b16 %v10971
    %v11223 = vunpack.c.l.b16 %v10972
    %v11224 = vunpack.c.h.b16 %v10972
    %v11225 = vunpack.c.l.b16 %v10973
    %v11226 = vunpack.c.h.b16 %v10973
    %v11227 = vunpack.c.l.b16 %v10974
    %v11228 = vunpack.c.h.b16 %v10974
    %v11229 = vunpack.c.l.b16 %v10975
    %v11230 = vunpack.c.h.b16 %v10975
    %v11231 = vunpack.c.l.b16 %v10976
    %v11232 = vunpack.c.h.b16 %v10976
    %v11233 = vunpack.c.l.b16 %v10977
    %v11234 = vunpack.c.h.b16 %v10977
    %v11235 = vunpack.c.l.b16 %v10978
    %v11236 = vunpack.c.h.b16 %v10978
    %v11237 = vunpack.c.l.b16 %v10979
    %v11238 = vunpack.c.h.b16 %v10979
    %v11239 = vunpack.c.l.b16 %v10980
    %v11240 = vunpack.c.h.b16 %v10980
    %v11241 = vunpack.c.l.b16 %v10981
    %v11242 = vunpack.c.h.b16 %v10981
    %v11243 = vunpack.c.l.b16 %v10982
    %v11244 = vunpack.c.h.b16 %v10982
    %v11245 = vunpack.c.l.b16 %v10983
    %v11246 = vunpack.c.h.b16 %v10983
    %v11247 = vunpack.c.l.b16 %v10984
    %v11248 = vunpack.c.h.b16 %v10984
    %v11249 = vunpack.c.l.b16 %v10985
    %v11250 = vunpack.c.h.b16 %v10985
    %v11251 = vunpack.c.l.b16 %v10986
    %v11252 = vunpack.c.h.b16 %v10986
    %v11253 = vunpack.c.l.b16 %v10987
    %v11254 = vunpack.c.h.b16 %v10987
    %v11255 = vunpack.c.l.b16 %v10988
    %v11256 = vunpack.c.h.b16 %v10988
    %v11257 = vunpack.c.l.b16 %v10989
    %v11258 = vunpack.c.h.b16 %v10989
    %v11259 = vunpack.c.l.b16 %v10990
    %v11260 = vunpack.c.h.b16 %v10990
    %v11261 = vunpack.c.l.b16 %v10991
    %v11262 = vunpack.c.h.b16 %v10991
    %v11263 = vunpack.c.l.b16 %v10992
    %v11264 = vunpack.c.h.b16 %v10992
    %v11265 = vunpack.c.l.b16 %v10993
    %v11266 = vunpack.c.h.b16 %v10993
    %v11267 = vunpack.c.l.b16 %v10994
    %v11268 = vunpack.c.h.b16 %v10994
    %v11269 = vunpack.c.l.b16 %v10995
    %v11270 = vunpack.c.h.b16 %v10995
    %v11271 = vunpack.c.l.b16 %v10996
    %v11272 = vunpack.c.h.b16 %v10996
    %v11273 = vunpack.c.l.b16 %v10997
    %v11274 = vunpack.c.h.b16 %v10997
    %v11275 = vunpack.c.l.b16 %v10998
    %v11276 = vunpack.c.h.b16 %v10998
    %v11277 = vunpack.c.l.b16 %v10999
    %v11278 = vunpack.c.h.b16 %v10999
    %v11279 = vunpack.c.l.b16 %v11000
    %v11280 = vunpack.c.h.b16 %v11000
    %v11281 = vunpack.c.l.b16 %v11001
    %v11282 = vunpack.c.h.b16 %v11001
    %v11283 = vunpack.c.l.b16 %v11002
    %v11284 = vunpack.c.h.b16 %v11002
    %v11285 = vunpack.c.l.b16 %v11003
    %v11286 = vunpack.c.h.b16 %v11003
    %v11287 = vunpack.c.l.b16 %v11004
    %v11288 = vunpack.c.h.b16 %v11004
    %v11289 = vunpack.c.l.b16 %v11005
    %v11290 = vunpack.c.h.b16 %v11005
    %v11291 = vunpack.c.l.b16 %v11006
    %v11292 = vunpack.c.h.b16 %v11006
    %v11293 = vunpack.c.l.b16 %v11007
    %v11294 = vunpack.c.h.b16 %v11007
    %v11295 = vunpack.c.l.b16 %v11008
    %v11296 = vunpack.c.h.b16 %v11008
    %v11297 = vpack.c.b16 %v11107, %v11105
    %v11298 = vpack.c.b16 %v11108, %v11106
    %v11299 = vpack.c.b16 %v11111, %v11109
    %v11300 = vpack.c.b16 %v11112, %v11110
    %v11301 = vpack.c.b16 %v11115, %v11113
    %v11302 = vpack.c.b16 %v11116, %v11114
    %v11303 = vpack.c.b16 %v11119, %v11117
    %v11304 = vpack.c.b16 %v11120, %v11118
    %v11305 = vpack.c.b16 %v11123, %v11121
    %v11306 = vpack.c.b16 %v11124, %v11122
    %v11307 = vpack.c.b16 %v11127, %v11125
    %v11308 = vpack.c.b16 %v11128, %v11126
    %v11309 = vpack.c.b16 %v11131, %v11129
    %v11310 = vpack.c.b16 %v11132, %v11130
    %v11311 = vpack.c.b16 %v11135, %v11133
    %v11312 = vpack.c.b16 %v11136, %v11134
    %v11313 = vpack.c.b16 %v11139, %v11137
    %v11314 = vpack.c.b16 %v11140, %v11138
    %v11315 = vpack.c.b16 %v11143, %v11141
    %v11316 = vpack.c.b16 %v11144, %v11142
    %v11317 = vpack.c.b16 %v11147, %v11145
    %v11318 = vpack.c.b16 %v11148, %v11146
    %v11319 = vpack.c.b16 %v11151, %v11149
    %v11320 = vpack.c.b16 %v11152, %v11150
    %v11321 = vpack.c.b16 %v11155, %v11153
    %v11322 = vpack.c.b16 %v11156, %v11154
    %v11323 = vpack.c.b16 %v11159, %v11157
    %v11324 = vpack.c.b16 %v11160, %v11158
    %v11325 = vpack.c.b16 %v11163, %v11161
    %v11326 = vpack.c.b16 %v11164, %v11162
    %v11327 = vpack.c.b16 %v11167, %v11165
    %v11328 = vpack.c.b16 %v11168, %v11166
    %v11329 = vpack.c.b16 %v11171, %v11169
    %v11330 = vpack.c.b16 %v11172, %v11170
    %v11331 = vpack.c.b16 %v11175, %v11173
    %v11332 = vpack.c.b16 %v11176, %v11174
    %v11333 = vpack.c.b16 %v11179, %v11177
    %v11334 = vpack.c.b16 %v11180, %v11178
    %v11335 = vpack.c.b16 %v11183, %v11181
    %v11336 = vpack.c.b16 %v11184, %v11182
    %v11337 = vpack.c.b16 %v11187, %v11185
    %v11338 = vpack.c.b16 %v11188, %v11186
    %v11339 = vpack.c.b16 %v11191, %v11189
    %v11340 = vpack.c.b16 %v11192, %v11190
    %v11341 = vpack.c.b16 %v11195, %v11193
    %v11342 = vpack.c.b16 %v11196, %v11194
    %v11343 = vpack.c.b16 %v11199, %v11197
    %v11344 = vpack.c.b16 %v11200, %v11198
    %v11345 = vpack.c.b16 %v11203, %v11201
    %v11346 = vpack.c.b16 %v11204, %v11202
    %v11347 = vpack.c.b16 %v11207, %v11205
    %v11348 = vpack.c.b16 %v11208, %v11206
    %v11349 = vpack.c.b16 %v11211, %v11209
    %v11350 = vpack.c.b16 %v11212, %v11210
    %v11351 = vpack.c.b16 %v11215, %v11213
    %v11352 = vpack.c.b16 %v11216, %v11214
    %v11353 = vpack.c.b16 %v11219, %v11217
    %v11354 = vpack.c.b16 %v11220, %v11218
    %v11355 = vpack.c.b16 %v11223, %v11221
    %v11356 = vpack.c.b16 %v11224, %v11222
    %v11357 = vpack.c.b16 %v11227, %v11225
    %v11358 = vpack.c.b16 %v11228, %v11226
    %v11359 = vpack.c.b16 %v11231, %v11229
    %v11360 = vpack.c.b16 %v11232, %v11230
    %v11361 = vpack.c.b16 %v11235, %v11233
    %v11362 = vpack.c.b16 %v11236, %v11234
    %v11363 = vpack.c.b16 %v11239, %v11237
    %v11364 = vpack.c.b16 %v11240, %v11238
    %v11365 = vpack.c.b16 %v11243, %v11241
    %v11366 = vpack.c.b16 %v11244, %v11242
    %v11367 = vpack.c.b16 %v11247, %v11245
    %v11368 = vpack.c.b16 %v11248, %v11246
    %v11369 = vpack.c.b16 %v11251, %v11249
    %v11370 = vpack.c.b16 %v11252, %v11250
    %v11371 = vpack.c.b16 %v11255, %v11253
    %v11372 = vpack.c.b16 %v11256, %v11254
    %v11373 = vpack.c.b16 %v11259, %v11257
    %v11374 = vpack.c.b16 %v11260, %v11258
    %v11375 = vpack.c.b16 %v11263, %v11261
    %v11376 = vpack.c.b16 %v11264, %v11262
    %v11377 = vpack.c.b16 %v11267, %v11265
    %v11378 = vpack.c.b16 %v11268, %v11266
    %v11379 = vpack.c.b16 %v11271, %v11269
    %v11380 = vpack.c.b16 %v11272, %v11270
    %v11381 = vpack.c.b16 %v11275, %v11273
    %v11382 = vpack.c.b16 %v11276, %v11274
    %v11383 = vpack.c.b16 %v11279, %v11277
    %v11384 = vpack.c.b16 %v11280, %v11278
    %v11385 = vpack.c.b16 %v11283, %v11281
    %v11386 = vpack.c.b16 %v11284, %v11282
    %v11387 = vpack.c.b16 %v11287, %v11285
    %v11388 = vpack.c.b16 %v11288, %v11286
    %v11389 = vpack.c.b16 %v11291, %v11289
    %v11390 = vpack.c.b16 %v11292, %v11290
    %v11391 = vpack.c.b16 %v11295, %v11293
    %v11392 = vpack.c.b16 %v11296, %v11294
    %11489 = vmatprep.subr.bf16.mxu0 %v11312
    %11490 = vmatpush1.bf16.msra.mxu0 %v11311
    %11491 = vmatprep.subr.bf16.mxu0 %v11310
    %11492 = vmatpush1.bf16.msra.mxu0 %v11309
    %11493 = vmatprep.subr.bf16.mxu0 %v11308
    %11494 = vmatpush1.bf16.msra.mxu0 %v11307
    %11495 = vmatprep.subr.bf16.mxu0 %v11306
    %11496 = vmatpush1.bf16.msra.mxu0 %v11305
    %11497 = vmatprep.subr.bf16.mxu0 %v11304
    %11498 = vmatpush1.bf16.msra.mxu0 %v11303
    %11499 = vmatprep.subr.bf16.mxu0 %v11302
    %11500 = vmatpush1.bf16.msra.mxu0 %v11301
    %11501 = vmatprep.subr.bf16.mxu0 %v11300
    %11502 = vmatpush1.bf16.msra.mxu0 %v11299
    %11503 = vmatprep.subr.bf16.mxu0 %v11298
    %11504 = vmatpush1.bf16.msra.mxu0 %v11297
    %11505 = vmatprep.subr.bf16.mxu0 %v11328
    %11506 = vmatpush2.bf16.msra.mxu0 %v11327
    %11507 = vmatprep.subr.bf16.mxu0 %v11326
    %11508 = vmatpush2.bf16.msra.mxu0 %v11325
    %11509 = vmatprep.subr.bf16.mxu0 %v11324
    %11510 = vmatpush2.bf16.msra.mxu0 %v11323
    %11511 = vmatprep.subr.bf16.mxu0 %v11322
    %11512 = vmatpush2.bf16.msra.mxu0 %v11321
    %11513 = vmatprep.subr.bf16.mxu0 %v11320
    %11514 = vmatpush2.bf16.msra.mxu0 %v11319
    %11515 = vmatprep.subr.bf16.mxu0 %v11318
    %11516 = vmatpush2.bf16.msra.mxu0 %v11317
    %11517 = vmatprep.subr.bf16.mxu0 %v11316
    %11518 = vmatpush2.bf16.msra.mxu0 %v11315
    %11519 = vmatprep.subr.bf16.mxu0 %v11314
    %11520 = vmatpush2.bf16.msra.mxu0 %v11313
    %11521 = vmatprep.mubr.bf16.mxu0 %v10209
    %11522 = vmatmul.mubr.bf16.gmra.mxu0 %v10208
    %v11523 = vpop.f32.mrf.mxu0
    %v11524 = vadd.f32 0.0, %v11523
    %v11525 = vpop.f32.mrf.mxu0
    %v11526 = vadd.f32 0.0, %v11525
    %v11527 = vpop.f32.mrf.mxu0
    %v11528 = vpop.f32.mrf.mxu0
    %11529 = vdwg.mxu0
    %11530 = vmatprep.subr.bf16.mxu0 %v11344
    %11531 = vmatpush1.bf16.msra.mxu0 %v11343
    %11532 = vmatprep.subr.bf16.mxu0 %v11342
    %11533 = vmatpush1.bf16.msra.mxu0 %v11341
    %11534 = vmatprep.subr.bf16.mxu0 %v11340
    %11535 = vmatpush1.bf16.msra.mxu0 %v11339
    %11536 = vmatprep.subr.bf16.mxu0 %v11338
    %11537 = vmatpush1.bf16.msra.mxu0 %v11337
    %11538 = vmatprep.subr.bf16.mxu0 %v11336
    %11539 = vmatpush1.bf16.msra.mxu0 %v11335
    %11540 = vmatprep.subr.bf16.mxu0 %v11334
    %11541 = vmatpush1.bf16.msra.mxu0 %v11333
    %11542 = vmatprep.subr.bf16.mxu0 %v11332
    %11543 = vmatpush1.bf16.msra.mxu0 %v11331
    %11544 = vmatprep.subr.bf16.mxu0 %v11330
    %11545 = vmatpush1.bf16.msra.mxu0 %v11329
    %11546 = vmatprep.subr.bf16.mxu0 %v11360
    %11547 = vmatpush2.bf16.msra.mxu0 %v11359
    %11548 = vmatprep.subr.bf16.mxu0 %v11358
    %11549 = vmatpush2.bf16.msra.mxu0 %v11357
    %11550 = vmatprep.subr.bf16.mxu0 %v11356
    %11551 = vmatpush2.bf16.msra.mxu0 %v11355
    %11552 = vmatprep.subr.bf16.mxu0 %v11354
    %11553 = vmatpush2.bf16.msra.mxu0 %v11353
    %11554 = vmatprep.subr.bf16.mxu0 %v11352
    %11555 = vmatpush2.bf16.msra.mxu0 %v11351
    %11556 = vmatprep.subr.bf16.mxu0 %v11350
    %11557 = vmatpush2.bf16.msra.mxu0 %v11349
    %11558 = vmatprep.subr.bf16.mxu0 %v11348
    %11559 = vmatpush2.bf16.msra.mxu0 %v11347
    %11560 = vmatprep.subr.bf16.mxu0 %v11346
    %11561 = vmatpush2.bf16.msra.mxu0 %v11345
    %11562 = vmatprep.mubr.bf16.mxu0 %v10211
    %11563 = vmatmul.mubr.bf16.gmra.mxu0 %v10210
    %v11564 = vpop.f32.mrf.mxu0
    %v11565 = vadd.f32 %v11524, %v11564
    %v11566 = vpop.f32.mrf.mxu0
    %v11567 = vadd.f32 %v11526, %v11566
    %v11568 = vpop.f32.mrf.mxu0
    %v11569 = vpop.f32.mrf.mxu0
    %11570 = vdwg.mxu0
    %11571 = vmatprep.subr.bf16.mxu0 %v11376
    %11572 = vmatpush1.bf16.msra.mxu0 %v11375
    %11573 = vmatprep.subr.bf16.mxu0 %v11374
    %11574 = vmatpush1.bf16.msra.mxu0 %v11373
    %11575 = vmatprep.subr.bf16.mxu0 %v11372
    %11576 = vmatpush1.bf16.msra.mxu0 %v11371
    %11577 = vmatprep.subr.bf16.mxu0 %v11370
    %11578 = vmatpush1.bf16.msra.mxu0 %v11369
    %11579 = vmatprep.subr.bf16.mxu0 %v11368
    %11580 = vmatpush1.bf16.msra.mxu0 %v11367
    %11581 = vmatprep.subr.bf16.mxu0 %v11366
    %11582 = vmatpush1.bf16.msra.mxu0 %v11365
    %11583 = vmatprep.subr.bf16.mxu0 %v11364
    %11584 = vmatpush1.bf16.msra.mxu0 %v11363
    %11585 = vmatprep.subr.bf16.mxu0 %v11362
    %11586 = vmatpush1.bf16.msra.mxu0 %v11361
    %11587 = vmatprep.subr.bf16.mxu0 %v11392
    %11588 = vmatpush2.bf16.msra.mxu0 %v11391
    %11589 = vmatprep.subr.bf16.mxu0 %v11390
    %11590 = vmatpush2.bf16.msra.mxu0 %v11389
    %11591 = vmatprep.subr.bf16.mxu0 %v11388
    %11592 = vmatpush2.bf16.msra.mxu0 %v11387
    %11593 = vmatprep.subr.bf16.mxu0 %v11386
    %11594 = vmatpush2.bf16.msra.mxu0 %v11385
    %11595 = vmatprep.subr.bf16.mxu0 %v11384
    %11596 = vmatpush2.bf16.msra.mxu0 %v11383
    %11597 = vmatprep.subr.bf16.mxu0 %v11382
    %11598 = vmatpush2.bf16.msra.mxu0 %v11381
    %11599 = vmatprep.subr.bf16.mxu0 %v11380
    %11600 = vmatpush2.bf16.msra.mxu0 %v11379
    %11601 = vmatprep.subr.bf16.mxu0 %v11378
    %11602 = vmatpush2.bf16.msra.mxu0 %v11377
    %11603 = vmatprep.mubr.bf16.mxu0 %v10213
    %11604 = vmatmul.mubr.bf16.gmra.mxu0 %v10212
    %v11605 = vpop.f32.mrf.mxu0
    %v11606 = vadd.f32 %v11565, %v11605
    %v11607 = vpop.f32.mrf.mxu0
    %v11608 = vadd.f32 %v11567, %v11607
    %v11609 = vpop.f32.mrf.mxu0
    %v11610 = vpop.f32.mrf.mxu0
    %11611 = vdwg.mxu0
    %v11612 = vmax.f32 %v10907, %v11606
    %v11613 = vmax.f32 %v10909, %v11608
    %v11614 = vld [vmem:[#allocation5] sm:$0xff]
    %v11615 = vld [vmem:[#allocation16] sm:$0xf]
    %v11616 = vld [vmem:[#allocation16 + $0x4] sm:$0xf]
    %v11617 = vld [vmem:[#allocation16 + $0x8] sm:$0xf]
    %v11618 = vld [vmem:[#allocation16 + $0xc] sm:$0xf]
    %v11619 = vld [vmem:[#allocation16 + $0x10] sm:$0xf]
    %v11620 = vld [vmem:[#allocation16 + $0x14] sm:$0xf]
    %v11621 = vld [vmem:[#allocation16 + $0x18] sm:$0xf]
    %v11622 = vld [vmem:[#allocation16 + $0x1c] sm:$0xf]
    %v11623 = vld [vmem:[#allocation16 + $0x20] sm:$0xf]
    %v11624 = vld [vmem:[#allocation16 + $0x24] sm:$0xf]
    %v11625 = vld [vmem:[#allocation16 + $0x28] sm:$0xf]
    %v11626 = vld [vmem:[#allocation16 + $0x2c] sm:$0xf]
    %v11627 = vld [vmem:[#allocation16 + $0x30] sm:$0xf]
    %v11628 = vld [vmem:[#allocation16 + $0x34] sm:$0xf]
    %v11629 = vld [vmem:[#allocation16 + $0x38] sm:$0xf]
    %v11630 = vld [vmem:[#allocation16 + $0x3c] sm:$0xf]
    %v11631 = vld [vmem:[#allocation16 + $0x40] sm:$0xf]
    %v11632 = vld [vmem:[#allocation16 + $0x44] sm:$0xf]
    %v11633 = vld [vmem:[#allocation16 + $0x48] sm:$0xf]
    %v11634 = vld [vmem:[#allocation16 + $0x4c] sm:$0xf]
    %v11635 = vld [vmem:[#allocation16 + $0x50] sm:$0xf]
    %v11636 = vld [vmem:[#allocation16 + $0x54] sm:$0xf]
    %v11637 = vld [vmem:[#allocation16 + $0x58] sm:$0xf]
    %v11638 = vld [vmem:[#allocation16 + $0x5c] sm:$0xf]
    %v11639 = vld [vmem:[#allocation16 + $0x60] sm:$0xf]
    %v11640 = vld [vmem:[#allocation16 + $0x64] sm:$0xf]
    %v11641 = vld [vmem:[#allocation16 + $0x68] sm:$0xf]
    %v11642 = vld [vmem:[#allocation16 + $0x6c] sm:$0xf]
    %v11643 = vld [vmem:[#allocation16 + $0x70] sm:$0xf]
    %v11644 = vld [vmem:[#allocation16 + $0x74] sm:$0xf]
    %v11645 = vld [vmem:[#allocation16 + $0x78] sm:$0xf]
    %v11646 = vld [vmem:[#allocation16 + $0x7c] sm:$0xf]
    %v11648 = vunpack.c.l.b16 %v11614
    %v11649 = vunpack.c.h.b16 %v11614
    %v11650 = vpack.c.b16 %v11648, %v11648
    %v11651 = vpack.c.b16 %v11649, %v11649
    %v11686 = vunpack.c.l.b16 %v11615
    %v11687 = vunpack.c.l.b16 %v11616
    %v11688 = vunpack.c.l.b16 %v11617
    %v11689 = vunpack.c.l.b16 %v11618
    %v11690 = vunpack.c.l.b16 %v11619
    %v11691 = vunpack.c.l.b16 %v11620
    %v11692 = vunpack.c.l.b16 %v11621
    %v11693 = vunpack.c.l.b16 %v11622
    %v11694 = vunpack.c.l.b16 %v11623
    %v11695 = vunpack.c.l.b16 %v11624
    %v11696 = vunpack.c.l.b16 %v11625
    %v11697 = vunpack.c.l.b16 %v11626
    %v11698 = vunpack.c.l.b16 %v11627
    %v11699 = vunpack.c.l.b16 %v11628
    %v11700 = vunpack.c.l.b16 %v11629
    %v11701 = vunpack.c.l.b16 %v11630
    %v11702 = vunpack.c.l.b16 %v11631
    %v11703 = vunpack.c.l.b16 %v11632
    %v11704 = vunpack.c.l.b16 %v11633
    %v11705 = vunpack.c.l.b16 %v11634
    %v11706 = vunpack.c.l.b16 %v11635
    %v11707 = vunpack.c.l.b16 %v11636
    %v11708 = vunpack.c.l.b16 %v11637
    %v11709 = vunpack.c.l.b16 %v11638
    %v11710 = vunpack.c.l.b16 %v11639
    %v11711 = vunpack.c.l.b16 %v11640
    %v11712 = vunpack.c.l.b16 %v11641
    %v11713 = vunpack.c.l.b16 %v11642
    %v11714 = vunpack.c.l.b16 %v11643
    %v11715 = vunpack.c.l.b16 %v11644
    %v11716 = vunpack.c.l.b16 %v11645
    %v11717 = vunpack.c.l.b16 %v11646
    %v11718 = vpack.c.b16 %v11687, %v11686
    %v11719 = vpack.c.b16 %v11689, %v11688
    %v11720 = vpack.c.b16 %v11691, %v11690
    %v11721 = vpack.c.b16 %v11693, %v11692
    %v11722 = vpack.c.b16 %v11695, %v11694
    %v11723 = vpack.c.b16 %v11697, %v11696
    %v11724 = vpack.c.b16 %v11699, %v11698
    %v11725 = vpack.c.b16 %v11701, %v11700
    %v11726 = vpack.c.b16 %v11703, %v11702
    %v11727 = vpack.c.b16 %v11705, %v11704
    %v11728 = vpack.c.b16 %v11707, %v11706
    %v11729 = vpack.c.b16 %v11709, %v11708
    %v11730 = vpack.c.b16 %v11711, %v11710
    %v11731 = vpack.c.b16 %v11713, %v11712
    %v11732 = vpack.c.b16 %v11715, %v11714
    %v11733 = vpack.c.b16 %v11717, %v11716
    %11750 = vmatprep.subr.bf16.mxu0 0
    %11751 = vmatpush1.bf16.msra.mxu0 %v11725
    %11752 = vmatprep.subr.bf16.mxu0 0
    %11753 = vmatpush1.bf16.msra.mxu0 %v11724
    %11754 = vmatprep.subr.bf16.mxu0 0
    %11755 = vmatpush1.bf16.msra.mxu0 %v11723
    %11756 = vmatprep.subr.bf16.mxu0 0
    %11757 = vmatpush1.bf16.msra.mxu0 %v11722
    %11758 = vmatprep.subr.bf16.mxu0 0
    %11759 = vmatpush1.bf16.msra.mxu0 %v11721
    %11760 = vmatprep.subr.bf16.mxu0 0
    %11761 = vmatpush1.bf16.msra.mxu0 %v11720
    %11762 = vmatprep.subr.bf16.mxu0 0
    %11763 = vmatpush1.bf16.msra.mxu0 %v11719
    %11764 = vmatprep.subr.bf16.mxu0 0
    %11765 = vmatpush1.bf16.msra.mxu0 %v11718
    %11766 = vmatprep.subr.bf16.mxu0 0
    %11767 = vmatpush2.bf16.msra.mxu0 %v11733
    %11768 = vmatprep.subr.bf16.mxu0 0
    %11769 = vmatpush2.bf16.msra.mxu0 %v11732
    %11770 = vmatprep.subr.bf16.mxu0 0
    %11771 = vmatpush2.bf16.msra.mxu0 %v11731
    %11772 = vmatprep.subr.bf16.mxu0 0
    %11773 = vmatpush2.bf16.msra.mxu0 %v11730
    %11774 = vmatprep.subr.bf16.mxu0 0
    %11775 = vmatpush2.bf16.msra.mxu0 %v11729
    %11776 = vmatprep.subr.bf16.mxu0 0
    %11777 = vmatpush2.bf16.msra.mxu0 %v11728
    %11778 = vmatprep.subr.bf16.mxu0 0
    %11779 = vmatpush2.bf16.msra.mxu0 %v11727
    %11780 = vmatprep.subr.bf16.mxu0 0
    %11781 = vmatpush2.bf16.msra.mxu0 %v11726
    %11782 = vmatprep.mubr.bf16.mxu0 %v11651
    %11783 = vmatmul.mubr.bf16.gmra.mxu0 %v11650
    %v11784 = vpop.f32.mrf.mxu0
    %v11785 = vadd.f32 0.0, %v11784
    %v11786 = vpop.f32.mrf.mxu0
    %v11787 = vpop.f32.mrf.mxu0
    %v11788 = vpop.f32.mrf.mxu0
    %11789 = vdwg.mxu0
    %v11790 = vld [vmem:[#allocation17] sm:$0xf]
    %v11791 = vld [vmem:[#allocation17 + $0x4] sm:$0xf]
    %v11792 = vld [vmem:[#allocation17 + $0x8] sm:$0xf]
    %v11793 = vld [vmem:[#allocation17 + $0xc] sm:$0xf]
    %v11794 = vld [vmem:[#allocation17 + $0x10] sm:$0xf]
    %v11795 = vld [vmem:[#allocation17 + $0x14] sm:$0xf]
    %v11796 = vld [vmem:[#allocation17 + $0x18] sm:$0xf]
    %v11797 = vld [vmem:[#allocation17 + $0x1c] sm:$0xf]
    %v11798 = vld [vmem:[#allocation17 + $0x20] sm:$0xf]
    %v11799 = vld [vmem:[#allocation17 + $0x24] sm:$0xf]
    %v11800 = vld [vmem:[#allocation17 + $0x28] sm:$0xf]
    %v11801 = vld [vmem:[#allocation17 + $0x2c] sm:$0xf]
    %v11802 = vld [vmem:[#allocation17 + $0x30] sm:$0xf]
    %v11803 = vld [vmem:[#allocation17 + $0x34] sm:$0xf]
    %v11804 = vld [vmem:[#allocation17 + $0x38] sm:$0xf]
    %v11805 = vld [vmem:[#allocation17 + $0x3c] sm:$0xf]
    %v11806 = vld [vmem:[#allocation17 + $0x40] sm:$0xf]
    %v11807 = vld [vmem:[#allocation17 + $0x44] sm:$0xf]
    %v11808 = vld [vmem:[#allocation17 + $0x48] sm:$0xf]
    %v11809 = vld [vmem:[#allocation17 + $0x4c] sm:$0xf]
    %v11810 = vld [vmem:[#allocation17 + $0x50] sm:$0xf]
    %v11811 = vld [vmem:[#allocation17 + $0x54] sm:$0xf]
    %v11812 = vld [vmem:[#allocation17 + $0x58] sm:$0xf]
    %v11813 = vld [vmem:[#allocation17 + $0x5c] sm:$0xf]
    %v11814 = vld [vmem:[#allocation17 + $0x60] sm:$0xf]
    %v11815 = vld [vmem:[#allocation17 + $0x64] sm:$0xf]
    %v11816 = vld [vmem:[#allocation17 + $0x68] sm:$0xf]
    %v11817 = vld [vmem:[#allocation17 + $0x6c] sm:$0xf]
    %v11818 = vld [vmem:[#allocation17 + $0x70] sm:$0xf]
    %v11819 = vld [vmem:[#allocation17 + $0x74] sm:$0xf]
    %v11820 = vld [vmem:[#allocation17 + $0x78] sm:$0xf]
    %v11821 = vld [vmem:[#allocation17 + $0x7c] sm:$0xf]
    %v11854 = vunpack.c.l.b16 %v11790
    %v11855 = vunpack.c.l.b16 %v11791
    %v11856 = vunpack.c.l.b16 %v11792
    %v11857 = vunpack.c.l.b16 %v11793
    %v11858 = vunpack.c.l.b16 %v11794
    %v11859 = vunpack.c.l.b16 %v11795
    %v11860 = vunpack.c.l.b16 %v11796
    %v11861 = vunpack.c.l.b16 %v11797
    %v11862 = vunpack.c.l.b16 %v11798
    %v11863 = vunpack.c.l.b16 %v11799
    %v11864 = vunpack.c.l.b16 %v11800
    %v11865 = vunpack.c.l.b16 %v11801
    %v11866 = vunpack.c.l.b16 %v11802
    %v11867 = vunpack.c.l.b16 %v11803
    %v11868 = vunpack.c.l.b16 %v11804
    %v11869 = vunpack.c.l.b16 %v11805
    %v11870 = vunpack.c.l.b16 %v11806
    %v11871 = vunpack.c.l.b16 %v11807
    %v11872 = vunpack.c.l.b16 %v11808
    %v11873 = vunpack.c.l.b16 %v11809
    %v11874 = vunpack.c.l.b16 %v11810
    %v11875 = vunpack.c.l.b16 %v11811
    %v11876 = vunpack.c.l.b16 %v11812
    %v11877 = vunpack.c.l.b16 %v11813
    %v11878 = vunpack.c.l.b16 %v11814
    %v11879 = vunpack.c.l.b16 %v11815
    %v11880 = vunpack.c.l.b16 %v11816
    %v11881 = vunpack.c.l.b16 %v11817
    %v11882 = vunpack.c.l.b16 %v11818
    %v11883 = vunpack.c.l.b16 %v11819
    %v11884 = vunpack.c.l.b16 %v11820
    %v11885 = vunpack.c.l.b16 %v11821
    %v11886 = vpack.c.b16 %v11855, %v11854
    %v11887 = vpack.c.b16 %v11857, %v11856
    %v11888 = vpack.c.b16 %v11859, %v11858
    %v11889 = vpack.c.b16 %v11861, %v11860
    %v11890 = vpack.c.b16 %v11863, %v11862
    %v11891 = vpack.c.b16 %v11865, %v11864
    %v11892 = vpack.c.b16 %v11867, %v11866
    %v11893 = vpack.c.b16 %v11869, %v11868
    %v11894 = vpack.c.b16 %v11871, %v11870
    %v11895 = vpack.c.b16 %v11873, %v11872
    %v11896 = vpack.c.b16 %v11875, %v11874
    %v11897 = vpack.c.b16 %v11877, %v11876
    %v11898 = vpack.c.b16 %v11879, %v11878
    %v11899 = vpack.c.b16 %v11881, %v11880
    %v11900 = vpack.c.b16 %v11883, %v11882
    %v11901 = vpack.c.b16 %v11885, %v11884
    %11918 = vmatprep.subr.bf16.mxu0 0
    %11919 = vmatpush1.bf16.msra.mxu0 %v11893
    %11920 = vmatprep.subr.bf16.mxu0 0
    %11921 = vmatpush1.bf16.msra.mxu0 %v11892
    %11922 = vmatprep.subr.bf16.mxu0 0
    %11923 = vmatpush1.bf16.msra.mxu0 %v11891
    %11924 = vmatprep.subr.bf16.mxu0 0
    %11925 = vmatpush1.bf16.msra.mxu0 %v11890
    %11926 = vmatprep.subr.bf16.mxu0 0
    %11927 = vmatpush1.bf16.msra.mxu0 %v11889
    %11928 = vmatprep.subr.bf16.mxu0 0
    %11929 = vmatpush1.bf16.msra.mxu0 %v11888
    %11930 = vmatprep.subr.bf16.mxu0 0
    %11931 = vmatpush1.bf16.msra.mxu0 %v11887
    %11932 = vmatprep.subr.bf16.mxu0 0
    %11933 = vmatpush1.bf16.msra.mxu0 %v11886
    %11934 = vmatprep.subr.bf16.mxu0 0
    %11935 = vmatpush2.bf16.msra.mxu0 %v11901
    %11936 = vmatprep.subr.bf16.mxu0 0
    %11937 = vmatpush2.bf16.msra.mxu0 %v11900
    %11938 = vmatprep.subr.bf16.mxu0 0
    %11939 = vmatpush2.bf16.msra.mxu0 %v11899
    %11940 = vmatprep.subr.bf16.mxu0 0
    %11941 = vmatpush2.bf16.msra.mxu0 %v11898
    %11942 = vmatprep.subr.bf16.mxu0 0
    %11943 = vmatpush2.bf16.msra.mxu0 %v11897
    %11944 = vmatprep.subr.bf16.mxu0 0
    %11945 = vmatpush2.bf16.msra.mxu0 %v11896
    %11946 = vmatprep.subr.bf16.mxu0 0
    %11947 = vmatpush2.bf16.msra.mxu0 %v11895
    %11948 = vmatprep.subr.bf16.mxu0 0
    %11949 = vmatpush2.bf16.msra.mxu0 %v11894
    %11950 = vmatprep.mubr.bf16.mxu0 %v11651
    %11951 = vmatmul.mubr.bf16.gmra.mxu0 %v11650
    %v11952 = vpop.f32.mrf.mxu0
    %v11953 = vadd.f32 0.0, %v11952
    %v11954 = vpop.f32.mrf.mxu0
    %v11955 = vpop.f32.mrf.mxu0
    %v11956 = vpop.f32.mrf.mxu0
    %11957 = vdwg.mxu0
    %v11958 = vmax.f32 %v11785, %v11953
    %v11959 = vpack.c.bf16 %v11612, %v11612
    %v11960 = vpack.c.bf16 %v11613, %v11613
    %v11961 = vld [vmem:[#allocation19] sm:$0xff]
    %v11962 = vld [vmem:[#allocation19 + $0x8] sm:$0xff]
    %v11963 = vld [vmem:[#allocation19 + $0x10] sm:$0xff]
    %v11964 = vld [vmem:[#allocation19 + $0x18] sm:$0xff]
    %v11965 = vld [vmem:[#allocation19 + $0x20] sm:$0xff]
    %v11966 = vld [vmem:[#allocation19 + $0x28] sm:$0xff]
    %v11967 = vld [vmem:[#allocation19 + $0x30] sm:$0xff]
    %v11968 = vld [vmem:[#allocation19 + $0x38] sm:$0xff]
    %v11969 = vld [vmem:[#allocation19 + $0x40] sm:$0xff]
    %v11970 = vld [vmem:[#allocation19 + $0x48] sm:$0xff]
    %v11971 = vld [vmem:[#allocation19 + $0x50] sm:$0xff]
    %v11972 = vld [vmem:[#allocation19 + $0x58] sm:$0xff]
    %v11973 = vld [vmem:[#allocation19 + $0x60] sm:$0xff]
    %v11974 = vld [vmem:[#allocation19 + $0x68] sm:$0xff]
    %v11975 = vld [vmem:[#allocation19 + $0x70] sm:$0xff]
    %v11976 = vld [vmem:[#allocation19 + $0x78] sm:$0xff]
    %v11977 = vld [vmem:[#allocation19 + $0x80] sm:$0xff]
    %v11978 = vld [vmem:[#allocation19 + $0x88] sm:$0xff]
    %v11979 = vld [vmem:[#allocation19 + $0x90] sm:$0xff]
    %v11980 = vld [vmem:[#allocation19 + $0x98] sm:$0xff]
    %v11981 = vld [vmem:[#allocation19 + $0xa0] sm:$0xff]
    %v11982 = vld [vmem:[#allocation19 + $0xa8] sm:$0xff]
    %v11983 = vld [vmem:[#allocation19 + $0xb0] sm:$0xff]
    %v11984 = vld [vmem:[#allocation19 + $0xb8] sm:$0xff]
    %v11985 = vld [vmem:[#allocation19 + $0xc0] sm:$0xff]
    %v11986 = vld [vmem:[#allocation19 + $0xc8] sm:$0xff]
    %v11987 = vld [vmem:[#allocation19 + $0xd0] sm:$0xff]
    %v11988 = vld [vmem:[#allocation19 + $0xd8] sm:$0xff]
    %v11989 = vld [vmem:[#allocation19 + $0xe0] sm:$0xff]
    %v11990 = vld [vmem:[#allocation19 + $0xe8] sm:$0xff]
    %v11991 = vld [vmem:[#allocation19 + $0xf0] sm:$0xff]
    %v11992 = vld [vmem:[#allocation19 + $0xf8] sm:$0xff]
    %v11993 = vld [vmem:[#allocation19 + $0x100] sm:$0xff]
    %v11994 = vld [vmem:[#allocation19 + $0x108] sm:$0xff]
    %v11995 = vld [vmem:[#allocation19 + $0x110] sm:$0xff]
    %v11996 = vld [vmem:[#allocation19 + $0x118] sm:$0xff]
    %v11997 = vld [vmem:[#allocation19 + $0x120] sm:$0xff]
    %v11998 = vld [vmem:[#allocation19 + $0x128] sm:$0xff]
    %v11999 = vld [vmem:[#allocation19 + $0x130] sm:$0xff]
    %v12000 = vld [vmem:[#allocation19 + $0x138] sm:$0xff]
    %v12001 = vld [vmem:[#allocation19 + $0x140] sm:$0xff]
    %v12002 = vld [vmem:[#allocation19 + $0x148] sm:$0xff]
    %v12003 = vld [vmem:[#allocation19 + $0x150] sm:$0xff]
    %v12004 = vld [vmem:[#allocation19 + $0x158] sm:$0xff]
    %v12005 = vld [vmem:[#allocation19 + $0x160] sm:$0xff]
    %v12006 = vld [vmem:[#allocation19 + $0x168] sm:$0xff]
    %v12007 = vld [vmem:[#allocation19 + $0x170] sm:$0xff]
    %v12008 = vld [vmem:[#allocation19 + $0x178] sm:$0xff]
    %v12009 = vld [vmem:[#allocation19 + $0x180] sm:$0xff]
    %v12010 = vld [vmem:[#allocation19 + $0x188] sm:$0xff]
    %v12011 = vld [vmem:[#allocation19 + $0x190] sm:$0xff]
    %v12012 = vld [vmem:[#allocation19 + $0x198] sm:$0xff]
    %v12013 = vld [vmem:[#allocation19 + $0x1a0] sm:$0xff]
    %v12014 = vld [vmem:[#allocation19 + $0x1a8] sm:$0xff]
    %v12015 = vld [vmem:[#allocation19 + $0x1b0] sm:$0xff]
    %v12016 = vld [vmem:[#allocation19 + $0x1b8] sm:$0xff]
    %v12017 = vld [vmem:[#allocation19 + $0x1c0] sm:$0xff]
    %v12018 = vld [vmem:[#allocation19 + $0x1c8] sm:$0xff]
    %v12019 = vld [vmem:[#allocation19 + $0x1d0] sm:$0xff]
    %v12020 = vld [vmem:[#allocation19 + $0x1d8] sm:$0xff]
    %v12021 = vld [vmem:[#allocation19 + $0x1e0] sm:$0xff]
    %v12022 = vld [vmem:[#allocation19 + $0x1e8] sm:$0xff]
    %v12023 = vld [vmem:[#allocation19 + $0x1f0] sm:$0xff]
    %v12024 = vld [vmem:[#allocation19 + $0x1f8] sm:$0xff]
    %v12025 = vpack.c.bf16 %v11958, %v11958
    %v12026 = vld [vmem:[#allocation20] sm:$0xff]
    %v12027 = vld [vmem:[#allocation20 + $0x8] sm:$0xff]
    %v12028 = vld [vmem:[#allocation20 + $0x10] sm:$0xff]
    %v12029 = vld [vmem:[#allocation20 + $0x18] sm:$0xff]
    %v12030 = vld [vmem:[#allocation20 + $0x20] sm:$0xff]
    %v12031 = vld [vmem:[#allocation20 + $0x28] sm:$0xff]
    %v12032 = vld [vmem:[#allocation20 + $0x30] sm:$0xff]
    %v12033 = vld [vmem:[#allocation20 + $0x38] sm:$0xff]
    %v12034 = vld [vmem:[#allocation20 + $0x40] sm:$0xff]
    %v12035 = vld [vmem:[#allocation20 + $0x48] sm:$0xff]
    %v12036 = vld [vmem:[#allocation20 + $0x50] sm:$0xff]
    %v12037 = vld [vmem:[#allocation20 + $0x58] sm:$0xff]
    %v12038 = vld [vmem:[#allocation20 + $0x60] sm:$0xff]
    %v12039 = vld [vmem:[#allocation20 + $0x68] sm:$0xff]
    %v12040 = vld [vmem:[#allocation20 + $0x70] sm:$0xff]
    %v12041 = vld [vmem:[#allocation20 + $0x78] sm:$0xff]
    %v12042 = vld [vmem:[#allocation20 + $0x80] sm:$0xff]
    %v12043 = vld [vmem:[#allocation20 + $0x88] sm:$0xff]
    %v12044 = vld [vmem:[#allocation20 + $0x90] sm:$0xff]
    %v12045 = vld [vmem:[#allocation20 + $0x98] sm:$0xff]
    %v12046 = vld [vmem:[#allocation20 + $0xa0] sm:$0xff]
    %v12047 = vld [vmem:[#allocation20 + $0xa8] sm:$0xff]
    %v12048 = vld [vmem:[#allocation20 + $0xb0] sm:$0xff]
    %v12049 = vld [vmem:[#allocation20 + $0xb8] sm:$0xff]
    %v12050 = vld [vmem:[#allocation20 + $0xc0] sm:$0xff]
    %v12051 = vld [vmem:[#allocation20 + $0xc8] sm:$0xff]
    %v12052 = vld [vmem:[#allocation20 + $0xd0] sm:$0xff]
    %v12053 = vld [vmem:[#allocation20 + $0xd8] sm:$0xff]
    %v12054 = vld [vmem:[#allocation20 + $0xe0] sm:$0xff]
    %v12055 = vld [vmem:[#allocation20 + $0xe8] sm:$0xff]
    %v12056 = vld [vmem:[#allocation20 + $0xf0] sm:$0xff]
    %v12057 = vld [vmem:[#allocation20 + $0xf8] sm:$0xff]
    %v12090 = vunpack.c.l.b16 %v12026
    %v12091 = vunpack.c.h.b16 %v12026
    %v12092 = vunpack.c.l.b16 %v12027
    %v12093 = vunpack.c.h.b16 %v12027
    %v12094 = vunpack.c.l.b16 %v12028
    %v12095 = vunpack.c.h.b16 %v12028
    %v12096 = vunpack.c.l.b16 %v12029
    %v12097 = vunpack.c.h.b16 %v12029
    %v12098 = vunpack.c.l.b16 %v12030
    %v12099 = vunpack.c.h.b16 %v12030
    %v12100 = vunpack.c.l.b16 %v12031
    %v12101 = vunpack.c.h.b16 %v12031
    %v12102 = vunpack.c.l.b16 %v12032
    %v12103 = vunpack.c.h.b16 %v12032
    %v12104 = vunpack.c.l.b16 %v12033
    %v12105 = vunpack.c.h.b16 %v12033
    %v12106 = vunpack.c.l.b16 %v12034
    %v12107 = vunpack.c.h.b16 %v12034
    %v12108 = vunpack.c.l.b16 %v12035
    %v12109 = vunpack.c.h.b16 %v12035
    %v12110 = vunpack.c.l.b16 %v12036
    %v12111 = vunpack.c.h.b16 %v12036
    %v12112 = vunpack.c.l.b16 %v12037
    %v12113 = vunpack.c.h.b16 %v12037
    %v12114 = vunpack.c.l.b16 %v12038
    %v12115 = vunpack.c.h.b16 %v12038
    %v12116 = vunpack.c.l.b16 %v12039
    %v12117 = vunpack.c.h.b16 %v12039
    %v12118 = vunpack.c.l.b16 %v12040
    %v12119 = vunpack.c.h.b16 %v12040
    %v12120 = vunpack.c.l.b16 %v12041
    %v12121 = vunpack.c.h.b16 %v12041
    %v12122 = vunpack.c.l.b16 %v12042
    %v12123 = vunpack.c.h.b16 %v12042
    %v12124 = vunpack.c.l.b16 %v12043
    %v12125 = vunpack.c.h.b16 %v12043
    %v12126 = vunpack.c.l.b16 %v12044
    %v12127 = vunpack.c.h.b16 %v12044
    %v12128 = vunpack.c.l.b16 %v12045
    %v12129 = vunpack.c.h.b16 %v12045
    %v12130 = vunpack.c.l.b16 %v12046
    %v12131 = vunpack.c.h.b16 %v12046
    %v12132 = vunpack.c.l.b16 %v12047
    %v12133 = vunpack.c.h.b16 %v12047
    %v12134 = vunpack.c.l.b16 %v12048
    %v12135 = vunpack.c.h.b16 %v12048
    %v12136 = vunpack.c.l.b16 %v12049
    %v12137 = vunpack.c.h.b16 %v12049
    %v12138 = vunpack.c.l.b16 %v12050
    %v12139 = vunpack.c.h.b16 %v12050
    %v12140 = vunpack.c.l.b16 %v12051
    %v12141 = vunpack.c.h.b16 %v12051
    %v12142 = vunpack.c.l.b16 %v12052
    %v12143 = vunpack.c.h.b16 %v12052
    %v12144 = vunpack.c.l.b16 %v12053
    %v12145 = vunpack.c.h.b16 %v12053
    %v12146 = vunpack.c.l.b16 %v12054
    %v12147 = vunpack.c.h.b16 %v12054
    %v12148 = vunpack.c.l.b16 %v12055
    %v12149 = vunpack.c.h.b16 %v12055
    %v12150 = vunpack.c.l.b16 %v12056
    %v12151 = vunpack.c.h.b16 %v12056
    %v12152 = vunpack.c.l.b16 %v12057
    %v12153 = vunpack.c.h.b16 %v12057
    %v12154 = vpack.c.b16 %v12094, %v12090
    %v12155 = vpack.c.b16 %v12095, %v12091
    %v12156 = vpack.c.b16 %v12096, %v12092
    %v12157 = vpack.c.b16 %v12097, %v12093
    %v12158 = vpack.c.b16 %v12102, %v12098
    %v12159 = vpack.c.b16 %v12103, %v12099
    %v12160 = vpack.c.b16 %v12104, %v12100
    %v12161 = vpack.c.b16 %v12105, %v12101
    %v12162 = vpack.c.b16 %v12110, %v12106
    %v12163 = vpack.c.b16 %v12111, %v12107
    %v12164 = vpack.c.b16 %v12112, %v12108
    %v12165 = vpack.c.b16 %v12113, %v12109
    %v12166 = vpack.c.b16 %v12118, %v12114
    %v12167 = vpack.c.b16 %v12119, %v12115
    %v12168 = vpack.c.b16 %v12120, %v12116
    %v12169 = vpack.c.b16 %v12121, %v12117
    %v12170 = vpack.c.b16 %v12126, %v12122
    %v12171 = vpack.c.b16 %v12127, %v12123
    %v12172 = vpack.c.b16 %v12128, %v12124
    %v12173 = vpack.c.b16 %v12129, %v12125
    %v12174 = vpack.c.b16 %v12134, %v12130
    %v12175 = vpack.c.b16 %v12135, %v12131
    %v12176 = vpack.c.b16 %v12136, %v12132
    %v12177 = vpack.c.b16 %v12137, %v12133
    %v12178 = vpack.c.b16 %v12142, %v12138
    %v12179 = vpack.c.b16 %v12143, %v12139
    %v12180 = vpack.c.b16 %v12144, %v12140
    %v12181 = vpack.c.b16 %v12145, %v12141
    %v12182 = vpack.c.b16 %v12150, %v12146
    %v12183 = vpack.c.b16 %v12151, %v12147
    %v12184 = vpack.c.b16 %v12152, %v12148
    %v12185 = vpack.c.b16 %v12153, %v12149
    %12218 = vmatprep.subr.bf16.mxu0 %v12183
    %12219 = vmatpush1.bf16.msra.mxu0 %v12182
    %12220 = vmatprep.subr.bf16.mxu0 %v12179
    %12221 = vmatpush1.bf16.msra.mxu0 %v12178
    %12222 = vmatprep.subr.bf16.mxu0 %v12175
    %12223 = vmatpush1.bf16.msra.mxu0 %v12174
    %12224 = vmatprep.subr.bf16.mxu0 %v12171
    %12225 = vmatpush1.bf16.msra.mxu0 %v12170
    %12226 = vmatprep.subr.bf16.mxu0 %v12167
    %12227 = vmatpush1.bf16.msra.mxu0 %v12166
    %12228 = vmatprep.subr.bf16.mxu0 %v12163
    %12229 = vmatpush1.bf16.msra.mxu0 %v12162
    %12230 = vmatprep.subr.bf16.mxu0 %v12159
    %12231 = vmatpush1.bf16.msra.mxu0 %v12158
    %12232 = vmatprep.subr.bf16.mxu0 %v12155
    %12233 = vmatpush1.bf16.msra.mxu0 %v12154
    %12234 = vmatprep.subr.bf16.mxu0 0
    %12235 = vmatpush2.bf16.msra.mxu0 0
    %12236 = vmatprep.subr.bf16.mxu0 0
    %12237 = vmatpush2.bf16.msra.mxu0 0
    %12238 = vmatprep.subr.bf16.mxu0 0
    %12239 = vmatpush2.bf16.msra.mxu0 0
    %12240 = vmatprep.subr.bf16.mxu0 0
    %12241 = vmatpush2.bf16.msra.mxu0 0
    %12242 = vmatprep.subr.bf16.mxu0 0
    %12243 = vmatpush2.bf16.msra.mxu0 0
    %12244 = vmatprep.subr.bf16.mxu0 0
    %12245 = vmatpush2.bf16.msra.mxu0 0
    %12246 = vmatprep.subr.bf16.mxu0 0
    %12247 = vmatpush2.bf16.msra.mxu0 0
    %12248 = vmatprep.subr.bf16.mxu0 0
    %12249 = vmatpush2.bf16.msra.mxu0 0
    %12250 = vmatprep.mubr.bf16.mxu0 0
    %12251 = vmatmul.mubr.bf16.gmra.mxu0 %v12025
    %v12252 = vpop.f32.mrf.mxu0
    %v12253 = vadd.f32 0.0, %v12252
    %v12254 = vpop.f32.mrf.mxu0
    %v12255 = vadd.f32 0.0, %v12254
    %v12256 = vpop.f32.mrf.mxu0
    %v12257 = vpop.f32.mrf.mxu0
    %12258 = vdwg.mxu0
    %12259 = vmatprep.subr.bf16.mxu0 %v12185
    %12260 = vmatpush1.bf16.msra.mxu0 %v12184
    %12261 = vmatprep.subr.bf16.mxu0 %v12181
    %12262 = vmatpush1.bf16.msra.mxu0 %v12180
    %12263 = vmatprep.subr.bf16.mxu0 %v12177
    %12264 = vmatpush1.bf16.msra.mxu0 %v12176
    %12265 = vmatprep.subr.bf16.mxu0 %v12173
    %12266 = vmatpush1.bf16.msra.mxu0 %v12172
    %12267 = vmatprep.subr.bf16.mxu0 %v12169
    %12268 = vmatpush1.bf16.msra.mxu0 %v12168
    %12269 = vmatprep.subr.bf16.mxu0 %v12165
    %12270 = vmatpush1.bf16.msra.mxu0 %v12164
    %12271 = vmatprep.subr.bf16.mxu0 %v12161
    %12272 = vmatpush1.bf16.msra.mxu0 %v12160
    %12273 = vmatprep.subr.bf16.mxu0 %v12157
    %12274 = vmatpush1.bf16.msra.mxu0 %v12156
    %12275 = vmatprep.subr.bf16.mxu0 0
    %12276 = vmatpush2.bf16.msra.mxu0 0
    %12277 = vmatprep.subr.bf16.mxu0 0
    %12278 = vmatpush2.bf16.msra.mxu0 0
    %12279 = vmatprep.subr.bf16.mxu0 0
    %12280 = vmatpush2.bf16.msra.mxu0 0
    %12281 = vmatprep.subr.bf16.mxu0 0
    %12282 = vmatpush2.bf16.msra.mxu0 0
    %12283 = vmatprep.subr.bf16.mxu0 0
    %12284 = vmatpush2.bf16.msra.mxu0 0
    %12285 = vmatprep.subr.bf16.mxu0 0
    %12286 = vmatpush2.bf16.msra.mxu0 0
    %12287 = vmatprep.subr.bf16.mxu0 0
    %12288 = vmatpush2.bf16.msra.mxu0 0
    %12289 = vmatprep.subr.bf16.mxu0 0
    %12290 = vmatpush2.bf16.msra.mxu0 0
    %12291 = vmatprep.mubr.bf16.mxu0 0
    %12292 = vmatmul.mubr.bf16.gmra.mxu0 %v12025
    %v12293 = vpop.f32.mrf.mxu0
    %v12294 = vadd.f32 0.0, %v12293
    %v12295 = vpop.f32.mrf.mxu0
    %v12296 = vadd.f32 0.0, %v12295
    %v12297 = vpop.f32.mrf.mxu0
    %v12298 = vpop.f32.mrf.mxu0
    %12299 = vdwg.mxu0
    %v12364 = vunpack.c.l.b16 %v11961
    %v12365 = vunpack.c.h.b16 %v11961
    %v12366 = vunpack.c.l.b16 %v11962
    %v12367 = vunpack.c.h.b16 %v11962
    %v12368 = vunpack.c.l.b16 %v11963
    %v12369 = vunpack.c.h.b16 %v11963
    %v12370 = vunpack.c.l.b16 %v11964
    %v12371 = vunpack.c.h.b16 %v11964
    %v12372 = vunpack.c.l.b16 %v11965
    %v12373 = vunpack.c.h.b16 %v11965
    %v12374 = vunpack.c.l.b16 %v11966
    %v12375 = vunpack.c.h.b16 %v11966
    %v12376 = vunpack.c.l.b16 %v11967
    %v12377 = vunpack.c.h.b16 %v11967
    %v12378 = vunpack.c.l.b16 %v11968
    %v12379 = vunpack.c.h.b16 %v11968
    %v12380 = vunpack.c.l.b16 %v11969
    %v12381 = vunpack.c.h.b16 %v11969
    %v12382 = vunpack.c.l.b16 %v11970
    %v12383 = vunpack.c.h.b16 %v11970
    %v12384 = vunpack.c.l.b16 %v11971
    %v12385 = vunpack.c.h.b16 %v11971
    %v12386 = vunpack.c.l.b16 %v11972
    %v12387 = vunpack.c.h.b16 %v11972
    %v12388 = vunpack.c.l.b16 %v11973
    %v12389 = vunpack.c.h.b16 %v11973
    %v12390 = vunpack.c.l.b16 %v11974
    %v12391 = vunpack.c.h.b16 %v11974
    %v12392 = vunpack.c.l.b16 %v11975
    %v12393 = vunpack.c.h.b16 %v11975
    %v12394 = vunpack.c.l.b16 %v11976
    %v12395 = vunpack.c.h.b16 %v11976
    %v12396 = vunpack.c.l.b16 %v11977
    %v12397 = vunpack.c.h.b16 %v11977
    %v12398 = vunpack.c.l.b16 %v11978
    %v12399 = vunpack.c.h.b16 %v11978
    %v12400 = vunpack.c.l.b16 %v11979
    %v12401 = vunpack.c.h.b16 %v11979
    %v12402 = vunpack.c.l.b16 %v11980
    %v12403 = vunpack.c.h.b16 %v11980
    %v12404 = vunpack.c.l.b16 %v11981
    %v12405 = vunpack.c.h.b16 %v11981
    %v12406 = vunpack.c.l.b16 %v11982
    %v12407 = vunpack.c.h.b16 %v11982
    %v12408 = vunpack.c.l.b16 %v11983
    %v12409 = vunpack.c.h.b16 %v11983
    %v12410 = vunpack.c.l.b16 %v11984
    %v12411 = vunpack.c.h.b16 %v11984
    %v12412 = vunpack.c.l.b16 %v11985
    %v12413 = vunpack.c.h.b16 %v11985
    %v12414 = vunpack.c.l.b16 %v11986
    %v12415 = vunpack.c.h.b16 %v11986
    %v12416 = vunpack.c.l.b16 %v11987
    %v12417 = vunpack.c.h.b16 %v11987
    %v12418 = vunpack.c.l.b16 %v11988
    %v12419 = vunpack.c.h.b16 %v11988
    %v12420 = vunpack.c.l.b16 %v11989
    %v12421 = vunpack.c.h.b16 %v11989
    %v12422 = vunpack.c.l.b16 %v11990
    %v12423 = vunpack.c.h.b16 %v11990
    %v12424 = vunpack.c.l.b16 %v11991
    %v12425 = vunpack.c.h.b16 %v11991
    %v12426 = vunpack.c.l.b16 %v11992
    %v12427 = vunpack.c.h.b16 %v11992
    %v12428 = vunpack.c.l.b16 %v11993
    %v12429 = vunpack.c.h.b16 %v11993
    %v12430 = vunpack.c.l.b16 %v11994
    %v12431 = vunpack.c.h.b16 %v11994
    %v12432 = vunpack.c.l.b16 %v11995
    %v12433 = vunpack.c.h.b16 %v11995
    %v12434 = vunpack.c.l.b16 %v11996
    %v12435 = vunpack.c.h.b16 %v11996
    %v12436 = vunpack.c.l.b16 %v11997
    %v12437 = vunpack.c.h.b16 %v11997
    %v12438 = vunpack.c.l.b16 %v11998
    %v12439 = vunpack.c.h.b16 %v11998
    %v12440 = vunpack.c.l.b16 %v11999
    %v12441 = vunpack.c.h.b16 %v11999
    %v12442 = vunpack.c.l.b16 %v12000
    %v12443 = vunpack.c.h.b16 %v12000
    %v12444 = vunpack.c.l.b16 %v12001
    %v12445 = vunpack.c.h.b16 %v12001
    %v12446 = vunpack.c.l.b16 %v12002
    %v12447 = vunpack.c.h.b16 %v12002
    %v12448 = vunpack.c.l.b16 %v12003
    %v12449 = vunpack.c.h.b16 %v12003
    %v12450 = vunpack.c.l.b16 %v12004
    %v12451 = vunpack.c.h.b16 %v12004
    %v12452 = vunpack.c.l.b16 %v12005
    %v12453 = vunpack.c.h.b16 %v12005
    %v12454 = vunpack.c.l.b16 %v12006
    %v12455 = vunpack.c.h.b16 %v12006
    %v12456 = vunpack.c.l.b16 %v12007
    %v12457 = vunpack.c.h.b16 %v12007
    %v12458 = vunpack.c.l.b16 %v12008
    %v12459 = vunpack.c.h.b16 %v12008
    %v12460 = vunpack.c.l.b16 %v12009
    %v12461 = vunpack.c.h.b16 %v12009
    %v12462 = vunpack.c.l.b16 %v12010
    %v12463 = vunpack.c.h.b16 %v12010
    %v12464 = vunpack.c.l.b16 %v12011
    %v12465 = vunpack.c.h.b16 %v12011
    %v12466 = vunpack.c.l.b16 %v12012
    %v12467 = vunpack.c.h.b16 %v12012
    %v12468 = vunpack.c.l.b16 %v12013
    %v12469 = vunpack.c.h.b16 %v12013
    %v12470 = vunpack.c.l.b16 %v12014
    %v12471 = vunpack.c.h.b16 %v12014
    %v12472 = vunpack.c.l.b16 %v12015
    %v12473 = vunpack.c.h.b16 %v12015
    %v12474 = vunpack.c.l.b16 %v12016
    %v12475 = vunpack.c.h.b16 %v12016
    %v12476 = vunpack.c.l.b16 %v12017
    %v12477 = vunpack.c.h.b16 %v12017
    %v12478 = vunpack.c.l.b16 %v12018
    %v12479 = vunpack.c.h.b16 %v12018
    %v12480 = vunpack.c.l.b16 %v12019
    %v12481 = vunpack.c.h.b16 %v12019
    %v12482 = vunpack.c.l.b16 %v12020
    %v12483 = vunpack.c.h.b16 %v12020
    %v12484 = vunpack.c.l.b16 %v12021
    %v12485 = vunpack.c.h.b16 %v12021
    %v12486 = vunpack.c.l.b16 %v12022
    %v12487 = vunpack.c.h.b16 %v12022
    %v12488 = vunpack.c.l.b16 %v12023
    %v12489 = vunpack.c.h.b16 %v12023
    %v12490 = vunpack.c.l.b16 %v12024
    %v12491 = vunpack.c.h.b16 %v12024
    %v12492 = vpack.c.b16 %v12368, %v12364
    %v12493 = vpack.c.b16 %v12369, %v12365
    %v12494 = vpack.c.b16 %v12370, %v12366
    %v12495 = vpack.c.b16 %v12371, %v12367
    %v12496 = vpack.c.b16 %v12376, %v12372
    %v12497 = vpack.c.b16 %v12377, %v12373
    %v12498 = vpack.c.b16 %v12378, %v12374
    %v12499 = vpack.c.b16 %v12379, %v12375
    %v12500 = vpack.c.b16 %v12384, %v12380
    %v12501 = vpack.c.b16 %v12385, %v12381
    %v12502 = vpack.c.b16 %v12386, %v12382
    %v12503 = vpack.c.b16 %v12387, %v12383
    %v12504 = vpack.c.b16 %v12392, %v12388
    %v12505 = vpack.c.b16 %v12393, %v12389
    %v12506 = vpack.c.b16 %v12394, %v12390
    %v12507 = vpack.c.b16 %v12395, %v12391
    %v12508 = vpack.c.b16 %v12400, %v12396
    %v12509 = vpack.c.b16 %v12401, %v12397
    %v12510 = vpack.c.b16 %v12402, %v12398
    %v12511 = vpack.c.b16 %v12403, %v12399
    %v12512 = vpack.c.b16 %v12408, %v12404
    %v12513 = vpack.c.b16 %v12409, %v12405
    %v12514 = vpack.c.b16 %v12410, %v12406
    %v12515 = vpack.c.b16 %v12411, %v12407
    %v12516 = vpack.c.b16 %v12416, %v12412
    %v12517 = vpack.c.b16 %v12417, %v12413
    %v12518 = vpack.c.b16 %v12418, %v12414
    %v12519 = vpack.c.b16 %v12419, %v12415
    %v12520 = vpack.c.b16 %v12424, %v12420
    %v12521 = vpack.c.b16 %v12425, %v12421
    %v12522 = vpack.c.b16 %v12426, %v12422
    %v12523 = vpack.c.b16 %v12427, %v12423
    %v12524 = vpack.c.b16 %v12432, %v12428
    %v12525 = vpack.c.b16 %v12433, %v12429
    %v12526 = vpack.c.b16 %v12434, %v12430
    %v12527 = vpack.c.b16 %v12435, %v12431
    %v12528 = vpack.c.b16 %v12440, %v12436
    %v12529 = vpack.c.b16 %v12441, %v12437
    %v12530 = vpack.c.b16 %v12442, %v12438
    %v12531 = vpack.c.b16 %v12443, %v12439
    %v12532 = vpack.c.b16 %v12448, %v12444
    %v12533 = vpack.c.b16 %v12449, %v12445
    %v12534 = vpack.c.b16 %v12450, %v12446
    %v12535 = vpack.c.b16 %v12451, %v12447
    %v12536 = vpack.c.b16 %v12456, %v12452
    %v12537 = vpack.c.b16 %v12457, %v12453
    %v12538 = vpack.c.b16 %v12458, %v12454
    %v12539 = vpack.c.b16 %v12459, %v12455
    %v12540 = vpack.c.b16 %v12464, %v12460
    %v12541 = vpack.c.b16 %v12465, %v12461
    %v12542 = vpack.c.b16 %v12466, %v12462
    %v12543 = vpack.c.b16 %v12467, %v12463
    %v12544 = vpack.c.b16 %v12472, %v12468
    %v12545 = vpack.c.b16 %v12473, %v12469
    %v12546 = vpack.c.b16 %v12474, %v12470
    %v12547 = vpack.c.b16 %v12475, %v12471
    %v12548 = vpack.c.b16 %v12480, %v12476
    %v12549 = vpack.c.b16 %v12481, %v12477
    %v12550 = vpack.c.b16 %v12482, %v12478
    %v12551 = vpack.c.b16 %v12483, %v12479
    %v12552 = vpack.c.b16 %v12488, %v12484
    %v12553 = vpack.c.b16 %v12489, %v12485
    %v12554 = vpack.c.b16 %v12490, %v12486
    %v12555 = vpack.c.b16 %v12491, %v12487
    %12620 = vmatprep.subr.bf16.mxu0 %v12521
    %12621 = vmatpush1.bf16.msra.mxu0 %v12520
    %12622 = vmatprep.subr.bf16.mxu0 %v12517
    %12623 = vmatpush1.bf16.msra.mxu0 %v12516
    %12624 = vmatprep.subr.bf16.mxu0 %v12513
    %12625 = vmatpush1.bf16.msra.mxu0 %v12512
    %12626 = vmatprep.subr.bf16.mxu0 %v12509
    %12627 = vmatpush1.bf16.msra.mxu0 %v12508
    %12628 = vmatprep.subr.bf16.mxu0 %v12505
    %12629 = vmatpush1.bf16.msra.mxu0 %v12504
    %12630 = vmatprep.subr.bf16.mxu0 %v12501
    %12631 = vmatpush1.bf16.msra.mxu0 %v12500
    %12632 = vmatprep.subr.bf16.mxu0 %v12497
    %12633 = vmatpush1.bf16.msra.mxu0 %v12496
    %12634 = vmatprep.subr.bf16.mxu0 %v12493
    %12635 = vmatpush1.bf16.msra.mxu0 %v12492
    %12636 = vmatprep.subr.bf16.mxu0 %v12553
    %12637 = vmatpush2.bf16.msra.mxu0 %v12552
    %12638 = vmatprep.subr.bf16.mxu0 %v12549
    %12639 = vmatpush2.bf16.msra.mxu0 %v12548
    %12640 = vmatprep.subr.bf16.mxu0 %v12545
    %12641 = vmatpush2.bf16.msra.mxu0 %v12544
    %12642 = vmatprep.subr.bf16.mxu0 %v12541
    %12643 = vmatpush2.bf16.msra.mxu0 %v12540
    %12644 = vmatprep.subr.bf16.mxu0 %v12537
    %12645 = vmatpush2.bf16.msra.mxu0 %v12536
    %12646 = vmatprep.subr.bf16.mxu0 %v12533
    %12647 = vmatpush2.bf16.msra.mxu0 %v12532
    %12648 = vmatprep.subr.bf16.mxu0 %v12529
    %12649 = vmatpush2.bf16.msra.mxu0 %v12528
    %12650 = vmatprep.subr.bf16.mxu0 %v12525
    %12651 = vmatpush2.bf16.msra.mxu0 %v12524
    %12652 = vmatprep.mubr.bf16.mxu0 %v11960
    %12653 = vmatmul.mubr.bf16.gmra.mxu0 %v11959
    %v12654 = vpop.f32.mrf.mxu0
    %v12655 = vadd.f32 %v12253, %v12654
    %v12656 = vpop.f32.mrf.mxu0
    %v12657 = vadd.f32 %v12255, %v12656
    %v12658 = vpop.f32.mrf.mxu0
    %v12659 = vpop.f32.mrf.mxu0
    %12660 = vdwg.mxu0
    %12661 = vmatprep.subr.bf16.mxu0 %v12523
    %12662 = vmatpush1.bf16.msra.mxu0 %v12522
    %12663 = vmatprep.subr.bf16.mxu0 %v12519
    %12664 = vmatpush1.bf16.msra.mxu0 %v12518
    %12665 = vmatprep.subr.bf16.mxu0 %v12515
    %12666 = vmatpush1.bf16.msra.mxu0 %v12514
    %12667 = vmatprep.subr.bf16.mxu0 %v12511
    %12668 = vmatpush1.bf16.msra.mxu0 %v12510
    %12669 = vmatprep.subr.bf16.mxu0 %v12507
    %12670 = vmatpush1.bf16.msra.mxu0 %v12506
    %12671 = vmatprep.subr.bf16.mxu0 %v12503
    %12672 = vmatpush1.bf16.msra.mxu0 %v12502
    %12673 = vmatprep.subr.bf16.mxu0 %v12499
    %12674 = vmatpush1.bf16.msra.mxu0 %v12498
    %12675 = vmatprep.subr.bf16.mxu0 %v12495
    %12676 = vmatpush1.bf16.msra.mxu0 %v12494
    %12677 = vmatprep.subr.bf16.mxu0 %v12555
    %12678 = vmatpush2.bf16.msra.mxu0 %v12554
    %12679 = vmatprep.subr.bf16.mxu0 %v12551
    %12680 = vmatpush2.bf16.msra.mxu0 %v12550
    %12681 = vmatprep.subr.bf16.mxu0 %v12547
    %12682 = vmatpush2.bf16.msra.mxu0 %v12546
    %12683 = vmatprep.subr.bf16.mxu0 %v12543
    %12684 = vmatpush2.bf16.msra.mxu0 %v12542
    %12685 = vmatprep.subr.bf16.mxu0 %v12539
    %12686 = vmatpush2.bf16.msra.mxu0 %v12538
    %12687 = vmatprep.subr.bf16.mxu0 %v12535
    %12688 = vmatpush2.bf16.msra.mxu0 %v12534
    %12689 = vmatprep.subr.bf16.mxu0 %v12531
    %12690 = vmatpush2.bf16.msra.mxu0 %v12530
    %12691 = vmatprep.subr.bf16.mxu0 %v12527
    %12692 = vmatpush2.bf16.msra.mxu0 %v12526
    %12693 = vmatprep.mubr.bf16.mxu0 %v11960
    %12694 = vmatmul.mubr.bf16.gmra.mxu0 %v11959
    %v12695 = vpop.f32.mrf.mxu0
    %v12696 = vadd.f32 %v12294, %v12695
    %v12697 = vpop.f32.mrf.mxu0
    %v12698 = vadd.f32 %v12296, %v12697
    %v12699 = vpop.f32.mrf.mxu0
    %v12700 = vpop.f32.mrf.mxu0
    %12701 = vdwg.mxu0
    %v12702 = vld [vmem:[#allocation7] sm:$0xf]
    %v12703 = vld [vmem:[#allocation22] sm:$0xff]
    %v12704 = vld [vmem:[#allocation22 + $0x8] sm:$0xff]
    %v12705 = vld [vmem:[#allocation22 + $0x10] sm:$0xff]
    %v12706 = vld [vmem:[#allocation22 + $0x18] sm:$0xff]
    %v12707 = vld [vmem:[#allocation22 + $0x20] sm:$0xff]
    %v12708 = vld [vmem:[#allocation22 + $0x28] sm:$0xff]
    %v12709 = vld [vmem:[#allocation22 + $0x30] sm:$0xff]
    %v12710 = vld [vmem:[#allocation22 + $0x38] sm:$0xff]
    %v12711 = vld [vmem:[#allocation22 + $0x40] sm:$0xff]
    %v12712 = vld [vmem:[#allocation22 + $0x48] sm:$0xff]
    %v12713 = vld [vmem:[#allocation22 + $0x50] sm:$0xff]
    %v12714 = vld [vmem:[#allocation22 + $0x58] sm:$0xff]
    %v12715 = vld [vmem:[#allocation22 + $0x60] sm:$0xff]
    %v12716 = vld [vmem:[#allocation22 + $0x68] sm:$0xff]
    %v12717 = vld [vmem:[#allocation22 + $0x70] sm:$0xff]
    %v12718 = vld [vmem:[#allocation22 + $0x78] sm:$0xff]
    %v12719 = vld [vmem:[#allocation22 + $0x80] sm:$0xff]
    %v12720 = vld [vmem:[#allocation22 + $0x88] sm:$0xff]
    %v12721 = vld [vmem:[#allocation22 + $0x90] sm:$0xff]
    %v12722 = vld [vmem:[#allocation22 + $0x98] sm:$0xff]
    %v12723 = vld [vmem:[#allocation22 + $0xa0] sm:$0xff]
    %v12724 = vld [vmem:[#allocation22 + $0xa8] sm:$0xff]
    %v12725 = vld [vmem:[#allocation22 + $0xb0] sm:$0xff]
    %v12726 = vld [vmem:[#allocation22 + $0xb8] sm:$0xff]
    %v12727 = vld [vmem:[#allocation22 + $0xc0] sm:$0xff]
    %v12728 = vld [vmem:[#allocation22 + $0xc8] sm:$0xff]
    %v12729 = vld [vmem:[#allocation22 + $0xd0] sm:$0xff]
    %v12730 = vld [vmem:[#allocation22 + $0xd8] sm:$0xff]
    %v12731 = vld [vmem:[#allocation22 + $0xe0] sm:$0xff]
    %v12732 = vld [vmem:[#allocation22 + $0xe8] sm:$0xff]
    %v12733 = vld [vmem:[#allocation22 + $0xf0] sm:$0xff]
    %v12734 = vld [vmem:[#allocation22 + $0xf8] sm:$0xff]
    %v12767 = vunpack.c.l.b16 %v12703
    %v12768 = vunpack.c.h.b16 %v12703
    %v12769 = vunpack.c.l.b16 %v12704
    %v12770 = vunpack.c.h.b16 %v12704
    %v12771 = vunpack.c.l.b16 %v12705
    %v12772 = vunpack.c.h.b16 %v12705
    %v12773 = vunpack.c.l.b16 %v12706
    %v12774 = vunpack.c.h.b16 %v12706
    %v12775 = vunpack.c.l.b16 %v12707
    %v12776 = vunpack.c.h.b16 %v12707
    %v12777 = vunpack.c.l.b16 %v12708
    %v12778 = vunpack.c.h.b16 %v12708
    %v12779 = vunpack.c.l.b16 %v12709
    %v12780 = vunpack.c.h.b16 %v12709
    %v12781 = vunpack.c.l.b16 %v12710
    %v12782 = vunpack.c.h.b16 %v12710
    %v12783 = vunpack.c.l.b16 %v12711
    %v12784 = vunpack.c.h.b16 %v12711
    %v12785 = vunpack.c.l.b16 %v12712
    %v12786 = vunpack.c.h.b16 %v12712
    %v12787 = vunpack.c.l.b16 %v12713
    %v12788 = vunpack.c.h.b16 %v12713
    %v12789 = vunpack.c.l.b16 %v12714
    %v12790 = vunpack.c.h.b16 %v12714
    %v12791 = vunpack.c.l.b16 %v12715
    %v12792 = vunpack.c.h.b16 %v12715
    %v12793 = vunpack.c.l.b16 %v12716
    %v12794 = vunpack.c.h.b16 %v12716
    %v12795 = vunpack.c.l.b16 %v12717
    %v12796 = vunpack.c.h.b16 %v12717
    %v12797 = vunpack.c.l.b16 %v12718
    %v12798 = vunpack.c.h.b16 %v12718
    %v12799 = vunpack.c.l.b16 %v12719
    %v12800 = vunpack.c.h.b16 %v12719
    %v12801 = vunpack.c.l.b16 %v12720
    %v12802 = vunpack.c.h.b16 %v12720
    %v12803 = vunpack.c.l.b16 %v12721
    %v12804 = vunpack.c.h.b16 %v12721
    %v12805 = vunpack.c.l.b16 %v12722
    %v12806 = vunpack.c.h.b16 %v12722
    %v12807 = vunpack.c.l.b16 %v12723
    %v12808 = vunpack.c.h.b16 %v12723
    %v12809 = vunpack.c.l.b16 %v12724
    %v12810 = vunpack.c.h.b16 %v12724
    %v12811 = vunpack.c.l.b16 %v12725
    %v12812 = vunpack.c.h.b16 %v12725
    %v12813 = vunpack.c.l.b16 %v12726
    %v12814 = vunpack.c.h.b16 %v12726
    %v12815 = vunpack.c.l.b16 %v12727
    %v12816 = vunpack.c.h.b16 %v12727
    %v12817 = vunpack.c.l.b16 %v12728
    %v12818 = vunpack.c.h.b16 %v12728
    %v12819 = vunpack.c.l.b16 %v12729
    %v12820 = vunpack.c.h.b16 %v12729
    %v12821 = vunpack.c.l.b16 %v12730
    %v12822 = vunpack.c.h.b16 %v12730
    %v12823 = vunpack.c.l.b16 %v12731
    %v12824 = vunpack.c.h.b16 %v12731
    %v12825 = vunpack.c.l.b16 %v12732
    %v12826 = vunpack.c.h.b16 %v12732
    %v12827 = vunpack.c.l.b16 %v12733
    %v12828 = vunpack.c.h.b16 %v12733
    %v12829 = vunpack.c.l.b16 %v12734
    %v12830 = vunpack.c.h.b16 %v12734
    %v12831 = vpack.c.b16 %v12771, %v12767
    %v12832 = vpack.c.b16 %v12772, %v12768
    %v12833 = vpack.c.b16 %v12773, %v12769
    %v12834 = vpack.c.b16 %v12774, %v12770
    %v12835 = vpack.c.b16 %v12779, %v12775
    %v12836 = vpack.c.b16 %v12780, %v12776
    %v12837 = vpack.c.b16 %v12781, %v12777
    %v12838 = vpack.c.b16 %v12782, %v12778
    %v12839 = vpack.c.b16 %v12787, %v12783
    %v12840 = vpack.c.b16 %v12788, %v12784
    %v12841 = vpack.c.b16 %v12789, %v12785
    %v12842 = vpack.c.b16 %v12790, %v12786
    %v12843 = vpack.c.b16 %v12795, %v12791
    %v12844 = vpack.c.b16 %v12796, %v12792
    %v12845 = vpack.c.b16 %v12797, %v12793
    %v12846 = vpack.c.b16 %v12798, %v12794
    %v12847 = vpack.c.b16 %v12803, %v12799
    %v12848 = vpack.c.b16 %v12804, %v12800
    %v12849 = vpack.c.b16 %v12805, %v12801
    %v12850 = vpack.c.b16 %v12806, %v12802
    %v12851 = vpack.c.b16 %v12811, %v12807
    %v12852 = vpack.c.b16 %v12812, %v12808
    %v12853 = vpack.c.b16 %v12813, %v12809
    %v12854 = vpack.c.b16 %v12814, %v12810
    %v12855 = vpack.c.b16 %v12819, %v12815
    %v12856 = vpack.c.b16 %v12820, %v12816
    %v12857 = vpack.c.b16 %v12821, %v12817
    %v12858 = vpack.c.b16 %v12822, %v12818
    %v12859 = vpack.c.b16 %v12827, %v12823
    %v12860 = vpack.c.b16 %v12828, %v12824
    %v12861 = vpack.c.b16 %v12829, %v12825
    %v12862 = vpack.c.b16 %v12830, %v12826
    %12895 = vmatprep.subr.bf16.mxu0 %v12860
    %12896 = vmatpush1.bf16.msra.mxu0 %v12859
    %12897 = vmatprep.subr.bf16.mxu0 %v12856
    %12898 = vmatpush1.bf16.msra.mxu0 %v12855
    %12899 = vmatprep.subr.bf16.mxu0 %v12852
    %12900 = vmatpush1.bf16.msra.mxu0 %v12851
    %12901 = vmatprep.subr.bf16.mxu0 %v12848
    %12902 = vmatpush1.bf16.msra.mxu0 %v12847
    %12903 = vmatprep.subr.bf16.mxu0 %v12844
    %12904 = vmatpush1.bf16.msra.mxu0 %v12843
    %12905 = vmatprep.subr.bf16.mxu0 %v12840
    %12906 = vmatpush1.bf16.msra.mxu0 %v12839
    %12907 = vmatprep.subr.bf16.mxu0 %v12836
    %12908 = vmatpush1.bf16.msra.mxu0 %v12835
    %12909 = vmatprep.subr.bf16.mxu0 %v12832
    %12910 = vmatpush1.bf16.msra.mxu0 %v12831
    %12911 = vmatprep.subr.bf16.mxu0 0
    %12912 = vmatpush2.bf16.msra.mxu0 0
    %12913 = vmatprep.subr.bf16.mxu0 0
    %12914 = vmatpush2.bf16.msra.mxu0 0
    %12915 = vmatprep.subr.bf16.mxu0 0
    %12916 = vmatpush2.bf16.msra.mxu0 0
    %12917 = vmatprep.subr.bf16.mxu0 0
    %12918 = vmatpush2.bf16.msra.mxu0 0
    %12919 = vmatprep.subr.bf16.mxu0 0
    %12920 = vmatpush2.bf16.msra.mxu0 0
    %12921 = vmatprep.subr.bf16.mxu0 0
    %12922 = vmatpush2.bf16.msra.mxu0 0
    %12923 = vmatprep.subr.bf16.mxu0 0
    %12924 = vmatpush2.bf16.msra.mxu0 0
    %12925 = vmatprep.subr.bf16.mxu0 0
    %12926 = vmatpush2.bf16.msra.mxu0 0
    %12927 = vmatprep.mubr.bf16.mxu0 0
    %12928 = vmatmul.mubr.bf16.gmra.mxu0 %v12702
    %v12929 = vpop.f32.mrf.mxu0
    %v12930 = vadd.f32 0.0, %v12929
    %v12931 = vpop.f32.mrf.mxu0
    %v12932 = vadd.f32 0.0, %v12931
    %v12933 = vpop.f32.mrf.mxu0
    %v12934 = vpop.f32.mrf.mxu0
    %12935 = vdwg.mxu0
    %12936 = vmatprep.subr.bf16.mxu0 %v12862
    %12937 = vmatpush1.bf16.msra.mxu0 %v12861
    %12938 = vmatprep.subr.bf16.mxu0 %v12858
    %12939 = vmatpush1.bf16.msra.mxu0 %v12857
    %12940 = vmatprep.subr.bf16.mxu0 %v12854
    %12941 = vmatpush1.bf16.msra.mxu0 %v12853
    %12942 = vmatprep.subr.bf16.mxu0 %v12850
    %12943 = vmatpush1.bf16.msra.mxu0 %v12849
    %12944 = vmatprep.subr.bf16.mxu0 %v12846
    %12945 = vmatpush1.bf16.msra.mxu0 %v12845
    %12946 = vmatprep.subr.bf16.mxu0 %v12842
    %12947 = vmatpush1.bf16.msra.mxu0 %v12841
    %12948 = vmatprep.subr.bf16.mxu0 %v12838
    %12949 = vmatpush1.bf16.msra.mxu0 %v12837
    %12950 = vmatprep.subr.bf16.mxu0 %v12834
    %12951 = vmatpush1.bf16.msra.mxu0 %v12833
    %12952 = vmatprep.subr.bf16.mxu0 0
    %12953 = vmatpush2.bf16.msra.mxu0 0
    %12954 = vmatprep.subr.bf16.mxu0 0
    %12955 = vmatpush2.bf16.msra.mxu0 0
    %12956 = vmatprep.subr.bf16.mxu0 0
    %12957 = vmatpush2.bf16.msra.mxu0 0
    %12958 = vmatprep.subr.bf16.mxu0 0
    %12959 = vmatpush2.bf16.msra.mxu0 0
    %12960 = vmatprep.subr.bf16.mxu0 0
    %12961 = vmatpush2.bf16.msra.mxu0 0
    %12962 = vmatprep.subr.bf16.mxu0 0
    %12963 = vmatpush2.bf16.msra.mxu0 0
    %12964 = vmatprep.subr.bf16.mxu0 0
    %12965 = vmatpush2.bf16.msra.mxu0 0
    %12966 = vmatprep.subr.bf16.mxu0 0
    %12967 = vmatpush2.bf16.msra.mxu0 0
    %12968 = vmatprep.mubr.bf16.mxu0 0
    %12969 = vmatmul.mubr.bf16.gmra.mxu0 %v12702
    %v12970 = vpop.f32.mrf.mxu0
    %v12971 = vadd.f32 0.0, %v12970
    %v12972 = vpop.f32.mrf.mxu0
    %v12973 = vadd.f32 0.0, %v12972
    %v12974 = vpop.f32.mrf.mxu0
    %v12975 = vpop.f32.mrf.mxu0
    %12976 = vdwg.mxu0
    %v12977 = vadd.f32 %v12655, %v12930
    %v12978 = vadd.f32 %v12657, %v12932
    %v12979 = vadd.f32 %v12696, %v12971
    %v12980 = vadd.f32 %v12698, %v12973
    %v12981 = vld [vmem:[#allocation23] sm:$0xf]
    %v12983 = vlaneseq
    %v12984 = vshrl.u32 %v12983, 7
    %v12985 = vsub.s32 0, %v12984
    %v12986 = vrot.slane %v12981, %v12985
    %v12987 = vlaneseq
    %v12988 = vshrl.u32 %v12987, 7
    %v12989 = vsub.s32 1, %v12988
    %v12990 = vrot.slane %v12981, %v12989
    %v12991 = vlaneseq
    %v12992 = vshrl.u32 %v12991, 7
    %v12993 = vsub.s32 2, %v12992
    %v12994 = vrot.slane %v12981, %v12993
    %v12995 = vlaneseq
    %v12996 = vshrl.u32 %v12995, 7
    %v12997 = vsub.s32 3, %v12996
    %v12998 = vrot.slane %v12981, %v12997
    %v13003 = vadd.f32 %v12977, %v12986
    %v13004 = vadd.f32 %v12978, %v12990
    %v13005 = vadd.f32 %v12979, %v12994
    %v13006 = vadd.f32 %v12980, %v12998
    %vm13007 = vcmp.gt.f32.partialorder %v13003, 0.0
    %vm13008 = vcmp.gt.f32.partialorder %v13004, 0.0
    %vm13009 = vcmp.gt.f32.partialorder %v13005, 0.0
    %vm13010 = vcmp.gt.f32.partialorder %v13006, 0.0
    %v13011 = vmin.f32 %v13003, 0.0
    %v13012 = vmin.f32 %v13004, 0.0
    %v13013 = vmin.f32 %v13005, 0.0
    %v13014 = vmin.f32 %v13006, 0.0
    %v13015 = vmul.f32 %v13011, 1.442695
    %v13016 = vpow.pop %v13015
    %v13017 = vmul.f32 %v13012, 1.442695
    %v13018 = vpow.pop %v13017
    %v13019 = vmul.f32 %v13013, 1.442695
    %v13020 = vpow.pop %v13019
    %v13021 = vmul.f32 %v13014, 1.442695
    %v13022 = vpow.pop %v13021
    %v13023 = vsub.f32 %v13016, 1.0
    %v13024 = vsub.f32 %v13018, 1.0
    %v13025 = vsub.f32 %v13020, 1.0
    %v13026 = vsub.f32 %v13022, 1.0
    %v13027 = vsel %vm13007, %v13003, %v13023
    %v13028 = vsel %vm13008, %v13004, %v13024
    %v13029 = vsel %vm13009, %v13005, %v13025
    %v13030 = vsel %vm13010, %v13006, %v13026
    %v13031 = vpack.c.bf16 %v13027, %v13027
    %v13032 = vpack.c.bf16 %v13028, %v13028
    %v13033 = vpack.c.bf16 %v13029, %v13029
    %v13034 = vpack.c.bf16 %v13030, %v13030
    %v13035 = vld [vmem:[#allocation25] sm:$0xff]
    %v13036 = vld [vmem:[#allocation25 + $0x8] sm:$0xff]
    %v13037 = vld [vmem:[#allocation25 + $0x10] sm:$0xff]
    %v13038 = vld [vmem:[#allocation25 + $0x18] sm:$0xff]
    %v13039 = vld [vmem:[#allocation25 + $0x20] sm:$0xff]
    %v13040 = vld [vmem:[#allocation25 + $0x28] sm:$0xff]
    %v13041 = vld [vmem:[#allocation25 + $0x30] sm:$0xff]
    %v13042 = vld [vmem:[#allocation25 + $0x38] sm:$0xff]
    %v13043 = vld [vmem:[#allocation25 + $0x40] sm:$0xff]
    %v13044 = vld [vmem:[#allocation25 + $0x48] sm:$0xff]
    %v13045 = vld [vmem:[#allocation25 + $0x50] sm:$0xff]
    %v13046 = vld [vmem:[#allocation25 + $0x58] sm:$0xff]
    %v13047 = vld [vmem:[#allocation25 + $0x60] sm:$0xff]
    %v13048 = vld [vmem:[#allocation25 + $0x68] sm:$0xff]
    %v13049 = vld [vmem:[#allocation25 + $0x70] sm:$0xff]
    %v13050 = vld [vmem:[#allocation25 + $0x78] sm:$0xff]
    %v13051 = vld [vmem:[#allocation25 + $0x80] sm:$0xff]
    %v13052 = vld [vmem:[#allocation25 + $0x88] sm:$0xff]
    %v13053 = vld [vmem:[#allocation25 + $0x90] sm:$0xff]
    %v13054 = vld [vmem:[#allocation25 + $0x98] sm:$0xff]
    %v13055 = vld [vmem:[#allocation25 + $0xa0] sm:$0xff]
    %v13056 = vld [vmem:[#allocation25 + $0xa8] sm:$0xff]
    %v13057 = vld [vmem:[#allocation25 + $0xb0] sm:$0xff]
    %v13058 = vld [vmem:[#allocation25 + $0xb8] sm:$0xff]
    %v13059 = vld [vmem:[#allocation25 + $0xc0] sm:$0xff]
    %v13060 = vld [vmem:[#allocation25 + $0xc8] sm:$0xff]
    %v13061 = vld [vmem:[#allocation25 + $0xd0] sm:$0xff]
    %v13062 = vld [vmem:[#allocation25 + $0xd8] sm:$0xff]
    %v13063 = vld [vmem:[#allocation25 + $0xe0] sm:$0xff]
    %v13064 = vld [vmem:[#allocation25 + $0xe8] sm:$0xff]
    %v13065 = vld [vmem:[#allocation25 + $0xf0] sm:$0xff]
    %v13066 = vld [vmem:[#allocation25 + $0xf8] sm:$0xff]
    %v13067 = vld [vmem:[#allocation25 + $0x100] sm:$0xff]
    %v13068 = vld [vmem:[#allocation25 + $0x108] sm:$0xff]
    %v13069 = vld [vmem:[#allocation25 + $0x110] sm:$0xff]
    %v13070 = vld [vmem:[#allocation25 + $0x118] sm:$0xff]
    %v13071 = vld [vmem:[#allocation25 + $0x120] sm:$0xff]
    %v13072 = vld [vmem:[#allocation25 + $0x128] sm:$0xff]
    %v13073 = vld [vmem:[#allocation25 + $0x130] sm:$0xff]
    %v13074 = vld [vmem:[#allocation25 + $0x138] sm:$0xff]
    %v13075 = vld [vmem:[#allocation25 + $0x140] sm:$0xff]
    %v13076 = vld [vmem:[#allocation25 + $0x148] sm:$0xff]
    %v13077 = vld [vmem:[#allocation25 + $0x150] sm:$0xff]
    %v13078 = vld [vmem:[#allocation25 + $0x158] sm:$0xff]
    %v13079 = vld [vmem:[#allocation25 + $0x160] sm:$0xff]
    %v13080 = vld [vmem:[#allocation25 + $0x168] sm:$0xff]
    %v13081 = vld [vmem:[#allocation25 + $0x170] sm:$0xff]
    %v13082 = vld [vmem:[#allocation25 + $0x178] sm:$0xff]
    %v13083 = vld [vmem:[#allocation25 + $0x180] sm:$0xff]
    %v13084 = vld [vmem:[#allocation25 + $0x188] sm:$0xff]
    %v13085 = vld [vmem:[#allocation25 + $0x190] sm:$0xff]
    %v13086 = vld [vmem:[#allocation25 + $0x198] sm:$0xff]
    %v13087 = vld [vmem:[#allocation25 + $0x1a0] sm:$0xff]
    %v13088 = vld [vmem:[#allocation25 + $0x1a8] sm:$0xff]
    %v13089 = vld [vmem:[#allocation25 + $0x1b0] sm:$0xff]
    %v13090 = vld [vmem:[#allocation25 + $0x1b8] sm:$0xff]
    %v13091 = vld [vmem:[#allocation25 + $0x1c0] sm:$0xff]
    %v13092 = vld [vmem:[#allocation25 + $0x1c8] sm:$0xff]
    %v13093 = vld [vmem:[#allocation25 + $0x1d0] sm:$0xff]
    %v13094 = vld [vmem:[#allocation25 + $0x1d8] sm:$0xff]
    %v13095 = vld [vmem:[#allocation25 + $0x1e0] sm:$0xff]
    %v13096 = vld [vmem:[#allocation25 + $0x1e8] sm:$0xff]
    %v13097 = vld [vmem:[#allocation25 + $0x1f0] sm:$0xff]
    %v13098 = vld [vmem:[#allocation25 + $0x1f8] sm:$0xff]
    %v13099 = vld [vmem:[#allocation26] sm:$0x3]
    %v13101 = vlaneseq
    %v13102 = vshrl.u32 %v13101, 7
    %v13103 = vsub.s32 0, %v13102
    %v13104 = vrot.slane %v13099, %v13103
    %v13105 = vlaneseq
    %v13106 = vshrl.u32 %v13105, 7
    %v13107 = vsub.s32 1, %v13106
    %v13108 = vrot.slane %v13099, %v13107
    %v13175 = vunpack.c.l.b16 %v13035
    %v13176 = vunpack.c.h.b16 %v13035
    %v13177 = vunpack.c.l.b16 %v13036
    %v13178 = vunpack.c.h.b16 %v13036
    %v13179 = vunpack.c.l.b16 %v13037
    %v13180 = vunpack.c.h.b16 %v13037
    %v13181 = vunpack.c.l.b16 %v13038
    %v13182 = vunpack.c.h.b16 %v13038
    %v13183 = vunpack.c.l.b16 %v13039
    %v13184 = vunpack.c.h.b16 %v13039
    %v13185 = vunpack.c.l.b16 %v13040
    %v13186 = vunpack.c.h.b16 %v13040
    %v13187 = vunpack.c.l.b16 %v13041
    %v13188 = vunpack.c.h.b16 %v13041
    %v13189 = vunpack.c.l.b16 %v13042
    %v13190 = vunpack.c.h.b16 %v13042
    %v13191 = vunpack.c.l.b16 %v13043
    %v13192 = vunpack.c.h.b16 %v13043
    %v13193 = vunpack.c.l.b16 %v13044
    %v13194 = vunpack.c.h.b16 %v13044
    %v13195 = vunpack.c.l.b16 %v13045
    %v13196 = vunpack.c.h.b16 %v13045
    %v13197 = vunpack.c.l.b16 %v13046
    %v13198 = vunpack.c.h.b16 %v13046
    %v13199 = vunpack.c.l.b16 %v13047
    %v13200 = vunpack.c.h.b16 %v13047
    %v13201 = vunpack.c.l.b16 %v13048
    %v13202 = vunpack.c.h.b16 %v13048
    %v13203 = vunpack.c.l.b16 %v13049
    %v13204 = vunpack.c.h.b16 %v13049
    %v13205 = vunpack.c.l.b16 %v13050
    %v13206 = vunpack.c.h.b16 %v13050
    %v13207 = vunpack.c.l.b16 %v13051
    %v13208 = vunpack.c.h.b16 %v13051
    %v13209 = vunpack.c.l.b16 %v13052
    %v13210 = vunpack.c.h.b16 %v13052
    %v13211 = vunpack.c.l.b16 %v13053
    %v13212 = vunpack.c.h.b16 %v13053
    %v13213 = vunpack.c.l.b16 %v13054
    %v13214 = vunpack.c.h.b16 %v13054
    %v13215 = vunpack.c.l.b16 %v13055
    %v13216 = vunpack.c.h.b16 %v13055
    %v13217 = vunpack.c.l.b16 %v13056
    %v13218 = vunpack.c.h.b16 %v13056
    %v13219 = vunpack.c.l.b16 %v13057
    %v13220 = vunpack.c.h.b16 %v13057
    %v13221 = vunpack.c.l.b16 %v13058
    %v13222 = vunpack.c.h.b16 %v13058
    %v13223 = vunpack.c.l.b16 %v13059
    %v13224 = vunpack.c.h.b16 %v13059
    %v13225 = vunpack.c.l.b16 %v13060
    %v13226 = vunpack.c.h.b16 %v13060
    %v13227 = vunpack.c.l.b16 %v13061
    %v13228 = vunpack.c.h.b16 %v13061
    %v13229 = vunpack.c.l.b16 %v13062
    %v13230 = vunpack.c.h.b16 %v13062
    %v13231 = vunpack.c.l.b16 %v13063
    %v13232 = vunpack.c.h.b16 %v13063
    %v13233 = vunpack.c.l.b16 %v13064
    %v13234 = vunpack.c.h.b16 %v13064
    %v13235 = vunpack.c.l.b16 %v13065
    %v13236 = vunpack.c.h.b16 %v13065
    %v13237 = vunpack.c.l.b16 %v13066
    %v13238 = vunpack.c.h.b16 %v13066
    %v13239 = vunpack.c.l.b16 %v13067
    %v13240 = vunpack.c.h.b16 %v13067
    %v13241 = vunpack.c.l.b16 %v13068
    %v13242 = vunpack.c.h.b16 %v13068
    %v13243 = vunpack.c.l.b16 %v13069
    %v13244 = vunpack.c.h.b16 %v13069
    %v13245 = vunpack.c.l.b16 %v13070
    %v13246 = vunpack.c.h.b16 %v13070
    %v13247 = vunpack.c.l.b16 %v13071
    %v13248 = vunpack.c.h.b16 %v13071
    %v13249 = vunpack.c.l.b16 %v13072
    %v13250 = vunpack.c.h.b16 %v13072
    %v13251 = vunpack.c.l.b16 %v13073
    %v13252 = vunpack.c.h.b16 %v13073
    %v13253 = vunpack.c.l.b16 %v13074
    %v13254 = vunpack.c.h.b16 %v13074
    %v13255 = vunpack.c.l.b16 %v13075
    %v13256 = vunpack.c.h.b16 %v13075
    %v13257 = vunpack.c.l.b16 %v13076
    %v13258 = vunpack.c.h.b16 %v13076
    %v13259 = vunpack.c.l.b16 %v13077
    %v13260 = vunpack.c.h.b16 %v13077
    %v13261 = vunpack.c.l.b16 %v13078
    %v13262 = vunpack.c.h.b16 %v13078
    %v13263 = vunpack.c.l.b16 %v13079
    %v13264 = vunpack.c.h.b16 %v13079
    %v13265 = vunpack.c.l.b16 %v13080
    %v13266 = vunpack.c.h.b16 %v13080
    %v13267 = vunpack.c.l.b16 %v13081
    %v13268 = vunpack.c.h.b16 %v13081
    %v13269 = vunpack.c.l.b16 %v13082
    %v13270 = vunpack.c.h.b16 %v13082
    %v13271 = vunpack.c.l.b16 %v13083
    %v13272 = vunpack.c.h.b16 %v13083
    %v13273 = vunpack.c.l.b16 %v13084
    %v13274 = vunpack.c.h.b16 %v13084
    %v13275 = vunpack.c.l.b16 %v13085
    %v13276 = vunpack.c.h.b16 %v13085
    %v13277 = vunpack.c.l.b16 %v13086
    %v13278 = vunpack.c.h.b16 %v13086
    %v13279 = vunpack.c.l.b16 %v13087
    %v13280 = vunpack.c.h.b16 %v13087
    %v13281 = vunpack.c.l.b16 %v13088
    %v13282 = vunpack.c.h.b16 %v13088
    %v13283 = vunpack.c.l.b16 %v13089
    %v13284 = vunpack.c.h.b16 %v13089
    %v13285 = vunpack.c.l.b16 %v13090
    %v13286 = vunpack.c.h.b16 %v13090
    %v13287 = vunpack.c.l.b16 %v13091
    %v13288 = vunpack.c.h.b16 %v13091
    %v13289 = vunpack.c.l.b16 %v13092
    %v13290 = vunpack.c.h.b16 %v13092
    %v13291 = vunpack.c.l.b16 %v13093
    %v13292 = vunpack.c.h.b16 %v13093
    %v13293 = vunpack.c.l.b16 %v13094
    %v13294 = vunpack.c.h.b16 %v13094
    %v13295 = vunpack.c.l.b16 %v13095
    %v13296 = vunpack.c.h.b16 %v13095
    %v13297 = vunpack.c.l.b16 %v13096
    %v13298 = vunpack.c.h.b16 %v13096
    %v13299 = vunpack.c.l.b16 %v13097
    %v13300 = vunpack.c.h.b16 %v13097
    %v13301 = vunpack.c.l.b16 %v13098
    %v13302 = vunpack.c.h.b16 %v13098
    %v13303 = vpack.c.b16 %v13177, %v13175
    %v13304 = vpack.c.b16 %v13178, %v13176
    %v13305 = vpack.c.b16 %v13181, %v13179
    %v13306 = vpack.c.b16 %v13182, %v13180
    %v13307 = vpack.c.b16 %v13185, %v13183
    %v13308 = vpack.c.b16 %v13186, %v13184
    %v13309 = vpack.c.b16 %v13189, %v13187
    %v13310 = vpack.c.b16 %v13190, %v13188
    %v13311 = vpack.c.b16 %v13193, %v13191
    %v13312 = vpack.c.b16 %v13194, %v13192
    %v13313 = vpack.c.b16 %v13197, %v13195
    %v13314 = vpack.c.b16 %v13198, %v13196
    %v13315 = vpack.c.b16 %v13201, %v13199
    %v13316 = vpack.c.b16 %v13202, %v13200
    %v13317 = vpack.c.b16 %v13205, %v13203
    %v13318 = vpack.c.b16 %v13206, %v13204
    %v13319 = vpack.c.b16 %v13209, %v13207
    %v13320 = vpack.c.b16 %v13210, %v13208
    %v13321 = vpack.c.b16 %v13213, %v13211
    %v13322 = vpack.c.b16 %v13214, %v13212
    %v13323 = vpack.c.b16 %v13217, %v13215
    %v13324 = vpack.c.b16 %v13218, %v13216
    %v13325 = vpack.c.b16 %v13221, %v13219
    %v13326 = vpack.c.b16 %v13222, %v13220
    %v13327 = vpack.c.b16 %v13225, %v13223
    %v13328 = vpack.c.b16 %v13226, %v13224
    %v13329 = vpack.c.b16 %v13229, %v13227
    %v13330 = vpack.c.b16 %v13230, %v13228
    %v13331 = vpack.c.b16 %v13233, %v13231
    %v13332 = vpack.c.b16 %v13234, %v13232
    %v13333 = vpack.c.b16 %v13237, %v13235
    %v13334 = vpack.c.b16 %v13238, %v13236
    %v13335 = vpack.c.b16 %v13241, %v13239
    %v13336 = vpack.c.b16 %v13242, %v13240
    %v13337 = vpack.c.b16 %v13245, %v13243
    %v13338 = vpack.c.b16 %v13246, %v13244
    %v13339 = vpack.c.b16 %v13249, %v13247
    %v13340 = vpack.c.b16 %v13250, %v13248
    %v13341 = vpack.c.b16 %v13253, %v13251
    %v13342 = vpack.c.b16 %v13254, %v13252
    %v13343 = vpack.c.b16 %v13257, %v13255
    %v13344 = vpack.c.b16 %v13258, %v13256
    %v13345 = vpack.c.b16 %v13261, %v13259
    %v13346 = vpack.c.b16 %v13262, %v13260
    %v13347 = vpack.c.b16 %v13265, %v13263
    %v13348 = vpack.c.b16 %v13266, %v13264
    %v13349 = vpack.c.b16 %v13269, %v13267
    %v13350 = vpack.c.b16 %v13270, %v13268
    %v13351 = vpack.c.b16 %v13273, %v13271
    %v13352 = vpack.c.b16 %v13274, %v13272
    %v13353 = vpack.c.b16 %v13277, %v13275
    %v13354 = vpack.c.b16 %v13278, %v13276
    %v13355 = vpack.c.b16 %v13281, %v13279
    %v13356 = vpack.c.b16 %v13282, %v13280
    %v13357 = vpack.c.b16 %v13285, %v13283
    %v13358 = vpack.c.b16 %v13286, %v13284
    %v13359 = vpack.c.b16 %v13289, %v13287
    %v13360 = vpack.c.b16 %v13290, %v13288
    %v13361 = vpack.c.b16 %v13293, %v13291
    %v13362 = vpack.c.b16 %v13294, %v13292
    %v13363 = vpack.c.b16 %v13297, %v13295
    %v13364 = vpack.c.b16 %v13298, %v13296
    %v13365 = vpack.c.b16 %v13301, %v13299
    %v13366 = vpack.c.b16 %v13302, %v13300
    %13431 = vmatprep.subr.bf16.mxu0 %v13318
    %13432 = vmatpush1.bf16.msra.mxu0 %v13317
    %13433 = vmatprep.subr.bf16.mxu0 %v13316
    %13434 = vmatpush1.bf16.msra.mxu0 %v13315
    %13435 = vmatprep.subr.bf16.mxu0 %v13314
    %13436 = vmatpush1.bf16.msra.mxu0 %v13313
    %13437 = vmatprep.subr.bf16.mxu0 %v13312
    %13438 = vmatpush1.bf16.msra.mxu0 %v13311
    %13439 = vmatprep.subr.bf16.mxu0 %v13310
    %13440 = vmatpush1.bf16.msra.mxu0 %v13309
    %13441 = vmatprep.subr.bf16.mxu0 %v13308
    %13442 = vmatpush1.bf16.msra.mxu0 %v13307
    %13443 = vmatprep.subr.bf16.mxu0 %v13306
    %13444 = vmatpush1.bf16.msra.mxu0 %v13305
    %13445 = vmatprep.subr.bf16.mxu0 %v13304
    %13446 = vmatpush1.bf16.msra.mxu0 %v13303
    %13447 = vmatprep.subr.bf16.mxu0 %v13334
    %13448 = vmatpush2.bf16.msra.mxu0 %v13333
    %13449 = vmatprep.subr.bf16.mxu0 %v13332
    %13450 = vmatpush2.bf16.msra.mxu0 %v13331
    %13451 = vmatprep.subr.bf16.mxu0 %v13330
    %13452 = vmatpush2.bf16.msra.mxu0 %v13329
    %13453 = vmatprep.subr.bf16.mxu0 %v13328
    %13454 = vmatpush2.bf16.msra.mxu0 %v13327
    %13455 = vmatprep.subr.bf16.mxu0 %v13326
    %13456 = vmatpush2.bf16.msra.mxu0 %v13325
    %13457 = vmatprep.subr.bf16.mxu0 %v13324
    %13458 = vmatpush2.bf16.msra.mxu0 %v13323
    %13459 = vmatprep.subr.bf16.mxu0 %v13322
    %13460 = vmatpush2.bf16.msra.mxu0 %v13321
    %13461 = vmatprep.subr.bf16.mxu0 %v13320
    %13462 = vmatpush2.bf16.msra.mxu0 %v13319
    %13463 = vmatprep.mubr.bf16.mxu0 %v13032
    %13464 = vmatmul.mubr.bf16.gmra.mxu0 %v13031
    %v13465 = vpop.f32.mrf.mxu0
    %v13466 = vadd.f32 %v13104, %v13465
    %v13467 = vpop.f32.mrf.mxu0
    %v13468 = vadd.f32 %v13108, %v13467
    %v13469 = vpop.f32.mrf.mxu0
    %v13470 = vpop.f32.mrf.mxu0
    %13471 = vdwg.mxu0
    %13472 = vmatprep.subr.bf16.mxu0 %v13350
    %13473 = vmatpush1.bf16.msra.mxu0 %v13349
    %13474 = vmatprep.subr.bf16.mxu0 %v13348
    %13475 = vmatpush1.bf16.msra.mxu0 %v13347
    %13476 = vmatprep.subr.bf16.mxu0 %v13346
    %13477 = vmatpush1.bf16.msra.mxu0 %v13345
    %13478 = vmatprep.subr.bf16.mxu0 %v13344
    %13479 = vmatpush1.bf16.msra.mxu0 %v13343
    %13480 = vmatprep.subr.bf16.mxu0 %v13342
    %13481 = vmatpush1.bf16.msra.mxu0 %v13341
    %13482 = vmatprep.subr.bf16.mxu0 %v13340
    %13483 = vmatpush1.bf16.msra.mxu0 %v13339
    %13484 = vmatprep.subr.bf16.mxu0 %v13338
    %13485 = vmatpush1.bf16.msra.mxu0 %v13337
    %13486 = vmatprep.subr.bf16.mxu0 %v13336
    %13487 = vmatpush1.bf16.msra.mxu0 %v13335
    %13488 = vmatprep.subr.bf16.mxu0 %v13366
    %13489 = vmatpush2.bf16.msra.mxu0 %v13365
    %13490 = vmatprep.subr.bf16.mxu0 %v13364
    %13491 = vmatpush2.bf16.msra.mxu0 %v13363
    %13492 = vmatprep.subr.bf16.mxu0 %v13362
    %13493 = vmatpush2.bf16.msra.mxu0 %v13361
    %13494 = vmatprep.subr.bf16.mxu0 %v13360
    %13495 = vmatpush2.bf16.msra.mxu0 %v13359
    %13496 = vmatprep.subr.bf16.mxu0 %v13358
    %13497 = vmatpush2.bf16.msra.mxu0 %v13357
    %13498 = vmatprep.subr.bf16.mxu0 %v13356
    %13499 = vmatpush2.bf16.msra.mxu0 %v13355
    %13500 = vmatprep.subr.bf16.mxu0 %v13354
    %13501 = vmatpush2.bf16.msra.mxu0 %v13353
    %13502 = vmatprep.subr.bf16.mxu0 %v13352
    %13503 = vmatpush2.bf16.msra.mxu0 %v13351
    %13504 = vmatprep.mubr.bf16.mxu0 %v13034
    %13505 = vmatmul.mubr.bf16.gmra.mxu0 %v13033
    %v13506 = vpop.f32.mrf.mxu0
    %v13507 = vadd.f32 %v13466, %v13506
    %v13508 = vpop.f32.mrf.mxu0
    %v13509 = vadd.f32 %v13468, %v13508
    %v13510 = vpop.f32.mrf.mxu0
    %v13511 = vpop.f32.mrf.mxu0
    %13512 = vdwg.mxu0
    %vm13513 = vcmp.gt.f32.partialorder %v13507, 0.0
    %vm13514 = vcmp.gt.f32.partialorder %v13509, 0.0
    %v13515 = vmin.f32 %v13507, 0.0
    %v13516 = vmin.f32 %v13509, 0.0
    %v13517 = vmul.f32 %v13515, 1.442695
    %v13518 = vpow.pop %v13517
    %v13519 = vmul.f32 %v13516, 1.442695
    %v13520 = vpow.pop %v13519
    %v13521 = vsub.f32 %v13518, 1.0
    %v13522 = vsub.f32 %v13520, 1.0
    %v13523 = vsel %vm13513, %v13507, %v13521
    %v13524 = vsel %vm13514, %v13509, %v13522
    %v13525 = vpack.c.bf16 %v13523, %v13523
    %v13526 = vpack.c.bf16 %v13524, %v13524
    %v13527 = vld [vmem:[#allocation28] sm:$0xf]
    %v13528 = vld [vmem:[#allocation28 + $0x4] sm:$0xf]
    %v13529 = vld [vmem:[#allocation28 + $0x8] sm:$0xf]
    %v13530 = vld [vmem:[#allocation28 + $0xc] sm:$0xf]
    %v13531 = vld [vmem:[#allocation28 + $0x10] sm:$0xf]
    %v13532 = vld [vmem:[#allocation28 + $0x14] sm:$0xf]
    %v13533 = vld [vmem:[#allocation28 + $0x18] sm:$0xf]
    %v13534 = vld [vmem:[#allocation28 + $0x1c] sm:$0xf]
    %v13535 = vld [vmem:[#allocation28 + $0x20] sm:$0xf]
    %v13536 = vld [vmem:[#allocation28 + $0x24] sm:$0xf]
    %v13537 = vld [vmem:[#allocation28 + $0x28] sm:$0xf]
    %v13538 = vld [vmem:[#allocation28 + $0x2c] sm:$0xf]
    %v13539 = vld [vmem:[#allocation28 + $0x30] sm:$0xf]
    %v13540 = vld [vmem:[#allocation28 + $0x34] sm:$0xf]
    %v13541 = vld [vmem:[#allocation28 + $0x38] sm:$0xf]
    %v13542 = vld [vmem:[#allocation28 + $0x3c] sm:$0xf]
    %v13543 = vld [vmem:[#allocation28 + $0x40] sm:$0xf]
    %v13544 = vld [vmem:[#allocation28 + $0x44] sm:$0xf]
    %v13545 = vld [vmem:[#allocation28 + $0x48] sm:$0xf]
    %v13546 = vld [vmem:[#allocation28 + $0x4c] sm:$0xf]
    %v13547 = vld [vmem:[#allocation28 + $0x50] sm:$0xf]
    %v13548 = vld [vmem:[#allocation28 + $0x54] sm:$0xf]
    %v13549 = vld [vmem:[#allocation28 + $0x58] sm:$0xf]
    %v13550 = vld [vmem:[#allocation28 + $0x5c] sm:$0xf]
    %v13551 = vld [vmem:[#allocation28 + $0x60] sm:$0xf]
    %v13552 = vld [vmem:[#allocation28 + $0x64] sm:$0xf]
    %v13553 = vld [vmem:[#allocation28 + $0x68] sm:$0xf]
    %v13554 = vld [vmem:[#allocation28 + $0x6c] sm:$0xf]
    %v13555 = vld [vmem:[#allocation28 + $0x70] sm:$0xf]
    %v13556 = vld [vmem:[#allocation28 + $0x74] sm:$0xf]
    %v13557 = vld [vmem:[#allocation28 + $0x78] sm:$0xf]
    %v13558 = vld [vmem:[#allocation28 + $0x7c] sm:$0xf]
    %v13559 = vld [vmem:[#allocation29] sm:$0x1]
    %v13561 = vlaneseq
    %v13562 = vshrl.u32 %v13561, 7
    %v13563 = vsub.s32 0, %v13562
    %v13564 = vrot.slane %v13559, %v13563
    %v13598 = vunpack.c.l.b16 %v13527
    %v13599 = vunpack.c.l.b16 %v13528
    %v13600 = vunpack.c.l.b16 %v13529
    %v13601 = vunpack.c.l.b16 %v13530
    %v13602 = vunpack.c.l.b16 %v13531
    %v13603 = vunpack.c.l.b16 %v13532
    %v13604 = vunpack.c.l.b16 %v13533
    %v13605 = vunpack.c.l.b16 %v13534
    %v13606 = vunpack.c.l.b16 %v13535
    %v13607 = vunpack.c.l.b16 %v13536
    %v13608 = vunpack.c.l.b16 %v13537
    %v13609 = vunpack.c.l.b16 %v13538
    %v13610 = vunpack.c.l.b16 %v13539
    %v13611 = vunpack.c.l.b16 %v13540
    %v13612 = vunpack.c.l.b16 %v13541
    %v13613 = vunpack.c.l.b16 %v13542
    %v13614 = vunpack.c.l.b16 %v13543
    %v13615 = vunpack.c.l.b16 %v13544
    %v13616 = vunpack.c.l.b16 %v13545
    %v13617 = vunpack.c.l.b16 %v13546
    %v13618 = vunpack.c.l.b16 %v13547
    %v13619 = vunpack.c.l.b16 %v13548
    %v13620 = vunpack.c.l.b16 %v13549
    %v13621 = vunpack.c.l.b16 %v13550
    %v13622 = vunpack.c.l.b16 %v13551
    %v13623 = vunpack.c.l.b16 %v13552
    %v13624 = vunpack.c.l.b16 %v13553
    %v13625 = vunpack.c.l.b16 %v13554
    %v13626 = vunpack.c.l.b16 %v13555
    %v13627 = vunpack.c.l.b16 %v13556
    %v13628 = vunpack.c.l.b16 %v13557
    %v13629 = vunpack.c.l.b16 %v13558
    %v13630 = vpack.c.b16 %v13599, %v13598
    %v13631 = vpack.c.b16 %v13601, %v13600
    %v13632 = vpack.c.b16 %v13603, %v13602
    %v13633 = vpack.c.b16 %v13605, %v13604
    %v13634 = vpack.c.b16 %v13607, %v13606
    %v13635 = vpack.c.b16 %v13609, %v13608
    %v13636 = vpack.c.b16 %v13611, %v13610
    %v13637 = vpack.c.b16 %v13613, %v13612
    %v13638 = vpack.c.b16 %v13615, %v13614
    %v13639 = vpack.c.b16 %v13617, %v13616
    %v13640 = vpack.c.b16 %v13619, %v13618
    %v13641 = vpack.c.b16 %v13621, %v13620
    %v13642 = vpack.c.b16 %v13623, %v13622
    %v13643 = vpack.c.b16 %v13625, %v13624
    %v13644 = vpack.c.b16 %v13627, %v13626
    %v13645 = vpack.c.b16 %v13629, %v13628
    %13662 = vmatprep.subr.bf16.mxu0 0
    %13663 = vmatpush1.bf16.msra.mxu0 %v13637
    %13664 = vmatprep.subr.bf16.mxu0 0
    %13665 = vmatpush1.bf16.msra.mxu0 %v13636
    %13666 = vmatprep.subr.bf16.mxu0 0
    %13667 = vmatpush1.bf16.msra.mxu0 %v13635
    %13668 = vmatprep.subr.bf16.mxu0 0
    %13669 = vmatpush1.bf16.msra.mxu0 %v13634
    %13670 = vmatprep.subr.bf16.mxu0 0
    %13671 = vmatpush1.bf16.msra.mxu0 %v13633
    %13672 = vmatprep.subr.bf16.mxu0 0
    %13673 = vmatpush1.bf16.msra.mxu0 %v13632
    %13674 = vmatprep.subr.bf16.mxu0 0
    %13675 = vmatpush1.bf16.msra.mxu0 %v13631
    %13676 = vmatprep.subr.bf16.mxu0 0
    %13677 = vmatpush1.bf16.msra.mxu0 %v13630
    %13678 = vmatprep.subr.bf16.mxu0 0
    %13679 = vmatpush2.bf16.msra.mxu0 %v13645
    %13680 = vmatprep.subr.bf16.mxu0 0
    %13681 = vmatpush2.bf16.msra.mxu0 %v13644
    %13682 = vmatprep.subr.bf16.mxu0 0
    %13683 = vmatpush2.bf16.msra.mxu0 %v13643
    %13684 = vmatprep.subr.bf16.mxu0 0
    %13685 = vmatpush2.bf16.msra.mxu0 %v13642
    %13686 = vmatprep.subr.bf16.mxu0 0
    %13687 = vmatpush2.bf16.msra.mxu0 %v13641
    %13688 = vmatprep.subr.bf16.mxu0 0
    %13689 = vmatpush2.bf16.msra.mxu0 %v13640
    %13690 = vmatprep.subr.bf16.mxu0 0
    %13691 = vmatpush2.bf16.msra.mxu0 %v13639
    %13692 = vmatprep.subr.bf16.mxu0 0
    %13693 = vmatpush2.bf16.msra.mxu0 %v13638
    %13694 = vmatprep.mubr.bf16.mxu0 %v13526
    %13695 = vmatmul.mubr.bf16.gmra.mxu0 %v13525
    %v13696 = vpop.f32.mrf.mxu0
    %v13697 = vadd.f32 %v13564, %v13696
    %v13698 = vpop.f32.mrf.mxu0
    %v13699 = vpop.f32.mrf.mxu0
    %v13700 = vpop.f32.mrf.mxu0
    %13701 = vdwg.mxu0
    %vm13702 = vcmp.gt.f32.partialorder %v13697, 0.0
    %v13703 = vmin.f32 %v13697, 0.0
    %v13704 = vmul.f32 %v13703, 1.442695
    %v13705 = vpow.pop %v13704
    %v13706 = vsub.f32 %v13705, 1.0
    %v13707 = vsel %vm13702, %v13697, %v13706
    %v13708 = vpack.c.bf16 %v13707, %v13707
    %v13709 = vld [vmem:[#allocation31] sm:$0xf]
    %v13710 = vld [vmem:[#allocation31 + $0x4] sm:$0xf]
    %v13711 = vld [vmem:[#allocation31 + $0x8] sm:$0xf]
    %v13712 = vld [vmem:[#allocation31 + $0xc] sm:$0xf]
    %v13713 = vld [vmem:[#allocation31 + $0x10] sm:$0xf]
    %v13714 = vld [vmem:[#allocation31 + $0x14] sm:$0xf]
    %v13715 = vld [vmem:[#allocation31 + $0x18] sm:$0xf]
    %v13716 = vld [vmem:[#allocation31 + $0x1c] sm:$0xf]
    %v13717 = vld [vmem:[#allocation31 + $0x20] sm:$0xf]
    %v13718 = vld [vmem:[#allocation31 + $0x24] sm:$0xf]
    %v13719 = vld [vmem:[#allocation31 + $0x28] sm:$0xf]
    %v13720 = vld [vmem:[#allocation31 + $0x2c] sm:$0xf]
    %v13721 = vld [vmem:[#allocation31 + $0x30] sm:$0xf]
    %v13722 = vld [vmem:[#allocation31 + $0x34] sm:$0xf]
    %v13723 = vld [vmem:[#allocation31 + $0x38] sm:$0xf]
    %v13724 = vld [vmem:[#allocation31 + $0x3c] sm:$0xf]
    %v13725 = vld [vmem:[#allocation32] sm:$0x1]
    %v13727 = vlaneseq
    %v13728 = vshrl.u32 %v13727, 7
    %v13729 = vsub.s32 0, %v13728
    %v13730 = vrot.slane %v13725, %v13729
    %v13748 = vunpack.c.l.b16 %v13709
    %v13749 = vunpack.c.l.b16 %v13710
    %v13750 = vunpack.c.l.b16 %v13711
    %v13751 = vunpack.c.l.b16 %v13712
    %v13752 = vunpack.c.l.b16 %v13713
    %v13753 = vunpack.c.l.b16 %v13714
    %v13754 = vunpack.c.l.b16 %v13715
    %v13755 = vunpack.c.l.b16 %v13716
    %v13756 = vunpack.c.l.b16 %v13717
    %v13757 = vunpack.c.l.b16 %v13718
    %v13758 = vunpack.c.l.b16 %v13719
    %v13759 = vunpack.c.l.b16 %v13720
    %v13760 = vunpack.c.l.b16 %v13721
    %v13761 = vunpack.c.l.b16 %v13722
    %v13762 = vunpack.c.l.b16 %v13723
    %v13763 = vunpack.c.l.b16 %v13724
    %v13764 = vpack.c.b16 %v13749, %v13748
    %v13765 = vpack.c.b16 %v13751, %v13750
    %v13766 = vpack.c.b16 %v13753, %v13752
    %v13767 = vpack.c.b16 %v13755, %v13754
    %v13768 = vpack.c.b16 %v13757, %v13756
    %v13769 = vpack.c.b16 %v13759, %v13758
    %v13770 = vpack.c.b16 %v13761, %v13760
    %v13771 = vpack.c.b16 %v13763, %v13762
    %13780 = vmatprep.subr.bf16.mxu0 0
    %13781 = vmatpush1.bf16.msra.mxu0 %v13771
    %13782 = vmatprep.subr.bf16.mxu0 0
    %13783 = vmatpush1.bf16.msra.mxu0 %v13770
    %13784 = vmatprep.subr.bf16.mxu0 0
    %13785 = vmatpush1.bf16.msra.mxu0 %v13769
    %13786 = vmatprep.subr.bf16.mxu0 0
    %13787 = vmatpush1.bf16.msra.mxu0 %v13768
    %13788 = vmatprep.subr.bf16.mxu0 0
    %13789 = vmatpush1.bf16.msra.mxu0 %v13767
    %13790 = vmatprep.subr.bf16.mxu0 0
    %13791 = vmatpush1.bf16.msra.mxu0 %v13766
    %13792 = vmatprep.subr.bf16.mxu0 0
    %13793 = vmatpush1.bf16.msra.mxu0 %v13765
    %13794 = vmatprep.subr.bf16.mxu0 0
    %13795 = vmatpush1.bf16.msra.mxu0 %v13764
    %13796 = vmatprep.subr.bf16.mxu0 0
    %13797 = vmatpush2.bf16.msra.mxu0 0
    %13798 = vmatprep.subr.bf16.mxu0 0
    %13799 = vmatpush2.bf16.msra.mxu0 0
    %13800 = vmatprep.subr.bf16.mxu0 0
    %13801 = vmatpush2.bf16.msra.mxu0 0
    %13802 = vmatprep.subr.bf16.mxu0 0
    %13803 = vmatpush2.bf16.msra.mxu0 0
    %13804 = vmatprep.subr.bf16.mxu0 0
    %13805 = vmatpush2.bf16.msra.mxu0 0
    %13806 = vmatprep.subr.bf16.mxu0 0
    %13807 = vmatpush2.bf16.msra.mxu0 0
    %13808 = vmatprep.subr.bf16.mxu0 0
    %13809 = vmatpush2.bf16.msra.mxu0 0
    %13810 = vmatprep.subr.bf16.mxu0 0
    %13811 = vmatpush2.bf16.msra.mxu0 0
    %13812 = vmatprep.mubr.bf16.mxu0 0
    %13813 = vmatmul.mubr.bf16.gmra.mxu0 %v13708
    %v13814 = vpop.f32.mrf.mxu0
    %v13815 = vadd.f32 %v13730, %v13814
    %v13816 = vpop.f32.mrf.mxu0
    %v13817 = vpop.f32.mrf.mxu0
    %v13818 = vpop.f32.mrf.mxu0
    %13819 = vdwg.mxu0
    %13820 = vmax.xlane.f32.xlu0 %v13815
    %v13821 = vpop.xlane.xlu0 %13820
    %v13822 = vsub.f32 %v13815, %v13821
    %v13823 = vmul.f32 %v13822, 1.442695
    %v13824 = vpow.pop %v13823
    %13825 = vadd.xlane.f32.xlu0 %v13824
    %v13826 = vpop.xlane.xlu0 %13825
    %v13827 = vrcp.pop %v13826
    %v13828 = vmul.f32 %v13824, %v13827
    %13829 = vst [vmem:[#allocation34] sm:$0xff] %v13828
    // Predicated region
    $region162: #{tpu_custom_call.1} parent=1 // pred_check
      _
    $region163: #{tpu_custom_call.1} parent=1 // pred_check_branch
      %13831 = sbr.rel (0) target = $region165
    $region164: #{tpu_custom_call.1} parent=1 // pred_region
      %s13833 = ssub.s32 128, 128
      %13834 = vsyncadd [#allocation4], %s13833
      %s13836 = sshll.u32 [#allocation34], 4
      %s13837 = int_to_ptr.vmem [resolvable:$true] %s13836
      %13839 = dma.vmem_to_hbm [thread:$0]  %s13837, 128, %s20, [#allocation4]
    $region165: #{tpu_custom_call.1} parent=1 // pred_fallthru
      _
    // Predicated region
    $region166: #{tpu_custom_call.1} parent=1 // pred_check
      _
    $region167: #{tpu_custom_call.1} parent=1 // pred_check_branch
      %13841 = sbr.rel (0) target = $region169
    $region168: #{tpu_custom_call.1} parent=1 // pred_region
      %13842 = dma.done [#allocation4], 128
    $region169: #{tpu_custom_call.1} parent=1 // pred_fallthru
      _
    %13843 = vsyncpa [#allocation3], 1
    %13844 = vsyncpa [#allocation6], 1
    %13845 = vsyncpa [#allocation9], 1
    %13846 = vsyncpa [#allocation12], 1
    %13847 = vsyncpa [#allocation15], 1
    %13848 = vsyncpa [#allocation18], 1
    %13849 = vsyncpa [#allocation21], 1
    %13850 = vsyncpa [#allocation24], 1
    %13851 = vsyncpa [#allocation27], 1
    %13852 = vsyncpa [#allocation30], 1
    %13853 = vsyncpa [#allocation33], 1
    %13854 = vsyncpa [#allocation4], 1

</llo_original>
